<compile_context>
chip_gen: v6e
topology: v6e:2x2x1
jax: 0.10.0
libtpu: 0.0.40
codegen_flags: <defaults>
</compile_context>

<pallas_src>
import jax
import jax.numpy as jnp
from jax.experimental import pallas as pl
from jax.experimental.pallas import tpu as pltpu

C = 128      # in/out channels (fixed by the module)
K = 5        # kernel size
EPS = 1e-5   # BatchNorm2d default eps

# (px, dx) pairs with a valid kx = px + 4 - 2*dx in [0, 5).
_PXDX = ((0, 0), (0, 1), (0, 2), (1, 1), (1, 2))
_PXDX_IDX = {pd: i for i, pd in enumerate(_PXDX)}


def _convt_stats_kernel(x_ref, w_ref, y_ref, sum_ref, sq_ref):
    # x_ref : (1, H+2, W+2, C) bf16  one zero-padded NHWC image
    # w_ref : (5, 3C, 2C)      bf16  fused taps (indexed by _PXDX); cols [0:C]=py0, [C:2C]=py1
    # y_ref : (1, 4, H, W, C)  bf16  parity-separated conv output (p = 2*py + px), bias-free
    # sum_ref/sq_ref : (1, 1, C) f32 per-image channel sum / sum-of-squares (for BatchNorm)
    H, W = y_ref.shape[2], y_ref.shape[3]
    x = x_ref[0]                                              # (H+2, W+2, C)

    # Hoist the three dx-shifted views once and build the dy-stacked "fat-K" patch matrices.
    cats = []
    for dx in range(3):
        xs = x[:, dx:dx + W, :]                               # (H+2, W, C)
        cats.append(jnp.concatenate(
            [xs[dy:dy + H].reshape(H * W, C) for dy in range(3)], axis=-1))  # (H*W, 3C)

    s_tot = jnp.zeros((1, C), jnp.float32)
    sq_tot = jnp.zeros((1, C), jnp.float32)
    for px in range(2):
        acc = None
        for dx in ((0, 1, 2) if px == 0 else (1, 2)):
            d = jnp.dot(cats[dx], w_ref[_PXDX_IDX[(px, dx)]],
                        preferred_element_type=jnp.float32)   # (H*W, 2C), both row parities
            acc = d if acc is None else acc + d
        for py in range(2):
            part = acc[:, py * C:(py + 1) * C]                # (H*W, C) f32
            y_ref[0, 2 * py + px] = part.reshape(H, W, C).astype(y_ref.dtype)
            s_tot = s_tot + jnp.sum(part, axis=0, keepdims=True)
            sq_tot = sq_tot + jnp.sum(part * part, axis=0, keepdims=True)
    sum_ref[0] = s_tot
    sq_ref[0] = sq_tot


def _bn_relu_nchw_kernel(y_ref, scale_ref, shift_ref, perm_ref, o_ref):
    # y_ref : (1, 4, TH, W, C) bf16  parity-separated conv rows
    # scale_ref / shift_ref : (1, C) f32
    # perm_ref : (2W, 2W) f32  0/1 lane permutation, column (2x+px) <- row (px*W + x)
    # o_ref : (1, C, TH, 4W) f32  final NCHW rows; lane l = py*2W + 2x + px, sublane = y
    TH, W = y_ref.shape[2], y_ref.shape[3]
    scale = scale_ref[...]                                    # (1, C)
    shift = shift_ref[...]
    z = jnp.maximum(y_ref[0].astype(jnp.float32) * scale + shift, 0.0)   # (4, TH, W, C)

    halves = []
    for py in range(2):
        pieces = []
        for px in range(2):
            zp = z[2 * py + px]                               # (TH, W, C)
            pieces.append(jnp.swapaxes(zp, 1, 2))             # (TH, C, W) minor-dim transpose
        cat = jnp.concatenate(pieces, axis=-1)                # (TH, C, 2W) lanes [px0 | px1]
        # px interleave along lanes via a 0/1 permutation matmul (MXU has headroom here).
        half = jnp.dot(cat.reshape(TH * C, 2 * W), perm_ref[...],
                       preferred_element_type=jnp.float32)    # (TH*C, 2W) lanes = 2x+px
        halves.append(half)
    rows = jnp.concatenate(halves, axis=-1)                   # (TH*C, 4W) lanes = py*2W+2x+px
    rows = rows.reshape(TH, C, 4 * W)
    o_ref[0] = pltpu.einshape("tcl->ctl", rows)               # (C, TH, 4W)


def group9_forward(x_nchw, weight, bias, gamma, beta):
    # weight: (Cin, Cout, 5, 5) as stored by nn.ConvTranspose2d; bias/gamma/beta: (C,)
    N, Cin, H, W = x_nchw.shape
    assert Cin == C
    assert W % 8 == 0, "W must be a multiple of 8 (sublane tile) for this kernel"
    Ho, Wo = 2 * H, 2 * W
    TH = 8 if H % 8 == 0 else H
    assert H % TH == 0

    # NCHW -> NHWC, zero-pad spatially by 1, bf16 matmul operand.
    # TODO(synk): this input prep pass could also be folded into the conv kernel.
    x = jnp.transpose(x_nchw, (0, 2, 3, 1))
    x_pad = jnp.pad(x, ((0, 0), (1, 1), (1, 1), (0, 0))).astype(jnp.bfloat16)

    # Pack exactly the 25 valid taps.  For output parity (py, px) and padded-input offset
    # (dy, dx): ky = py + 4 - 2*dy, kx = px + 4 - 2*dx (valid iff in [0, 5)).  dy stacks along
    # the contraction axis; py stacks along the output axis (missing py=1/dy=0 tap is zero).
    wf_list = []
    for (px, dx) in _PXDX:
        kx = px + 4 - 2 * dx
        row_blocks = []
        for dy in range(3):
            w_py0 = weight[:, :, 4 - 2 * dy, kx]                           # (C, C)
            w_py1 = (jnp.zeros((C, C), weight.dtype) if dy == 0
                     else weight[:, :, 5 - 2 * dy, kx])                    # (C, C)
            row_blocks.append(jnp.concatenate([w_py0, w_py1], axis=1))     # (C, 2C)
        wf_list.append(jnp.concatenate(row_blocks, axis=0))                # (3C, 2C)
    wf = jnp.stack(wf_list).astype(jnp.bfloat16)                           # (5, 3C, 2C)

    # --- ConvTranspose2d (bias-free) + fused per-image BatchNorm statistics ---
    y_p, sums, sqs = pl.pallas_call(
        _convt_stats_kernel,
        out_shape=(
            jax.ShapeDtypeStruct((N, 4, H, W, C), jnp.bfloat16),
            jax.ShapeDtypeStruct((N, 1, C), jnp.float32),
            jax.ShapeDtypeStruct((N, 1, C), jnp.float32),
        ),
        grid=(N,),
        in_specs=[
            pl.BlockSpec((1, H + 2, W + 2, C), lambda n: (n, 0, 0, 0)),
            pl.BlockSpec((5, 3 * C, 2 * C), lambda n: (0, 0, 0)),   # resident across the grid
        ],
        out_specs=(
            pl.BlockSpec((1, 4, H, W, C), lambda n: (n, 0, 0, 0, 0)),
            pl.BlockSpec((1, 1, C), lambda n: (n, 0, 0)),
            pl.BlockSpec((1, 1, C), lambda n: (n, 0, 0)),
        ),
        compiler_params=pltpu.CompilerParams(
            dimension_semantics=("parallel",),
            vmem_limit_bytes=48 * 1024 * 1024),
    )(x_pad, wf)
    # TODO(synk): for large H the conv kernel should additionally be row-band tiled (with a
    # stats accumulator grid axis) to fit v7x's 64 MiB VMEM.

    # --- BatchNorm2d scale/shift from batch statistics (training mode, biased variance) ---
    # The conv bias is a per-channel constant, so it cancels exactly in training-mode BN:
    #   BN(y + b) = gamma * (y - mean_y) * rsqrt(var_y + eps) + beta.
    count = jnp.float32(N * Ho * Wo)
    mean = jnp.sum(sums, axis=(0, 1)) / count
    var = jnp.maximum(jnp.sum(sqs, axis=(0, 1)) / count - mean * mean, 0.0)
    invstd = jax.lax.rsqrt(var + jnp.float32(EPS))
    scale = (gamma * invstd).reshape(1, C).astype(jnp.float32)
    shift = (beta - mean * gamma * invstd).reshape(1, C).astype(jnp.float32)
    del bias  # cancels in training-mode BN
    # TODO(synk): running_mean/running_var updates (stateful nn.BatchNorm2d side effects)
    # are not produced; the forward output does not need them.

    # 0/1 lane-permutation matrix for the px interleave: column (2x+px) <- row (px*W + x).
    j = jnp.arange(2 * W)
    perm = jax.nn.one_hot(2 * (j % W) + j // W, 2 * W, dtype=jnp.float32)

    # --- BN + ReLU fused with parity interleave and NHWC -> NCHW ---
    # The kernel writes (N, C, H, 4W); reshaping to (N, C, 2H, 2W) is a pure bitcast because
    # flat row order (y, [py, x, px]) equals NCHW order (2y+py, 2x+px).
    out4 = pl.pallas_call(
        _bn_relu_nchw_kernel,
        out_shape=jax.ShapeDtypeStruct((N, C, H, 4 * W), jnp.float32),
        grid=(N, H // TH),
        in_specs=[
            pl.BlockSpec((1, 4, TH, W, C), lambda n, b: (n, 0, b, 0, 0)),
            pl.BlockSpec((1, C), lambda n, b: (0, 0)),
            pl.BlockSpec((1, C), lambda n, b: (0, 0)),
            pl.BlockSpec((2 * W, 2 * W), lambda n, b: (0, 0)),
        ],
        out_specs=pl.BlockSpec((1, C, TH, 4 * W), lambda n, b: (n, 0, b, 0)),
        compiler_params=pltpu.CompilerParams(
            dimension_semantics=("parallel", "parallel"),
            vmem_limit_bytes=48 * 1024 * 1024),
    )(y_p, scale, shift, perm)

    return out4.reshape(N, C, Ho, Wo)


if __name__ == "__main__":
    key = jax.random.PRNGKey(0)
    kx, kw, kb = jax.random.split(key, 3)

    N, H, W = 2, 8, 8
    x = jax.random.normal(kx, (N, C, H, W), jnp.float32)

    # Deterministic parameter init (PyTorch-style uniform bounds for the conv).
    fan_in = C * K * K
    bound = 1.0 / (fan_in ** 0.5)
    weight = jax.random.uniform(kw, (C, C, K, K), jnp.float32, -bound, bound)
    bias = jax.random.uniform(kb, (C,), jnp.float32, -bound, bound)
    gamma = jnp.ones((C,), jnp.float32)     # BatchNorm2d default weight
    beta = jnp.zeros((C,), jnp.float32)     # BatchNorm2d default bias

    out = jax.jit(group9_forward)(x, weight, bias, gamma, beta)
    out = jax.block_until_ready(out)
    assert out.shape == (N, C, 2 * H, 2 * W)
    assert bool(jnp.all(out >= 0.0))        # ReLU sanity check
    print("KERNEL_OK")
</pallas_src>

<mosaic_0001>
module attributes {stable_mosaic.version = 11 : i64} {
  func.func @_convt_stats_kernel(%arg0: i32, %arg1: memref<1x10x10x128xbf16, #tpu.memory_space<vmem>>, %arg2: memref<5x384x256xbf16, #tpu.memory_space<vmem>>, %arg3: memref<1x4x8x8x128xbf16, #tpu.memory_space<vmem>>, %arg4: memref<1x1x128xf32, #tpu.memory_space<vmem>>, %arg5: memref<1x1x128xf32, #tpu.memory_space<vmem>>) attributes {dimension_semantics = [#tpu.dimension_semantics<parallel>], iteration_bounds = array<i64: 2>, scalar_prefetch = 0 : i64, scratch_operands = 0 : i64, tpu.core_type = #tpu.core_type<tc>, window_params = [{transform_indices = @transform_0, window_bounds = array<i64: 1, 10, 10, 128>}, {pipeline_mode = #tpu.pipeline_mode<synchronous>, transform_indices = @transform_1, window_bounds = array<i64: 5, 384, 256>}, {transform_indices = @transform_2, window_bounds = array<i64: 1, 4, 8, 8, 128>}, {transform_indices = @transform_3, window_bounds = array<i64: 1, 1, 128>}, {transform_indices = @transform_4, window_bounds = array<i64: 1, 1, 128>}]} {
    %c0 = arith.constant 0 : index
    %c0_0 = arith.constant 0 : index
    %c0_1 = arith.constant 0 : index
    %c0_2 = arith.constant 0 : index
    %0 = vector.load %arg1[%c0, %c0_0, %c0_1, %c0_2] : memref<1x10x10x128xbf16, #tpu.memory_space<vmem>>, vector<1x10x10x128xbf16>
    %1 = vector.shape_cast %0 : vector<1x10x10x128xbf16> to vector<10x10x128xbf16>
    %2 = vector.extract_strided_slice %1 {offsets = [0, 0, 0], sizes = [10, 8, 128], strides = [1, 1, 1]} : vector<10x10x128xbf16> to vector<10x8x128xbf16>
    %3 = vector.extract_strided_slice %2 {offsets = [0, 0, 0], sizes = [8, 8, 128], strides = [1, 1, 1]} : vector<10x8x128xbf16> to vector<8x8x128xbf16>
    %4 = vector.shape_cast %3 : vector<8x8x128xbf16> to vector<64x128xbf16>
    %5 = vector.extract_strided_slice %2 {offsets = [1, 0, 0], sizes = [8, 8, 128], strides = [1, 1, 1]} : vector<10x8x128xbf16> to vector<8x8x128xbf16>
    %6 = vector.shape_cast %5 : vector<8x8x128xbf16> to vector<64x128xbf16>
    %7 = vector.extract_strided_slice %2 {offsets = [2, 0, 0], sizes = [8, 8, 128], strides = [1, 1, 1]} : vector<10x8x128xbf16> to vector<8x8x128xbf16>
    %8 = vector.shape_cast %7 : vector<8x8x128xbf16> to vector<64x128xbf16>
    %9 = tpu.concatenate %4, %6, %8 in 1 : vector<64x128xbf16>, vector<64x128xbf16>, vector<64x128xbf16> -> vector<64x384xbf16>
    %10 = vector.extract_strided_slice %1 {offsets = [0, 1, 0], sizes = [10, 8, 128], strides = [1, 1, 1]} : vector<10x10x128xbf16> to vector<10x8x128xbf16>
    %11 = vector.extract_strided_slice %10 {offsets = [0, 0, 0], sizes = [8, 8, 128], strides = [1, 1, 1]} : vector<10x8x128xbf16> to vector<8x8x128xbf16>
    %12 = vector.shape_cast %11 : vector<8x8x128xbf16> to vector<64x128xbf16>
    %13 = vector.extract_strided_slice %10 {offsets = [1, 0, 0], sizes = [8, 8, 128], strides = [1, 1, 1]} : vector<10x8x128xbf16> to vector<8x8x128xbf16>
    %14 = vector.shape_cast %13 : vector<8x8x128xbf16> to vector<64x128xbf16>
    %15 = vector.extract_strided_slice %10 {offsets = [2, 0, 0], sizes = [8, 8, 128], strides = [1, 1, 1]} : vector<10x8x128xbf16> to vector<8x8x128xbf16>
    %16 = vector.shape_cast %15 : vector<8x8x128xbf16> to vector<64x128xbf16>
    %17 = tpu.concatenate %12, %14, %16 in 1 : vector<64x128xbf16>, vector<64x128xbf16>, vector<64x128xbf16> -> vector<64x384xbf16>
    %18 = vector.extract_strided_slice %1 {offsets = [0, 2, 0], sizes = [10, 8, 128], strides = [1, 1, 1]} : vector<10x10x128xbf16> to vector<10x8x128xbf16>
    %19 = vector.extract_strided_slice %18 {offsets = [0, 0, 0], sizes = [8, 8, 128], strides = [1, 1, 1]} : vector<10x8x128xbf16> to vector<8x8x128xbf16>
    %20 = vector.shape_cast %19 : vector<8x8x128xbf16> to vector<64x128xbf16>
    %21 = vector.extract_strided_slice %18 {offsets = [1, 0, 0], sizes = [8, 8, 128], strides = [1, 1, 1]} : vector<10x8x128xbf16> to vector<8x8x128xbf16>
    %22 = vector.shape_cast %21 : vector<8x8x128xbf16> to vector<64x128xbf16>
    %23 = vector.extract_strided_slice %18 {offsets = [2, 0, 0], sizes = [8, 8, 128], strides = [1, 1, 1]} : vector<10x8x128xbf16> to vector<8x8x128xbf16>
    %24 = vector.shape_cast %23 : vector<8x8x128xbf16> to vector<64x128xbf16>
    %25 = tpu.concatenate %20, %22, %24 in 1 : vector<64x128xbf16>, vector<64x128xbf16>, vector<64x128xbf16> -> vector<64x384xbf16>
    %cst = arith.constant 0.000000e+00 : f32
    %26 = vector.broadcast %cst : f32 to vector<1x128xf32>
    %cst_3 = arith.constant 0.000000e+00 : f32
    %27 = vector.broadcast %cst_3 : f32 to vector<1x128xf32>
    %c0_4 = arith.constant 0 : index
    %c0_5 = arith.constant 0 : index
    %c0_6 = arith.constant 0 : index
    %28 = vector.load %arg2[%c0_4, %c0_5, %c0_6] : memref<5x384x256xbf16, #tpu.memory_space<vmem>>, vector<1x384x256xbf16>
    %29 = vector.shape_cast %28 : vector<1x384x256xbf16> to vector<384x256xbf16>
    %cst_7 = arith.constant dense<0.000000e+00> : vector<64x256xf32>
    %30 = tpu.matmul %9, %29, %cst_7 {dimension_numbers = #tpu.dot_dimension_numbers<[1], [0], [0], [1], [0, 0, 1, 1], [], []>} : vector<64x384xbf16>, vector<384x256xbf16>, vector<64x256xf32> -> vector<64x256xf32>
    %c1 = arith.constant 1 : index
    %c0_8 = arith.constant 0 : index
    %c0_9 = arith.constant 0 : index
    %31 = vector.load %arg2[%c1, %c0_8, %c0_9] : memref<5x384x256xbf16, #tpu.memory_space<vmem>>, vector<1x384x256xbf16>
    %32 = vector.shape_cast %31 : vector<1x384x256xbf16> to vector<384x256xbf16>
    %cst_10 = arith.constant dense<0.000000e+00> : vector<64x256xf32>
    %33 = tpu.matmul %17, %32, %cst_10 {dimension_numbers = #tpu.dot_dimension_numbers<[1], [0], [0], [1], [0, 0, 1, 1], [], []>} : vector<64x384xbf16>, vector<384x256xbf16>, vector<64x256xf32> -> vector<64x256xf32>
    %34 = arith.addf %30, %33 : vector<64x256xf32>
    %c2 = arith.constant 2 : index
    %c0_11 = arith.constant 0 : index
    %c0_12 = arith.constant 0 : index
    %35 = vector.load %arg2[%c2, %c0_11, %c0_12] : memref<5x384x256xbf16, #tpu.memory_space<vmem>>, vector<1x384x256xbf16>
    %36 = vector.shape_cast %35 : vector<1x384x256xbf16> to vector<384x256xbf16>
    %cst_13 = arith.constant dense<0.000000e+00> : vector<64x256xf32>
    %37 = tpu.matmul %25, %36, %cst_13 {dimension_numbers = #tpu.dot_dimension_numbers<[1], [0], [0], [1], [0, 0, 1, 1], [], []>} : vector<64x384xbf16>, vector<384x256xbf16>, vector<64x256xf32> -> vector<64x256xf32>
    %38 = arith.addf %34, %37 : vector<64x256xf32>
    %39 = vector.extract_strided_slice %38 {offsets = [0, 0], sizes = [64, 128], strides = [1, 1]} : vector<64x256xf32> to vector<64x128xf32>
    %40 = vector.shape_cast %39 : vector<64x128xf32> to vector<8x8x128xf32>
    %41 = arith.truncf %40 : vector<8x8x128xf32> to vector<8x8x128xbf16>
    %c0_14 = arith.constant 0 : index
    %c0_15 = arith.constant 0 : index
    %c0_16 = arith.constant 0 : index
    %c0_17 = arith.constant 0 : index
    %c0_18 = arith.constant 0 : index
    %42 = vector.load %arg3[%c0_14, %c0_15, %c0_16, %c0_17, %c0_18] : memref<1x4x8x8x128xbf16, #tpu.memory_space<vmem>>, vector<1x1x8x8x128xbf16>
    %43 = vector.shape_cast %42 : vector<1x1x8x8x128xbf16> to vector<8x8x128xbf16>
    %44 = vector.shape_cast %41 : vector<8x8x128xbf16> to vector<1x1x8x8x128xbf16>
    tpu.vector_store %arg3[%c0_14, %c0_15, %c0_16, %c0_17, %c0_18], %44 {strides = array<i32>} : memref<1x4x8x8x128xbf16, #tpu.memory_space<vmem>>, vector<1x1x8x8x128xbf16>,
    %cst_19 = arith.constant dense<0.000000e+00> : vector<128xf32>
    %45 = vector.multi_reduction <add>, %39, %cst_19 [0] : vector<64x128xf32> to vector<128xf32>
    %46 = vector.shape_cast %45 : vector<128xf32> to vector<1x128xf32>
    %47 = arith.addf %26, %46 : vector<1x128xf32>
    %48 = arith.mulf %39, %39 : vector<64x128xf32>
    %cst_20 = arith.constant dense<0.000000e+00> : vector<128xf32>
    %49 = vector.multi_reduction <add>, %48, %cst_20 [0] : vector<64x128xf32> to vector<128xf32>
    %50 = vector.shape_cast %49 : vector<128xf32> to vector<1x128xf32>
    %51 = arith.addf %27, %50 : vector<1x128xf32>
    %52 = vector.extract_strided_slice %38 {offsets = [0, 128], sizes = [64, 128], strides = [1, 1]} : vector<64x256xf32> to vector<64x128xf32>
    %53 = vector.shape_cast %52 : vector<64x128xf32> to vector<8x8x128xf32>
    %54 = arith.truncf %53 : vector<8x8x128xf32> to vector<8x8x128xbf16>
    %c0_21 = arith.constant 0 : index
    %c2_22 = arith.constant 2 : index
    %c0_23 = arith.constant 0 : index
    %c0_24 = arith.constant 0 : index
    %c0_25 = arith.constant 0 : index
    %55 = vector.load %arg3[%c0_21, %c2_22, %c0_23, %c0_24, %c0_25] : memref<1x4x8x8x128xbf16, #tpu.memory_space<vmem>>, vector<1x1x8x8x128xbf16>
    %56 = vector.shape_cast %55 : vector<1x1x8x8x128xbf16> to vector<8x8x128xbf16>
    %57 = vector.shape_cast %54 : vector<8x8x128xbf16> to vector<1x1x8x8x128xbf16>
    tpu.vector_store %arg3[%c0_21, %c2_22, %c0_23, %c0_24, %c0_25], %57 {strides = array<i32>} : memref<1x4x8x8x128xbf16, #tpu.memory_space<vmem>>, vector<1x1x8x8x128xbf16>,
    %cst_26 = arith.constant dense<0.000000e+00> : vector<128xf32>
    %58 = vector.multi_reduction <add>, %52, %cst_26 [0] : vector<64x128xf32> to vector<128xf32>
    %59 = vector.shape_cast %58 : vector<128xf32> to vector<1x128xf32>
    %60 = arith.addf %47, %59 : vector<1x128xf32>
    %61 = arith.mulf %52, %52 : vector<64x128xf32>
    %cst_27 = arith.constant dense<0.000000e+00> : vector<128xf32>
    %62 = vector.multi_reduction <add>, %61, %cst_27 [0] : vector<64x128xf32> to vector<128xf32>
    %63 = vector.shape_cast %62 : vector<128xf32> to vector<1x128xf32>
    %64 = arith.addf %51, %63 : vector<1x128xf32>
    %c3 = arith.constant 3 : index
    %c0_28 = arith.constant 0 : index
    %c0_29 = arith.constant 0 : index
    %65 = vector.load %arg2[%c3, %c0_28, %c0_29] : memref<5x384x256xbf16, #tpu.memory_space<vmem>>, vector<1x384x256xbf16>
    %66 = vector.shape_cast %65 : vector<1x384x256xbf16> to vector<384x256xbf16>
    %cst_30 = arith.constant dense<0.000000e+00> : vector<64x256xf32>
    %67 = tpu.matmul %17, %66, %cst_30 {dimension_numbers = #tpu.dot_dimension_numbers<[1], [0], [0], [1], [0, 0, 1, 1], [], []>} : vector<64x384xbf16>, vector<384x256xbf16>, vector<64x256xf32> -> vector<64x256xf32>
    %c4 = arith.constant 4 : index
    %c0_31 = arith.constant 0 : index
    %c0_32 = arith.constant 0 : index
    %68 = vector.load %arg2[%c4, %c0_31, %c0_32] : memref<5x384x256xbf16, #tpu.memory_space<vmem>>, vector<1x384x256xbf16>
    %69 = vector.shape_cast %68 : vector<1x384x256xbf16> to vector<384x256xbf16>
    %cst_33 = arith.constant dense<0.000000e+00> : vector<64x256xf32>
    %70 = tpu.matmul %25, %69, %cst_33 {dimension_numbers = #tpu.dot_dimension_numbers<[1], [0], [0], [1], [0, 0, 1, 1], [], []>} : vector<64x384xbf16>, vector<384x256xbf16>, vector<64x256xf32> -> vector<64x256xf32>
    %71 = arith.addf %67, %70 : vector<64x256xf32>
    %72 = vector.extract_strided_slice %71 {offsets = [0, 0], sizes = [64, 128], strides = [1, 1]} : vector<64x256xf32> to vector<64x128xf32>
    %73 = vector.shape_cast %72 : vector<64x128xf32> to vector<8x8x128xf32>
    %74 = arith.truncf %73 : vector<8x8x128xf32> to vector<8x8x128xbf16>
    %c0_34 = arith.constant 0 : index
    %c1_35 = arith.constant 1 : index
    %c0_36 = arith.constant 0 : index
    %c0_37 = arith.constant 0 : index
    %c0_38 = arith.constant 0 : index
    %75 = vector.load %arg3[%c0_34, %c1_35, %c0_36, %c0_37, %c0_38] : memref<1x4x8x8x128xbf16, #tpu.memory_space<vmem>>, vector<1x1x8x8x128xbf16>
    %76 = vector.shape_cast %75 : vector<1x1x8x8x128xbf16> to vector<8x8x128xbf16>
    %77 = vector.shape_cast %74 : vector<8x8x128xbf16> to vector<1x1x8x8x128xbf16>
    tpu.vector_store %arg3[%c0_34, %c1_35, %c0_36, %c0_37, %c0_38], %77 {strides = array<i32>} : memref<1x4x8x8x128xbf16, #tpu.memory_space<vmem>>, vector<1x1x8x8x128xbf16>,
    %cst_39 = arith.constant dense<0.000000e+00> : vector<128xf32>
    %78 = vector.multi_reduction <add>, %72, %cst_39 [0] : vector<64x128xf32> to vector<128xf32>
    %79 = vector.shape_cast %78 : vector<128xf32> to vector<1x128xf32>
    %80 = arith.addf %60, %79 : vector<1x128xf32>
    %81 = arith.mulf %72, %72 : vector<64x128xf32>
    %cst_40 = arith.constant dense<0.000000e+00> : vector<128xf32>
    %82 = vector.multi_reduction <add>, %81, %cst_40 [0] : vector<64x128xf32> to vector<128xf32>
    %83 = vector.shape_cast %82 : vector<128xf32> to vector<1x128xf32>
    %84 = arith.addf %64, %83 : vector<1x128xf32>
    %85 = vector.extract_strided_slice %71 {offsets = [0, 128], sizes = [64, 128], strides = [1, 1]} : vector<64x256xf32> to vector<64x128xf32>
    %86 = vector.shape_cast %85 : vector<64x128xf32> to vector<8x8x128xf32>
    %87 = arith.truncf %86 : vector<8x8x128xf32> to vector<8x8x128xbf16>
    %c0_41 = arith.constant 0 : index
    %c3_42 = arith.constant 3 : index
    %c0_43 = arith.constant 0 : index
    %c0_44 = arith.constant 0 : index
    %c0_45 = arith.constant 0 : index
    %88 = vector.load %arg3[%c0_41, %c3_42, %c0_43, %c0_44, %c0_45] : memref<1x4x8x8x128xbf16, #tpu.memory_space<vmem>>, vector<1x1x8x8x128xbf16>
    %89 = vector.shape_cast %88 : vector<1x1x8x8x128xbf16> to vector<8x8x128xbf16>
    %90 = vector.shape_cast %87 : vector<8x8x128xbf16> to vector<1x1x8x8x128xbf16>
    tpu.vector_store %arg3[%c0_41, %c3_42, %c0_43, %c0_44, %c0_45], %90 {strides = array<i32>} : memref<1x4x8x8x128xbf16, #tpu.memory_space<vmem>>, vector<1x1x8x8x128xbf16>,
    %cst_46 = arith.constant dense<0.000000e+00> : vector<128xf32>
    %91 = vector.multi_reduction <add>, %85, %cst_46 [0] : vector<64x128xf32> to vector<128xf32>
    %92 = vector.shape_cast %91 : vector<128xf32> to vector<1x128xf32>
    %93 = arith.addf %80, %92 : vector<1x128xf32>
    %94 = arith.mulf %85, %85 : vector<64x128xf32>
    %cst_47 = arith.constant dense<0.000000e+00> : vector<128xf32>
    %95 = vector.multi_reduction <add>, %94, %cst_47 [0] : vector<64x128xf32> to vector<128xf32>
    %96 = vector.shape_cast %95 : vector<128xf32> to vector<1x128xf32>
    %97 = arith.addf %84, %96 : vector<1x128xf32>
    %c0_48 = arith.constant 0 : index
    %c0_49 = arith.constant 0 : index
    %c0_50 = arith.constant 0 : index
    %98 = vector.load %arg4[%c0_48, %c0_49, %c0_50] : memref<1x1x128xf32, #tpu.memory_space<vmem>>, vector<1x1x128xf32>
    %99 = vector.shape_cast %98 : vector<1x1x128xf32> to vector<1x128xf32>
    %100 = vector.shape_cast %93 : vector<1x128xf32> to vector<1x1x128xf32>
    tpu.vector_store %arg4[%c0_48, %c0_49, %c0_50], %100 {strides = array<i32>} : memref<1x1x128xf32, #tpu.memory_space<vmem>>, vector<1x1x128xf32>,
    %c0_51 = arith.constant 0 : index
    %c0_52 = arith.constant 0 : index
    %c0_53 = arith.constant 0 : index
    %101 = vector.load %arg5[%c0_51, %c0_52, %c0_53] : memref<1x1x128xf32, #tpu.memory_space<vmem>>, vector<1x1x128xf32>
    %102 = vector.shape_cast %101 : vector<1x1x128xf32> to vector<1x128xf32>
    %103 = vector.shape_cast %97 : vector<1x128xf32> to vector<1x1x128xf32>
    tpu.vector_store %arg5[%c0_51, %c0_52, %c0_53], %103 {strides = array<i32>} : memref<1x1x128xf32, #tpu.memory_space<vmem>>, vector<1x1x128xf32>,
    return
  }
  func.func @transform_0(%arg0: i32) -> (i32, i32, i32, i32) {
    %c0_i32 = arith.constant 0 : i32
    %c0_i32_0 = arith.constant 0 : i32
    %c0_i32_1 = arith.constant 0 : i32
    %c0_i32_2 = arith.constant 0 : i32
    return %arg0, %c0_i32, %c0_i32_0, %c0_i32_1 : i32, i32, i32, i32
  }
  func.func @transform_1(%arg0: i32) -> (i32, i32, i32) {
    %c0_i32 = arith.constant 0 : i32
    %c0_i32_0 = arith.constant 0 : i32
    %c0_i32_1 = arith.constant 0 : i32
    %c0_i32_2 = arith.constant 0 : i32
    return %c0_i32, %c0_i32_0, %c0_i32_1 : i32, i32, i32
  }
  func.func @transform_2(%arg0: i32) -> (i32, i32, i32, i32, i32) {
    %c0_i32 = arith.constant 0 : i32
    %c0_i32_0 = arith.constant 0 : i32
    %c0_i32_1 = arith.constant 0 : i32
    %c0_i32_2 = arith.constant 0 : i32
    %c0_i32_3 = arith.constant 0 : i32
    return %arg0, %c0_i32, %c0_i32_0, %c0_i32_1, %c0_i32_2 : i32, i32, i32, i32, i32
  }
  func.func @transform_3(%arg0: i32) -> (i32, i32, i32) {
    %c0_i32 = arith.constant 0 : i32
    %c0_i32_0 = arith.constant 0 : i32
    %c0_i32_1 = arith.constant 0 : i32
    return %arg0, %c0_i32, %c0_i32_0 : i32, i32, i32
  }
  func.func @transform_4(%arg0: i32) -> (i32, i32, i32) {
    %c0_i32 = arith.constant 0 : i32
    %c0_i32_0 = arith.constant 0 : i32
    %c0_i32_1 = arith.constant 0 : i32
    return %arg0, %c0_i32, %c0_i32_0 : i32, i32, i32
  }
}

module attributes {stable_mosaic.version = 11 : i64} {
  func.func @_bn_relu_nchw_kernel(%arg0: i32, %arg1: i32, %arg2: memref<1x4x8x8x128xbf16, #tpu.memory_space<vmem>>, %arg3: memref<1x128xf32, #tpu.memory_space<vmem>>, %arg4: memref<1x128xf32, #tpu.memory_space<vmem>>, %arg5: memref<16x16xf32, #tpu.memory_space<vmem>>, %arg6: memref<1x128x8x32xf32, #tpu.memory_space<vmem>>) attributes {dimension_semantics = [#tpu.dimension_semantics<parallel>, #tpu.dimension_semantics<parallel>], iteration_bounds = array<i64: 2, 1>, scalar_prefetch = 0 : i64, scratch_operands = 0 : i64, tpu.core_type = #tpu.core_type<tc>, window_params = [{transform_indices = @transform_0, window_bounds = array<i64: 1, 4, 8, 8, 128>}, {pipeline_mode = #tpu.pipeline_mode<synchronous>, transform_indices = @transform_1, window_bounds = array<i64: 1, 128>}, {pipeline_mode = #tpu.pipeline_mode<synchronous>, transform_indices = @transform_2, window_bounds = array<i64: 1, 128>}, {pipeline_mode = #tpu.pipeline_mode<synchronous>, transform_indices = @transform_3, window_bounds = array<i64: 16, 16>}, {transform_indices = @transform_4, window_bounds = array<i64: 1, 128, 8, 32>}]} {
    %c0 = arith.constant 0 : index
    %c0_0 = arith.constant 0 : index
    %0 = vector.load %arg3[%c0, %c0_0] : memref<1x128xf32, #tpu.memory_space<vmem>>, vector<1x128xf32>
    %c0_1 = arith.constant 0 : index
    %c0_2 = arith.constant 0 : index
    %1 = vector.load %arg4[%c0_1, %c0_2] : memref<1x128xf32, #tpu.memory_space<vmem>>, vector<1x128xf32>
    %c0_3 = arith.constant 0 : index
    %c0_4 = arith.constant 0 : index
    %c0_5 = arith.constant 0 : index
    %c0_6 = arith.constant 0 : index
    %c0_7 = arith.constant 0 : index
    %2 = vector.load %arg2[%c0_3, %c0_4, %c0_5, %c0_6, %c0_7] : memref<1x4x8x8x128xbf16, #tpu.memory_space<vmem>>, vector<1x4x8x8x128xbf16>
    %3 = vector.shape_cast %2 : vector<1x4x8x8x128xbf16> to vector<4x8x8x128xbf16>
    %4 = arith.extf %3 : vector<4x8x8x128xbf16> to vector<4x8x8x128xf32>
    %5 = vector.shape_cast %0 : vector<1x128xf32> to vector<1x1x1x128xf32>
    %6 = vector.broadcast %5 : vector<1x1x1x128xf32> to vector<4x8x8x128xf32>
    %7 = arith.mulf %4, %6 : vector<4x8x8x128xf32>
    %8 = vector.shape_cast %1 : vector<1x128xf32> to vector<1x1x1x128xf32>
    %9 = vector.broadcast %8 : vector<1x1x1x128xf32> to vector<4x8x8x128xf32>
    %10 = arith.addf %7, %9 : vector<4x8x8x128xf32>
    %cst = arith.constant 0.000000e+00 : f32
    %11 = vector.broadcast %cst : f32 to vector<4x8x8x128xf32>
    %12 = arith.maximumf %10, %11 : vector<4x8x8x128xf32>
    %13 = vector.extract_strided_slice %12 {offsets = [0, 0, 0, 0], sizes = [1, 8, 8, 128], strides = [1, 1, 1, 1]} : vector<4x8x8x128xf32> to vector<1x8x8x128xf32>
    %14 = vector.shape_cast %13 : vector<1x8x8x128xf32> to vector<8x8x128xf32>
    %15 = tpu.transpose %14, [0, 2, 1] : vector<8x8x128xf32> -> vector<8x128x8xf32>
    %16 = vector.extract_strided_slice %12 {offsets = [1, 0, 0, 0], sizes = [1, 8, 8, 128], strides = [1, 1, 1, 1]} : vector<4x8x8x128xf32> to vector<1x8x8x128xf32>
    %17 = vector.shape_cast %16 : vector<1x8x8x128xf32> to vector<8x8x128xf32>
    %18 = tpu.transpose %17, [0, 2, 1] : vector<8x8x128xf32> -> vector<8x128x8xf32>
    %19 = tpu.concatenate %15, %18 in 2 : vector<8x128x8xf32>, vector<8x128x8xf32> -> vector<8x128x16xf32>
    %20 = vector.shape_cast %19 : vector<8x128x16xf32> to vector<1024x16xf32>
    %c0_8 = arith.constant 0 : index
    %c0_9 = arith.constant 0 : index
    %21 = vector.load %arg5[%c0_8, %c0_9] : memref<16x16xf32, #tpu.memory_space<vmem>>, vector<16x16xf32>
    %cst_10 = arith.constant dense<0.000000e+00> : vector<1024x16xf32>
    %22 = tpu.matmul %20, %21, %cst_10 {dimension_numbers = #tpu.dot_dimension_numbers<[1], [0], [0], [1], [0, 0, 1, 1], [], []>} : vector<1024x16xf32>, vector<16x16xf32>, vector<1024x16xf32> -> vector<1024x16xf32>
    %23 = vector.extract_strided_slice %12 {offsets = [2, 0, 0, 0], sizes = [1, 8, 8, 128], strides = [1, 1, 1, 1]} : vector<4x8x8x128xf32> to vector<1x8x8x128xf32>
    %24 = vector.shape_cast %23 : vector<1x8x8x128xf32> to vector<8x8x128xf32>
    %25 = tpu.transpose %24, [0, 2, 1] : vector<8x8x128xf32> -> vector<8x128x8xf32>
    %26 = vector.extract_strided_slice %12 {offsets = [3, 0, 0, 0], sizes = [1, 8, 8, 128], strides = [1, 1, 1, 1]} : vector<4x8x8x128xf32> to vector<1x8x8x128xf32>
    %27 = vector.shape_cast %26 : vector<1x8x8x128xf32> to vector<8x8x128xf32>
    %28 = tpu.transpose %27, [0, 2, 1] : vector<8x8x128xf32> -> vector<8x128x8xf32>
    %29 = tpu.concatenate %25, %28 in 2 : vector<8x128x8xf32>, vector<8x128x8xf32> -> vector<8x128x16xf32>
    %30 = vector.shape_cast %29 : vector<8x128x16xf32> to vector<1024x16xf32>
    %c0_11 = arith.constant 0 : index
    %c0_12 = arith.constant 0 : index
    %31 = vector.load %arg5[%c0_11, %c0_12] : memref<16x16xf32, #tpu.memory_space<vmem>>, vector<16x16xf32>
    %cst_13 = arith.constant dense<0.000000e+00> : vector<1024x16xf32>
    %32 = tpu.matmul %30, %31, %cst_13 {dimension_numbers = #tpu.dot_dimension_numbers<[1], [0], [0], [1], [0, 0, 1, 1], [], []>} : vector<1024x16xf32>, vector<16x16xf32>, vector<1024x16xf32> -> vector<1024x16xf32>
    %33 = tpu.concatenate %22, %32 in 1 : vector<1024x16xf32>, vector<1024x16xf32> -> vector<1024x32xf32>
    %34 = vector.shape_cast %33 : vector<1024x32xf32> to vector<8x128x32xf32>
    %35 = tpu.transpose %34, [1, 0, 2] : vector<8x128x32xf32> -> vector<128x8x32xf32>
    %c0_14 = arith.constant 0 : index
    %c0_15 = arith.constant 0 : index
    %c0_16 = arith.constant 0 : index
    %c0_17 = arith.constant 0 : index
    %36 = vector.load %arg6[%c0_14, %c0_15, %c0_16, %c0_17] : memref<1x128x8x32xf32, #tpu.memory_space<vmem>>, vector<1x128x8x32xf32>
    %37 = vector.shape_cast %36 : vector<1x128x8x32xf32> to vector<128x8x32xf32>
    %38 = vector.shape_cast %35 : vector<128x8x32xf32> to vector<1x128x8x32xf32>
    tpu.vector_store %arg6[%c0_14, %c0_15, %c0_16, %c0_17], %38 {strides = array<i32>} : memref<1x128x8x32xf32, #tpu.memory_space<vmem>>, vector<1x128x8x32xf32>,
    return
  }
  func.func @transform_0(%arg0: i32, %arg1: i32) -> (i32, i32, i32, i32, i32) {
    %c0_i32 = arith.constant 0 : i32
    %c0_i32_0 = arith.constant 0 : i32
    %c0_i32_1 = arith.constant 0 : i32
    %c0_i32_2 = arith.constant 0 : i32
    return %arg0, %c0_i32, %arg1, %c0_i32_0, %c0_i32_1 : i32, i32, i32, i32, i32
  }
  func.func @transform_1(%arg0: i32, %arg1: i32) -> (i32, i32) {
    %c0_i32 = arith.constant 0 : i32
    %c0_i32_0 = arith.constant 0 : i32
    %c0_i32_1 = arith.constant 0 : i32
    return %c0_i32, %c0_i32_0 : i32, i32
  }
  func.func @transform_2(%arg0: i32, %arg1: i32) -> (i32, i32) {
    %c0_i32 = arith.constant 0 : i32
    %c0_i32_0 = arith.constant 0 : i32
    %c0_i32_1 = arith.constant 0 : i32
    return %c0_i32, %c0_i32_0 : i32, i32
  }
  func.func @transform_3(%arg0: i32, %arg1: i32) -> (i32, i32) {
    %c0_i32 = arith.constant 0 : i32
    %c0_i32_0 = arith.constant 0 : i32
    %c0_i32_1 = arith.constant 0 : i32
    return %c0_i32, %c0_i32_0 : i32, i32
  }
  func.func @transform_4(%arg0: i32, %arg1: i32) -> (i32, i32, i32, i32) {
    %c0_i32 = arith.constant 0 : i32
    %c0_i32_0 = arith.constant 0 : i32
    %c0_i32_1 = arith.constant 0 : i32
    return %arg0, %c0_i32, %arg1, %c0_i32_0 : i32, i32, i32, i32
  }
}

</mosaic_0001>

<llo_original>
// kernel: group9_forward.2
$region0: #{group9_forward.2}
  #allocation0 [shape = 'u32[]', space=smem, size = 0x4, offset = 0x4, fixed_abs, tag = 'smem constant byte address 0x4 - core index']
  #allocation1 [shape = 'u32[144,128]{1,0:T(1,128)}', space=vmem, size = 0x12000, scoped, tag = 'internal scratch']
  %s0 = inlined_call_operand.vmem [shape: bf16[2,10,10,128], index: 0, kind: input, shape index: {}]
  %s1 = inlined_call_operand.vmem [shape: bf16[5,384,256], index: 1, kind: input, shape index: {}]
  %s2 = inlined_call_operand.vmem [shape: bf16[2,4,8,8,128], index: 2, kind: output, shape index: {0}]
  %s3 = inlined_call_operand.vmem [shape: f32[2,1,128], index: 3, kind: output, shape index: {1}]
  %s4 = inlined_call_operand.vmem [shape: f32[2,1,128], index: 4, kind: output, shape index: {2}]
  %5 = xla_tuple %s2, %s3, %s4
  %s6 = sld [smem:[#allocation0]]
  $region57: #{group9_forward.2} parent=0
    _
  %s8 = ssub.s32 1, %s6
  %s9 = scalar_select 0, %s8, %s6
  loop: start=0, step=1, limit=4
  $region2: #{group9_forward.2} parent=0 // loop_pre_header
    _
  $region3: #{group9_forward.2} parent=0 // loop_header
    %s11 = sphi 0, %s15
    %p12 = scmp.ge.s32.totalorder %s11, 4
    %s21 = sphi 0, %s23
    %s24 = sphi 0, %s21
    %s25 = sphi 0, %s24
    %s41 = sphi 0, %s25
    %s45 = sphi 0, %s45
    %s47 = sphi 0, %s45
    %s48 = sphi 0, %s47
    %s62 = sphi 0, %s48
    %s68 = sphi 0, %s70
    %s71 = sphi 0, %s68
    %s72 = sphi 0, %s71
    %s88 = sphi 0, %s72
    %s94 = sphi 0, %s96
    %s97 = sphi 0, %s94
    %s98 = sphi 0, %s97
    %s114 = sphi 0, %s98
    %s120 = sphi 0, %s122
    %s123 = sphi 0, %s120
    %s124 = sphi 0, %s123
    %s140 = sphi 0, %s124
  $region4: #{group9_forward.2} parent=0 // loop_header_branch
    %14 = sbr.rel (%p12) target = $region8
  $region5: #{group9_forward.2} parent=0 // loop_body
    %s16 = ssub.s32 %s11, 1
    %s17 = ssub.s32 %s11, 2
    %s18 = sadd.s32 %s11, 1
    %s19 = ssub.s32 %s11, %s18
    %p20 = scmp.eq.s32.totalorder %s19, 0
    %s22 = sadd.s32 %s21, 1
    %s23 = scalar_select %p20, %s21, %s22
    %p26 = pneg %p20
    %p27 = scmp.eq.s32.totalorder %s11, 1
    %p28 = por %p26, %p27
    %p29 = scmp.ne.s32.totalorder %s21, %s24
    %p30 = scmp.eq.s32.totalorder %s11, 0
    %p31 = por %p29, %p30
    %p32 = scmp.ne.s32.totalorder %s21, %s24
    %p33 = scmp.eq.s32.totalorder %s16, 1
    %p34 = por %p32, %p33
    %p35 = scmp.ne.s32.totalorder %s24, %s25
    %p36 = scmp.eq.s32.totalorder %s16, 0
    %p37 = por %p35, %p36
    %p38 = scmp.ne.s32.totalorder %s24, %s25
    %p39 = scmp.eq.s32.totalorder %s17, 1
    %p40 = por %p38, %p39
    %p42 = scmp.ne.s32.totalorder %s25, %s41
    %p43 = scmp.eq.s32.totalorder %s17, 0
    %p44 = por %p42, %p43
    %s46 = sadd.s32 %s45, 1
    %p49 = scmp.eq.s32.totalorder %s11, 1
    %p50 = scmp.ne.s32.totalorder %s45, %s47
    %p51 = scmp.eq.s32.totalorder %s11, 0
    %p52 = por %p50, %p51
    %p53 = scmp.ne.s32.totalorder %s45, %s47
    %p54 = scmp.eq.s32.totalorder %s16, 1
    %p55 = por %p53, %p54
    %p56 = scmp.ne.s32.totalorder %s47, %s48
    %p57 = scmp.eq.s32.totalorder %s16, 0
    %p58 = por %p56, %p57
    %p59 = scmp.ne.s32.totalorder %s47, %s48
    %p60 = scmp.eq.s32.totalorder %s17, 1
    %p61 = por %p59, %p60
    %p63 = scmp.ne.s32.totalorder %s48, %s62
    %p64 = scmp.eq.s32.totalorder %s17, 0
    %p65 = por %p63, %p64
    %s66 = ssub.s32 %s11, %s18
    %p67 = scmp.eq.s32.totalorder %s66, 0
    %s69 = sadd.s32 %s68, 1
    %s70 = scalar_select %p67, %s68, %s69
    %p73 = pneg %p67
    %p74 = scmp.eq.s32.totalorder %s11, 1
    %p75 = por %p73, %p74
    %p76 = scmp.ne.s32.totalorder %s68, %s71
    %p77 = scmp.eq.s32.totalorder %s11, 0
    %p78 = por %p76, %p77
    %p79 = scmp.ne.s32.totalorder %s68, %s71
    %p80 = scmp.eq.s32.totalorder %s16, 1
    %p81 = por %p79, %p80
    %p82 = scmp.ne.s32.totalorder %s71, %s72
    %p83 = scmp.eq.s32.totalorder %s16, 0
    %p84 = por %p82, %p83
    %p85 = scmp.ne.s32.totalorder %s71, %s72
    %p86 = scmp.eq.s32.totalorder %s17, 1
    %p87 = por %p85, %p86
    %p89 = scmp.ne.s32.totalorder %s72, %s88
    %p90 = scmp.eq.s32.totalorder %s17, 0
    %p91 = por %p89, %p90
    %s92 = ssub.s32 %s11, %s18
    %p93 = scmp.eq.s32.totalorder %s92, 0
    %s95 = sadd.s32 %s94, 1
    %s96 = scalar_select %p93, %s94, %s95
    %p99 = pneg %p93
    %p100 = scmp.eq.s32.totalorder %s11, 1
    %p101 = por %p99, %p100
    %p102 = scmp.ne.s32.totalorder %s94, %s97
    %p103 = scmp.eq.s32.totalorder %s11, 0
    %p104 = por %p102, %p103
    %p105 = scmp.ne.s32.totalorder %s94, %s97
    %p106 = scmp.eq.s32.totalorder %s16, 1
    %p107 = por %p105, %p106
    %p108 = scmp.ne.s32.totalorder %s97, %s98
    %p109 = scmp.eq.s32.totalorder %s16, 0
    %p110 = por %p108, %p109
    %p111 = scmp.ne.s32.totalorder %s97, %s98
    %p112 = scmp.eq.s32.totalorder %s17, 1
    %p113 = por %p111, %p112
    %p115 = scmp.ne.s32.totalorder %s98, %s114
    %p116 = scmp.eq.s32.totalorder %s17, 0
    %p117 = por %p115, %p116
    %s118 = ssub.s32 %s11, %s18
    %p119 = scmp.eq.s32.totalorder %s118, 0
    %s121 = sadd.s32 %s120, 1
    %s122 = scalar_select %p119, %s120, %s121
    %p125 = pneg %p119
    %p126 = scmp.eq.s32.totalorder %s11, 1
    %p127 = por %p125, %p126
    %p128 = scmp.ne.s32.totalorder %s120, %s123
    %p129 = scmp.eq.s32.totalorder %s11, 0
    %p130 = por %p128, %p129
    %p131 = scmp.ne.s32.totalorder %s120, %s123
    %p132 = scmp.eq.s32.totalorder %s16, 1
    %p133 = por %p131, %p132
    %p134 = scmp.ne.s32.totalorder %s123, %s124
    %p135 = scmp.eq.s32.totalorder %s16, 0
    %p136 = por %p134, %p135
    %p137 = scmp.ne.s32.totalorder %s123, %s124
    %p138 = scmp.eq.s32.totalorder %s17, 1
    %p139 = por %p137, %p138
    %p141 = scmp.ne.s32.totalorder %s124, %s140
    %p142 = scmp.eq.s32.totalorder %s17, 0
    %p143 = por %p141, %p142
    %p144 = scmp.le.s32.totalorder 1, %s11
    %p145 = scmp.lt.s32.totalorder %s11, 3
    %p146 = pnand %p144, %p145
    %p147 = pneg %p146
    // Predicated region
    $region9: #{group9_forward.2} parent=5 // pred_check
      _
    $region10: #{group9_forward.2} parent=5 // pred_check_branch
      %149 = sbr.rel (%p146) target = $region12
    $region11: #{group9_forward.2} parent=5 // pred_region
      %s150 = ssub.s32 %s11, 1
      // Predicated region
      $region13: #{group9_forward.2} parent=11 // pred_check
        %p151 = pneg %p58
      $region14: #{group9_forward.2} parent=11 // pred_check_branch
        %153 = sbr.rel (%p151) target = $region16
      $region15: #{group9_forward.2} parent=11 // pred_region
        _
      $region16: #{group9_forward.2} parent=11 // pred_fallthru
        _
    $region12: #{group9_forward.2} parent=5 // pred_fallthru
      _
    %p154 = scmp.lt.s32.totalorder %s11, 2
    // Predicated region
    $region17: #{group9_forward.2} parent=5 // pred_check
      %p155 = pneg %p154
    $region18: #{group9_forward.2} parent=5 // pred_check_branch
      %157 = sbr.rel (%p155) target = $region20
    $region19: #{group9_forward.2} parent=5 // pred_region
      // Predicated region
      $region21: #{group9_forward.2} parent=19 // pred_check
        %p158 = pneg %p31
      $region22: #{group9_forward.2} parent=19 // pred_check_branch
        %160 = sbr.rel (%p158) target = $region24
      $region23: #{group9_forward.2} parent=19 // pred_region
        %p161 = scmp.lt.s32.totalorder %s11, 1
        %s162 = scalar_select %p161, %s11, 1
        %s163 = smul.addr %s162, 20
        %s164 = smul.addr %s163, 4
        %s165 = scalar_lea.vmem %s0, %s164
      $region24: #{group9_forward.2} parent=19 // pred_fallthru
        _
    $region20: #{group9_forward.2} parent=5 // pred_fallthru
      _
    %p166 = scmp.le.s32.totalorder 1, %s11
    %p167 = scmp.lt.s32.totalorder %s11, 3
    %p168 = pnand %p166, %p167
    %p169 = pneg %p168
    // Predicated region
    $region25: #{group9_forward.2} parent=5 // pred_check
      _
    $region26: #{group9_forward.2} parent=5 // pred_check_branch
      %171 = sbr.rel (%p168) target = $region28
    $region27: #{group9_forward.2} parent=5 // pred_region
      %s172 = ssub.s32 %s11, 1
      %p173 = scmp.lt.s32.totalorder %s16, 1
      %s174 = scalar_select %p173, %s16, 1
      %s175 = smul.addr %s174, 20
      %s176 = smul.addr %s175, 4
      %s177 = scalar_lea.vmem %s0, %s176
      %p178 = pneg %p37
      %p179 = pneg %p34
      %p180 = pneg %p58
      %p181 = pneg %p55
      %p182 = pneg %p84
      %p183 = pneg %p81
      %p184 = scmp.lt.s32.totalorder %s16, 1
      %s185 = scalar_select %p184, %s16, 1
      %s186 = smul.addr %s185, 32
      %s187 = smul.addr %s186, 4
      %s188 = scalar_lea.vmem %s2, %s187
      %p189 = pneg %p110
      %p190 = pneg %p107
      %p191 = scmp.lt.s32.totalorder %s16, 1
      %s192 = scalar_select %p191, %s16, 1
      %s193 = scalar_lea.vmem %s3, %s192
      %p194 = pneg %p136
      %p195 = pneg %p133
      %p196 = scmp.lt.s32.totalorder %s16, 1
      %s197 = scalar_select %p196, %s16, 1
      %s198 = scalar_lea.vmem %s4, %s197
      %p199 = scmp.lt.s32.totalorder %s16, 1
      %s200 = scalar_select %p199, %s16, 1
      %s201 = smul.addr %s200, 20
      %s202 = smul.addr %s201, 4
      %s203 = scalar_lea.vmem %s0, %s202
      %p204 = scmp.lt.s32.totalorder %s16, 1
      %s205 = scalar_select %p204, %s16, 1
      %s206 = smul.addr %s205, 32
      %s207 = smul.addr %s206, 4
      %s208 = scalar_lea.vmem %s2, %s207
      %p209 = scmp.lt.s32.totalorder %s16, 1
      %s210 = scalar_select %p209, %s16, 1
      %s211 = scalar_lea.vmem %s3, %s210
      %p212 = scmp.lt.s32.totalorder %s16, 1
      %s213 = scalar_select %p212, %s16, 1
      %s214 = scalar_lea.vmem %s4, %s213
      %v216 = vld [vmem:[%s203] sm:$0xf]
      %v217 = vld [vmem:[%s203 + $0x4] sm:$0x1]
      %v218 = vld [vmem:[%s203 + $0x8] sm:$0xf]
      %v219 = vld [vmem:[%s203 + $0xc] sm:$0x1]
      %v220 = vld [vmem:[%s203 + $0x10] sm:$0xf]
      %v221 = vld [vmem:[%s203 + $0x14] sm:$0x1]
      %v222 = vld [vmem:[%s203 + $0x18] sm:$0xf]
      %v223 = vld [vmem:[%s203 + $0x1c] sm:$0x1]
      %v224 = vld [vmem:[%s203 + $0x20] sm:$0xf]
      %v225 = vld [vmem:[%s203 + $0x24] sm:$0x1]
      %v226 = vld [vmem:[%s203 + $0x28] sm:$0xf]
      %v227 = vld [vmem:[%s203 + $0x2c] sm:$0x1]
      %v228 = vld [vmem:[%s203 + $0x30] sm:$0xf]
      %v229 = vld [vmem:[%s203 + $0x34] sm:$0x1]
      %v230 = vld [vmem:[%s203 + $0x38] sm:$0xf]
      %v231 = vld [vmem:[%s203 + $0x3c] sm:$0x1]
      %v232 = vld [vmem:[%s203 + $0x40] sm:$0xf]
      %v233 = vld [vmem:[%s203 + $0x44] sm:$0x1]
      %v234 = vld [vmem:[%s203 + $0x48] sm:$0xf]
      %v235 = vld [vmem:[%s203 + $0x4c] sm:$0x1]
      %v244 = vunpack.c.l.b16 %v216
      %v245 = vunpack.c.l.b16 %v218
      %v246 = vunpack.c.l.b16 %v220
      %v247 = vunpack.c.l.b16 %v222
      %v248 = vunpack.c.l.b16 %v224
      %v249 = vunpack.c.l.b16 %v226
      %v250 = vunpack.c.l.b16 %v228
      %v251 = vunpack.c.l.b16 %v230
      %v252 = vpack.c.b16 %v245, %v244
      %v253 = vpack.c.b16 %v247, %v246
      %v254 = vpack.c.b16 %v249, %v248
      %v255 = vpack.c.b16 %v251, %v250
      %v261 = vunpack.c.l.b16 %v232
      %v262 = vpack.c.b16 %v246, %v245
      %v263 = vpack.c.b16 %v248, %v247
      %v264 = vpack.c.b16 %v250, %v249
      %v265 = vpack.c.b16 %v261, %v251
      %v271 = vunpack.c.l.b16 %v234
      %v272 = vpack.c.b16 %v271, %v261
      %vm274 = vsmask.f32 3328
      %vm275 = vsmask.f32 7440
      %vm276 = vmor %vm274, %vm275
      %v278 = vshrl.u32 %v216, 16
      %v280 = vrot.slane %v278, 4
      %v281 = vshll.u32 %v216, 16
      %v283 = vrot.slane %v281, 5
      %v284 = vor.u32 %v280, %v283
      %v285 = vrot.slane %v284, 4
      %v287 = vshll.u32 %v217, 16
      %v289 = vrot.slane %v287, 5
      %v290 = vsel %vm276, %v285, %v289
      %v292 = vshrl.u32 %v218, 16
      %v294 = vrot.slane %v292, 4
      %v295 = vshll.u32 %v218, 16
      %v297 = vrot.slane %v295, 5
      %v298 = vor.u32 %v294, %v297
      %v299 = vrot.slane %v298, 4
      %v301 = vshll.u32 %v219, 16
      %v303 = vrot.slane %v301, 5
      %v304 = vsel %vm276, %v299, %v303
      %v306 = vshrl.u32 %v220, 16
      %v308 = vrot.slane %v306, 4
      %v309 = vshll.u32 %v220, 16
      %v311 = vrot.slane %v309, 5
      %v312 = vor.u32 %v308, %v311
      %v313 = vrot.slane %v312, 4
      %v315 = vshll.u32 %v221, 16
      %v317 = vrot.slane %v315, 5
      %v318 = vsel %vm276, %v313, %v317
      %v320 = vshrl.u32 %v222, 16
      %v322 = vrot.slane %v320, 4
      %v323 = vshll.u32 %v222, 16
      %v325 = vrot.slane %v323, 5
      %v326 = vor.u32 %v322, %v325
      %v327 = vrot.slane %v326, 4
      %v329 = vshll.u32 %v223, 16
      %v331 = vrot.slane %v329, 5
      %v332 = vsel %vm276, %v327, %v331
      %v334 = vshrl.u32 %v224, 16
      %v336 = vrot.slane %v334, 4
      %v337 = vshll.u32 %v224, 16
      %v339 = vrot.slane %v337, 5
      %v340 = vor.u32 %v336, %v339
      %v341 = vrot.slane %v340, 4
      %v343 = vshll.u32 %v225, 16
      %v345 = vrot.slane %v343, 5
      %v346 = vsel %vm276, %v341, %v345
      %v348 = vshrl.u32 %v226, 16
      %v350 = vrot.slane %v348, 4
      %v351 = vshll.u32 %v226, 16
      %v353 = vrot.slane %v351, 5
      %v354 = vor.u32 %v350, %v353
      %v355 = vrot.slane %v354, 4
      %v357 = vshll.u32 %v227, 16
      %v359 = vrot.slane %v357, 5
      %v360 = vsel %vm276, %v355, %v359
      %v362 = vshrl.u32 %v228, 16
      %v364 = vrot.slane %v362, 4
      %v365 = vshll.u32 %v228, 16
      %v367 = vrot.slane %v365, 5
      %v368 = vor.u32 %v364, %v367
      %v369 = vrot.slane %v368, 4
      %v371 = vshll.u32 %v229, 16
      %v373 = vrot.slane %v371, 5
      %v374 = vsel %vm276, %v369, %v373
      %v376 = vshrl.u32 %v230, 16
      %v378 = vrot.slane %v376, 4
      %v379 = vshll.u32 %v230, 16
      %v381 = vrot.slane %v379, 5
      %v382 = vor.u32 %v378, %v381
      %v383 = vrot.slane %v382, 4
      %v385 = vshll.u32 %v231, 16
      %v387 = vrot.slane %v385, 5
      %v388 = vsel %vm276, %v383, %v387
      %v390 = vshrl.u32 %v232, 16
      %v392 = vrot.slane %v390, 4
      %v393 = vshll.u32 %v232, 16
      %v395 = vrot.slane %v393, 5
      %v396 = vor.u32 %v392, %v395
      %v397 = vrot.slane %v396, 4
      %v399 = vshll.u32 %v233, 16
      %v401 = vrot.slane %v399, 5
      %v402 = vsel %vm276, %v397, %v401
      %v404 = vshrl.u32 %v234, 16
      %v406 = vrot.slane %v404, 4
      %v407 = vshll.u32 %v234, 16
      %v409 = vrot.slane %v407, 5
      %v410 = vor.u32 %v406, %v409
      %v411 = vrot.slane %v410, 4
      %v413 = vshll.u32 %v235, 16
      %v415 = vrot.slane %v413, 5
      %v416 = vsel %vm276, %v411, %v415
      %v417 = vunpack.c.l.b16 %v290
      %v418 = vunpack.c.l.b16 %v304
      %v419 = vunpack.c.l.b16 %v318
      %v420 = vunpack.c.l.b16 %v332
      %v421 = vunpack.c.l.b16 %v346
      %v422 = vunpack.c.l.b16 %v360
      %v423 = vunpack.c.l.b16 %v374
      %v424 = vunpack.c.l.b16 %v388
      %v425 = vpack.c.b16 %v418, %v417
      %v426 = vpack.c.b16 %v420, %v419
      %v427 = vpack.c.b16 %v422, %v421
      %v428 = vpack.c.b16 %v424, %v423
      %v433 = vunpack.c.l.b16 %v402
      %v434 = vpack.c.b16 %v419, %v418
      %v435 = vpack.c.b16 %v421, %v420
      %v436 = vpack.c.b16 %v423, %v422
      %v437 = vpack.c.b16 %v433, %v424
      %v442 = vunpack.c.l.b16 %v416
      %v443 = vpack.c.b16 %v442, %v433
      %vm453 = vcmask 1042432
      %vm454 = vcmask 1046532
      %vm455 = vmor %vm453, %vm454
      %v456 = vrot.slane %v216, 5
      %v457 = vrot.slane %v456, 4
      %v458 = vrot.slane %v217, 5
      %v459 = vsel %vm455, %v457, %v458
      %v460 = vrot.slane %v218, 5
      %v461 = vrot.slane %v460, 4
      %v462 = vrot.slane %v219, 5
      %v463 = vsel %vm455, %v461, %v462
      %v464 = vrot.slane %v220, 5
      %v465 = vrot.slane %v464, 4
      %v466 = vrot.slane %v221, 5
      %v467 = vsel %vm455, %v465, %v466
      %v468 = vrot.slane %v222, 5
      %v469 = vrot.slane %v468, 4
      %v470 = vrot.slane %v223, 5
      %v471 = vsel %vm455, %v469, %v470
      %v472 = vrot.slane %v224, 5
      %v473 = vrot.slane %v472, 4
      %v474 = vrot.slane %v225, 5
      %v475 = vsel %vm455, %v473, %v474
      %v476 = vrot.slane %v226, 5
      %v477 = vrot.slane %v476, 4
      %v478 = vrot.slane %v227, 5
      %v479 = vsel %vm455, %v477, %v478
      %v480 = vrot.slane %v228, 5
      %v481 = vrot.slane %v480, 4
      %v482 = vrot.slane %v229, 5
      %v483 = vsel %vm455, %v481, %v482
      %v484 = vrot.slane %v230, 5
      %v485 = vrot.slane %v484, 4
      %v486 = vrot.slane %v231, 5
      %v487 = vsel %vm455, %v485, %v486
      %v489 = vrot.slane %v232, 5
      %v490 = vrot.slane %v489, 4
      %v491 = vrot.slane %v233, 5
      %v492 = vsel %vm455, %v490, %v491
      %v494 = vrot.slane %v234, 5
      %v495 = vrot.slane %v494, 4
      %v496 = vrot.slane %v235, 5
      %v497 = vsel %vm455, %v495, %v496
      %v498 = vunpack.c.l.b16 %v459
      %v499 = vunpack.c.l.b16 %v463
      %v500 = vunpack.c.l.b16 %v467
      %v501 = vunpack.c.l.b16 %v471
      %v502 = vunpack.c.l.b16 %v475
      %v503 = vunpack.c.l.b16 %v479
      %v504 = vunpack.c.l.b16 %v483
      %v505 = vunpack.c.l.b16 %v487
      %v506 = vpack.c.b16 %v499, %v498
      %v507 = vpack.c.b16 %v501, %v500
      %v508 = vpack.c.b16 %v503, %v502
      %v509 = vpack.c.b16 %v505, %v504
      %v514 = vunpack.c.l.b16 %v492
      %v515 = vpack.c.b16 %v500, %v499
      %v516 = vpack.c.b16 %v502, %v501
      %v517 = vpack.c.b16 %v504, %v503
      %v518 = vpack.c.b16 %v514, %v505
      %v523 = vunpack.c.l.b16 %v497
      %v524 = vpack.c.b16 %v523, %v514
      %v526 = vld [vmem:[%s1] sm:$0xff]
      %v527 = vld [vmem:[%s1 + $0x8] sm:$0xff]
      %v528 = vld [vmem:[%s1 + $0x10] sm:$0xff]
      %v529 = vld [vmem:[%s1 + $0x18] sm:$0xff]
      %v530 = vld [vmem:[%s1 + $0x20] sm:$0xff]
      %v531 = vld [vmem:[%s1 + $0x28] sm:$0xff]
      %v532 = vld [vmem:[%s1 + $0x30] sm:$0xff]
      %v533 = vld [vmem:[%s1 + $0x38] sm:$0xff]
      %v534 = vld [vmem:[%s1 + $0x40] sm:$0xff]
      %v535 = vld [vmem:[%s1 + $0x48] sm:$0xff]
      %v536 = vld [vmem:[%s1 + $0x50] sm:$0xff]
      %v537 = vld [vmem:[%s1 + $0x58] sm:$0xff]
      %v538 = vld [vmem:[%s1 + $0x60] sm:$0xff]
      %v539 = vld [vmem:[%s1 + $0x68] sm:$0xff]
      %v540 = vld [vmem:[%s1 + $0x70] sm:$0xff]
      %v541 = vld [vmem:[%s1 + $0x78] sm:$0xff]
      %v542 = vld [vmem:[%s1 + $0x80] sm:$0xff]
      %v543 = vld [vmem:[%s1 + $0x88] sm:$0xff]
      %v544 = vld [vmem:[%s1 + $0x90] sm:$0xff]
      %v545 = vld [vmem:[%s1 + $0x98] sm:$0xff]
      %v546 = vld [vmem:[%s1 + $0xa0] sm:$0xff]
      %v547 = vld [vmem:[%s1 + $0xa8] sm:$0xff]
      %v548 = vld [vmem:[%s1 + $0xb0] sm:$0xff]
      %v549 = vld [vmem:[%s1 + $0xb8] sm:$0xff]
      %v550 = vld [vmem:[%s1 + $0xc0] sm:$0xff]
      %v551 = vld [vmem:[%s1 + $0xc8] sm:$0xff]
      %v552 = vld [vmem:[%s1 + $0xd0] sm:$0xff]
      %v553 = vld [vmem:[%s1 + $0xd8] sm:$0xff]
      %v554 = vld [vmem:[%s1 + $0xe0] sm:$0xff]
      %v555 = vld [vmem:[%s1 + $0xe8] sm:$0xff]
      %v556 = vld [vmem:[%s1 + $0xf0] sm:$0xff]
      %v557 = vld [vmem:[%s1 + $0xf8] sm:$0xff]
      %v558 = vld [vmem:[%s1 + $0x100] sm:$0xff]
      %v559 = vld [vmem:[%s1 + $0x108] sm:$0xff]
      %v560 = vld [vmem:[%s1 + $0x110] sm:$0xff]
      %v561 = vld [vmem:[%s1 + $0x118] sm:$0xff]
      %v562 = vld [vmem:[%s1 + $0x120] sm:$0xff]
      %v563 = vld [vmem:[%s1 + $0x128] sm:$0xff]
      %v564 = vld [vmem:[%s1 + $0x130] sm:$0xff]
      %v565 = vld [vmem:[%s1 + $0x138] sm:$0xff]
      %v566 = vld [vmem:[%s1 + $0x140] sm:$0xff]
      %v567 = vld [vmem:[%s1 + $0x148] sm:$0xff]
      %v568 = vld [vmem:[%s1 + $0x150] sm:$0xff]
      %v569 = vld [vmem:[%s1 + $0x158] sm:$0xff]
      %v570 = vld [vmem:[%s1 + $0x160] sm:$0xff]
      %v571 = vld [vmem:[%s1 + $0x168] sm:$0xff]
      %v572 = vld [vmem:[%s1 + $0x170] sm:$0xff]
      %v573 = vld [vmem:[%s1 + $0x178] sm:$0xff]
      %s574 = scalar_lea.vmem %s1, 384
      %v575 = vld [vmem:[%s574] sm:$0xff]
      %v576 = vld [vmem:[%s574 + $0x8] sm:$0xff]
      %v577 = vld [vmem:[%s574 + $0x10] sm:$0xff]
      %v578 = vld [vmem:[%s574 + $0x18] sm:$0xff]
      %v579 = vld [vmem:[%s574 + $0x20] sm:$0xff]
      %v580 = vld [vmem:[%s574 + $0x28] sm:$0xff]
      %v581 = vld [vmem:[%s574 + $0x30] sm:$0xff]
      %v582 = vld [vmem:[%s574 + $0x38] sm:$0xff]
      %v583 = vld [vmem:[%s574 + $0x40] sm:$0xff]
      %v584 = vld [vmem:[%s574 + $0x48] sm:$0xff]
      %v585 = vld [vmem:[%s574 + $0x50] sm:$0xff]
      %v586 = vld [vmem:[%s574 + $0x58] sm:$0xff]
      %v587 = vld [vmem:[%s574 + $0x60] sm:$0xff]
      %v588 = vld [vmem:[%s574 + $0x68] sm:$0xff]
      %v589 = vld [vmem:[%s574 + $0x70] sm:$0xff]
      %v590 = vld [vmem:[%s574 + $0x78] sm:$0xff]
      %v591 = vld [vmem:[%s574 + $0x80] sm:$0xff]
      %v592 = vld [vmem:[%s574 + $0x88] sm:$0xff]
      %v593 = vld [vmem:[%s574 + $0x90] sm:$0xff]
      %v594 = vld [vmem:[%s574 + $0x98] sm:$0xff]
      %v595 = vld [vmem:[%s574 + $0xa0] sm:$0xff]
      %v596 = vld [vmem:[%s574 + $0xa8] sm:$0xff]
      %v597 = vld [vmem:[%s574 + $0xb0] sm:$0xff]
      %v598 = vld [vmem:[%s574 + $0xb8] sm:$0xff]
      %v599 = vld [vmem:[%s574 + $0xc0] sm:$0xff]
      %v600 = vld [vmem:[%s574 + $0xc8] sm:$0xff]
      %v601 = vld [vmem:[%s574 + $0xd0] sm:$0xff]
      %v602 = vld [vmem:[%s574 + $0xd8] sm:$0xff]
      %v603 = vld [vmem:[%s574 + $0xe0] sm:$0xff]
      %v604 = vld [vmem:[%s574 + $0xe8] sm:$0xff]
      %v605 = vld [vmem:[%s574 + $0xf0] sm:$0xff]
      %v606 = vld [vmem:[%s574 + $0xf8] sm:$0xff]
      %v607 = vld [vmem:[%s574 + $0x100] sm:$0xff]
      %v608 = vld [vmem:[%s574 + $0x108] sm:$0xff]
      %v609 = vld [vmem:[%s574 + $0x110] sm:$0xff]
      %v610 = vld [vmem:[%s574 + $0x118] sm:$0xff]
      %v611 = vld [vmem:[%s574 + $0x120] sm:$0xff]
      %v612 = vld [vmem:[%s574 + $0x128] sm:$0xff]
      %v613 = vld [vmem:[%s574 + $0x130] sm:$0xff]
      %v614 = vld [vmem:[%s574 + $0x138] sm:$0xff]
      %v615 = vld [vmem:[%s574 + $0x140] sm:$0xff]
      %v616 = vld [vmem:[%s574 + $0x148] sm:$0xff]
      %v617 = vld [vmem:[%s574 + $0x150] sm:$0xff]
      %v618 = vld [vmem:[%s574 + $0x158] sm:$0xff]
      %v619 = vld [vmem:[%s574 + $0x160] sm:$0xff]
      %v620 = vld [vmem:[%s574 + $0x168] sm:$0xff]
      %v621 = vld [vmem:[%s574 + $0x170] sm:$0xff]
      %v622 = vld [vmem:[%s574 + $0x178] sm:$0xff]
      %v671 = vunpack.c.l.b16 %v575
      %v672 = vunpack.c.h.b16 %v575
      %v673 = vunpack.c.l.b16 %v576
      %v674 = vunpack.c.h.b16 %v576
      %v675 = vunpack.c.l.b16 %v577
      %v676 = vunpack.c.h.b16 %v577
      %v677 = vunpack.c.l.b16 %v578
      %v678 = vunpack.c.h.b16 %v578
      %v679 = vunpack.c.l.b16 %v579
      %v680 = vunpack.c.h.b16 %v579
      %v681 = vunpack.c.l.b16 %v580
      %v682 = vunpack.c.h.b16 %v580
      %v683 = vunpack.c.l.b16 %v581
      %v684 = vunpack.c.h.b16 %v581
      %v685 = vunpack.c.l.b16 %v582
      %v686 = vunpack.c.h.b16 %v582
      %v687 = vunpack.c.l.b16 %v583
      %v688 = vunpack.c.h.b16 %v583
      %v689 = vunpack.c.l.b16 %v584
      %v690 = vunpack.c.h.b16 %v584
      %v691 = vunpack.c.l.b16 %v585
      %v692 = vunpack.c.h.b16 %v585
      %v693 = vunpack.c.l.b16 %v586
      %v694 = vunpack.c.h.b16 %v586
      %v695 = vunpack.c.l.b16 %v587
      %v696 = vunpack.c.h.b16 %v587
      %v697 = vunpack.c.l.b16 %v588
      %v698 = vunpack.c.h.b16 %v588
      %v699 = vunpack.c.l.b16 %v589
      %v700 = vunpack.c.h.b16 %v589
      %v701 = vunpack.c.l.b16 %v590
      %v702 = vunpack.c.h.b16 %v590
      %v703 = vunpack.c.l.b16 %v591
      %v704 = vunpack.c.h.b16 %v591
      %v705 = vunpack.c.l.b16 %v592
      %v706 = vunpack.c.h.b16 %v592
      %v707 = vunpack.c.l.b16 %v593
      %v708 = vunpack.c.h.b16 %v593
      %v709 = vunpack.c.l.b16 %v594
      %v710 = vunpack.c.h.b16 %v594
      %v711 = vunpack.c.l.b16 %v595
      %v712 = vunpack.c.h.b16 %v595
      %v713 = vunpack.c.l.b16 %v596
      %v714 = vunpack.c.h.b16 %v596
      %v715 = vunpack.c.l.b16 %v597
      %v716 = vunpack.c.h.b16 %v597
      %v717 = vunpack.c.l.b16 %v598
      %v718 = vunpack.c.h.b16 %v598
      %v719 = vunpack.c.l.b16 %v599
      %v720 = vunpack.c.h.b16 %v599
      %v721 = vunpack.c.l.b16 %v600
      %v722 = vunpack.c.h.b16 %v600
      %v723 = vunpack.c.l.b16 %v601
      %v724 = vunpack.c.h.b16 %v601
      %v725 = vunpack.c.l.b16 %v602
      %v726 = vunpack.c.h.b16 %v602
      %v727 = vunpack.c.l.b16 %v603
      %v728 = vunpack.c.h.b16 %v603
      %v729 = vunpack.c.l.b16 %v604
      %v730 = vunpack.c.h.b16 %v604
      %v731 = vunpack.c.l.b16 %v605
      %v732 = vunpack.c.h.b16 %v605
      %v733 = vunpack.c.l.b16 %v606
      %v734 = vunpack.c.h.b16 %v606
      %v735 = vunpack.c.l.b16 %v607
      %v736 = vunpack.c.h.b16 %v607
      %v737 = vunpack.c.l.b16 %v608
      %v738 = vunpack.c.h.b16 %v608
      %v739 = vunpack.c.l.b16 %v609
      %v740 = vunpack.c.h.b16 %v609
      %v741 = vunpack.c.l.b16 %v610
      %v742 = vunpack.c.h.b16 %v610
      %v743 = vunpack.c.l.b16 %v611
      %v744 = vunpack.c.h.b16 %v611
      %v745 = vunpack.c.l.b16 %v612
      %v746 = vunpack.c.h.b16 %v612
      %v747 = vunpack.c.l.b16 %v613
      %v748 = vunpack.c.h.b16 %v613
      %v749 = vunpack.c.l.b16 %v614
      %v750 = vunpack.c.h.b16 %v614
      %v751 = vunpack.c.l.b16 %v615
      %v752 = vunpack.c.h.b16 %v615
      %v753 = vunpack.c.l.b16 %v616
      %v754 = vunpack.c.h.b16 %v616
      %v755 = vunpack.c.l.b16 %v617
      %v756 = vunpack.c.h.b16 %v617
      %v757 = vunpack.c.l.b16 %v618
      %v758 = vunpack.c.h.b16 %v618
      %v759 = vunpack.c.l.b16 %v619
      %v760 = vunpack.c.h.b16 %v619
      %v761 = vunpack.c.l.b16 %v620
      %v762 = vunpack.c.h.b16 %v620
      %v763 = vunpack.c.l.b16 %v621
      %v764 = vunpack.c.h.b16 %v621
      %v765 = vunpack.c.l.b16 %v622
      %v766 = vunpack.c.h.b16 %v622
      %v767 = vpack.c.b16 %v673, %v671
      %v768 = vpack.c.b16 %v674, %v672
      %v769 = vpack.c.b16 %v677, %v675
      %v770 = vpack.c.b16 %v678, %v676
      %v771 = vpack.c.b16 %v681, %v679
      %v772 = vpack.c.b16 %v682, %v680
      %v773 = vpack.c.b16 %v685, %v683
      %v774 = vpack.c.b16 %v686, %v684
      %v775 = vpack.c.b16 %v689, %v687
      %v776 = vpack.c.b16 %v690, %v688
      %v777 = vpack.c.b16 %v693, %v691
      %v778 = vpack.c.b16 %v694, %v692
      %v779 = vpack.c.b16 %v697, %v695
      %v780 = vpack.c.b16 %v698, %v696
      %v781 = vpack.c.b16 %v701, %v699
      %v782 = vpack.c.b16 %v702, %v700
      %v783 = vpack.c.b16 %v705, %v703
      %v784 = vpack.c.b16 %v706, %v704
      %v785 = vpack.c.b16 %v709, %v707
      %v786 = vpack.c.b16 %v710, %v708
      %v787 = vpack.c.b16 %v713, %v711
      %v788 = vpack.c.b16 %v714, %v712
      %v789 = vpack.c.b16 %v717, %v715
      %v790 = vpack.c.b16 %v718, %v716
      %v791 = vpack.c.b16 %v721, %v719
      %v792 = vpack.c.b16 %v722, %v720
      %v793 = vpack.c.b16 %v725, %v723
      %v794 = vpack.c.b16 %v726, %v724
      %v795 = vpack.c.b16 %v729, %v727
      %v796 = vpack.c.b16 %v730, %v728
      %v797 = vpack.c.b16 %v733, %v731
      %v798 = vpack.c.b16 %v734, %v732
      %v799 = vpack.c.b16 %v737, %v735
      %v800 = vpack.c.b16 %v738, %v736
      %v801 = vpack.c.b16 %v741, %v739
      %v802 = vpack.c.b16 %v742, %v740
      %v803 = vpack.c.b16 %v745, %v743
      %v804 = vpack.c.b16 %v746, %v744
      %v805 = vpack.c.b16 %v749, %v747
      %v806 = vpack.c.b16 %v750, %v748
      %v807 = vpack.c.b16 %v753, %v751
      %v808 = vpack.c.b16 %v754, %v752
      %v809 = vpack.c.b16 %v757, %v755
      %v810 = vpack.c.b16 %v758, %v756
      %v811 = vpack.c.b16 %v761, %v759
      %v812 = vpack.c.b16 %v762, %v760
      %v813 = vpack.c.b16 %v765, %v763
      %v814 = vpack.c.b16 %v766, %v764
      %863 = vmatprep.subr.bf16.mxu0 %v782
      %864 = vmatpush1.bf16.msra.mxu0 %v781
      %865 = vmatprep.subr.bf16.mxu0 %v780
      %866 = vmatpush1.bf16.msra.mxu0 %v779
      %867 = vmatprep.subr.bf16.mxu0 %v778
      %868 = vmatpush1.bf16.msra.mxu0 %v777
      %869 = vmatprep.subr.bf16.mxu0 %v776
      %870 = vmatpush1.bf16.msra.mxu0 %v775
      %871 = vmatprep.subr.bf16.mxu0 %v774
      %872 = vmatpush1.bf16.msra.mxu0 %v773
      %873 = vmatprep.subr.bf16.mxu0 %v772
      %874 = vmatpush1.bf16.msra.mxu0 %v771
      %875 = vmatprep.subr.bf16.mxu0 %v770
      %876 = vmatpush1.bf16.msra.mxu0 %v769
      %877 = vmatprep.subr.bf16.mxu0 %v768
      %878 = vmatpush1.bf16.msra.mxu0 %v767
      %879 = vmatprep.subr.bf16.mxu0 %v798
      %880 = vmatpush2.bf16.msra.mxu0 %v797
      %881 = vmatprep.subr.bf16.mxu0 %v796
      %882 = vmatpush2.bf16.msra.mxu0 %v795
      %883 = vmatprep.subr.bf16.mxu0 %v794
      %884 = vmatpush2.bf16.msra.mxu0 %v793
      %885 = vmatprep.subr.bf16.mxu0 %v792
      %886 = vmatpush2.bf16.msra.mxu0 %v791
      %887 = vmatprep.subr.bf16.mxu0 %v790
      %888 = vmatpush2.bf16.msra.mxu0 %v789
      %889 = vmatprep.subr.bf16.mxu0 %v788
      %890 = vmatpush2.bf16.msra.mxu0 %v787
      %891 = vmatprep.subr.bf16.mxu0 %v786
      %892 = vmatpush2.bf16.msra.mxu0 %v785
      %893 = vmatprep.subr.bf16.mxu0 %v784
      %894 = vmatpush2.bf16.msra.mxu0 %v783
      %895 = vmatprep.mubr.bf16.mxu0 %v434
      %896 = vmatmul.mubr.bf16.gmra.mxu0 %v425
      %v897 = vpop.f32.mrf.mxu0
      %v898 = vadd.f32 0.0, %v897
      %v899 = vpop.f32.mrf.mxu0
      %v900 = vadd.f32 0.0, %v899
      %v901 = vpop.f32.mrf.mxu0
      %v902 = vadd.f32 0.0, %v901
      %v903 = vpop.f32.mrf.mxu0
      %v904 = vadd.f32 0.0, %v903
      %905 = vmatprep.mubr.bf16.mxu0 %v435
      %906 = vmatmul.mubr.bf16.gmra.mxu0 %v426
      %v907 = vpop.f32.mrf.mxu0
      %v908 = vadd.f32 0.0, %v907
      %v909 = vpop.f32.mrf.mxu0
      %v910 = vadd.f32 0.0, %v909
      %v911 = vpop.f32.mrf.mxu0
      %v912 = vadd.f32 0.0, %v911
      %v913 = vpop.f32.mrf.mxu0
      %v914 = vadd.f32 0.0, %v913
      %915 = vmatprep.mubr.bf16.mxu0 %v436
      %916 = vmatmul.mubr.bf16.gmra.mxu0 %v427
      %v917 = vpop.f32.mrf.mxu0
      %v918 = vadd.f32 0.0, %v917
      %v919 = vpop.f32.mrf.mxu0
      %v920 = vadd.f32 0.0, %v919
      %v921 = vpop.f32.mrf.mxu0
      %v922 = vadd.f32 0.0, %v921
      %v923 = vpop.f32.mrf.mxu0
      %v924 = vadd.f32 0.0, %v923
      %925 = vmatprep.mubr.bf16.mxu0 %v437
      %926 = vmatmul.mubr.bf16.gmra.mxu0 %v428
      %v927 = vpop.f32.mrf.mxu0
      %v928 = vadd.f32 0.0, %v927
      %v929 = vpop.f32.mrf.mxu0
      %v930 = vadd.f32 0.0, %v929
      %v931 = vpop.f32.mrf.mxu0
      %v932 = vadd.f32 0.0, %v931
      %v933 = vpop.f32.mrf.mxu0
      %v934 = vadd.f32 0.0, %v933
      %935 = vdwg.mxu0
      %936 = vmatprep.subr.bf16.mxu0 %v814
      %937 = vmatpush1.bf16.msra.mxu0 %v813
      %938 = vmatprep.subr.bf16.mxu0 %v812
      %939 = vmatpush1.bf16.msra.mxu0 %v811
      %940 = vmatprep.subr.bf16.mxu0 %v810
      %941 = vmatpush1.bf16.msra.mxu0 %v809
      %942 = vmatprep.subr.bf16.mxu0 %v808
      %943 = vmatpush1.bf16.msra.mxu0 %v807
      %944 = vmatprep.subr.bf16.mxu0 %v806
      %945 = vmatpush1.bf16.msra.mxu0 %v805
      %946 = vmatprep.subr.bf16.mxu0 %v804
      %947 = vmatpush1.bf16.msra.mxu0 %v803
      %948 = vmatprep.subr.bf16.mxu0 %v802
      %949 = vmatpush1.bf16.msra.mxu0 %v801
      %950 = vmatprep.subr.bf16.mxu0 %v800
      %951 = vmatpush1.bf16.msra.mxu0 %v799
      %952 = vmatprep.subr.bf16.mxu0 0
      %953 = vmatpush2.bf16.msra.mxu0 0
      %954 = vmatprep.subr.bf16.mxu0 0
      %955 = vmatpush2.bf16.msra.mxu0 0
      %956 = vmatprep.subr.bf16.mxu0 0
      %957 = vmatpush2.bf16.msra.mxu0 0
      %958 = vmatprep.subr.bf16.mxu0 0
      %959 = vmatpush2.bf16.msra.mxu0 0
      %960 = vmatprep.subr.bf16.mxu0 0
      %961 = vmatpush2.bf16.msra.mxu0 0
      %962 = vmatprep.subr.bf16.mxu0 0
      %963 = vmatpush2.bf16.msra.mxu0 0
      %964 = vmatprep.subr.bf16.mxu0 0
      %965 = vmatpush2.bf16.msra.mxu0 0
      %966 = vmatprep.subr.bf16.mxu0 0
      %967 = vmatpush2.bf16.msra.mxu0 0
      %968 = vmatprep.mubr.bf16.mxu0 0
      %969 = vmatmul.mubr.bf16.gmra.mxu0 %v426
      %v970 = vpop.f32.mrf.mxu0
      %v971 = vadd.f32 %v898, %v970
      %v972 = vpop.f32.mrf.mxu0
      %v973 = vadd.f32 %v900, %v972
      %v974 = vpop.f32.mrf.mxu0
      %v975 = vadd.f32 %v902, %v974
      %v976 = vpop.f32.mrf.mxu0
      %v977 = vadd.f32 %v904, %v976
      %978 = vmatprep.mubr.bf16.mxu0 0
      %979 = vmatmul.mubr.bf16.gmra.mxu0 %v427
      %v980 = vpop.f32.mrf.mxu0
      %v981 = vadd.f32 %v908, %v980
      %v982 = vpop.f32.mrf.mxu0
      %v983 = vadd.f32 %v910, %v982
      %v984 = vpop.f32.mrf.mxu0
      %v985 = vadd.f32 %v912, %v984
      %v986 = vpop.f32.mrf.mxu0
      %v987 = vadd.f32 %v914, %v986
      %988 = vmatprep.mubr.bf16.mxu0 0
      %989 = vmatmul.mubr.bf16.gmra.mxu0 %v428
      %v990 = vpop.f32.mrf.mxu0
      %v991 = vadd.f32 %v918, %v990
      %v992 = vpop.f32.mrf.mxu0
      %v993 = vadd.f32 %v920, %v992
      %v994 = vpop.f32.mrf.mxu0
      %v995 = vadd.f32 %v922, %v994
      %v996 = vpop.f32.mrf.mxu0
      %v997 = vadd.f32 %v924, %v996
      %998 = vmatprep.mubr.bf16.mxu0 0
      %999 = vmatmul.mubr.bf16.gmra.mxu0 %v443
      %v1000 = vpop.f32.mrf.mxu0
      %v1001 = vadd.f32 %v928, %v1000
      %v1002 = vpop.f32.mrf.mxu0
      %v1003 = vadd.f32 %v930, %v1002
      %v1004 = vpop.f32.mrf.mxu0
      %v1005 = vadd.f32 %v932, %v1004
      %v1006 = vpop.f32.mrf.mxu0
      %v1007 = vadd.f32 %v934, %v1006
      %1008 = vdwg.mxu0
      %v1057 = vunpack.c.l.b16 %v526
      %v1058 = vunpack.c.h.b16 %v526
      %v1059 = vunpack.c.l.b16 %v527
      %v1060 = vunpack.c.h.b16 %v527
      %v1061 = vunpack.c.l.b16 %v528
      %v1062 = vunpack.c.h.b16 %v528
      %v1063 = vunpack.c.l.b16 %v529
      %v1064 = vunpack.c.h.b16 %v529
      %v1065 = vunpack.c.l.b16 %v530
      %v1066 = vunpack.c.h.b16 %v530
      %v1067 = vunpack.c.l.b16 %v531
      %v1068 = vunpack.c.h.b16 %v531
      %v1069 = vunpack.c.l.b16 %v532
      %v1070 = vunpack.c.h.b16 %v532
      %v1071 = vunpack.c.l.b16 %v533
      %v1072 = vunpack.c.h.b16 %v533
      %v1073 = vunpack.c.l.b16 %v534
      %v1074 = vunpack.c.h.b16 %v534
      %v1075 = vunpack.c.l.b16 %v535
      %v1076 = vunpack.c.h.b16 %v535
      %v1077 = vunpack.c.l.b16 %v536
      %v1078 = vunpack.c.h.b16 %v536
      %v1079 = vunpack.c.l.b16 %v537
      %v1080 = vunpack.c.h.b16 %v537
      %v1081 = vunpack.c.l.b16 %v538
      %v1082 = vunpack.c.h.b16 %v538
      %v1083 = vunpack.c.l.b16 %v539
      %v1084 = vunpack.c.h.b16 %v539
      %v1085 = vunpack.c.l.b16 %v540
      %v1086 = vunpack.c.h.b16 %v540
      %v1087 = vunpack.c.l.b16 %v541
      %v1088 = vunpack.c.h.b16 %v541
      %v1089 = vunpack.c.l.b16 %v542
      %v1090 = vunpack.c.h.b16 %v542
      %v1091 = vunpack.c.l.b16 %v543
      %v1092 = vunpack.c.h.b16 %v543
      %v1093 = vunpack.c.l.b16 %v544
      %v1094 = vunpack.c.h.b16 %v544
      %v1095 = vunpack.c.l.b16 %v545
      %v1096 = vunpack.c.h.b16 %v545
      %v1097 = vunpack.c.l.b16 %v546
      %v1098 = vunpack.c.h.b16 %v546
      %v1099 = vunpack.c.l.b16 %v547
      %v1100 = vunpack.c.h.b16 %v547
      %v1101 = vunpack.c.l.b16 %v548
      %v1102 = vunpack.c.h.b16 %v548
      %v1103 = vunpack.c.l.b16 %v549
      %v1104 = vunpack.c.h.b16 %v549
      %v1105 = vunpack.c.l.b16 %v550
      %v1106 = vunpack.c.h.b16 %v550
      %v1107 = vunpack.c.l.b16 %v551
      %v1108 = vunpack.c.h.b16 %v551
      %v1109 = vunpack.c.l.b16 %v552
      %v1110 = vunpack.c.h.b16 %v552
      %v1111 = vunpack.c.l.b16 %v553
      %v1112 = vunpack.c.h.b16 %v553
      %v1113 = vunpack.c.l.b16 %v554
      %v1114 = vunpack.c.h.b16 %v554
      %v1115 = vunpack.c.l.b16 %v555
      %v1116 = vunpack.c.h.b16 %v555
      %v1117 = vunpack.c.l.b16 %v556
      %v1118 = vunpack.c.h.b16 %v556
      %v1119 = vunpack.c.l.b16 %v557
      %v1120 = vunpack.c.h.b16 %v557
      %v1121 = vunpack.c.l.b16 %v558
      %v1122 = vunpack.c.h.b16 %v558
      %v1123 = vunpack.c.l.b16 %v559
      %v1124 = vunpack.c.h.b16 %v559
      %v1125 = vunpack.c.l.b16 %v560
      %v1126 = vunpack.c.h.b16 %v560
      %v1127 = vunpack.c.l.b16 %v561
      %v1128 = vunpack.c.h.b16 %v561
      %v1129 = vunpack.c.l.b16 %v562
      %v1130 = vunpack.c.h.b16 %v562
      %v1131 = vunpack.c.l.b16 %v563
      %v1132 = vunpack.c.h.b16 %v563
      %v1133 = vunpack.c.l.b16 %v564
      %v1134 = vunpack.c.h.b16 %v564
      %v1135 = vunpack.c.l.b16 %v565
      %v1136 = vunpack.c.h.b16 %v565
      %v1137 = vunpack.c.l.b16 %v566
      %v1138 = vunpack.c.h.b16 %v566
      %v1139 = vunpack.c.l.b16 %v567
      %v1140 = vunpack.c.h.b16 %v567
      %v1141 = vunpack.c.l.b16 %v568
      %v1142 = vunpack.c.h.b16 %v568
      %v1143 = vunpack.c.l.b16 %v569
      %v1144 = vunpack.c.h.b16 %v569
      %v1145 = vunpack.c.l.b16 %v570
      %v1146 = vunpack.c.h.b16 %v570
      %v1147 = vunpack.c.l.b16 %v571
      %v1148 = vunpack.c.h.b16 %v571
      %v1149 = vunpack.c.l.b16 %v572
      %v1150 = vunpack.c.h.b16 %v572
      %v1151 = vunpack.c.l.b16 %v573
      %v1152 = vunpack.c.h.b16 %v573
      %v1153 = vpack.c.b16 %v1059, %v1057
      %v1154 = vpack.c.b16 %v1060, %v1058
      %v1155 = vpack.c.b16 %v1063, %v1061
      %v1156 = vpack.c.b16 %v1064, %v1062
      %v1157 = vpack.c.b16 %v1067, %v1065
      %v1158 = vpack.c.b16 %v1068, %v1066
      %v1159 = vpack.c.b16 %v1071, %v1069
      %v1160 = vpack.c.b16 %v1072, %v1070
      %v1161 = vpack.c.b16 %v1075, %v1073
      %v1162 = vpack.c.b16 %v1076, %v1074
      %v1163 = vpack.c.b16 %v1079, %v1077
      %v1164 = vpack.c.b16 %v1080, %v1078
      %v1165 = vpack.c.b16 %v1083, %v1081
      %v1166 = vpack.c.b16 %v1084, %v1082
      %v1167 = vpack.c.b16 %v1087, %v1085
      %v1168 = vpack.c.b16 %v1088, %v1086
      %v1169 = vpack.c.b16 %v1091, %v1089
      %v1170 = vpack.c.b16 %v1092, %v1090
      %v1171 = vpack.c.b16 %v1095, %v1093
      %v1172 = vpack.c.b16 %v1096, %v1094
      %v1173 = vpack.c.b16 %v1099, %v1097
      %v1174 = vpack.c.b16 %v1100, %v1098
      %v1175 = vpack.c.b16 %v1103, %v1101
      %v1176 = vpack.c.b16 %v1104, %v1102
      %v1177 = vpack.c.b16 %v1107, %v1105
      %v1178 = vpack.c.b16 %v1108, %v1106
      %v1179 = vpack.c.b16 %v1111, %v1109
      %v1180 = vpack.c.b16 %v1112, %v1110
      %v1181 = vpack.c.b16 %v1115, %v1113
      %v1182 = vpack.c.b16 %v1116, %v1114
      %v1183 = vpack.c.b16 %v1119, %v1117
      %v1184 = vpack.c.b16 %v1120, %v1118
      %v1185 = vpack.c.b16 %v1123, %v1121
      %v1186 = vpack.c.b16 %v1124, %v1122
      %v1187 = vpack.c.b16 %v1127, %v1125
      %v1188 = vpack.c.b16 %v1128, %v1126
      %v1189 = vpack.c.b16 %v1131, %v1129
      %v1190 = vpack.c.b16 %v1132, %v1130
      %v1191 = vpack.c.b16 %v1135, %v1133
      %v1192 = vpack.c.b16 %v1136, %v1134
      %v1193 = vpack.c.b16 %v1139, %v1137
      %v1194 = vpack.c.b16 %v1140, %v1138
      %v1195 = vpack.c.b16 %v1143, %v1141
      %v1196 = vpack.c.b16 %v1144, %v1142
      %v1197 = vpack.c.b16 %v1147, %v1145
      %v1198 = vpack.c.b16 %v1148, %v1146
      %v1199 = vpack.c.b16 %v1151, %v1149
      %v1200 = vpack.c.b16 %v1152, %v1150
      %1249 = vmatprep.subr.bf16.mxu0 %v1168
      %1250 = vmatpush1.bf16.msra.mxu0 %v1167
      %1251 = vmatprep.subr.bf16.mxu0 %v1166
      %1252 = vmatpush1.bf16.msra.mxu0 %v1165
      %1253 = vmatprep.subr.bf16.mxu0 %v1164
      %1254 = vmatpush1.bf16.msra.mxu0 %v1163
      %1255 = vmatprep.subr.bf16.mxu0 %v1162
      %1256 = vmatpush1.bf16.msra.mxu0 %v1161
      %1257 = vmatprep.subr.bf16.mxu0 %v1160
      %1258 = vmatpush1.bf16.msra.mxu0 %v1159
      %1259 = vmatprep.subr.bf16.mxu0 %v1158
      %1260 = vmatpush1.bf16.msra.mxu0 %v1157
      %1261 = vmatprep.subr.bf16.mxu0 %v1156
      %1262 = vmatpush1.bf16.msra.mxu0 %v1155
      %1263 = vmatprep.subr.bf16.mxu0 %v1154
      %1264 = vmatpush1.bf16.msra.mxu0 %v1153
      %1265 = vmatprep.subr.bf16.mxu0 %v1184
      %1266 = vmatpush2.bf16.msra.mxu0 %v1183
      %1267 = vmatprep.subr.bf16.mxu0 %v1182
      %1268 = vmatpush2.bf16.msra.mxu0 %v1181
      %1269 = vmatprep.subr.bf16.mxu0 %v1180
      %1270 = vmatpush2.bf16.msra.mxu0 %v1179
      %1271 = vmatprep.subr.bf16.mxu0 %v1178
      %1272 = vmatpush2.bf16.msra.mxu0 %v1177
      %1273 = vmatprep.subr.bf16.mxu0 %v1176
      %1274 = vmatpush2.bf16.msra.mxu0 %v1175
      %1275 = vmatprep.subr.bf16.mxu0 %v1174
      %1276 = vmatpush2.bf16.msra.mxu0 %v1173
      %1277 = vmatprep.subr.bf16.mxu0 %v1172
      %1278 = vmatpush2.bf16.msra.mxu0 %v1171
      %1279 = vmatprep.subr.bf16.mxu0 %v1170
      %1280 = vmatpush2.bf16.msra.mxu0 %v1169
      %1281 = vmatprep.mubr.bf16.mxu0 %v262
      %1282 = vmatmul.mubr.bf16.gmra.mxu0 %v252
      %v1283 = vpop.f32.mrf.mxu0
      %v1284 = vadd.f32 %v971, %v1283
      %v1285 = vpop.f32.mrf.mxu0
      %v1286 = vadd.f32 %v973, %v1285
      %v1287 = vpop.f32.mrf.mxu0
      %v1288 = vadd.f32 %v975, %v1287
      %v1289 = vpop.f32.mrf.mxu0
      %v1290 = vadd.f32 %v977, %v1289
      %1291 = vmatprep.mubr.bf16.mxu0 %v263
      %1292 = vmatmul.mubr.bf16.gmra.mxu0 %v253
      %v1293 = vpop.f32.mrf.mxu0
      %v1294 = vadd.f32 %v981, %v1293
      %v1295 = vpop.f32.mrf.mxu0
      %v1296 = vadd.f32 %v983, %v1295
      %v1297 = vpop.f32.mrf.mxu0
      %v1298 = vadd.f32 %v985, %v1297
      %v1299 = vpop.f32.mrf.mxu0
      %v1300 = vadd.f32 %v987, %v1299
      %1301 = vmatprep.mubr.bf16.mxu0 %v264
      %1302 = vmatmul.mubr.bf16.gmra.mxu0 %v254
      %v1303 = vpop.f32.mrf.mxu0
      %v1304 = vadd.f32 %v991, %v1303
      %v1305 = vpop.f32.mrf.mxu0
      %v1306 = vadd.f32 %v993, %v1305
      %v1307 = vpop.f32.mrf.mxu0
      %v1308 = vadd.f32 %v995, %v1307
      %v1309 = vpop.f32.mrf.mxu0
      %v1310 = vadd.f32 %v997, %v1309
      %1311 = vmatprep.mubr.bf16.mxu0 %v265
      %1312 = vmatmul.mubr.bf16.gmra.mxu0 %v255
      %v1313 = vpop.f32.mrf.mxu0
      %v1314 = vadd.f32 %v1001, %v1313
      %v1315 = vpop.f32.mrf.mxu0
      %v1316 = vadd.f32 %v1003, %v1315
      %v1317 = vpop.f32.mrf.mxu0
      %v1318 = vadd.f32 %v1005, %v1317
      %v1319 = vpop.f32.mrf.mxu0
      %v1320 = vadd.f32 %v1007, %v1319
      %1321 = vdwg.mxu0
      %1322 = vmatprep.subr.bf16.mxu0 %v1200
      %1323 = vmatpush1.bf16.msra.mxu0 %v1199
      %1324 = vmatprep.subr.bf16.mxu0 %v1198
      %1325 = vmatpush1.bf16.msra.mxu0 %v1197
      %1326 = vmatprep.subr.bf16.mxu0 %v1196
      %1327 = vmatpush1.bf16.msra.mxu0 %v1195
      %1328 = vmatprep.subr.bf16.mxu0 %v1194
      %1329 = vmatpush1.bf16.msra.mxu0 %v1193
      %1330 = vmatprep.subr.bf16.mxu0 %v1192
      %1331 = vmatpush1.bf16.msra.mxu0 %v1191
      %1332 = vmatprep.subr.bf16.mxu0 %v1190
      %1333 = vmatpush1.bf16.msra.mxu0 %v1189
      %1334 = vmatprep.subr.bf16.mxu0 %v1188
      %1335 = vmatpush1.bf16.msra.mxu0 %v1187
      %1336 = vmatprep.subr.bf16.mxu0 %v1186
      %1337 = vmatpush1.bf16.msra.mxu0 %v1185
      %1338 = vmatprep.subr.bf16.mxu0 0
      %1339 = vmatpush2.bf16.msra.mxu0 0
      %1340 = vmatprep.subr.bf16.mxu0 0
      %1341 = vmatpush2.bf16.msra.mxu0 0
      %1342 = vmatprep.subr.bf16.mxu0 0
      %1343 = vmatpush2.bf16.msra.mxu0 0
      %1344 = vmatprep.subr.bf16.mxu0 0
      %1345 = vmatpush2.bf16.msra.mxu0 0
      %1346 = vmatprep.subr.bf16.mxu0 0
      %1347 = vmatpush2.bf16.msra.mxu0 0
      %1348 = vmatprep.subr.bf16.mxu0 0
      %1349 = vmatpush2.bf16.msra.mxu0 0
      %1350 = vmatprep.subr.bf16.mxu0 0
      %1351 = vmatpush2.bf16.msra.mxu0 0
      %1352 = vmatprep.subr.bf16.mxu0 0
      %1353 = vmatpush2.bf16.msra.mxu0 0
      %1354 = vmatprep.mubr.bf16.mxu0 0
      %1355 = vmatmul.mubr.bf16.gmra.mxu0 %v253
      %v1356 = vpop.f32.mrf.mxu0
      %v1357 = vadd.f32 %v1284, %v1356
      %v1358 = vpop.f32.mrf.mxu0
      %v1359 = vadd.f32 %v1286, %v1358
      %v1360 = vpop.f32.mrf.mxu0
      %v1361 = vadd.f32 %v1288, %v1360
      %v1362 = vpop.f32.mrf.mxu0
      %v1363 = vadd.f32 %v1290, %v1362
      %1364 = vmatprep.mubr.bf16.mxu0 0
      %1365 = vmatmul.mubr.bf16.gmra.mxu0 %v254
      %v1366 = vpop.f32.mrf.mxu0
      %v1367 = vadd.f32 %v1294, %v1366
      %v1368 = vpop.f32.mrf.mxu0
      %v1369 = vadd.f32 %v1296, %v1368
      %v1370 = vpop.f32.mrf.mxu0
      %v1371 = vadd.f32 %v1298, %v1370
      %v1372 = vpop.f32.mrf.mxu0
      %v1373 = vadd.f32 %v1300, %v1372
      %1374 = vmatprep.mubr.bf16.mxu0 0
      %1375 = vmatmul.mubr.bf16.gmra.mxu0 %v255
      %v1376 = vpop.f32.mrf.mxu0
      %v1377 = vadd.f32 %v1304, %v1376
      %v1378 = vpop.f32.mrf.mxu0
      %v1379 = vadd.f32 %v1306, %v1378
      %v1380 = vpop.f32.mrf.mxu0
      %v1381 = vadd.f32 %v1308, %v1380
      %v1382 = vpop.f32.mrf.mxu0
      %v1383 = vadd.f32 %v1310, %v1382
      %1384 = vmatprep.mubr.bf16.mxu0 0
      %1385 = vmatmul.mubr.bf16.gmra.mxu0 %v272
      %v1386 = vpop.f32.mrf.mxu0
      %v1387 = vadd.f32 %v1314, %v1386
      %v1388 = vpop.f32.mrf.mxu0
      %v1389 = vadd.f32 %v1316, %v1388
      %v1390 = vpop.f32.mrf.mxu0
      %v1391 = vadd.f32 %v1318, %v1390
      %v1392 = vpop.f32.mrf.mxu0
      %v1393 = vadd.f32 %v1320, %v1392
      %1394 = vdwg.mxu0
      %s1395 = scalar_lea.vmem %s1, 768
      %v1396 = vld [vmem:[%s1395] sm:$0xff]
      %v1397 = vld [vmem:[%s1395 + $0x8] sm:$0xff]
      %v1398 = vld [vmem:[%s1395 + $0x10] sm:$0xff]
      %v1399 = vld [vmem:[%s1395 + $0x18] sm:$0xff]
      %v1400 = vld [vmem:[%s1395 + $0x20] sm:$0xff]
      %v1401 = vld [vmem:[%s1395 + $0x28] sm:$0xff]
      %v1402 = vld [vmem:[%s1395 + $0x30] sm:$0xff]
      %v1403 = vld [vmem:[%s1395 + $0x38] sm:$0xff]
      %v1404 = vld [vmem:[%s1395 + $0x40] sm:$0xff]
      %v1405 = vld [vmem:[%s1395 + $0x48] sm:$0xff]
      %v1406 = vld [vmem:[%s1395 + $0x50] sm:$0xff]
      %v1407 = vld [vmem:[%s1395 + $0x58] sm:$0xff]
      %v1408 = vld [vmem:[%s1395 + $0x60] sm:$0xff]
      %v1409 = vld [vmem:[%s1395 + $0x68] sm:$0xff]
      %v1410 = vld [vmem:[%s1395 + $0x70] sm:$0xff]
      %v1411 = vld [vmem:[%s1395 + $0x78] sm:$0xff]
      %v1412 = vld [vmem:[%s1395 + $0x80] sm:$0xff]
      %v1413 = vld [vmem:[%s1395 + $0x88] sm:$0xff]
      %v1414 = vld [vmem:[%s1395 + $0x90] sm:$0xff]
      %v1415 = vld [vmem:[%s1395 + $0x98] sm:$0xff]
      %v1416 = vld [vmem:[%s1395 + $0xa0] sm:$0xff]
      %v1417 = vld [vmem:[%s1395 + $0xa8] sm:$0xff]
      %v1418 = vld [vmem:[%s1395 + $0xb0] sm:$0xff]
      %v1419 = vld [vmem:[%s1395 + $0xb8] sm:$0xff]
      %v1420 = vld [vmem:[%s1395 + $0xc0] sm:$0xff]
      %v1421 = vld [vmem:[%s1395 + $0xc8] sm:$0xff]
      %v1422 = vld [vmem:[%s1395 + $0xd0] sm:$0xff]
      %v1423 = vld [vmem:[%s1395 + $0xd8] sm:$0xff]
      %v1424 = vld [vmem:[%s1395 + $0xe0] sm:$0xff]
      %v1425 = vld [vmem:[%s1395 + $0xe8] sm:$0xff]
      %v1426 = vld [vmem:[%s1395 + $0xf0] sm:$0xff]
      %v1427 = vld [vmem:[%s1395 + $0xf8] sm:$0xff]
      %v1428 = vld [vmem:[%s1395 + $0x100] sm:$0xff]
      %v1429 = vld [vmem:[%s1395 + $0x108] sm:$0xff]
      %v1430 = vld [vmem:[%s1395 + $0x110] sm:$0xff]
      %v1431 = vld [vmem:[%s1395 + $0x118] sm:$0xff]
      %v1432 = vld [vmem:[%s1395 + $0x120] sm:$0xff]
      %v1433 = vld [vmem:[%s1395 + $0x128] sm:$0xff]
      %v1434 = vld [vmem:[%s1395 + $0x130] sm:$0xff]
      %v1435 = vld [vmem:[%s1395 + $0x138] sm:$0xff]
      %v1436 = vld [vmem:[%s1395 + $0x140] sm:$0xff]
      %v1437 = vld [vmem:[%s1395 + $0x148] sm:$0xff]
      %v1438 = vld [vmem:[%s1395 + $0x150] sm:$0xff]
      %v1439 = vld [vmem:[%s1395 + $0x158] sm:$0xff]
      %v1440 = vld [vmem:[%s1395 + $0x160] sm:$0xff]
      %v1441 = vld [vmem:[%s1395 + $0x168] sm:$0xff]
      %v1442 = vld [vmem:[%s1395 + $0x170] sm:$0xff]
      %v1443 = vld [vmem:[%s1395 + $0x178] sm:$0xff]
      %v1492 = vunpack.c.l.b16 %v1396
      %v1493 = vunpack.c.h.b16 %v1396
      %v1494 = vunpack.c.l.b16 %v1397
      %v1495 = vunpack.c.h.b16 %v1397
      %v1496 = vunpack.c.l.b16 %v1398
      %v1497 = vunpack.c.h.b16 %v1398
      %v1498 = vunpack.c.l.b16 %v1399
      %v1499 = vunpack.c.h.b16 %v1399
      %v1500 = vunpack.c.l.b16 %v1400
      %v1501 = vunpack.c.h.b16 %v1400
      %v1502 = vunpack.c.l.b16 %v1401
      %v1503 = vunpack.c.h.b16 %v1401
      %v1504 = vunpack.c.l.b16 %v1402
      %v1505 = vunpack.c.h.b16 %v1402
      %v1506 = vunpack.c.l.b16 %v1403
      %v1507 = vunpack.c.h.b16 %v1403
      %v1508 = vunpack.c.l.b16 %v1404
      %v1509 = vunpack.c.h.b16 %v1404
      %v1510 = vunpack.c.l.b16 %v1405
      %v1511 = vunpack.c.h.b16 %v1405
      %v1512 = vunpack.c.l.b16 %v1406
      %v1513 = vunpack.c.h.b16 %v1406
      %v1514 = vunpack.c.l.b16 %v1407
      %v1515 = vunpack.c.h.b16 %v1407
      %v1516 = vunpack.c.l.b16 %v1408
      %v1517 = vunpack.c.h.b16 %v1408
      %v1518 = vunpack.c.l.b16 %v1409
      %v1519 = vunpack.c.h.b16 %v1409
      %v1520 = vunpack.c.l.b16 %v1410
      %v1521 = vunpack.c.h.b16 %v1410
      %v1522 = vunpack.c.l.b16 %v1411
      %v1523 = vunpack.c.h.b16 %v1411
      %v1524 = vunpack.c.l.b16 %v1412
      %v1525 = vunpack.c.h.b16 %v1412
      %v1526 = vunpack.c.l.b16 %v1413
      %v1527 = vunpack.c.h.b16 %v1413
      %v1528 = vunpack.c.l.b16 %v1414
      %v1529 = vunpack.c.h.b16 %v1414
      %v1530 = vunpack.c.l.b16 %v1415
      %v1531 = vunpack.c.h.b16 %v1415
      %v1532 = vunpack.c.l.b16 %v1416
      %v1533 = vunpack.c.h.b16 %v1416
      %v1534 = vunpack.c.l.b16 %v1417
      %v1535 = vunpack.c.h.b16 %v1417
      %v1536 = vunpack.c.l.b16 %v1418
      %v1537 = vunpack.c.h.b16 %v1418
      %v1538 = vunpack.c.l.b16 %v1419
      %v1539 = vunpack.c.h.b16 %v1419
      %v1540 = vunpack.c.l.b16 %v1420
      %v1541 = vunpack.c.h.b16 %v1420
      %v1542 = vunpack.c.l.b16 %v1421
      %v1543 = vunpack.c.h.b16 %v1421
      %v1544 = vunpack.c.l.b16 %v1422
      %v1545 = vunpack.c.h.b16 %v1422
      %v1546 = vunpack.c.l.b16 %v1423
      %v1547 = vunpack.c.h.b16 %v1423
      %v1548 = vunpack.c.l.b16 %v1424
      %v1549 = vunpack.c.h.b16 %v1424
      %v1550 = vunpack.c.l.b16 %v1425
      %v1551 = vunpack.c.h.b16 %v1425
      %v1552 = vunpack.c.l.b16 %v1426
      %v1553 = vunpack.c.h.b16 %v1426
      %v1554 = vunpack.c.l.b16 %v1427
      %v1555 = vunpack.c.h.b16 %v1427
      %v1556 = vunpack.c.l.b16 %v1428
      %v1557 = vunpack.c.h.b16 %v1428
      %v1558 = vunpack.c.l.b16 %v1429
      %v1559 = vunpack.c.h.b16 %v1429
      %v1560 = vunpack.c.l.b16 %v1430
      %v1561 = vunpack.c.h.b16 %v1430
      %v1562 = vunpack.c.l.b16 %v1431
      %v1563 = vunpack.c.h.b16 %v1431
      %v1564 = vunpack.c.l.b16 %v1432
      %v1565 = vunpack.c.h.b16 %v1432
      %v1566 = vunpack.c.l.b16 %v1433
      %v1567 = vunpack.c.h.b16 %v1433
      %v1568 = vunpack.c.l.b16 %v1434
      %v1569 = vunpack.c.h.b16 %v1434
      %v1570 = vunpack.c.l.b16 %v1435
      %v1571 = vunpack.c.h.b16 %v1435
      %v1572 = vunpack.c.l.b16 %v1436
      %v1573 = vunpack.c.h.b16 %v1436
      %v1574 = vunpack.c.l.b16 %v1437
      %v1575 = vunpack.c.h.b16 %v1437
      %v1576 = vunpack.c.l.b16 %v1438
      %v1577 = vunpack.c.h.b16 %v1438
      %v1578 = vunpack.c.l.b16 %v1439
      %v1579 = vunpack.c.h.b16 %v1439
      %v1580 = vunpack.c.l.b16 %v1440
      %v1581 = vunpack.c.h.b16 %v1440
      %v1582 = vunpack.c.l.b16 %v1441
      %v1583 = vunpack.c.h.b16 %v1441
      %v1584 = vunpack.c.l.b16 %v1442
      %v1585 = vunpack.c.h.b16 %v1442
      %v1586 = vunpack.c.l.b16 %v1443
      %v1587 = vunpack.c.h.b16 %v1443
      %v1588 = vpack.c.b16 %v1494, %v1492
      %v1589 = vpack.c.b16 %v1495, %v1493
      %v1590 = vpack.c.b16 %v1498, %v1496
      %v1591 = vpack.c.b16 %v1499, %v1497
      %v1592 = vpack.c.b16 %v1502, %v1500
      %v1593 = vpack.c.b16 %v1503, %v1501
      %v1594 = vpack.c.b16 %v1506, %v1504
      %v1595 = vpack.c.b16 %v1507, %v1505
      %v1596 = vpack.c.b16 %v1510, %v1508
      %v1597 = vpack.c.b16 %v1511, %v1509
      %v1598 = vpack.c.b16 %v1514, %v1512
      %v1599 = vpack.c.b16 %v1515, %v1513
      %v1600 = vpack.c.b16 %v1518, %v1516
      %v1601 = vpack.c.b16 %v1519, %v1517
      %v1602 = vpack.c.b16 %v1522, %v1520
      %v1603 = vpack.c.b16 %v1523, %v1521
      %v1604 = vpack.c.b16 %v1526, %v1524
      %v1605 = vpack.c.b16 %v1527, %v1525
      %v1606 = vpack.c.b16 %v1530, %v1528
      %v1607 = vpack.c.b16 %v1531, %v1529
      %v1608 = vpack.c.b16 %v1534, %v1532
      %v1609 = vpack.c.b16 %v1535, %v1533
      %v1610 = vpack.c.b16 %v1538, %v1536
      %v1611 = vpack.c.b16 %v1539, %v1537
      %v1612 = vpack.c.b16 %v1542, %v1540
      %v1613 = vpack.c.b16 %v1543, %v1541
      %v1614 = vpack.c.b16 %v1546, %v1544
      %v1615 = vpack.c.b16 %v1547, %v1545
      %v1616 = vpack.c.b16 %v1550, %v1548
      %v1617 = vpack.c.b16 %v1551, %v1549
      %v1618 = vpack.c.b16 %v1554, %v1552
      %v1619 = vpack.c.b16 %v1555, %v1553
      %v1620 = vpack.c.b16 %v1558, %v1556
      %v1621 = vpack.c.b16 %v1559, %v1557
      %v1622 = vpack.c.b16 %v1562, %v1560
      %v1623 = vpack.c.b16 %v1563, %v1561
      %v1624 = vpack.c.b16 %v1566, %v1564
      %v1625 = vpack.c.b16 %v1567, %v1565
      %v1626 = vpack.c.b16 %v1570, %v1568
      %v1627 = vpack.c.b16 %v1571, %v1569
      %v1628 = vpack.c.b16 %v1574, %v1572
      %v1629 = vpack.c.b16 %v1575, %v1573
      %v1630 = vpack.c.b16 %v1578, %v1576
      %v1631 = vpack.c.b16 %v1579, %v1577
      %v1632 = vpack.c.b16 %v1582, %v1580
      %v1633 = vpack.c.b16 %v1583, %v1581
      %v1634 = vpack.c.b16 %v1586, %v1584
      %v1635 = vpack.c.b16 %v1587, %v1585
      %1684 = vmatprep.subr.bf16.mxu0 %v1603
      %1685 = vmatpush1.bf16.msra.mxu0 %v1602
      %1686 = vmatprep.subr.bf16.mxu0 %v1601
      %1687 = vmatpush1.bf16.msra.mxu0 %v1600
      %1688 = vmatprep.subr.bf16.mxu0 %v1599
      %1689 = vmatpush1.bf16.msra.mxu0 %v1598
      %1690 = vmatprep.subr.bf16.mxu0 %v1597
      %1691 = vmatpush1.bf16.msra.mxu0 %v1596
      %1692 = vmatprep.subr.bf16.mxu0 %v1595
      %1693 = vmatpush1.bf16.msra.mxu0 %v1594
      %1694 = vmatprep.subr.bf16.mxu0 %v1593
      %1695 = vmatpush1.bf16.msra.mxu0 %v1592
      %1696 = vmatprep.subr.bf16.mxu0 %v1591
      %1697 = vmatpush1.bf16.msra.mxu0 %v1590
      %1698 = vmatprep.subr.bf16.mxu0 %v1589
      %1699 = vmatpush1.bf16.msra.mxu0 %v1588
      %1700 = vmatprep.subr.bf16.mxu0 %v1619
      %1701 = vmatpush2.bf16.msra.mxu0 %v1618
      %1702 = vmatprep.subr.bf16.mxu0 %v1617
      %1703 = vmatpush2.bf16.msra.mxu0 %v1616
      %1704 = vmatprep.subr.bf16.mxu0 %v1615
      %1705 = vmatpush2.bf16.msra.mxu0 %v1614
      %1706 = vmatprep.subr.bf16.mxu0 %v1613
      %1707 = vmatpush2.bf16.msra.mxu0 %v1612
      %1708 = vmatprep.subr.bf16.mxu0 %v1611
      %1709 = vmatpush2.bf16.msra.mxu0 %v1610
      %1710 = vmatprep.subr.bf16.mxu0 %v1609
      %1711 = vmatpush2.bf16.msra.mxu0 %v1608
      %1712 = vmatprep.subr.bf16.mxu0 %v1607
      %1713 = vmatpush2.bf16.msra.mxu0 %v1606
      %1714 = vmatprep.subr.bf16.mxu0 %v1605
      %1715 = vmatpush2.bf16.msra.mxu0 %v1604
      %1716 = vmatprep.mubr.bf16.mxu0 %v515
      %1717 = vmatmul.mubr.bf16.gmra.mxu0 %v506
      %v1718 = vpop.f32.mrf.mxu0
      %v1719 = vadd.f32 0.0, %v1718
      %v1720 = vpop.f32.mrf.mxu0
      %v1721 = vadd.f32 0.0, %v1720
      %v1722 = vpop.f32.mrf.mxu0
      %v1723 = vadd.f32 0.0, %v1722
      %v1724 = vpop.f32.mrf.mxu0
      %v1725 = vadd.f32 0.0, %v1724
      %1726 = vmatprep.mubr.bf16.mxu0 %v516
      %1727 = vmatmul.mubr.bf16.gmra.mxu0 %v507
      %v1728 = vpop.f32.mrf.mxu0
      %v1729 = vadd.f32 0.0, %v1728
      %v1730 = vpop.f32.mrf.mxu0
      %v1731 = vadd.f32 0.0, %v1730
      %v1732 = vpop.f32.mrf.mxu0
      %v1733 = vadd.f32 0.0, %v1732
      %v1734 = vpop.f32.mrf.mxu0
      %v1735 = vadd.f32 0.0, %v1734
      %1736 = vmatprep.mubr.bf16.mxu0 %v517
      %1737 = vmatmul.mubr.bf16.gmra.mxu0 %v508
      %v1738 = vpop.f32.mrf.mxu0
      %v1739 = vadd.f32 0.0, %v1738
      %v1740 = vpop.f32.mrf.mxu0
      %v1741 = vadd.f32 0.0, %v1740
      %v1742 = vpop.f32.mrf.mxu0
      %v1743 = vadd.f32 0.0, %v1742
      %v1744 = vpop.f32.mrf.mxu0
      %v1745 = vadd.f32 0.0, %v1744
      %1746 = vmatprep.mubr.bf16.mxu0 %v518
      %1747 = vmatmul.mubr.bf16.gmra.mxu0 %v509
      %v1748 = vpop.f32.mrf.mxu0
      %v1749 = vadd.f32 0.0, %v1748
      %v1750 = vpop.f32.mrf.mxu0
      %v1751 = vadd.f32 0.0, %v1750
      %v1752 = vpop.f32.mrf.mxu0
      %v1753 = vadd.f32 0.0, %v1752
      %v1754 = vpop.f32.mrf.mxu0
      %v1755 = vadd.f32 0.0, %v1754
      %1756 = vdwg.mxu0
      %1757 = vmatprep.subr.bf16.mxu0 %v1635
      %1758 = vmatpush1.bf16.msra.mxu0 %v1634
      %1759 = vmatprep.subr.bf16.mxu0 %v1633
      %1760 = vmatpush1.bf16.msra.mxu0 %v1632
      %1761 = vmatprep.subr.bf16.mxu0 %v1631
      %1762 = vmatpush1.bf16.msra.mxu0 %v1630
      %1763 = vmatprep.subr.bf16.mxu0 %v1629
      %1764 = vmatpush1.bf16.msra.mxu0 %v1628
      %1765 = vmatprep.subr.bf16.mxu0 %v1627
      %1766 = vmatpush1.bf16.msra.mxu0 %v1626
      %1767 = vmatprep.subr.bf16.mxu0 %v1625
      %1768 = vmatpush1.bf16.msra.mxu0 %v1624
      %1769 = vmatprep.subr.bf16.mxu0 %v1623
      %1770 = vmatpush1.bf16.msra.mxu0 %v1622
      %1771 = vmatprep.subr.bf16.mxu0 %v1621
      %1772 = vmatpush1.bf16.msra.mxu0 %v1620
      %1773 = vmatprep.subr.bf16.mxu0 0
      %1774 = vmatpush2.bf16.msra.mxu0 0
      %1775 = vmatprep.subr.bf16.mxu0 0
      %1776 = vmatpush2.bf16.msra.mxu0 0
      %1777 = vmatprep.subr.bf16.mxu0 0
      %1778 = vmatpush2.bf16.msra.mxu0 0
      %1779 = vmatprep.subr.bf16.mxu0 0
      %1780 = vmatpush2.bf16.msra.mxu0 0
      %1781 = vmatprep.subr.bf16.mxu0 0
      %1782 = vmatpush2.bf16.msra.mxu0 0
      %1783 = vmatprep.subr.bf16.mxu0 0
      %1784 = vmatpush2.bf16.msra.mxu0 0
      %1785 = vmatprep.subr.bf16.mxu0 0
      %1786 = vmatpush2.bf16.msra.mxu0 0
      %1787 = vmatprep.subr.bf16.mxu0 0
      %1788 = vmatpush2.bf16.msra.mxu0 0
      %1789 = vmatprep.mubr.bf16.mxu0 0
      %1790 = vmatmul.mubr.bf16.gmra.mxu0 %v507
      %v1791 = vpop.f32.mrf.mxu0
      %v1792 = vadd.f32 %v1719, %v1791
      %v1793 = vpop.f32.mrf.mxu0
      %v1794 = vadd.f32 %v1721, %v1793
      %v1795 = vpop.f32.mrf.mxu0
      %v1796 = vadd.f32 %v1723, %v1795
      %v1797 = vpop.f32.mrf.mxu0
      %v1798 = vadd.f32 %v1725, %v1797
      %1799 = vmatprep.mubr.bf16.mxu0 0
      %1800 = vmatmul.mubr.bf16.gmra.mxu0 %v508
      %v1801 = vpop.f32.mrf.mxu0
      %v1802 = vadd.f32 %v1729, %v1801
      %v1803 = vpop.f32.mrf.mxu0
      %v1804 = vadd.f32 %v1731, %v1803
      %v1805 = vpop.f32.mrf.mxu0
      %v1806 = vadd.f32 %v1733, %v1805
      %v1807 = vpop.f32.mrf.mxu0
      %v1808 = vadd.f32 %v1735, %v1807
      %1809 = vmatprep.mubr.bf16.mxu0 0
      %1810 = vmatmul.mubr.bf16.gmra.mxu0 %v509
      %v1811 = vpop.f32.mrf.mxu0
      %v1812 = vadd.f32 %v1739, %v1811
      %v1813 = vpop.f32.mrf.mxu0
      %v1814 = vadd.f32 %v1741, %v1813
      %v1815 = vpop.f32.mrf.mxu0
      %v1816 = vadd.f32 %v1743, %v1815
      %v1817 = vpop.f32.mrf.mxu0
      %v1818 = vadd.f32 %v1745, %v1817
      %1819 = vmatprep.mubr.bf16.mxu0 0
      %1820 = vmatmul.mubr.bf16.gmra.mxu0 %v524
      %v1821 = vpop.f32.mrf.mxu0
      %v1822 = vadd.f32 %v1749, %v1821
      %v1823 = vpop.f32.mrf.mxu0
      %v1824 = vadd.f32 %v1751, %v1823
      %v1825 = vpop.f32.mrf.mxu0
      %v1826 = vadd.f32 %v1753, %v1825
      %v1827 = vpop.f32.mrf.mxu0
      %v1828 = vadd.f32 %v1755, %v1827
      %1829 = vdwg.mxu0
      %v1830 = vadd.f32 %v1357, %v1792
      %v1831 = vadd.f32 %v1359, %v1794
      %v1832 = vadd.f32 %v1361, %v1796
      %v1833 = vadd.f32 %v1363, %v1798
      %v1834 = vadd.f32 %v1367, %v1802
      %v1835 = vadd.f32 %v1369, %v1804
      %v1836 = vadd.f32 %v1371, %v1806
      %v1837 = vadd.f32 %v1373, %v1808
      %v1838 = vadd.f32 %v1377, %v1812
      %v1839 = vadd.f32 %v1379, %v1814
      %v1840 = vadd.f32 %v1381, %v1816
      %v1841 = vadd.f32 %v1383, %v1818
      %v1842 = vadd.f32 %v1387, %v1822
      %v1843 = vadd.f32 %v1389, %v1824
      %v1844 = vadd.f32 %v1391, %v1826
      %v1845 = vadd.f32 %v1393, %v1828
      %v1846 = vpack.c.bf16 %v1830, %v1830
      %v1847 = vpack.c.bf16 %v1832, %v1832
      %v1848 = vpack.c.bf16 %v1834, %v1834
      %v1849 = vpack.c.bf16 %v1836, %v1836
      %v1850 = vpack.c.bf16 %v1838, %v1838
      %v1851 = vpack.c.bf16 %v1840, %v1840
      %v1852 = vpack.c.bf16 %v1842, %v1842
      %v1853 = vpack.c.bf16 %v1844, %v1844
      %1854 = vst [vmem:[%s208] sm:$0xf] %v1846
      %1855 = vst [vmem:[%s208 + $0x4] sm:$0xf] %v1847
      %1856 = vst [vmem:[%s208 + $0x8] sm:$0xf] %v1848
      %1857 = vst [vmem:[%s208 + $0xc] sm:$0xf] %v1849
      %1858 = vst [vmem:[%s208 + $0x10] sm:$0xf] %v1850
      %1859 = vst [vmem:[%s208 + $0x14] sm:$0xf] %v1851
      %1860 = vst [vmem:[%s208 + $0x18] sm:$0xf] %v1852
      %1861 = vst [vmem:[%s208 + $0x1c] sm:$0xf] %v1853
      %v1862 = vadd.f32 %v1830, %v1832
      %v1863 = vadd.f32 %v1862, %v1834
      %v1864 = vadd.f32 %v1863, %v1836
      %v1865 = vadd.f32 %v1864, %v1838
      %v1866 = vadd.f32 %v1865, %v1840
      %v1867 = vadd.f32 %v1866, %v1842
      %v1868 = vadd.f32 %v1867, %v1844
      %v1869 = vrot.slane %v1868, 4
      %v1870 = vadd.f32 %v1868, %v1869
      %v1871 = vrot.slane %v1870, 2
      %v1872 = vadd.f32 %v1870, %v1871
      %v1873 = vrot.slane %v1872, 1
      %v1874 = vadd.f32 %v1872, %v1873
      %v1875 = vadd.f32 %v1874, 0.0
      %v1876 = vmul.f32 %v1830, %v1830
      %v1877 = vmul.f32 %v1832, %v1832
      %v1878 = vmul.f32 %v1834, %v1834
      %v1879 = vmul.f32 %v1836, %v1836
      %v1880 = vmul.f32 %v1838, %v1838
      %v1881 = vmul.f32 %v1840, %v1840
      %v1882 = vmul.f32 %v1842, %v1842
      %v1883 = vmul.f32 %v1844, %v1844
      %v1884 = vadd.f32 %v1876, %v1877
      %v1885 = vadd.f32 %v1884, %v1878
      %v1886 = vadd.f32 %v1885, %v1879
      %v1887 = vadd.f32 %v1886, %v1880
      %v1888 = vadd.f32 %v1887, %v1881
      %v1889 = vadd.f32 %v1888, %v1882
      %v1890 = vadd.f32 %v1889, %v1883
      %v1891 = vrot.slane %v1890, 4
      %v1892 = vadd.f32 %v1890, %v1891
      %v1893 = vrot.slane %v1892, 2
      %v1894 = vadd.f32 %v1892, %v1893
      %v1895 = vrot.slane %v1894, 1
      %v1896 = vadd.f32 %v1894, %v1895
      %v1897 = vadd.f32 %v1896, 0.0
      %v1898 = vpack.c.bf16 %v1831, %v1831
      %v1899 = vpack.c.bf16 %v1833, %v1833
      %v1900 = vpack.c.bf16 %v1835, %v1835
      %v1901 = vpack.c.bf16 %v1837, %v1837
      %v1902 = vpack.c.bf16 %v1839, %v1839
      %v1903 = vpack.c.bf16 %v1841, %v1841
      %v1904 = vpack.c.bf16 %v1843, %v1843
      %v1905 = vpack.c.bf16 %v1845, %v1845
      %s1906 = scalar_lea.vmem %s208, 64
      %1907 = vst [vmem:[%s1906] sm:$0xf] %v1898
      %1908 = vst [vmem:[%s1906 + $0x4] sm:$0xf] %v1899
      %1909 = vst [vmem:[%s1906 + $0x8] sm:$0xf] %v1900
      %1910 = vst [vmem:[%s1906 + $0xc] sm:$0xf] %v1901
      %1911 = vst [vmem:[%s1906 + $0x10] sm:$0xf] %v1902
      %1912 = vst [vmem:[%s1906 + $0x14] sm:$0xf] %v1903
      %1913 = vst [vmem:[%s1906 + $0x18] sm:$0xf] %v1904
      %1914 = vst [vmem:[%s1906 + $0x1c] sm:$0xf] %v1905
      %v1915 = vadd.f32 %v1831, %v1833
      %v1916 = vadd.f32 %v1915, %v1835
      %v1917 = vadd.f32 %v1916, %v1837
      %v1918 = vadd.f32 %v1917, %v1839
      %v1919 = vadd.f32 %v1918, %v1841
      %v1920 = vadd.f32 %v1919, %v1843
      %v1921 = vadd.f32 %v1920, %v1845
      %v1922 = vrot.slane %v1921, 4
      %v1923 = vadd.f32 %v1921, %v1922
      %v1924 = vrot.slane %v1923, 2
      %v1925 = vadd.f32 %v1923, %v1924
      %v1926 = vrot.slane %v1925, 1
      %v1927 = vadd.f32 %v1925, %v1926
      %v1928 = vadd.f32 %v1875, %v1927
      %v1929 = vmul.f32 %v1831, %v1831
      %v1930 = vmul.f32 %v1833, %v1833
      %v1931 = vmul.f32 %v1835, %v1835
      %v1932 = vmul.f32 %v1837, %v1837
      %v1933 = vmul.f32 %v1839, %v1839
      %v1934 = vmul.f32 %v1841, %v1841
      %v1935 = vmul.f32 %v1843, %v1843
      %v1936 = vmul.f32 %v1845, %v1845
      %v1937 = vadd.f32 %v1929, %v1930
      %v1938 = vadd.f32 %v1937, %v1931
      %v1939 = vadd.f32 %v1938, %v1932
      %v1940 = vadd.f32 %v1939, %v1933
      %v1941 = vadd.f32 %v1940, %v1934
      %v1942 = vadd.f32 %v1941, %v1935
      %v1943 = vadd.f32 %v1942, %v1936
      %v1944 = vrot.slane %v1943, 4
      %v1945 = vadd.f32 %v1943, %v1944
      %v1946 = vrot.slane %v1945, 2
      %v1947 = vadd.f32 %v1945, %v1946
      %v1948 = vrot.slane %v1947, 1
      %v1949 = vadd.f32 %v1947, %v1948
      %v1950 = vadd.f32 %v1897, %v1949
      %s1951 = scalar_lea.vmem %s1, 1152
      %v1952 = vld [vmem:[%s1951] sm:$0xff]
      %v1953 = vld [vmem:[%s1951 + $0x8] sm:$0xff]
      %v1954 = vld [vmem:[%s1951 + $0x10] sm:$0xff]
      %v1955 = vld [vmem:[%s1951 + $0x18] sm:$0xff]
      %v1956 = vld [vmem:[%s1951 + $0x20] sm:$0xff]
      %v1957 = vld [vmem:[%s1951 + $0x28] sm:$0xff]
      %v1958 = vld [vmem:[%s1951 + $0x30] sm:$0xff]
      %v1959 = vld [vmem:[%s1951 + $0x38] sm:$0xff]
      %v1960 = vld [vmem:[%s1951 + $0x40] sm:$0xff]
      %v1961 = vld [vmem:[%s1951 + $0x48] sm:$0xff]
      %v1962 = vld [vmem:[%s1951 + $0x50] sm:$0xff]
      %v1963 = vld [vmem:[%s1951 + $0x58] sm:$0xff]
      %v1964 = vld [vmem:[%s1951 + $0x60] sm:$0xff]
      %v1965 = vld [vmem:[%s1951 + $0x68] sm:$0xff]
      %v1966 = vld [vmem:[%s1951 + $0x70] sm:$0xff]
      %v1967 = vld [vmem:[%s1951 + $0x78] sm:$0xff]
      %v1968 = vld [vmem:[%s1951 + $0x80] sm:$0xff]
      %v1969 = vld [vmem:[%s1951 + $0x88] sm:$0xff]
      %v1970 = vld [vmem:[%s1951 + $0x90] sm:$0xff]
      %v1971 = vld [vmem:[%s1951 + $0x98] sm:$0xff]
      %v1972 = vld [vmem:[%s1951 + $0xa0] sm:$0xff]
      %v1973 = vld [vmem:[%s1951 + $0xa8] sm:$0xff]
      %v1974 = vld [vmem:[%s1951 + $0xb0] sm:$0xff]
      %v1975 = vld [vmem:[%s1951 + $0xb8] sm:$0xff]
      %v1976 = vld [vmem:[%s1951 + $0xc0] sm:$0xff]
      %v1977 = vld [vmem:[%s1951 + $0xc8] sm:$0xff]
      %v1978 = vld [vmem:[%s1951 + $0xd0] sm:$0xff]
      %v1979 = vld [vmem:[%s1951 + $0xd8] sm:$0xff]
      %v1980 = vld [vmem:[%s1951 + $0xe0] sm:$0xff]
      %v1981 = vld [vmem:[%s1951 + $0xe8] sm:$0xff]
      %v1982 = vld [vmem:[%s1951 + $0xf0] sm:$0xff]
      %v1983 = vld [vmem:[%s1951 + $0xf8] sm:$0xff]
      %v1984 = vld [vmem:[%s1951 + $0x100] sm:$0xff]
      %v1985 = vld [vmem:[%s1951 + $0x108] sm:$0xff]
      %v1986 = vld [vmem:[%s1951 + $0x110] sm:$0xff]
      %v1987 = vld [vmem:[%s1951 + $0x118] sm:$0xff]
      %v1988 = vld [vmem:[%s1951 + $0x120] sm:$0xff]
      %v1989 = vld [vmem:[%s1951 + $0x128] sm:$0xff]
      %v1990 = vld [vmem:[%s1951 + $0x130] sm:$0xff]
      %v1991 = vld [vmem:[%s1951 + $0x138] sm:$0xff]
      %v1992 = vld [vmem:[%s1951 + $0x140] sm:$0xff]
      %v1993 = vld [vmem:[%s1951 + $0x148] sm:$0xff]
      %v1994 = vld [vmem:[%s1951 + $0x150] sm:$0xff]
      %v1995 = vld [vmem:[%s1951 + $0x158] sm:$0xff]
      %v1996 = vld [vmem:[%s1951 + $0x160] sm:$0xff]
      %v1997 = vld [vmem:[%s1951 + $0x168] sm:$0xff]
      %v1998 = vld [vmem:[%s1951 + $0x170] sm:$0xff]
      %v1999 = vld [vmem:[%s1951 + $0x178] sm:$0xff]
      %s2000 = scalar_lea.vmem %s1, 1536
      %v2001 = vld [vmem:[%s2000] sm:$0xff]
      %v2002 = vld [vmem:[%s2000 + $0x8] sm:$0xff]
      %v2003 = vld [vmem:[%s2000 + $0x10] sm:$0xff]
      %v2004 = vld [vmem:[%s2000 + $0x18] sm:$0xff]
      %v2005 = vld [vmem:[%s2000 + $0x20] sm:$0xff]
      %v2006 = vld [vmem:[%s2000 + $0x28] sm:$0xff]
      %v2007 = vld [vmem:[%s2000 + $0x30] sm:$0xff]
      %v2008 = vld [vmem:[%s2000 + $0x38] sm:$0xff]
      %v2009 = vld [vmem:[%s2000 + $0x40] sm:$0xff]
      %v2010 = vld [vmem:[%s2000 + $0x48] sm:$0xff]
      %v2011 = vld [vmem:[%s2000 + $0x50] sm:$0xff]
      %v2012 = vld [vmem:[%s2000 + $0x58] sm:$0xff]
      %v2013 = vld [vmem:[%s2000 + $0x60] sm:$0xff]
      %v2014 = vld [vmem:[%s2000 + $0x68] sm:$0xff]
      %v2015 = vld [vmem:[%s2000 + $0x70] sm:$0xff]
      %v2016 = vld [vmem:[%s2000 + $0x78] sm:$0xff]
      %v2017 = vld [vmem:[%s2000 + $0x80] sm:$0xff]
      %v2018 = vld [vmem:[%s2000 + $0x88] sm:$0xff]
      %v2019 = vld [vmem:[%s2000 + $0x90] sm:$0xff]
      %v2020 = vld [vmem:[%s2000 + $0x98] sm:$0xff]
      %v2021 = vld [vmem:[%s2000 + $0xa0] sm:$0xff]
      %v2022 = vld [vmem:[%s2000 + $0xa8] sm:$0xff]
      %v2023 = vld [vmem:[%s2000 + $0xb0] sm:$0xff]
      %v2024 = vld [vmem:[%s2000 + $0xb8] sm:$0xff]
      %v2025 = vld [vmem:[%s2000 + $0xc0] sm:$0xff]
      %v2026 = vld [vmem:[%s2000 + $0xc8] sm:$0xff]
      %v2027 = vld [vmem:[%s2000 + $0xd0] sm:$0xff]
      %v2028 = vld [vmem:[%s2000 + $0xd8] sm:$0xff]
      %v2029 = vld [vmem:[%s2000 + $0xe0] sm:$0xff]
      %v2030 = vld [vmem:[%s2000 + $0xe8] sm:$0xff]
      %v2031 = vld [vmem:[%s2000 + $0xf0] sm:$0xff]
      %v2032 = vld [vmem:[%s2000 + $0xf8] sm:$0xff]
      %v2033 = vld [vmem:[%s2000 + $0x100] sm:$0xff]
      %v2034 = vld [vmem:[%s2000 + $0x108] sm:$0xff]
      %v2035 = vld [vmem:[%s2000 + $0x110] sm:$0xff]
      %v2036 = vld [vmem:[%s2000 + $0x118] sm:$0xff]
      %v2037 = vld [vmem:[%s2000 + $0x120] sm:$0xff]
      %v2038 = vld [vmem:[%s2000 + $0x128] sm:$0xff]
      %v2039 = vld [vmem:[%s2000 + $0x130] sm:$0xff]
      %v2040 = vld [vmem:[%s2000 + $0x138] sm:$0xff]
      %v2041 = vld [vmem:[%s2000 + $0x140] sm:$0xff]
      %v2042 = vld [vmem:[%s2000 + $0x148] sm:$0xff]
      %v2043 = vld [vmem:[%s2000 + $0x150] sm:$0xff]
      %v2044 = vld [vmem:[%s2000 + $0x158] sm:$0xff]
      %v2045 = vld [vmem:[%s2000 + $0x160] sm:$0xff]
      %v2046 = vld [vmem:[%s2000 + $0x168] sm:$0xff]
      %v2047 = vld [vmem:[%s2000 + $0x170] sm:$0xff]
      %v2048 = vld [vmem:[%s2000 + $0x178] sm:$0xff]
      %v2097 = vunpack.c.l.b16 %v2001
      %v2098 = vunpack.c.h.b16 %v2001
      %v2099 = vunpack.c.l.b16 %v2002
      %v2100 = vunpack.c.h.b16 %v2002
      %v2101 = vunpack.c.l.b16 %v2003
      %v2102 = vunpack.c.h.b16 %v2003
      %v2103 = vunpack.c.l.b16 %v2004
      %v2104 = vunpack.c.h.b16 %v2004
      %v2105 = vunpack.c.l.b16 %v2005
      %v2106 = vunpack.c.h.b16 %v2005
      %v2107 = vunpack.c.l.b16 %v2006
      %v2108 = vunpack.c.h.b16 %v2006
      %v2109 = vunpack.c.l.b16 %v2007
      %v2110 = vunpack.c.h.b16 %v2007
      %v2111 = vunpack.c.l.b16 %v2008
      %v2112 = vunpack.c.h.b16 %v2008
      %v2113 = vunpack.c.l.b16 %v2009
      %v2114 = vunpack.c.h.b16 %v2009
      %v2115 = vunpack.c.l.b16 %v2010
      %v2116 = vunpack.c.h.b16 %v2010
      %v2117 = vunpack.c.l.b16 %v2011
      %v2118 = vunpack.c.h.b16 %v2011
      %v2119 = vunpack.c.l.b16 %v2012
      %v2120 = vunpack.c.h.b16 %v2012
      %v2121 = vunpack.c.l.b16 %v2013
      %v2122 = vunpack.c.h.b16 %v2013
      %v2123 = vunpack.c.l.b16 %v2014
      %v2124 = vunpack.c.h.b16 %v2014
      %v2125 = vunpack.c.l.b16 %v2015
      %v2126 = vunpack.c.h.b16 %v2015
      %v2127 = vunpack.c.l.b16 %v2016
      %v2128 = vunpack.c.h.b16 %v2016
      %v2129 = vunpack.c.l.b16 %v2017
      %v2130 = vunpack.c.h.b16 %v2017
      %v2131 = vunpack.c.l.b16 %v2018
      %v2132 = vunpack.c.h.b16 %v2018
      %v2133 = vunpack.c.l.b16 %v2019
      %v2134 = vunpack.c.h.b16 %v2019
      %v2135 = vunpack.c.l.b16 %v2020
      %v2136 = vunpack.c.h.b16 %v2020
      %v2137 = vunpack.c.l.b16 %v2021
      %v2138 = vunpack.c.h.b16 %v2021
      %v2139 = vunpack.c.l.b16 %v2022
      %v2140 = vunpack.c.h.b16 %v2022
      %v2141 = vunpack.c.l.b16 %v2023
      %v2142 = vunpack.c.h.b16 %v2023
      %v2143 = vunpack.c.l.b16 %v2024
      %v2144 = vunpack.c.h.b16 %v2024
      %v2145 = vunpack.c.l.b16 %v2025
      %v2146 = vunpack.c.h.b16 %v2025
      %v2147 = vunpack.c.l.b16 %v2026
      %v2148 = vunpack.c.h.b16 %v2026
      %v2149 = vunpack.c.l.b16 %v2027
      %v2150 = vunpack.c.h.b16 %v2027
      %v2151 = vunpack.c.l.b16 %v2028
      %v2152 = vunpack.c.h.b16 %v2028
      %v2153 = vunpack.c.l.b16 %v2029
      %v2154 = vunpack.c.h.b16 %v2029
      %v2155 = vunpack.c.l.b16 %v2030
      %v2156 = vunpack.c.h.b16 %v2030
      %v2157 = vunpack.c.l.b16 %v2031
      %v2158 = vunpack.c.h.b16 %v2031
      %v2159 = vunpack.c.l.b16 %v2032
      %v2160 = vunpack.c.h.b16 %v2032
      %v2161 = vunpack.c.l.b16 %v2033
      %v2162 = vunpack.c.h.b16 %v2033
      %v2163 = vunpack.c.l.b16 %v2034
      %v2164 = vunpack.c.h.b16 %v2034
      %v2165 = vunpack.c.l.b16 %v2035
      %v2166 = vunpack.c.h.b16 %v2035
      %v2167 = vunpack.c.l.b16 %v2036
      %v2168 = vunpack.c.h.b16 %v2036
      %v2169 = vunpack.c.l.b16 %v2037
      %v2170 = vunpack.c.h.b16 %v2037
      %v2171 = vunpack.c.l.b16 %v2038
      %v2172 = vunpack.c.h.b16 %v2038
      %v2173 = vunpack.c.l.b16 %v2039
      %v2174 = vunpack.c.h.b16 %v2039
      %v2175 = vunpack.c.l.b16 %v2040
      %v2176 = vunpack.c.h.b16 %v2040
      %v2177 = vunpack.c.l.b16 %v2041
      %v2178 = vunpack.c.h.b16 %v2041
      %v2179 = vunpack.c.l.b16 %v2042
      %v2180 = vunpack.c.h.b16 %v2042
      %v2181 = vunpack.c.l.b16 %v2043
      %v2182 = vunpack.c.h.b16 %v2043
      %v2183 = vunpack.c.l.b16 %v2044
      %v2184 = vunpack.c.h.b16 %v2044
      %v2185 = vunpack.c.l.b16 %v2045
      %v2186 = vunpack.c.h.b16 %v2045
      %v2187 = vunpack.c.l.b16 %v2046
      %v2188 = vunpack.c.h.b16 %v2046
      %v2189 = vunpack.c.l.b16 %v2047
      %v2190 = vunpack.c.h.b16 %v2047
      %v2191 = vunpack.c.l.b16 %v2048
      %v2192 = vunpack.c.h.b16 %v2048
      %v2193 = vpack.c.b16 %v2099, %v2097
      %v2194 = vpack.c.b16 %v2100, %v2098
      %v2195 = vpack.c.b16 %v2103, %v2101
      %v2196 = vpack.c.b16 %v2104, %v2102
      %v2197 = vpack.c.b16 %v2107, %v2105
      %v2198 = vpack.c.b16 %v2108, %v2106
      %v2199 = vpack.c.b16 %v2111, %v2109
      %v2200 = vpack.c.b16 %v2112, %v2110
      %v2201 = vpack.c.b16 %v2115, %v2113
      %v2202 = vpack.c.b16 %v2116, %v2114
      %v2203 = vpack.c.b16 %v2119, %v2117
      %v2204 = vpack.c.b16 %v2120, %v2118
      %v2205 = vpack.c.b16 %v2123, %v2121
      %v2206 = vpack.c.b16 %v2124, %v2122
      %v2207 = vpack.c.b16 %v2127, %v2125
      %v2208 = vpack.c.b16 %v2128, %v2126
      %v2209 = vpack.c.b16 %v2131, %v2129
      %v2210 = vpack.c.b16 %v2132, %v2130
      %v2211 = vpack.c.b16 %v2135, %v2133
      %v2212 = vpack.c.b16 %v2136, %v2134
      %v2213 = vpack.c.b16 %v2139, %v2137
      %v2214 = vpack.c.b16 %v2140, %v2138
      %v2215 = vpack.c.b16 %v2143, %v2141
      %v2216 = vpack.c.b16 %v2144, %v2142
      %v2217 = vpack.c.b16 %v2147, %v2145
      %v2218 = vpack.c.b16 %v2148, %v2146
      %v2219 = vpack.c.b16 %v2151, %v2149
      %v2220 = vpack.c.b16 %v2152, %v2150
      %v2221 = vpack.c.b16 %v2155, %v2153
      %v2222 = vpack.c.b16 %v2156, %v2154
      %v2223 = vpack.c.b16 %v2159, %v2157
      %v2224 = vpack.c.b16 %v2160, %v2158
      %v2225 = vpack.c.b16 %v2163, %v2161
      %v2226 = vpack.c.b16 %v2164, %v2162
      %v2227 = vpack.c.b16 %v2167, %v2165
      %v2228 = vpack.c.b16 %v2168, %v2166
      %v2229 = vpack.c.b16 %v2171, %v2169
      %v2230 = vpack.c.b16 %v2172, %v2170
      %v2231 = vpack.c.b16 %v2175, %v2173
      %v2232 = vpack.c.b16 %v2176, %v2174
      %v2233 = vpack.c.b16 %v2179, %v2177
      %v2234 = vpack.c.b16 %v2180, %v2178
      %v2235 = vpack.c.b16 %v2183, %v2181
      %v2236 = vpack.c.b16 %v2184, %v2182
      %v2237 = vpack.c.b16 %v2187, %v2185
      %v2238 = vpack.c.b16 %v2188, %v2186
      %v2239 = vpack.c.b16 %v2191, %v2189
      %v2240 = vpack.c.b16 %v2192, %v2190
      %2289 = vmatprep.subr.bf16.mxu0 %v2208
      %2290 = vmatpush1.bf16.msra.mxu0 %v2207
      %2291 = vmatprep.subr.bf16.mxu0 %v2206
      %2292 = vmatpush1.bf16.msra.mxu0 %v2205
      %2293 = vmatprep.subr.bf16.mxu0 %v2204
      %2294 = vmatpush1.bf16.msra.mxu0 %v2203
      %2295 = vmatprep.subr.bf16.mxu0 %v2202
      %2296 = vmatpush1.bf16.msra.mxu0 %v2201
      %2297 = vmatprep.subr.bf16.mxu0 %v2200
      %2298 = vmatpush1.bf16.msra.mxu0 %v2199
      %2299 = vmatprep.subr.bf16.mxu0 %v2198
      %2300 = vmatpush1.bf16.msra.mxu0 %v2197
      %2301 = vmatprep.subr.bf16.mxu0 %v2196
      %2302 = vmatpush1.bf16.msra.mxu0 %v2195
      %2303 = vmatprep.subr.bf16.mxu0 %v2194
      %2304 = vmatpush1.bf16.msra.mxu0 %v2193
      %2305 = vmatprep.subr.bf16.mxu0 %v2224
      %2306 = vmatpush2.bf16.msra.mxu0 %v2223
      %2307 = vmatprep.subr.bf16.mxu0 %v2222
      %2308 = vmatpush2.bf16.msra.mxu0 %v2221
      %2309 = vmatprep.subr.bf16.mxu0 %v2220
      %2310 = vmatpush2.bf16.msra.mxu0 %v2219
      %2311 = vmatprep.subr.bf16.mxu0 %v2218
      %2312 = vmatpush2.bf16.msra.mxu0 %v2217
      %2313 = vmatprep.subr.bf16.mxu0 %v2216
      %2314 = vmatpush2.bf16.msra.mxu0 %v2215
      %2315 = vmatprep.subr.bf16.mxu0 %v2214
      %2316 = vmatpush2.bf16.msra.mxu0 %v2213
      %2317 = vmatprep.subr.bf16.mxu0 %v2212
      %2318 = vmatpush2.bf16.msra.mxu0 %v2211
      %2319 = vmatprep.subr.bf16.mxu0 %v2210
      %2320 = vmatpush2.bf16.msra.mxu0 %v2209
      %2321 = vmatprep.mubr.bf16.mxu0 %v515
      %2322 = vmatmul.mubr.bf16.gmra.mxu0 %v506
      %v2323 = vpop.f32.mrf.mxu0
      %v2324 = vadd.f32 0.0, %v2323
      %v2325 = vpop.f32.mrf.mxu0
      %v2326 = vadd.f32 0.0, %v2325
      %v2327 = vpop.f32.mrf.mxu0
      %v2328 = vadd.f32 0.0, %v2327
      %v2329 = vpop.f32.mrf.mxu0
      %v2330 = vadd.f32 0.0, %v2329
      %2331 = vmatprep.mubr.bf16.mxu0 %v516
      %2332 = vmatmul.mubr.bf16.gmra.mxu0 %v507
      %v2333 = vpop.f32.mrf.mxu0
      %v2334 = vadd.f32 0.0, %v2333
      %v2335 = vpop.f32.mrf.mxu0
      %v2336 = vadd.f32 0.0, %v2335
      %v2337 = vpop.f32.mrf.mxu0
      %v2338 = vadd.f32 0.0, %v2337
      %v2339 = vpop.f32.mrf.mxu0
      %v2340 = vadd.f32 0.0, %v2339
      %2341 = vmatprep.mubr.bf16.mxu0 %v517
      %2342 = vmatmul.mubr.bf16.gmra.mxu0 %v508
      %v2343 = vpop.f32.mrf.mxu0
      %v2344 = vadd.f32 0.0, %v2343
      %v2345 = vpop.f32.mrf.mxu0
      %v2346 = vadd.f32 0.0, %v2345
      %v2347 = vpop.f32.mrf.mxu0
      %v2348 = vadd.f32 0.0, %v2347
      %v2349 = vpop.f32.mrf.mxu0
      %v2350 = vadd.f32 0.0, %v2349
      %2351 = vmatprep.mubr.bf16.mxu0 %v518
      %2352 = vmatmul.mubr.bf16.gmra.mxu0 %v509
      %v2353 = vpop.f32.mrf.mxu0
      %v2354 = vadd.f32 0.0, %v2353
      %v2355 = vpop.f32.mrf.mxu0
      %v2356 = vadd.f32 0.0, %v2355
      %v2357 = vpop.f32.mrf.mxu0
      %v2358 = vadd.f32 0.0, %v2357
      %v2359 = vpop.f32.mrf.mxu0
      %v2360 = vadd.f32 0.0, %v2359
      %2361 = vdwg.mxu0
      %2362 = vmatprep.subr.bf16.mxu0 %v2240
      %2363 = vmatpush1.bf16.msra.mxu0 %v2239
      %2364 = vmatprep.subr.bf16.mxu0 %v2238
      %2365 = vmatpush1.bf16.msra.mxu0 %v2237
      %2366 = vmatprep.subr.bf16.mxu0 %v2236
      %2367 = vmatpush1.bf16.msra.mxu0 %v2235
      %2368 = vmatprep.subr.bf16.mxu0 %v2234
      %2369 = vmatpush1.bf16.msra.mxu0 %v2233
      %2370 = vmatprep.subr.bf16.mxu0 %v2232
      %2371 = vmatpush1.bf16.msra.mxu0 %v2231
      %2372 = vmatprep.subr.bf16.mxu0 %v2230
      %2373 = vmatpush1.bf16.msra.mxu0 %v2229
      %2374 = vmatprep.subr.bf16.mxu0 %v2228
      %2375 = vmatpush1.bf16.msra.mxu0 %v2227
      %2376 = vmatprep.subr.bf16.mxu0 %v2226
      %2377 = vmatpush1.bf16.msra.mxu0 %v2225
      %2378 = vmatprep.subr.bf16.mxu0 0
      %2379 = vmatpush2.bf16.msra.mxu0 0
      %2380 = vmatprep.subr.bf16.mxu0 0
      %2381 = vmatpush2.bf16.msra.mxu0 0
      %2382 = vmatprep.subr.bf16.mxu0 0
      %2383 = vmatpush2.bf16.msra.mxu0 0
      %2384 = vmatprep.subr.bf16.mxu0 0
      %2385 = vmatpush2.bf16.msra.mxu0 0
      %2386 = vmatprep.subr.bf16.mxu0 0
      %2387 = vmatpush2.bf16.msra.mxu0 0
      %2388 = vmatprep.subr.bf16.mxu0 0
      %2389 = vmatpush2.bf16.msra.mxu0 0
      %2390 = vmatprep.subr.bf16.mxu0 0
      %2391 = vmatpush2.bf16.msra.mxu0 0
      %2392 = vmatprep.subr.bf16.mxu0 0
      %2393 = vmatpush2.bf16.msra.mxu0 0
      %2394 = vmatprep.mubr.bf16.mxu0 0
      %2395 = vmatmul.mubr.bf16.gmra.mxu0 %v507
      %v2396 = vpop.f32.mrf.mxu0
      %v2397 = vadd.f32 %v2324, %v2396
      %v2398 = vpop.f32.mrf.mxu0
      %v2399 = vadd.f32 %v2326, %v2398
      %v2400 = vpop.f32.mrf.mxu0
      %v2401 = vadd.f32 %v2328, %v2400
      %v2402 = vpop.f32.mrf.mxu0
      %v2403 = vadd.f32 %v2330, %v2402
      %2404 = vmatprep.mubr.bf16.mxu0 0
      %2405 = vmatmul.mubr.bf16.gmra.mxu0 %v508
      %v2406 = vpop.f32.mrf.mxu0
      %v2407 = vadd.f32 %v2334, %v2406
      %v2408 = vpop.f32.mrf.mxu0
      %v2409 = vadd.f32 %v2336, %v2408
      %v2410 = vpop.f32.mrf.mxu0
      %v2411 = vadd.f32 %v2338, %v2410
      %v2412 = vpop.f32.mrf.mxu0
      %v2413 = vadd.f32 %v2340, %v2412
      %2414 = vmatprep.mubr.bf16.mxu0 0
      %2415 = vmatmul.mubr.bf16.gmra.mxu0 %v509
      %v2416 = vpop.f32.mrf.mxu0
      %v2417 = vadd.f32 %v2344, %v2416
      %v2418 = vpop.f32.mrf.mxu0
      %v2419 = vadd.f32 %v2346, %v2418
      %v2420 = vpop.f32.mrf.mxu0
      %v2421 = vadd.f32 %v2348, %v2420
      %v2422 = vpop.f32.mrf.mxu0
      %v2423 = vadd.f32 %v2350, %v2422
      %2424 = vmatprep.mubr.bf16.mxu0 0
      %2425 = vmatmul.mubr.bf16.gmra.mxu0 %v524
      %v2426 = vpop.f32.mrf.mxu0
      %v2427 = vadd.f32 %v2354, %v2426
      %v2428 = vpop.f32.mrf.mxu0
      %v2429 = vadd.f32 %v2356, %v2428
      %v2430 = vpop.f32.mrf.mxu0
      %v2431 = vadd.f32 %v2358, %v2430
      %v2432 = vpop.f32.mrf.mxu0
      %v2433 = vadd.f32 %v2360, %v2432
      %2434 = vdwg.mxu0
      %v2483 = vunpack.c.l.b16 %v1952
      %v2484 = vunpack.c.h.b16 %v1952
      %v2485 = vunpack.c.l.b16 %v1953
      %v2486 = vunpack.c.h.b16 %v1953
      %v2487 = vunpack.c.l.b16 %v1954
      %v2488 = vunpack.c.h.b16 %v1954
      %v2489 = vunpack.c.l.b16 %v1955
      %v2490 = vunpack.c.h.b16 %v1955
      %v2491 = vunpack.c.l.b16 %v1956
      %v2492 = vunpack.c.h.b16 %v1956
      %v2493 = vunpack.c.l.b16 %v1957
      %v2494 = vunpack.c.h.b16 %v1957
      %v2495 = vunpack.c.l.b16 %v1958
      %v2496 = vunpack.c.h.b16 %v1958
      %v2497 = vunpack.c.l.b16 %v1959
      %v2498 = vunpack.c.h.b16 %v1959
      %v2499 = vunpack.c.l.b16 %v1960
      %v2500 = vunpack.c.h.b16 %v1960
      %v2501 = vunpack.c.l.b16 %v1961
      %v2502 = vunpack.c.h.b16 %v1961
      %v2503 = vunpack.c.l.b16 %v1962
      %v2504 = vunpack.c.h.b16 %v1962
      %v2505 = vunpack.c.l.b16 %v1963
      %v2506 = vunpack.c.h.b16 %v1963
      %v2507 = vunpack.c.l.b16 %v1964
      %v2508 = vunpack.c.h.b16 %v1964
      %v2509 = vunpack.c.l.b16 %v1965
      %v2510 = vunpack.c.h.b16 %v1965
      %v2511 = vunpack.c.l.b16 %v1966
      %v2512 = vunpack.c.h.b16 %v1966
      %v2513 = vunpack.c.l.b16 %v1967
      %v2514 = vunpack.c.h.b16 %v1967
      %v2515 = vunpack.c.l.b16 %v1968
      %v2516 = vunpack.c.h.b16 %v1968
      %v2517 = vunpack.c.l.b16 %v1969
      %v2518 = vunpack.c.h.b16 %v1969
      %v2519 = vunpack.c.l.b16 %v1970
      %v2520 = vunpack.c.h.b16 %v1970
      %v2521 = vunpack.c.l.b16 %v1971
      %v2522 = vunpack.c.h.b16 %v1971
      %v2523 = vunpack.c.l.b16 %v1972
      %v2524 = vunpack.c.h.b16 %v1972
      %v2525 = vunpack.c.l.b16 %v1973
      %v2526 = vunpack.c.h.b16 %v1973
      %v2527 = vunpack.c.l.b16 %v1974
      %v2528 = vunpack.c.h.b16 %v1974
      %v2529 = vunpack.c.l.b16 %v1975
      %v2530 = vunpack.c.h.b16 %v1975
      %v2531 = vunpack.c.l.b16 %v1976
      %v2532 = vunpack.c.h.b16 %v1976
      %v2533 = vunpack.c.l.b16 %v1977
      %v2534 = vunpack.c.h.b16 %v1977
      %v2535 = vunpack.c.l.b16 %v1978
      %v2536 = vunpack.c.h.b16 %v1978
      %v2537 = vunpack.c.l.b16 %v1979
      %v2538 = vunpack.c.h.b16 %v1979
      %v2539 = vunpack.c.l.b16 %v1980
      %v2540 = vunpack.c.h.b16 %v1980
      %v2541 = vunpack.c.l.b16 %v1981
      %v2542 = vunpack.c.h.b16 %v1981
      %v2543 = vunpack.c.l.b16 %v1982
      %v2544 = vunpack.c.h.b16 %v1982
      %v2545 = vunpack.c.l.b16 %v1983
      %v2546 = vunpack.c.h.b16 %v1983
      %v2547 = vunpack.c.l.b16 %v1984
      %v2548 = vunpack.c.h.b16 %v1984
      %v2549 = vunpack.c.l.b16 %v1985
      %v2550 = vunpack.c.h.b16 %v1985
      %v2551 = vunpack.c.l.b16 %v1986
      %v2552 = vunpack.c.h.b16 %v1986
      %v2553 = vunpack.c.l.b16 %v1987
      %v2554 = vunpack.c.h.b16 %v1987
      %v2555 = vunpack.c.l.b16 %v1988
      %v2556 = vunpack.c.h.b16 %v1988
      %v2557 = vunpack.c.l.b16 %v1989
      %v2558 = vunpack.c.h.b16 %v1989
      %v2559 = vunpack.c.l.b16 %v1990
      %v2560 = vunpack.c.h.b16 %v1990
      %v2561 = vunpack.c.l.b16 %v1991
      %v2562 = vunpack.c.h.b16 %v1991
      %v2563 = vunpack.c.l.b16 %v1992
      %v2564 = vunpack.c.h.b16 %v1992
      %v2565 = vunpack.c.l.b16 %v1993
      %v2566 = vunpack.c.h.b16 %v1993
      %v2567 = vunpack.c.l.b16 %v1994
      %v2568 = vunpack.c.h.b16 %v1994
      %v2569 = vunpack.c.l.b16 %v1995
      %v2570 = vunpack.c.h.b16 %v1995
      %v2571 = vunpack.c.l.b16 %v1996
      %v2572 = vunpack.c.h.b16 %v1996
      %v2573 = vunpack.c.l.b16 %v1997
      %v2574 = vunpack.c.h.b16 %v1997
      %v2575 = vunpack.c.l.b16 %v1998
      %v2576 = vunpack.c.h.b16 %v1998
      %v2577 = vunpack.c.l.b16 %v1999
      %v2578 = vunpack.c.h.b16 %v1999
      %v2579 = vpack.c.b16 %v2485, %v2483
      %v2580 = vpack.c.b16 %v2486, %v2484
      %v2581 = vpack.c.b16 %v2489, %v2487
      %v2582 = vpack.c.b16 %v2490, %v2488
      %v2583 = vpack.c.b16 %v2493, %v2491
      %v2584 = vpack.c.b16 %v2494, %v2492
      %v2585 = vpack.c.b16 %v2497, %v2495
      %v2586 = vpack.c.b16 %v2498, %v2496
      %v2587 = vpack.c.b16 %v2501, %v2499
      %v2588 = vpack.c.b16 %v2502, %v2500
      %v2589 = vpack.c.b16 %v2505, %v2503
      %v2590 = vpack.c.b16 %v2506, %v2504
      %v2591 = vpack.c.b16 %v2509, %v2507
      %v2592 = vpack.c.b16 %v2510, %v2508
      %v2593 = vpack.c.b16 %v2513, %v2511
      %v2594 = vpack.c.b16 %v2514, %v2512
      %v2595 = vpack.c.b16 %v2517, %v2515
      %v2596 = vpack.c.b16 %v2518, %v2516
      %v2597 = vpack.c.b16 %v2521, %v2519
      %v2598 = vpack.c.b16 %v2522, %v2520
      %v2599 = vpack.c.b16 %v2525, %v2523
      %v2600 = vpack.c.b16 %v2526, %v2524
      %v2601 = vpack.c.b16 %v2529, %v2527
      %v2602 = vpack.c.b16 %v2530, %v2528
      %v2603 = vpack.c.b16 %v2533, %v2531
      %v2604 = vpack.c.b16 %v2534, %v2532
      %v2605 = vpack.c.b16 %v2537, %v2535
      %v2606 = vpack.c.b16 %v2538, %v2536
      %v2607 = vpack.c.b16 %v2541, %v2539
      %v2608 = vpack.c.b16 %v2542, %v2540
      %v2609 = vpack.c.b16 %v2545, %v2543
      %v2610 = vpack.c.b16 %v2546, %v2544
      %v2611 = vpack.c.b16 %v2549, %v2547
      %v2612 = vpack.c.b16 %v2550, %v2548
      %v2613 = vpack.c.b16 %v2553, %v2551
      %v2614 = vpack.c.b16 %v2554, %v2552
      %v2615 = vpack.c.b16 %v2557, %v2555
      %v2616 = vpack.c.b16 %v2558, %v2556
      %v2617 = vpack.c.b16 %v2561, %v2559
      %v2618 = vpack.c.b16 %v2562, %v2560
      %v2619 = vpack.c.b16 %v2565, %v2563
      %v2620 = vpack.c.b16 %v2566, %v2564
      %v2621 = vpack.c.b16 %v2569, %v2567
      %v2622 = vpack.c.b16 %v2570, %v2568
      %v2623 = vpack.c.b16 %v2573, %v2571
      %v2624 = vpack.c.b16 %v2574, %v2572
      %v2625 = vpack.c.b16 %v2577, %v2575
      %v2626 = vpack.c.b16 %v2578, %v2576
      %2675 = vmatprep.subr.bf16.mxu0 %v2594
      %2676 = vmatpush1.bf16.msra.mxu0 %v2593
      %2677 = vmatprep.subr.bf16.mxu0 %v2592
      %2678 = vmatpush1.bf16.msra.mxu0 %v2591
      %2679 = vmatprep.subr.bf16.mxu0 %v2590
      %2680 = vmatpush1.bf16.msra.mxu0 %v2589
      %2681 = vmatprep.subr.bf16.mxu0 %v2588
      %2682 = vmatpush1.bf16.msra.mxu0 %v2587
      %2683 = vmatprep.subr.bf16.mxu0 %v2586
      %2684 = vmatpush1.bf16.msra.mxu0 %v2585
      %2685 = vmatprep.subr.bf16.mxu0 %v2584
      %2686 = vmatpush1.bf16.msra.mxu0 %v2583
      %2687 = vmatprep.subr.bf16.mxu0 %v2582
      %2688 = vmatpush1.bf16.msra.mxu0 %v2581
      %2689 = vmatprep.subr.bf16.mxu0 %v2580
      %2690 = vmatpush1.bf16.msra.mxu0 %v2579
      %2691 = vmatprep.subr.bf16.mxu0 %v2610
      %2692 = vmatpush2.bf16.msra.mxu0 %v2609
      %2693 = vmatprep.subr.bf16.mxu0 %v2608
      %2694 = vmatpush2.bf16.msra.mxu0 %v2607
      %2695 = vmatprep.subr.bf16.mxu0 %v2606
      %2696 = vmatpush2.bf16.msra.mxu0 %v2605
      %2697 = vmatprep.subr.bf16.mxu0 %v2604
      %2698 = vmatpush2.bf16.msra.mxu0 %v2603
      %2699 = vmatprep.subr.bf16.mxu0 %v2602
      %2700 = vmatpush2.bf16.msra.mxu0 %v2601
      %2701 = vmatprep.subr.bf16.mxu0 %v2600
      %2702 = vmatpush2.bf16.msra.mxu0 %v2599
      %2703 = vmatprep.subr.bf16.mxu0 %v2598
      %2704 = vmatpush2.bf16.msra.mxu0 %v2597
      %2705 = vmatprep.subr.bf16.mxu0 %v2596
      %2706 = vmatpush2.bf16.msra.mxu0 %v2595
      %2707 = vmatprep.mubr.bf16.mxu0 %v434
      %2708 = vmatmul.mubr.bf16.gmra.mxu0 %v425
      %v2709 = vpop.f32.mrf.mxu0
      %v2710 = vadd.f32 %v2397, %v2709
      %v2711 = vpop.f32.mrf.mxu0
      %v2712 = vadd.f32 %v2399, %v2711
      %v2713 = vpop.f32.mrf.mxu0
      %v2714 = vadd.f32 %v2401, %v2713
      %v2715 = vpop.f32.mrf.mxu0
      %v2716 = vadd.f32 %v2403, %v2715
      %2717 = vmatprep.mubr.bf16.mxu0 %v435
      %2718 = vmatmul.mubr.bf16.gmra.mxu0 %v426
      %v2719 = vpop.f32.mrf.mxu0
      %v2720 = vadd.f32 %v2407, %v2719
      %v2721 = vpop.f32.mrf.mxu0
      %v2722 = vadd.f32 %v2409, %v2721
      %v2723 = vpop.f32.mrf.mxu0
      %v2724 = vadd.f32 %v2411, %v2723
      %v2725 = vpop.f32.mrf.mxu0
      %v2726 = vadd.f32 %v2413, %v2725
      %2727 = vmatprep.mubr.bf16.mxu0 %v436
      %2728 = vmatmul.mubr.bf16.gmra.mxu0 %v427
      %v2729 = vpop.f32.mrf.mxu0
      %v2730 = vadd.f32 %v2417, %v2729
      %v2731 = vpop.f32.mrf.mxu0
      %v2732 = vadd.f32 %v2419, %v2731
      %v2733 = vpop.f32.mrf.mxu0
      %v2734 = vadd.f32 %v2421, %v2733
      %v2735 = vpop.f32.mrf.mxu0
      %v2736 = vadd.f32 %v2423, %v2735
      %2737 = vmatprep.mubr.bf16.mxu0 %v437
      %2738 = vmatmul.mubr.bf16.gmra.mxu0 %v428
      %v2739 = vpop.f32.mrf.mxu0
      %v2740 = vadd.f32 %v2427, %v2739
      %v2741 = vpop.f32.mrf.mxu0
      %v2742 = vadd.f32 %v2429, %v2741
      %v2743 = vpop.f32.mrf.mxu0
      %v2744 = vadd.f32 %v2431, %v2743
      %v2745 = vpop.f32.mrf.mxu0
      %v2746 = vadd.f32 %v2433, %v2745
      %2747 = vdwg.mxu0
      %2748 = vmatprep.subr.bf16.mxu0 %v2626
      %2749 = vmatpush1.bf16.msra.mxu0 %v2625
      %2750 = vmatprep.subr.bf16.mxu0 %v2624
      %2751 = vmatpush1.bf16.msra.mxu0 %v2623
      %2752 = vmatprep.subr.bf16.mxu0 %v2622
      %2753 = vmatpush1.bf16.msra.mxu0 %v2621
      %2754 = vmatprep.subr.bf16.mxu0 %v2620
      %2755 = vmatpush1.bf16.msra.mxu0 %v2619
      %2756 = vmatprep.subr.bf16.mxu0 %v2618
      %2757 = vmatpush1.bf16.msra.mxu0 %v2617
      %2758 = vmatprep.subr.bf16.mxu0 %v2616
      %2759 = vmatpush1.bf16.msra.mxu0 %v2615
      %2760 = vmatprep.subr.bf16.mxu0 %v2614
      %2761 = vmatpush1.bf16.msra.mxu0 %v2613
      %2762 = vmatprep.subr.bf16.mxu0 %v2612
      %2763 = vmatpush1.bf16.msra.mxu0 %v2611
      %2764 = vmatprep.subr.bf16.mxu0 0
      %2765 = vmatpush2.bf16.msra.mxu0 0
      %2766 = vmatprep.subr.bf16.mxu0 0
      %2767 = vmatpush2.bf16.msra.mxu0 0
      %2768 = vmatprep.subr.bf16.mxu0 0
      %2769 = vmatpush2.bf16.msra.mxu0 0
      %2770 = vmatprep.subr.bf16.mxu0 0
      %2771 = vmatpush2.bf16.msra.mxu0 0
      %2772 = vmatprep.subr.bf16.mxu0 0
      %2773 = vmatpush2.bf16.msra.mxu0 0
      %2774 = vmatprep.subr.bf16.mxu0 0
      %2775 = vmatpush2.bf16.msra.mxu0 0
      %2776 = vmatprep.subr.bf16.mxu0 0
      %2777 = vmatpush2.bf16.msra.mxu0 0
      %2778 = vmatprep.subr.bf16.mxu0 0
      %2779 = vmatpush2.bf16.msra.mxu0 0
      %2780 = vmatprep.mubr.bf16.mxu0 0
      %2781 = vmatmul.mubr.bf16.gmra.mxu0 %v426
      %v2782 = vpop.f32.mrf.mxu0
      %v2783 = vadd.f32 %v2710, %v2782
      %v2784 = vpop.f32.mrf.mxu0
      %v2785 = vadd.f32 %v2712, %v2784
      %v2786 = vpop.f32.mrf.mxu0
      %v2787 = vadd.f32 %v2714, %v2786
      %v2788 = vpop.f32.mrf.mxu0
      %v2789 = vadd.f32 %v2716, %v2788
      %2790 = vmatprep.mubr.bf16.mxu0 0
      %2791 = vmatmul.mubr.bf16.gmra.mxu0 %v427
      %v2792 = vpop.f32.mrf.mxu0
      %v2793 = vadd.f32 %v2720, %v2792
      %v2794 = vpop.f32.mrf.mxu0
      %v2795 = vadd.f32 %v2722, %v2794
      %v2796 = vpop.f32.mrf.mxu0
      %v2797 = vadd.f32 %v2724, %v2796
      %v2798 = vpop.f32.mrf.mxu0
      %v2799 = vadd.f32 %v2726, %v2798
      %2800 = vmatprep.mubr.bf16.mxu0 0
      %2801 = vmatmul.mubr.bf16.gmra.mxu0 %v428
      %v2802 = vpop.f32.mrf.mxu0
      %v2803 = vadd.f32 %v2730, %v2802
      %v2804 = vpop.f32.mrf.mxu0
      %v2805 = vadd.f32 %v2732, %v2804
      %v2806 = vpop.f32.mrf.mxu0
      %v2807 = vadd.f32 %v2734, %v2806
      %v2808 = vpop.f32.mrf.mxu0
      %v2809 = vadd.f32 %v2736, %v2808
      %2810 = vmatprep.mubr.bf16.mxu0 0
      %2811 = vmatmul.mubr.bf16.gmra.mxu0 %v443
      %v2812 = vpop.f32.mrf.mxu0
      %v2813 = vadd.f32 %v2740, %v2812
      %v2814 = vpop.f32.mrf.mxu0
      %v2815 = vadd.f32 %v2742, %v2814
      %v2816 = vpop.f32.mrf.mxu0
      %v2817 = vadd.f32 %v2744, %v2816
      %v2818 = vpop.f32.mrf.mxu0
      %v2819 = vadd.f32 %v2746, %v2818
      %2820 = vdwg.mxu0
      %v2821 = vpack.c.bf16 %v2783, %v2783
      %v2822 = vpack.c.bf16 %v2787, %v2787
      %v2823 = vpack.c.bf16 %v2793, %v2793
      %v2824 = vpack.c.bf16 %v2797, %v2797
      %v2825 = vpack.c.bf16 %v2803, %v2803
      %v2826 = vpack.c.bf16 %v2807, %v2807
      %v2827 = vpack.c.bf16 %v2813, %v2813
      %v2828 = vpack.c.bf16 %v2817, %v2817
      %s2829 = scalar_lea.vmem %s208, 32
      %2830 = vst [vmem:[%s2829] sm:$0xf] %v2821
      %2831 = vst [vmem:[%s2829 + $0x4] sm:$0xf] %v2822
      %2832 = vst [vmem:[%s2829 + $0x8] sm:$0xf] %v2823
      %2833 = vst [vmem:[%s2829 + $0xc] sm:$0xf] %v2824
      %2834 = vst [vmem:[%s2829 + $0x10] sm:$0xf] %v2825
      %2835 = vst [vmem:[%s2829 + $0x14] sm:$0xf] %v2826
      %2836 = vst [vmem:[%s2829 + $0x18] sm:$0xf] %v2827
      %2837 = vst [vmem:[%s2829 + $0x1c] sm:$0xf] %v2828
      %v2838 = vadd.f32 %v2783, %v2787
      %v2839 = vadd.f32 %v2838, %v2793
      %v2840 = vadd.f32 %v2839, %v2797
      %v2841 = vadd.f32 %v2840, %v2803
      %v2842 = vadd.f32 %v2841, %v2807
      %v2843 = vadd.f32 %v2842, %v2813
      %v2844 = vadd.f32 %v2843, %v2817
      %v2845 = vrot.slane %v2844, 4
      %v2846 = vadd.f32 %v2844, %v2845
      %v2847 = vrot.slane %v2846, 2
      %v2848 = vadd.f32 %v2846, %v2847
      %v2849 = vrot.slane %v2848, 1
      %v2850 = vadd.f32 %v2848, %v2849
      %v2851 = vadd.f32 %v1928, %v2850
      %v2852 = vmul.f32 %v2783, %v2783
      %v2853 = vmul.f32 %v2787, %v2787
      %v2854 = vmul.f32 %v2793, %v2793
      %v2855 = vmul.f32 %v2797, %v2797
      %v2856 = vmul.f32 %v2803, %v2803
      %v2857 = vmul.f32 %v2807, %v2807
      %v2858 = vmul.f32 %v2813, %v2813
      %v2859 = vmul.f32 %v2817, %v2817
      %v2860 = vadd.f32 %v2852, %v2853
      %v2861 = vadd.f32 %v2860, %v2854
      %v2862 = vadd.f32 %v2861, %v2855
      %v2863 = vadd.f32 %v2862, %v2856
      %v2864 = vadd.f32 %v2863, %v2857
      %v2865 = vadd.f32 %v2864, %v2858
      %v2866 = vadd.f32 %v2865, %v2859
      %v2867 = vrot.slane %v2866, 4
      %v2868 = vadd.f32 %v2866, %v2867
      %v2869 = vrot.slane %v2868, 2
      %v2870 = vadd.f32 %v2868, %v2869
      %v2871 = vrot.slane %v2870, 1
      %v2872 = vadd.f32 %v2870, %v2871
      %v2873 = vadd.f32 %v1950, %v2872
      %v2874 = vpack.c.bf16 %v2785, %v2785
      %v2875 = vpack.c.bf16 %v2789, %v2789
      %v2876 = vpack.c.bf16 %v2795, %v2795
      %v2877 = vpack.c.bf16 %v2799, %v2799
      %v2878 = vpack.c.bf16 %v2805, %v2805
      %v2879 = vpack.c.bf16 %v2809, %v2809
      %v2880 = vpack.c.bf16 %v2815, %v2815
      %v2881 = vpack.c.bf16 %v2819, %v2819
      %s2882 = scalar_lea.vmem %s208, 96
      %2883 = vst [vmem:[%s2882] sm:$0xf] %v2874
      %2884 = vst [vmem:[%s2882 + $0x4] sm:$0xf] %v2875
      %2885 = vst [vmem:[%s2882 + $0x8] sm:$0xf] %v2876
      %2886 = vst [vmem:[%s2882 + $0xc] sm:$0xf] %v2877
      %2887 = vst [vmem:[%s2882 + $0x10] sm:$0xf] %v2878
      %2888 = vst [vmem:[%s2882 + $0x14] sm:$0xf] %v2879
      %2889 = vst [vmem:[%s2882 + $0x18] sm:$0xf] %v2880
      %2890 = vst [vmem:[%s2882 + $0x1c] sm:$0xf] %v2881
      %v2891 = vadd.f32 %v2785, %v2789
      %v2892 = vadd.f32 %v2891, %v2795
      %v2893 = vadd.f32 %v2892, %v2799
      %v2894 = vadd.f32 %v2893, %v2805
      %v2895 = vadd.f32 %v2894, %v2809
      %v2896 = vadd.f32 %v2895, %v2815
      %v2897 = vadd.f32 %v2896, %v2819
      %v2898 = vrot.slane %v2897, 4
      %v2899 = vadd.f32 %v2897, %v2898
      %v2900 = vrot.slane %v2899, 2
      %v2901 = vadd.f32 %v2899, %v2900
      %v2902 = vrot.slane %v2901, 1
      %v2903 = vadd.f32 %v2901, %v2902
      %v2904 = vadd.f32 %v2851, %v2903
      %v2905 = vmul.f32 %v2785, %v2785
      %v2906 = vmul.f32 %v2789, %v2789
      %v2907 = vmul.f32 %v2795, %v2795
      %v2908 = vmul.f32 %v2799, %v2799
      %v2909 = vmul.f32 %v2805, %v2805
      %v2910 = vmul.f32 %v2809, %v2809
      %v2911 = vmul.f32 %v2815, %v2815
      %v2912 = vmul.f32 %v2819, %v2819
      %v2913 = vadd.f32 %v2905, %v2906
      %v2914 = vadd.f32 %v2913, %v2907
      %v2915 = vadd.f32 %v2914, %v2908
      %v2916 = vadd.f32 %v2915, %v2909
      %v2917 = vadd.f32 %v2916, %v2910
      %v2918 = vadd.f32 %v2917, %v2911
      %v2919 = vadd.f32 %v2918, %v2912
      %v2920 = vrot.slane %v2919, 4
      %v2921 = vadd.f32 %v2919, %v2920
      %v2922 = vrot.slane %v2921, 2
      %v2923 = vadd.f32 %v2921, %v2922
      %v2924 = vrot.slane %v2923, 1
      %v2925 = vadd.f32 %v2923, %v2924
      %v2926 = vadd.f32 %v2873, %v2925
      %2927 = vst [vmem:[%s211] sm:$0x1] %v2904
      %2928 = vst [vmem:[%s214] sm:$0x1] %v2926
      %p2929 = scmp.lt.s32.totalorder %s16, 1
      %s2930 = scalar_select %p2929, %s16, 1
      %s2931 = smul.addr %s2930, 32
      %s2932 = smul.addr %s2931, 4
      %s2933 = scalar_lea.vmem %s2, %s2932
      %p2934 = scmp.lt.s32.totalorder %s16, 1
      %s2935 = scalar_select %p2934, %s16, 1
      %s2936 = scalar_lea.vmem %s3, %s2935
      %p2937 = scmp.lt.s32.totalorder %s16, 1
      %s2938 = scalar_select %p2937, %s16, 1
      %s2939 = scalar_lea.vmem %s4, %s2938
      // Predicated region
      $region29: #{group9_forward.2} parent=27 // pred_check
        %p2940 = pneg %p81
      $region30: #{group9_forward.2} parent=27 // pred_check_branch
        %2942 = sbr.rel (%p2940) target = $region32
      $region31: #{group9_forward.2} parent=27 // pred_region
        _
      $region32: #{group9_forward.2} parent=27 // pred_fallthru
        _
      // Predicated region
      $region33: #{group9_forward.2} parent=27 // pred_check
        %p2943 = pneg %p107
      $region34: #{group9_forward.2} parent=27 // pred_check_branch
        %2945 = sbr.rel (%p2943) target = $region36
      $region35: #{group9_forward.2} parent=27 // pred_region
        _
      $region36: #{group9_forward.2} parent=27 // pred_fallthru
        _
      // Predicated region
      $region37: #{group9_forward.2} parent=27 // pred_check
        %p2946 = pneg %p133
      $region38: #{group9_forward.2} parent=27 // pred_check_branch
        %2948 = sbr.rel (%p2946) target = $region40
      $region39: #{group9_forward.2} parent=27 // pred_region
        _
      $region40: #{group9_forward.2} parent=27 // pred_fallthru
        _
    $region28: #{group9_forward.2} parent=5 // pred_fallthru
      _
    %p2949 = scmp.le.s32.totalorder 2, %s11
    // Predicated region
    $region41: #{group9_forward.2} parent=5 // pred_check
      %p2950 = pneg %p2949
    $region42: #{group9_forward.2} parent=5 // pred_check_branch
      %2952 = sbr.rel (%p2950) target = $region44
    $region43: #{group9_forward.2} parent=5 // pred_region
      %s2953 = ssub.s32 %s11, 2
      // Predicated region
      $region45: #{group9_forward.2} parent=43 // pred_check
        %p2954 = pneg %p87
      $region46: #{group9_forward.2} parent=43 // pred_check_branch
        %2956 = sbr.rel (%p2954) target = $region48
      $region47: #{group9_forward.2} parent=43 // pred_region
        %p2957 = scmp.lt.s32.totalorder %s17, 1
        %s2958 = scalar_select %p2957, %s17, 1
        %s2959 = smul.addr %s2958, 32
        %s2960 = smul.addr %s2959, 4
        %s2961 = scalar_lea.vmem %s2, %s2960
      $region48: #{group9_forward.2} parent=43 // pred_fallthru
        _
      // Predicated region
      $region49: #{group9_forward.2} parent=43 // pred_check
        %p2962 = pneg %p113
      $region50: #{group9_forward.2} parent=43 // pred_check_branch
        %2964 = sbr.rel (%p2962) target = $region52
      $region51: #{group9_forward.2} parent=43 // pred_region
        %p2965 = scmp.lt.s32.totalorder %s17, 1
        %s2966 = scalar_select %p2965, %s17, 1
        %s2967 = scalar_lea.vmem %s3, %s2966
      $region52: #{group9_forward.2} parent=43 // pred_fallthru
        _
      // Predicated region
      $region53: #{group9_forward.2} parent=43 // pred_check
        %p2968 = pneg %p139
      $region54: #{group9_forward.2} parent=43 // pred_check_branch
        %2970 = sbr.rel (%p2968) target = $region56
      $region55: #{group9_forward.2} parent=43 // pred_region
        %p2971 = scmp.lt.s32.totalorder %s17, 1
        %s2972 = scalar_select %p2971, %s17, 1
        %s2973 = scalar_lea.vmem %s4, %s2972
      $region56: #{group9_forward.2} parent=43 // pred_fallthru
        _
    $region44: #{group9_forward.2} parent=5 // pred_fallthru
      _
  $region6: #{group9_forward.2} parent=0 // loop_footer
    %s15 = sadd.s32 1, %s11
  $region7: #{group9_forward.2} parent=0 // loop_footer_branch
    %10 = sbr.rel target = $region3
  $region8: #{group9_forward.2} parent=0 // loop_exit
    _

// kernel: group9_forward.3
$region0: #{group9_forward.3}
  #allocation0 [shape = 'u32[]', space=smem, size = 0x4, offset = 0x4, fixed_abs, tag = 'smem constant byte address 0x4 - core index']
  #allocation1 [shape = 'u32[144,128]{1,0:T(1,128)}', space=vmem, size = 0x12000, scoped, tag = 'internal scratch']
  %s0 = inlined_call_operand.vmem [shape: bf16[2,4,8,8,128], index: 0, kind: input, shape index: {}]
  %s1 = inlined_call_operand.vmem [shape: f32[1,128], index: 1, kind: input, shape index: {}]
  %s2 = inlined_call_operand.vmem [shape: f32[1,128], index: 2, kind: input, shape index: {}]
  %s3 = inlined_call_operand.vmem [shape: f32[16,16], index: 3, kind: input, shape index: {}]
  %s4 = inlined_call_operand.vmem [shape: f32[2,128,8,32], index: 4, kind: output, shape index: {}]
  %s5 = sld [smem:[#allocation0]]
  $region49: #{group9_forward.3} parent=0
    _
  %s7 = ssub.s32 1, %s5
  %s8 = scalar_select 0, %s7, %s5
  loop: start=0, step=1, limit=4
  $region2: #{group9_forward.3} parent=0 // loop_pre_header
    _
  $region3: #{group9_forward.3} parent=0 // loop_header
    %s10 = sphi 0, %s14
    %p11 = scmp.ge.s32.totalorder %s10, 4
    %s17 = sphi 0, %s29
    %s18 = sphi 0, %s25
    %s19 = sphi 0, %s17
    %s20 = sphi 0, %s18
    %s21 = sphi 0, %s19
    %s22 = sphi 0, %s20
    %s34 = sphi 0, %s36
    %s37 = sphi 0, %s34
    %s38 = sphi 0, %s37
    %s54 = sphi 0, %s38
    %s58 = sphi 0, %s58
    %s60 = sphi 0, %s58
    %s61 = sphi 0, %s60
    %s75 = sphi 0, %s61
    %s79 = sphi 0, %s79
    %s81 = sphi 0, %s79
    %s82 = sphi 0, %s81
    %s96 = sphi 0, %s82
    %s100 = sphi 0, %s100
    %s102 = sphi 0, %s100
    %s103 = sphi 0, %s102
    %s117 = sphi 0, %s103
    %s125 = sphi 0, %s127
    %s128 = sphi 0, %s125
    %s129 = sphi 0, %s128
    %s145 = sphi 0, %s129
  $region4: #{group9_forward.3} parent=0 // loop_header_branch
    %13 = sbr.rel (%p11) target = $region8
  $region5: #{group9_forward.3} parent=0 // loop_body
    %s15 = ssub.s32 %s10, 1
    %s16 = ssub.s32 %s10, 2
    %s23 = sadd.s32 1, %s18
    %p24 = scmp.ge.s32.totalorder %s23, 1
    %s25 = scalar_select %p24, 0, %s23
    %s26 = sadd.s32 1, %s17
    %s27 = scalar_select %p24, %s26, %s17
    %p28 = scmp.ge.s32.totalorder %s27, 2
    %s29 = scalar_select %p28, 0, %s27
    %s30 = ssub.s32 %s17, %s29
    %s31 = ssub.s32 %s18, %s25
    %s32 = sor.u32 %s30, %s31
    %p33 = scmp.eq.s32.totalorder %s32, 0
    %s35 = sadd.s32 %s34, 1
    %s36 = scalar_select %p33, %s34, %s35
    %p39 = pneg %p33
    %p40 = scmp.eq.s32.totalorder %s10, 1
    %p41 = por %p39, %p40
    %p42 = scmp.ne.s32.totalorder %s34, %s37
    %p43 = scmp.eq.s32.totalorder %s10, 0
    %p44 = por %p42, %p43
    %p45 = scmp.ne.s32.totalorder %s34, %s37
    %p46 = scmp.eq.s32.totalorder %s15, 1
    %p47 = por %p45, %p46
    %p48 = scmp.ne.s32.totalorder %s37, %s38
    %p49 = scmp.eq.s32.totalorder %s15, 0
    %p50 = por %p48, %p49
    %p51 = scmp.ne.s32.totalorder %s37, %s38
    %p52 = scmp.eq.s32.totalorder %s16, 1
    %p53 = por %p51, %p52
    %p55 = scmp.ne.s32.totalorder %s38, %s54
    %p56 = scmp.eq.s32.totalorder %s16, 0
    %p57 = por %p55, %p56
    %s59 = sadd.s32 %s58, 1
    %p62 = scmp.eq.s32.totalorder %s10, 1
    %p63 = scmp.ne.s32.totalorder %s58, %s60
    %p64 = scmp.eq.s32.totalorder %s10, 0
    %p65 = por %p63, %p64
    %p66 = scmp.ne.s32.totalorder %s58, %s60
    %p67 = scmp.eq.s32.totalorder %s15, 1
    %p68 = por %p66, %p67
    %p69 = scmp.ne.s32.totalorder %s60, %s61
    %p70 = scmp.eq.s32.totalorder %s15, 0
    %p71 = por %p69, %p70
    %p72 = scmp.ne.s32.totalorder %s60, %s61
    %p73 = scmp.eq.s32.totalorder %s16, 1
    %p74 = por %p72, %p73
    %p76 = scmp.ne.s32.totalorder %s61, %s75
    %p77 = scmp.eq.s32.totalorder %s16, 0
    %p78 = por %p76, %p77
    %s80 = sadd.s32 %s79, 1
    %p83 = scmp.eq.s32.totalorder %s10, 1
    %p84 = scmp.ne.s32.totalorder %s79, %s81
    %p85 = scmp.eq.s32.totalorder %s10, 0
    %p86 = por %p84, %p85
    %p87 = scmp.ne.s32.totalorder %s79, %s81
    %p88 = scmp.eq.s32.totalorder %s15, 1
    %p89 = por %p87, %p88
    %p90 = scmp.ne.s32.totalorder %s81, %s82
    %p91 = scmp.eq.s32.totalorder %s15, 0
    %p92 = por %p90, %p91
    %p93 = scmp.ne.s32.totalorder %s81, %s82
    %p94 = scmp.eq.s32.totalorder %s16, 1
    %p95 = por %p93, %p94
    %p97 = scmp.ne.s32.totalorder %s82, %s96
    %p98 = scmp.eq.s32.totalorder %s16, 0
    %p99 = por %p97, %p98
    %s101 = sadd.s32 %s100, 1
    %p104 = scmp.eq.s32.totalorder %s10, 1
    %p105 = scmp.ne.s32.totalorder %s100, %s102
    %p106 = scmp.eq.s32.totalorder %s10, 0
    %p107 = por %p105, %p106
    %p108 = scmp.ne.s32.totalorder %s100, %s102
    %p109 = scmp.eq.s32.totalorder %s15, 1
    %p110 = por %p108, %p109
    %p111 = scmp.ne.s32.totalorder %s102, %s103
    %p112 = scmp.eq.s32.totalorder %s15, 0
    %p113 = por %p111, %p112
    %p114 = scmp.ne.s32.totalorder %s102, %s103
    %p115 = scmp.eq.s32.totalorder %s16, 1
    %p116 = por %p114, %p115
    %p118 = scmp.ne.s32.totalorder %s103, %s117
    %p119 = scmp.eq.s32.totalorder %s16, 0
    %p120 = por %p118, %p119
    %s121 = ssub.s32 %s17, %s29
    %s122 = ssub.s32 %s18, %s25
    %s123 = sor.u32 %s121, %s122
    %p124 = scmp.eq.s32.totalorder %s123, 0
    %s126 = sadd.s32 %s125, 1
    %s127 = scalar_select %p124, %s125, %s126
    %p130 = pneg %p124
    %p131 = scmp.eq.s32.totalorder %s10, 1
    %p132 = por %p130, %p131
    %p133 = scmp.ne.s32.totalorder %s125, %s128
    %p134 = scmp.eq.s32.totalorder %s10, 0
    %p135 = por %p133, %p134
    %p136 = scmp.ne.s32.totalorder %s125, %s128
    %p137 = scmp.eq.s32.totalorder %s15, 1
    %p138 = por %p136, %p137
    %p139 = scmp.ne.s32.totalorder %s128, %s129
    %p140 = scmp.eq.s32.totalorder %s15, 0
    %p141 = por %p139, %p140
    %p142 = scmp.ne.s32.totalorder %s128, %s129
    %p143 = scmp.eq.s32.totalorder %s16, 1
    %p144 = por %p142, %p143
    %p146 = scmp.ne.s32.totalorder %s129, %s145
    %p147 = scmp.eq.s32.totalorder %s16, 0
    %p148 = por %p146, %p147
    %p149 = scmp.le.s32.totalorder 1, %s10
    %p150 = scmp.lt.s32.totalorder %s10, 3
    %p151 = pnand %p149, %p150
    %p152 = pneg %p151
    // Predicated region
    $region9: #{group9_forward.3} parent=5 // pred_check
      _
    $region10: #{group9_forward.3} parent=5 // pred_check_branch
      %154 = sbr.rel (%p151) target = $region12
    $region11: #{group9_forward.3} parent=5 // pred_region
      %s155 = ssub.s32 %s10, 1
      // Predicated region
      $region13: #{group9_forward.3} parent=11 // pred_check
        %p156 = pneg %p71
      $region14: #{group9_forward.3} parent=11 // pred_check_branch
        %158 = sbr.rel (%p156) target = $region16
      $region15: #{group9_forward.3} parent=11 // pred_region
        _
      $region16: #{group9_forward.3} parent=11 // pred_fallthru
        _
      // Predicated region
      $region17: #{group9_forward.3} parent=11 // pred_check
        %p159 = pneg %p92
      $region18: #{group9_forward.3} parent=11 // pred_check_branch
        %161 = sbr.rel (%p159) target = $region20
      $region19: #{group9_forward.3} parent=11 // pred_region
        _
      $region20: #{group9_forward.3} parent=11 // pred_fallthru
        _
      // Predicated region
      $region21: #{group9_forward.3} parent=11 // pred_check
        %p162 = pneg %p113
      $region22: #{group9_forward.3} parent=11 // pred_check_branch
        %164 = sbr.rel (%p162) target = $region24
      $region23: #{group9_forward.3} parent=11 // pred_region
        _
      $region24: #{group9_forward.3} parent=11 // pred_fallthru
        _
    $region12: #{group9_forward.3} parent=5 // pred_fallthru
      _
    %p165 = scmp.lt.s32.totalorder %s10, 2
    // Predicated region
    $region25: #{group9_forward.3} parent=5 // pred_check
      %p166 = pneg %p165
    $region26: #{group9_forward.3} parent=5 // pred_check_branch
      %168 = sbr.rel (%p166) target = $region28
    $region27: #{group9_forward.3} parent=5 // pred_region
      // Predicated region
      $region29: #{group9_forward.3} parent=27 // pred_check
        %p169 = pneg %p44
      $region30: #{group9_forward.3} parent=27 // pred_check_branch
        %171 = sbr.rel (%p169) target = $region32
      $region31: #{group9_forward.3} parent=27 // pred_region
        %s172 = smul.u32 8, %s18
        %p173 = scmp.lt.s32.totalorder %s17, 1
        %s174 = scalar_select %p173, %s17, 1
        %p175 = scmp.lt.s32.totalorder %s172, 7
        %s176 = scalar_select %p175, %s172, 7
        %s177 = smul.addr %s174, 32
        %s178 = sadd.s32 %s176, %s177
        %s179 = smul.addr %s178, 4
        %s180 = scalar_lea.vmem %s0, %s179
        %s181 = smul.u32 8, %s18
      $region32: #{group9_forward.3} parent=27 // pred_fallthru
        _
    $region28: #{group9_forward.3} parent=5 // pred_fallthru
      _
    %p182 = scmp.le.s32.totalorder 1, %s10
    %p183 = scmp.lt.s32.totalorder %s10, 3
    %p184 = pnand %p182, %p183
    %p185 = pneg %p184
    // Predicated region
    $region33: #{group9_forward.3} parent=5 // pred_check
      _
    $region34: #{group9_forward.3} parent=5 // pred_check_branch
      %187 = sbr.rel (%p184) target = $region36
    $region35: #{group9_forward.3} parent=5 // pred_region
      %s188 = ssub.s32 %s10, 1
      %s189 = smul.u32 8, %s20
      %p190 = scmp.lt.s32.totalorder %s19, 1
      %s191 = scalar_select %p190, %s19, 1
      %p192 = scmp.lt.s32.totalorder %s189, 7
      %s193 = scalar_select %p192, %s189, 7
      %s194 = smul.addr %s191, 32
      %s195 = sadd.s32 %s193, %s194
      %s196 = smul.addr %s195, 4
      %s197 = scalar_lea.vmem %s0, %s196
      %p198 = pneg %p50
      %p199 = pneg %p47
      %p200 = pneg %p71
      %p201 = pneg %p68
      %p202 = pneg %p92
      %p203 = pneg %p89
      %p204 = pneg %p113
      %p205 = pneg %p110
      %p206 = pneg %p141
      %p207 = pneg %p138
      %p208 = scmp.lt.s32.totalorder %s19, 1
      %s209 = scalar_select %p208, %s19, 1
      %p210 = scmp.lt.s32.totalorder %s20, 0
      %s211 = scalar_select %p210, %s20, 0
      %s212 = smul.addr %s209, 128
      %s213 = sadd.s32 %s211, %s212
      %s214 = smul.addr %s213, 8
      %s215 = scalar_lea.vmem %s4, %s214
      %s216 = smul.u32 8, %s20
      %p217 = scmp.lt.s32.totalorder %s19, 1
      %s218 = scalar_select %p217, %s19, 1
      %p219 = scmp.lt.s32.totalorder %s216, 7
      %s220 = scalar_select %p219, %s216, 7
      %s221 = smul.addr %s218, 32
      %s222 = sadd.s32 %s220, %s221
      %s223 = smul.addr %s222, 4
      %s224 = scalar_lea.vmem %s0, %s223
      %s225 = smul.u32 8, %s20
      %p226 = scmp.lt.s32.totalorder %s19, 1
      %s227 = scalar_select %p226, %s19, 1
      %p228 = scmp.lt.s32.totalorder %s20, 0
      %s229 = scalar_select %p228, %s20, 0
      %s230 = smul.addr %s227, 128
      %s231 = sadd.s32 %s229, %s230
      %s232 = smul.addr %s231, 8
      %s233 = scalar_lea.vmem %s4, %s232
      %v234 = vld [vmem:[%s1] sm:$0x1]
      %v235 = vld [vmem:[%s2] sm:$0x1]
      %v236 = vld [vmem:[%s224] sm:$0xf]
      %v237 = vld [vmem:[%s224 + $0x4] sm:$0xf]
      %v238 = vld [vmem:[%s224 + $0x8] sm:$0xf]
      %v239 = vld [vmem:[%s224 + $0xc] sm:$0xf]
      %v240 = vld [vmem:[%s224 + $0x10] sm:$0xf]
      %v241 = vld [vmem:[%s224 + $0x14] sm:$0xf]
      %v242 = vld [vmem:[%s224 + $0x18] sm:$0xf]
      %v243 = vld [vmem:[%s224 + $0x1c] sm:$0xf]
      %v244 = vld [vmem:[%s224 + $0x20] sm:$0xf]
      %v245 = vld [vmem:[%s224 + $0x24] sm:$0xf]
      %v246 = vld [vmem:[%s224 + $0x28] sm:$0xf]
      %v247 = vld [vmem:[%s224 + $0x2c] sm:$0xf]
      %v248 = vld [vmem:[%s224 + $0x30] sm:$0xf]
      %v249 = vld [vmem:[%s224 + $0x34] sm:$0xf]
      %v250 = vld [vmem:[%s224 + $0x38] sm:$0xf]
      %v251 = vld [vmem:[%s224 + $0x3c] sm:$0xf]
      %v252 = vld [vmem:[%s224 + $0x40] sm:$0xf]
      %v253 = vld [vmem:[%s224 + $0x44] sm:$0xf]
      %v254 = vld [vmem:[%s224 + $0x48] sm:$0xf]
      %v255 = vld [vmem:[%s224 + $0x4c] sm:$0xf]
      %v256 = vld [vmem:[%s224 + $0x50] sm:$0xf]
      %v257 = vld [vmem:[%s224 + $0x54] sm:$0xf]
      %v258 = vld [vmem:[%s224 + $0x58] sm:$0xf]
      %v259 = vld [vmem:[%s224 + $0x5c] sm:$0xf]
      %v260 = vld [vmem:[%s224 + $0x60] sm:$0xf]
      %v261 = vld [vmem:[%s224 + $0x64] sm:$0xf]
      %v262 = vld [vmem:[%s224 + $0x68] sm:$0xf]
      %v263 = vld [vmem:[%s224 + $0x6c] sm:$0xf]
      %v264 = vld [vmem:[%s224 + $0x70] sm:$0xf]
      %v265 = vld [vmem:[%s224 + $0x74] sm:$0xf]
      %v266 = vld [vmem:[%s224 + $0x78] sm:$0xf]
      %v267 = vld [vmem:[%s224 + $0x7c] sm:$0xf]
      %v268 = vunpack.c.l.bf16 %v236
      %v269 = vunpack.c.l.bf16 %v237
      %v270 = vunpack.c.l.bf16 %v238
      %v271 = vunpack.c.l.bf16 %v239
      %v272 = vunpack.c.l.bf16 %v240
      %v273 = vunpack.c.l.bf16 %v241
      %v274 = vunpack.c.l.bf16 %v242
      %v275 = vunpack.c.l.bf16 %v243
      %v276 = vunpack.c.l.bf16 %v244
      %v277 = vunpack.c.l.bf16 %v245
      %v278 = vunpack.c.l.bf16 %v246
      %v279 = vunpack.c.l.bf16 %v247
      %v280 = vunpack.c.l.bf16 %v248
      %v281 = vunpack.c.l.bf16 %v249
      %v282 = vunpack.c.l.bf16 %v250
      %v283 = vunpack.c.l.bf16 %v251
      %v284 = vunpack.c.l.bf16 %v252
      %v285 = vunpack.c.l.bf16 %v253
      %v286 = vunpack.c.l.bf16 %v254
      %v287 = vunpack.c.l.bf16 %v255
      %v288 = vunpack.c.l.bf16 %v256
      %v289 = vunpack.c.l.bf16 %v257
      %v290 = vunpack.c.l.bf16 %v258
      %v291 = vunpack.c.l.bf16 %v259
      %v292 = vunpack.c.l.bf16 %v260
      %v293 = vunpack.c.l.bf16 %v261
      %v294 = vunpack.c.l.bf16 %v262
      %v295 = vunpack.c.l.bf16 %v263
      %v296 = vunpack.c.l.bf16 %v264
      %v297 = vunpack.c.l.bf16 %v265
      %v298 = vunpack.c.l.bf16 %v266
      %v299 = vunpack.c.l.bf16 %v267
      %v301 = vlaneseq
      %v302 = vshrl.u32 %v301, 7
      %v303 = vsub.s32 0, %v302
      %v304 = vrot.slane %v234, %v303
      %v306 = vmul.f32 %v268, %v304
      %v307 = vmul.f32 %v269, %v304
      %v308 = vmul.f32 %v270, %v304
      %v309 = vmul.f32 %v271, %v304
      %v310 = vmul.f32 %v272, %v304
      %v311 = vmul.f32 %v273, %v304
      %v312 = vmul.f32 %v274, %v304
      %v313 = vmul.f32 %v275, %v304
      %v314 = vmul.f32 %v276, %v304
      %v315 = vmul.f32 %v277, %v304
      %v316 = vmul.f32 %v278, %v304
      %v317 = vmul.f32 %v279, %v304
      %v318 = vmul.f32 %v280, %v304
      %v319 = vmul.f32 %v281, %v304
      %v320 = vmul.f32 %v282, %v304
      %v321 = vmul.f32 %v283, %v304
      %v322 = vmul.f32 %v284, %v304
      %v323 = vmul.f32 %v285, %v304
      %v324 = vmul.f32 %v286, %v304
      %v325 = vmul.f32 %v287, %v304
      %v326 = vmul.f32 %v288, %v304
      %v327 = vmul.f32 %v289, %v304
      %v328 = vmul.f32 %v290, %v304
      %v329 = vmul.f32 %v291, %v304
      %v330 = vmul.f32 %v292, %v304
      %v331 = vmul.f32 %v293, %v304
      %v332 = vmul.f32 %v294, %v304
      %v333 = vmul.f32 %v295, %v304
      %v334 = vmul.f32 %v296, %v304
      %v335 = vmul.f32 %v297, %v304
      %v336 = vmul.f32 %v298, %v304
      %v337 = vmul.f32 %v299, %v304
      %v339 = vlaneseq
      %v340 = vshrl.u32 %v339, 7
      %v341 = vsub.s32 0, %v340
      %v342 = vrot.slane %v235, %v341
      %v344 = vadd.f32 %v306, %v342
      %v345 = vadd.f32 %v307, %v342
      %v346 = vadd.f32 %v308, %v342
      %v347 = vadd.f32 %v309, %v342
      %v348 = vadd.f32 %v310, %v342
      %v349 = vadd.f32 %v311, %v342
      %v350 = vadd.f32 %v312, %v342
      %v351 = vadd.f32 %v313, %v342
      %v352 = vadd.f32 %v314, %v342
      %v353 = vadd.f32 %v315, %v342
      %v354 = vadd.f32 %v316, %v342
      %v355 = vadd.f32 %v317, %v342
      %v356 = vadd.f32 %v318, %v342
      %v357 = vadd.f32 %v319, %v342
      %v358 = vadd.f32 %v320, %v342
      %v359 = vadd.f32 %v321, %v342
      %v360 = vadd.f32 %v322, %v342
      %v361 = vadd.f32 %v323, %v342
      %v362 = vadd.f32 %v324, %v342
      %v363 = vadd.f32 %v325, %v342
      %v364 = vadd.f32 %v326, %v342
      %v365 = vadd.f32 %v327, %v342
      %v366 = vadd.f32 %v328, %v342
      %v367 = vadd.f32 %v329, %v342
      %v368 = vadd.f32 %v330, %v342
      %v369 = vadd.f32 %v331, %v342
      %v370 = vadd.f32 %v332, %v342
      %v371 = vadd.f32 %v333, %v342
      %v372 = vadd.f32 %v334, %v342
      %v373 = vadd.f32 %v335, %v342
      %v374 = vadd.f32 %v336, %v342
      %v375 = vadd.f32 %v337, %v342
      %v376 = vmax.f32 %v344, 0.0
      %v377 = vmax.f32 %v345, 0.0
      %v378 = vmax.f32 %v346, 0.0
      %v379 = vmax.f32 %v347, 0.0
      %v380 = vmax.f32 %v348, 0.0
      %v381 = vmax.f32 %v349, 0.0
      %v382 = vmax.f32 %v350, 0.0
      %v383 = vmax.f32 %v351, 0.0
      %v384 = vmax.f32 %v352, 0.0
      %v385 = vmax.f32 %v353, 0.0
      %v386 = vmax.f32 %v354, 0.0
      %v387 = vmax.f32 %v355, 0.0
      %v388 = vmax.f32 %v356, 0.0
      %v389 = vmax.f32 %v357, 0.0
      %v390 = vmax.f32 %v358, 0.0
      %v391 = vmax.f32 %v359, 0.0
      %v392 = vmax.f32 %v360, 0.0
      %v393 = vmax.f32 %v361, 0.0
      %v394 = vmax.f32 %v362, 0.0
      %v395 = vmax.f32 %v363, 0.0
      %v396 = vmax.f32 %v364, 0.0
      %v397 = vmax.f32 %v365, 0.0
      %v398 = vmax.f32 %v366, 0.0
      %v399 = vmax.f32 %v367, 0.0
      %v400 = vmax.f32 %v368, 0.0
      %v401 = vmax.f32 %v369, 0.0
      %v402 = vmax.f32 %v370, 0.0
      %v403 = vmax.f32 %v371, 0.0
      %v404 = vmax.f32 %v372, 0.0
      %v405 = vmax.f32 %v373, 0.0
      %v406 = vmax.f32 %v374, 0.0
      %v407 = vmax.f32 %v375, 0.0
      %408 = vxpose.xlu0.b32.start [1/16] %v376, 128
      %409 = vxpose.xlu0.b32.cont [2/16] 0.0, 128
      %410 = vxpose.xlu0.b32.cont [3/16] 0.0, 128
      %411 = vxpose.xlu0.b32.cont [4/16] 0.0, 128
      %412 = vxpose.xlu0.b32.cont [5/16] 0.0, 128
      %413 = vxpose.xlu0.b32.cont [6/16] 0.0, 128
      %414 = vxpose.xlu0.b32.cont [7/16] 0.0, 128
      %415 = vxpose.xlu0.b32.cont [8/16] 0.0, 128
      %416 = vxpose.xlu0.b32.cont [9/16] 0.0, 128
      %417 = vxpose.xlu0.b32.cont [10/16] 0.0, 128
      %418 = vxpose.xlu0.b32.cont [11/16] 0.0, 128
      %419 = vxpose.xlu0.b32.cont [12/16] 0.0, 128
      %420 = vxpose.xlu0.b32.cont [13/16] 0.0, 128
      %421 = vxpose.xlu0.b32.cont [14/16] 0.0, 128
      %422 = vxpose.xlu0.b32.cont [15/16] 0.0, 128
      %423 = vxpose.xlu0.b32.end [16/16] 0.0, 128
      %v424 = vpop.trf.xlu0
      %v425 = vpop.trf.xlu0
      %v426 = vpop.trf.xlu0
      %v427 = vpop.trf.xlu0
      %v428 = vpop.trf.xlu0
      %v429 = vpop.trf.xlu0
      %v430 = vpop.trf.xlu0
      %v431 = vpop.trf.xlu0
      %v432 = vpop.trf.xlu0
      %v433 = vpop.trf.xlu0
      %v434 = vpop.trf.xlu0
      %v435 = vpop.trf.xlu0
      %v436 = vpop.trf.xlu0
      %v437 = vpop.trf.xlu0
      %v438 = vpop.trf.xlu0
      %v439 = vpop.trf.xlu0
      %440 = vxpose.xlu0.b32.start [1/16] %v377, 128
      %441 = vxpose.xlu0.b32.cont [2/16] 0.0, 128
      %442 = vxpose.xlu0.b32.cont [3/16] 0.0, 128
      %443 = vxpose.xlu0.b32.cont [4/16] 0.0, 128
      %444 = vxpose.xlu0.b32.cont [5/16] 0.0, 128
      %445 = vxpose.xlu0.b32.cont [6/16] 0.0, 128
      %446 = vxpose.xlu0.b32.cont [7/16] 0.0, 128
      %447 = vxpose.xlu0.b32.cont [8/16] 0.0, 128
      %448 = vxpose.xlu0.b32.cont [9/16] 0.0, 128
      %449 = vxpose.xlu0.b32.cont [10/16] 0.0, 128
      %450 = vxpose.xlu0.b32.cont [11/16] 0.0, 128
      %451 = vxpose.xlu0.b32.cont [12/16] 0.0, 128
      %452 = vxpose.xlu0.b32.cont [13/16] 0.0, 128
      %453 = vxpose.xlu0.b32.cont [14/16] 0.0, 128
      %454 = vxpose.xlu0.b32.cont [15/16] 0.0, 128
      %455 = vxpose.xlu0.b32.end [16/16] 0.0, 128
      %v456 = vpop.trf.xlu0
      %v457 = vpop.trf.xlu0
      %v458 = vpop.trf.xlu0
      %v459 = vpop.trf.xlu0
      %v460 = vpop.trf.xlu0
      %v461 = vpop.trf.xlu0
      %v462 = vpop.trf.xlu0
      %v463 = vpop.trf.xlu0
      %v464 = vpop.trf.xlu0
      %v465 = vpop.trf.xlu0
      %v466 = vpop.trf.xlu0
      %v467 = vpop.trf.xlu0
      %v468 = vpop.trf.xlu0
      %v469 = vpop.trf.xlu0
      %v470 = vpop.trf.xlu0
      %v471 = vpop.trf.xlu0
      %472 = vxpose.xlu0.b32.start [1/16] %v378, 128
      %473 = vxpose.xlu0.b32.cont [2/16] 0.0, 128
      %474 = vxpose.xlu0.b32.cont [3/16] 0.0, 128
      %475 = vxpose.xlu0.b32.cont [4/16] 0.0, 128
      %476 = vxpose.xlu0.b32.cont [5/16] 0.0, 128
      %477 = vxpose.xlu0.b32.cont [6/16] 0.0, 128
      %478 = vxpose.xlu0.b32.cont [7/16] 0.0, 128
      %479 = vxpose.xlu0.b32.cont [8/16] 0.0, 128
      %480 = vxpose.xlu0.b32.cont [9/16] 0.0, 128
      %481 = vxpose.xlu0.b32.cont [10/16] 0.0, 128
      %482 = vxpose.xlu0.b32.cont [11/16] 0.0, 128
      %483 = vxpose.xlu0.b32.cont [12/16] 0.0, 128
      %484 = vxpose.xlu0.b32.cont [13/16] 0.0, 128
      %485 = vxpose.xlu0.b32.cont [14/16] 0.0, 128
      %486 = vxpose.xlu0.b32.cont [15/16] 0.0, 128
      %487 = vxpose.xlu0.b32.end [16/16] 0.0, 128
      %v488 = vpop.trf.xlu0
      %v489 = vpop.trf.xlu0
      %v490 = vpop.trf.xlu0
      %v491 = vpop.trf.xlu0
      %v492 = vpop.trf.xlu0
      %v493 = vpop.trf.xlu0
      %v494 = vpop.trf.xlu0
      %v495 = vpop.trf.xlu0
      %v496 = vpop.trf.xlu0
      %v497 = vpop.trf.xlu0
      %v498 = vpop.trf.xlu0
      %v499 = vpop.trf.xlu0
      %v500 = vpop.trf.xlu0
      %v501 = vpop.trf.xlu0
      %v502 = vpop.trf.xlu0
      %v503 = vpop.trf.xlu0
      %504 = vxpose.xlu0.b32.start [1/16] %v379, 128
      %505 = vxpose.xlu0.b32.cont [2/16] 0.0, 128
      %506 = vxpose.xlu0.b32.cont [3/16] 0.0, 128
      %507 = vxpose.xlu0.b32.cont [4/16] 0.0, 128
      %508 = vxpose.xlu0.b32.cont [5/16] 0.0, 128
      %509 = vxpose.xlu0.b32.cont [6/16] 0.0, 128
      %510 = vxpose.xlu0.b32.cont [7/16] 0.0, 128
      %511 = vxpose.xlu0.b32.cont [8/16] 0.0, 128
      %512 = vxpose.xlu0.b32.cont [9/16] 0.0, 128
      %513 = vxpose.xlu0.b32.cont [10/16] 0.0, 128
      %514 = vxpose.xlu0.b32.cont [11/16] 0.0, 128
      %515 = vxpose.xlu0.b32.cont [12/16] 0.0, 128
      %516 = vxpose.xlu0.b32.cont [13/16] 0.0, 128
      %517 = vxpose.xlu0.b32.cont [14/16] 0.0, 128
      %518 = vxpose.xlu0.b32.cont [15/16] 0.0, 128
      %519 = vxpose.xlu0.b32.end [16/16] 0.0, 128
      %v520 = vpop.trf.xlu0
      %v521 = vpop.trf.xlu0
      %v522 = vpop.trf.xlu0
      %v523 = vpop.trf.xlu0
      %v524 = vpop.trf.xlu0
      %v525 = vpop.trf.xlu0
      %v526 = vpop.trf.xlu0
      %v527 = vpop.trf.xlu0
      %v528 = vpop.trf.xlu0
      %v529 = vpop.trf.xlu0
      %v530 = vpop.trf.xlu0
      %v531 = vpop.trf.xlu0
      %v532 = vpop.trf.xlu0
      %v533 = vpop.trf.xlu0
      %v534 = vpop.trf.xlu0
      %v535 = vpop.trf.xlu0
      %536 = vxpose.xlu0.b32.start [1/16] %v380, 128
      %537 = vxpose.xlu0.b32.cont [2/16] 0.0, 128
      %538 = vxpose.xlu0.b32.cont [3/16] 0.0, 128
      %539 = vxpose.xlu0.b32.cont [4/16] 0.0, 128
      %540 = vxpose.xlu0.b32.cont [5/16] 0.0, 128
      %541 = vxpose.xlu0.b32.cont [6/16] 0.0, 128
      %542 = vxpose.xlu0.b32.cont [7/16] 0.0, 128
      %543 = vxpose.xlu0.b32.cont [8/16] 0.0, 128
      %544 = vxpose.xlu0.b32.cont [9/16] 0.0, 128
      %545 = vxpose.xlu0.b32.cont [10/16] 0.0, 128
      %546 = vxpose.xlu0.b32.cont [11/16] 0.0, 128
      %547 = vxpose.xlu0.b32.cont [12/16] 0.0, 128
      %548 = vxpose.xlu0.b32.cont [13/16] 0.0, 128
      %549 = vxpose.xlu0.b32.cont [14/16] 0.0, 128
      %550 = vxpose.xlu0.b32.cont [15/16] 0.0, 128
      %551 = vxpose.xlu0.b32.end [16/16] 0.0, 128
      %v552 = vpop.trf.xlu0
      %v553 = vpop.trf.xlu0
      %v554 = vpop.trf.xlu0
      %v555 = vpop.trf.xlu0
      %v556 = vpop.trf.xlu0
      %v557 = vpop.trf.xlu0
      %v558 = vpop.trf.xlu0
      %v559 = vpop.trf.xlu0
      %v560 = vpop.trf.xlu0
      %v561 = vpop.trf.xlu0
      %v562 = vpop.trf.xlu0
      %v563 = vpop.trf.xlu0
      %v564 = vpop.trf.xlu0
      %v565 = vpop.trf.xlu0
      %v566 = vpop.trf.xlu0
      %v567 = vpop.trf.xlu0
      %568 = vxpose.xlu0.b32.start [1/16] %v381, 128
      %569 = vxpose.xlu0.b32.cont [2/16] 0.0, 128
      %570 = vxpose.xlu0.b32.cont [3/16] 0.0, 128
      %571 = vxpose.xlu0.b32.cont [4/16] 0.0, 128
      %572 = vxpose.xlu0.b32.cont [5/16] 0.0, 128
      %573 = vxpose.xlu0.b32.cont [6/16] 0.0, 128
      %574 = vxpose.xlu0.b32.cont [7/16] 0.0, 128
      %575 = vxpose.xlu0.b32.cont [8/16] 0.0, 128
      %576 = vxpose.xlu0.b32.cont [9/16] 0.0, 128
      %577 = vxpose.xlu0.b32.cont [10/16] 0.0, 128
      %578 = vxpose.xlu0.b32.cont [11/16] 0.0, 128
      %579 = vxpose.xlu0.b32.cont [12/16] 0.0, 128
      %580 = vxpose.xlu0.b32.cont [13/16] 0.0, 128
      %581 = vxpose.xlu0.b32.cont [14/16] 0.0, 128
      %582 = vxpose.xlu0.b32.cont [15/16] 0.0, 128
      %583 = vxpose.xlu0.b32.end [16/16] 0.0, 128
      %v584 = vpop.trf.xlu0
      %v585 = vpop.trf.xlu0
      %v586 = vpop.trf.xlu0
      %v587 = vpop.trf.xlu0
      %v588 = vpop.trf.xlu0
      %v589 = vpop.trf.xlu0
      %v590 = vpop.trf.xlu0
      %v591 = vpop.trf.xlu0
      %v592 = vpop.trf.xlu0
      %v593 = vpop.trf.xlu0
      %v594 = vpop.trf.xlu0
      %v595 = vpop.trf.xlu0
      %v596 = vpop.trf.xlu0
      %v597 = vpop.trf.xlu0
      %v598 = vpop.trf.xlu0
      %v599 = vpop.trf.xlu0
      %600 = vxpose.xlu0.b32.start [1/16] %v382, 128
      %601 = vxpose.xlu0.b32.cont [2/16] 0.0, 128
      %602 = vxpose.xlu0.b32.cont [3/16] 0.0, 128
      %603 = vxpose.xlu0.b32.cont [4/16] 0.0, 128
      %604 = vxpose.xlu0.b32.cont [5/16] 0.0, 128
      %605 = vxpose.xlu0.b32.cont [6/16] 0.0, 128
      %606 = vxpose.xlu0.b32.cont [7/16] 0.0, 128
      %607 = vxpose.xlu0.b32.cont [8/16] 0.0, 128
      %608 = vxpose.xlu0.b32.cont [9/16] 0.0, 128
      %609 = vxpose.xlu0.b32.cont [10/16] 0.0, 128
      %610 = vxpose.xlu0.b32.cont [11/16] 0.0, 128
      %611 = vxpose.xlu0.b32.cont [12/16] 0.0, 128
      %612 = vxpose.xlu0.b32.cont [13/16] 0.0, 128
      %613 = vxpose.xlu0.b32.cont [14/16] 0.0, 128
      %614 = vxpose.xlu0.b32.cont [15/16] 0.0, 128
      %615 = vxpose.xlu0.b32.end [16/16] 0.0, 128
      %v616 = vpop.trf.xlu0
      %v617 = vpop.trf.xlu0
      %v618 = vpop.trf.xlu0
      %v619 = vpop.trf.xlu0
      %v620 = vpop.trf.xlu0
      %v621 = vpop.trf.xlu0
      %v622 = vpop.trf.xlu0
      %v623 = vpop.trf.xlu0
      %v624 = vpop.trf.xlu0
      %v625 = vpop.trf.xlu0
      %v626 = vpop.trf.xlu0
      %v627 = vpop.trf.xlu0
      %v628 = vpop.trf.xlu0
      %v629 = vpop.trf.xlu0
      %v630 = vpop.trf.xlu0
      %v631 = vpop.trf.xlu0
      %632 = vxpose.xlu0.b32.start [1/16] %v383, 128
      %633 = vxpose.xlu0.b32.cont [2/16] 0.0, 128
      %634 = vxpose.xlu0.b32.cont [3/16] 0.0, 128
      %635 = vxpose.xlu0.b32.cont [4/16] 0.0, 128
      %636 = vxpose.xlu0.b32.cont [5/16] 0.0, 128
      %637 = vxpose.xlu0.b32.cont [6/16] 0.0, 128
      %638 = vxpose.xlu0.b32.cont [7/16] 0.0, 128
      %639 = vxpose.xlu0.b32.cont [8/16] 0.0, 128
      %640 = vxpose.xlu0.b32.cont [9/16] 0.0, 128
      %641 = vxpose.xlu0.b32.cont [10/16] 0.0, 128
      %642 = vxpose.xlu0.b32.cont [11/16] 0.0, 128
      %643 = vxpose.xlu0.b32.cont [12/16] 0.0, 128
      %644 = vxpose.xlu0.b32.cont [13/16] 0.0, 128
      %645 = vxpose.xlu0.b32.cont [14/16] 0.0, 128
      %646 = vxpose.xlu0.b32.cont [15/16] 0.0, 128
      %647 = vxpose.xlu0.b32.end [16/16] 0.0, 128
      %v648 = vpop.trf.xlu0
      %v649 = vpop.trf.xlu0
      %v650 = vpop.trf.xlu0
      %v651 = vpop.trf.xlu0
      %v652 = vpop.trf.xlu0
      %v653 = vpop.trf.xlu0
      %v654 = vpop.trf.xlu0
      %v655 = vpop.trf.xlu0
      %v656 = vpop.trf.xlu0
      %v657 = vpop.trf.xlu0
      %v658 = vpop.trf.xlu0
      %v659 = vpop.trf.xlu0
      %v660 = vpop.trf.xlu0
      %v661 = vpop.trf.xlu0
      %v662 = vpop.trf.xlu0
      %v663 = vpop.trf.xlu0
      %664 = vxpose.xlu0.b32.start [1/16] %v384, 128
      %665 = vxpose.xlu0.b32.cont [2/16] 0.0, 128
      %666 = vxpose.xlu0.b32.cont [3/16] 0.0, 128
      %667 = vxpose.xlu0.b32.cont [4/16] 0.0, 128
      %668 = vxpose.xlu0.b32.cont [5/16] 0.0, 128
      %669 = vxpose.xlu0.b32.cont [6/16] 0.0, 128
      %670 = vxpose.xlu0.b32.cont [7/16] 0.0, 128
      %671 = vxpose.xlu0.b32.cont [8/16] 0.0, 128
      %672 = vxpose.xlu0.b32.cont [9/16] 0.0, 128
      %673 = vxpose.xlu0.b32.cont [10/16] 0.0, 128
      %674 = vxpose.xlu0.b32.cont [11/16] 0.0, 128
      %675 = vxpose.xlu0.b32.cont [12/16] 0.0, 128
      %676 = vxpose.xlu0.b32.cont [13/16] 0.0, 128
      %677 = vxpose.xlu0.b32.cont [14/16] 0.0, 128
      %678 = vxpose.xlu0.b32.cont [15/16] 0.0, 128
      %679 = vxpose.xlu0.b32.end [16/16] 0.0, 128
      %v680 = vpop.trf.xlu0
      %v681 = vpop.trf.xlu0
      %v682 = vpop.trf.xlu0
      %v683 = vpop.trf.xlu0
      %v684 = vpop.trf.xlu0
      %v685 = vpop.trf.xlu0
      %v686 = vpop.trf.xlu0
      %v687 = vpop.trf.xlu0
      %v688 = vpop.trf.xlu0
      %v689 = vpop.trf.xlu0
      %v690 = vpop.trf.xlu0
      %v691 = vpop.trf.xlu0
      %v692 = vpop.trf.xlu0
      %v693 = vpop.trf.xlu0
      %v694 = vpop.trf.xlu0
      %v695 = vpop.trf.xlu0
      %696 = vxpose.xlu0.b32.start [1/16] %v385, 128
      %697 = vxpose.xlu0.b32.cont [2/16] 0.0, 128
      %698 = vxpose.xlu0.b32.cont [3/16] 0.0, 128
      %699 = vxpose.xlu0.b32.cont [4/16] 0.0, 128
      %700 = vxpose.xlu0.b32.cont [5/16] 0.0, 128
      %701 = vxpose.xlu0.b32.cont [6/16] 0.0, 128
      %702 = vxpose.xlu0.b32.cont [7/16] 0.0, 128
      %703 = vxpose.xlu0.b32.cont [8/16] 0.0, 128
      %704 = vxpose.xlu0.b32.cont [9/16] 0.0, 128
      %705 = vxpose.xlu0.b32.cont [10/16] 0.0, 128
      %706 = vxpose.xlu0.b32.cont [11/16] 0.0, 128
      %707 = vxpose.xlu0.b32.cont [12/16] 0.0, 128
      %708 = vxpose.xlu0.b32.cont [13/16] 0.0, 128
      %709 = vxpose.xlu0.b32.cont [14/16] 0.0, 128
      %710 = vxpose.xlu0.b32.cont [15/16] 0.0, 128
      %711 = vxpose.xlu0.b32.end [16/16] 0.0, 128
      %v712 = vpop.trf.xlu0
      %v713 = vpop.trf.xlu0
      %v714 = vpop.trf.xlu0
      %v715 = vpop.trf.xlu0
      %v716 = vpop.trf.xlu0
      %v717 = vpop.trf.xlu0
      %v718 = vpop.trf.xlu0
      %v719 = vpop.trf.xlu0
      %v720 = vpop.trf.xlu0
      %v721 = vpop.trf.xlu0
      %v722 = vpop.trf.xlu0
      %v723 = vpop.trf.xlu0
      %v724 = vpop.trf.xlu0
      %v725 = vpop.trf.xlu0
      %v726 = vpop.trf.xlu0
      %v727 = vpop.trf.xlu0
      %728 = vxpose.xlu0.b32.start [1/16] %v386, 128
      %729 = vxpose.xlu0.b32.cont [2/16] 0.0, 128
      %730 = vxpose.xlu0.b32.cont [3/16] 0.0, 128
      %731 = vxpose.xlu0.b32.cont [4/16] 0.0, 128
      %732 = vxpose.xlu0.b32.cont [5/16] 0.0, 128
      %733 = vxpose.xlu0.b32.cont [6/16] 0.0, 128
      %734 = vxpose.xlu0.b32.cont [7/16] 0.0, 128
      %735 = vxpose.xlu0.b32.cont [8/16] 0.0, 128
      %736 = vxpose.xlu0.b32.cont [9/16] 0.0, 128
      %737 = vxpose.xlu0.b32.cont [10/16] 0.0, 128
      %738 = vxpose.xlu0.b32.cont [11/16] 0.0, 128
      %739 = vxpose.xlu0.b32.cont [12/16] 0.0, 128
      %740 = vxpose.xlu0.b32.cont [13/16] 0.0, 128
      %741 = vxpose.xlu0.b32.cont [14/16] 0.0, 128
      %742 = vxpose.xlu0.b32.cont [15/16] 0.0, 128
      %743 = vxpose.xlu0.b32.end [16/16] 0.0, 128
      %v744 = vpop.trf.xlu0
      %v745 = vpop.trf.xlu0
      %v746 = vpop.trf.xlu0
      %v747 = vpop.trf.xlu0
      %v748 = vpop.trf.xlu0
      %v749 = vpop.trf.xlu0
      %v750 = vpop.trf.xlu0
      %v751 = vpop.trf.xlu0
      %v752 = vpop.trf.xlu0
      %v753 = vpop.trf.xlu0
      %v754 = vpop.trf.xlu0
      %v755 = vpop.trf.xlu0
      %v756 = vpop.trf.xlu0
      %v757 = vpop.trf.xlu0
      %v758 = vpop.trf.xlu0
      %v759 = vpop.trf.xlu0
      %760 = vxpose.xlu0.b32.start [1/16] %v387, 128
      %761 = vxpose.xlu0.b32.cont [2/16] 0.0, 128
      %762 = vxpose.xlu0.b32.cont [3/16] 0.0, 128
      %763 = vxpose.xlu0.b32.cont [4/16] 0.0, 128
      %764 = vxpose.xlu0.b32.cont [5/16] 0.0, 128
      %765 = vxpose.xlu0.b32.cont [6/16] 0.0, 128
      %766 = vxpose.xlu0.b32.cont [7/16] 0.0, 128
      %767 = vxpose.xlu0.b32.cont [8/16] 0.0, 128
      %768 = vxpose.xlu0.b32.cont [9/16] 0.0, 128
      %769 = vxpose.xlu0.b32.cont [10/16] 0.0, 128
      %770 = vxpose.xlu0.b32.cont [11/16] 0.0, 128
      %771 = vxpose.xlu0.b32.cont [12/16] 0.0, 128
      %772 = vxpose.xlu0.b32.cont [13/16] 0.0, 128
      %773 = vxpose.xlu0.b32.cont [14/16] 0.0, 128
      %774 = vxpose.xlu0.b32.cont [15/16] 0.0, 128
      %775 = vxpose.xlu0.b32.end [16/16] 0.0, 128
      %v776 = vpop.trf.xlu0
      %v777 = vpop.trf.xlu0
      %v778 = vpop.trf.xlu0
      %v779 = vpop.trf.xlu0
      %v780 = vpop.trf.xlu0
      %v781 = vpop.trf.xlu0
      %v782 = vpop.trf.xlu0
      %v783 = vpop.trf.xlu0
      %v784 = vpop.trf.xlu0
      %v785 = vpop.trf.xlu0
      %v786 = vpop.trf.xlu0
      %v787 = vpop.trf.xlu0
      %v788 = vpop.trf.xlu0
      %v789 = vpop.trf.xlu0
      %v790 = vpop.trf.xlu0
      %v791 = vpop.trf.xlu0
      %792 = vxpose.xlu0.b32.start [1/16] %v388, 128
      %793 = vxpose.xlu0.b32.cont [2/16] 0.0, 128
      %794 = vxpose.xlu0.b32.cont [3/16] 0.0, 128
      %795 = vxpose.xlu0.b32.cont [4/16] 0.0, 128
      %796 = vxpose.xlu0.b32.cont [5/16] 0.0, 128
      %797 = vxpose.xlu0.b32.cont [6/16] 0.0, 128
      %798 = vxpose.xlu0.b32.cont [7/16] 0.0, 128
      %799 = vxpose.xlu0.b32.cont [8/16] 0.0, 128
      %800 = vxpose.xlu0.b32.cont [9/16] 0.0, 128
      %801 = vxpose.xlu0.b32.cont [10/16] 0.0, 128
      %802 = vxpose.xlu0.b32.cont [11/16] 0.0, 128
      %803 = vxpose.xlu0.b32.cont [12/16] 0.0, 128
      %804 = vxpose.xlu0.b32.cont [13/16] 0.0, 128
      %805 = vxpose.xlu0.b32.cont [14/16] 0.0, 128
      %806 = vxpose.xlu0.b32.cont [15/16] 0.0, 128
      %807 = vxpose.xlu0.b32.end [16/16] 0.0, 128
      %v808 = vpop.trf.xlu0
      %v809 = vpop.trf.xlu0
      %v810 = vpop.trf.xlu0
      %v811 = vpop.trf.xlu0
      %v812 = vpop.trf.xlu0
      %v813 = vpop.trf.xlu0
      %v814 = vpop.trf.xlu0
      %v815 = vpop.trf.xlu0
      %v816 = vpop.trf.xlu0
      %v817 = vpop.trf.xlu0
      %v818 = vpop.trf.xlu0
      %v819 = vpop.trf.xlu0
      %v820 = vpop.trf.xlu0
      %v821 = vpop.trf.xlu0
      %v822 = vpop.trf.xlu0
      %v823 = vpop.trf.xlu0
      %824 = vxpose.xlu0.b32.start [1/16] %v389, 128
      %825 = vxpose.xlu0.b32.cont [2/16] 0.0, 128
      %826 = vxpose.xlu0.b32.cont [3/16] 0.0, 128
      %827 = vxpose.xlu0.b32.cont [4/16] 0.0, 128
      %828 = vxpose.xlu0.b32.cont [5/16] 0.0, 128
      %829 = vxpose.xlu0.b32.cont [6/16] 0.0, 128
      %830 = vxpose.xlu0.b32.cont [7/16] 0.0, 128
      %831 = vxpose.xlu0.b32.cont [8/16] 0.0, 128
      %832 = vxpose.xlu0.b32.cont [9/16] 0.0, 128
      %833 = vxpose.xlu0.b32.cont [10/16] 0.0, 128
      %834 = vxpose.xlu0.b32.cont [11/16] 0.0, 128
      %835 = vxpose.xlu0.b32.cont [12/16] 0.0, 128
      %836 = vxpose.xlu0.b32.cont [13/16] 0.0, 128
      %837 = vxpose.xlu0.b32.cont [14/16] 0.0, 128
      %838 = vxpose.xlu0.b32.cont [15/16] 0.0, 128
      %839 = vxpose.xlu0.b32.end [16/16] 0.0, 128
      %v840 = vpop.trf.xlu0
      %v841 = vpop.trf.xlu0
      %v842 = vpop.trf.xlu0
      %v843 = vpop.trf.xlu0
      %v844 = vpop.trf.xlu0
      %v845 = vpop.trf.xlu0
      %v846 = vpop.trf.xlu0
      %v847 = vpop.trf.xlu0
      %v848 = vpop.trf.xlu0
      %v849 = vpop.trf.xlu0
      %v850 = vpop.trf.xlu0
      %v851 = vpop.trf.xlu0
      %v852 = vpop.trf.xlu0
      %v853 = vpop.trf.xlu0
      %v854 = vpop.trf.xlu0
      %v855 = vpop.trf.xlu0
      %856 = vxpose.xlu0.b32.start [1/16] %v390, 128
      %857 = vxpose.xlu0.b32.cont [2/16] 0.0, 128
      %858 = vxpose.xlu0.b32.cont [3/16] 0.0, 128
      %859 = vxpose.xlu0.b32.cont [4/16] 0.0, 128
      %860 = vxpose.xlu0.b32.cont [5/16] 0.0, 128
      %861 = vxpose.xlu0.b32.cont [6/16] 0.0, 128
      %862 = vxpose.xlu0.b32.cont [7/16] 0.0, 128
      %863 = vxpose.xlu0.b32.cont [8/16] 0.0, 128
      %864 = vxpose.xlu0.b32.cont [9/16] 0.0, 128
      %865 = vxpose.xlu0.b32.cont [10/16] 0.0, 128
      %866 = vxpose.xlu0.b32.cont [11/16] 0.0, 128
      %867 = vxpose.xlu0.b32.cont [12/16] 0.0, 128
      %868 = vxpose.xlu0.b32.cont [13/16] 0.0, 128
      %869 = vxpose.xlu0.b32.cont [14/16] 0.0, 128
      %870 = vxpose.xlu0.b32.cont [15/16] 0.0, 128
      %871 = vxpose.xlu0.b32.end [16/16] 0.0, 128
      %v872 = vpop.trf.xlu0
      %v873 = vpop.trf.xlu0
      %v874 = vpop.trf.xlu0
      %v875 = vpop.trf.xlu0
      %v876 = vpop.trf.xlu0
      %v877 = vpop.trf.xlu0
      %v878 = vpop.trf.xlu0
      %v879 = vpop.trf.xlu0
      %v880 = vpop.trf.xlu0
      %v881 = vpop.trf.xlu0
      %v882 = vpop.trf.xlu0
      %v883 = vpop.trf.xlu0
      %v884 = vpop.trf.xlu0
      %v885 = vpop.trf.xlu0
      %v886 = vpop.trf.xlu0
      %v887 = vpop.trf.xlu0
      %888 = vxpose.xlu0.b32.start [1/16] %v391, 128
      %889 = vxpose.xlu0.b32.cont [2/16] 0.0, 128
      %890 = vxpose.xlu0.b32.cont [3/16] 0.0, 128
      %891 = vxpose.xlu0.b32.cont [4/16] 0.0, 128
      %892 = vxpose.xlu0.b32.cont [5/16] 0.0, 128
      %893 = vxpose.xlu0.b32.cont [6/16] 0.0, 128
      %894 = vxpose.xlu0.b32.cont [7/16] 0.0, 128
      %895 = vxpose.xlu0.b32.cont [8/16] 0.0, 128
      %896 = vxpose.xlu0.b32.cont [9/16] 0.0, 128
      %897 = vxpose.xlu0.b32.cont [10/16] 0.0, 128
      %898 = vxpose.xlu0.b32.cont [11/16] 0.0, 128
      %899 = vxpose.xlu0.b32.cont [12/16] 0.0, 128
      %900 = vxpose.xlu0.b32.cont [13/16] 0.0, 128
      %901 = vxpose.xlu0.b32.cont [14/16] 0.0, 128
      %902 = vxpose.xlu0.b32.cont [15/16] 0.0, 128
      %903 = vxpose.xlu0.b32.end [16/16] 0.0, 128
      %v904 = vpop.trf.xlu0
      %v905 = vpop.trf.xlu0
      %v906 = vpop.trf.xlu0
      %v907 = vpop.trf.xlu0
      %v908 = vpop.trf.xlu0
      %v909 = vpop.trf.xlu0
      %v910 = vpop.trf.xlu0
      %v911 = vpop.trf.xlu0
      %v912 = vpop.trf.xlu0
      %v913 = vpop.trf.xlu0
      %v914 = vpop.trf.xlu0
      %v915 = vpop.trf.xlu0
      %v916 = vpop.trf.xlu0
      %v917 = vpop.trf.xlu0
      %v918 = vpop.trf.xlu0
      %v919 = vpop.trf.xlu0
      %1048 = vrot.lane.b32.xlu0 %v680, 8
      %v1049 = vpop.permute.xlu0 %1048
      %1050 = vrot.lane.b32.xlu0 %v681, 8
      %v1051 = vpop.permute.xlu0 %1050
      %1052 = vrot.lane.b32.xlu0 %v682, 8
      %v1053 = vpop.permute.xlu0 %1052
      %1054 = vrot.lane.b32.xlu0 %v683, 8
      %v1055 = vpop.permute.xlu0 %1054
      %1056 = vrot.lane.b32.xlu0 %v684, 8
      %v1057 = vpop.permute.xlu0 %1056
      %1058 = vrot.lane.b32.xlu0 %v685, 8
      %v1059 = vpop.permute.xlu0 %1058
      %1060 = vrot.lane.b32.xlu0 %v686, 8
      %v1061 = vpop.permute.xlu0 %1060
      %1062 = vrot.lane.b32.xlu0 %v687, 8
      %v1063 = vpop.permute.xlu0 %1062
      %1064 = vrot.lane.b32.xlu0 %v688, 8
      %v1065 = vpop.permute.xlu0 %1064
      %1066 = vrot.lane.b32.xlu0 %v689, 8
      %v1067 = vpop.permute.xlu0 %1066
      %1068 = vrot.lane.b32.xlu0 %v690, 8
      %v1069 = vpop.permute.xlu0 %1068
      %1070 = vrot.lane.b32.xlu0 %v691, 8
      %v1071 = vpop.permute.xlu0 %1070
      %1072 = vrot.lane.b32.xlu0 %v692, 8
      %v1073 = vpop.permute.xlu0 %1072
      %1074 = vrot.lane.b32.xlu0 %v693, 8
      %v1075 = vpop.permute.xlu0 %1074
      %1076 = vrot.lane.b32.xlu0 %v694, 8
      %v1077 = vpop.permute.xlu0 %1076
      %1078 = vrot.lane.b32.xlu0 %v695, 8
      %v1079 = vpop.permute.xlu0 %1078
      %1080 = vrot.lane.b32.xlu0 %v712, 8
      %v1081 = vpop.permute.xlu0 %1080
      %1082 = vrot.lane.b32.xlu0 %v713, 8
      %v1083 = vpop.permute.xlu0 %1082
      %1084 = vrot.lane.b32.xlu0 %v714, 8
      %v1085 = vpop.permute.xlu0 %1084
      %1086 = vrot.lane.b32.xlu0 %v715, 8
      %v1087 = vpop.permute.xlu0 %1086
      %1088 = vrot.lane.b32.xlu0 %v716, 8
      %v1089 = vpop.permute.xlu0 %1088
      %1090 = vrot.lane.b32.xlu0 %v717, 8
      %v1091 = vpop.permute.xlu0 %1090
      %1092 = vrot.lane.b32.xlu0 %v718, 8
      %v1093 = vpop.permute.xlu0 %1092
      %1094 = vrot.lane.b32.xlu0 %v719, 8
      %v1095 = vpop.permute.xlu0 %1094
      %1096 = vrot.lane.b32.xlu0 %v720, 8
      %v1097 = vpop.permute.xlu0 %1096
      %1098 = vrot.lane.b32.xlu0 %v721, 8
      %v1099 = vpop.permute.xlu0 %1098
      %1100 = vrot.lane.b32.xlu0 %v722, 8
      %v1101 = vpop.permute.xlu0 %1100
      %1102 = vrot.lane.b32.xlu0 %v723, 8
      %v1103 = vpop.permute.xlu0 %1102
      %1104 = vrot.lane.b32.xlu0 %v724, 8
      %v1105 = vpop.permute.xlu0 %1104
      %1106 = vrot.lane.b32.xlu0 %v725, 8
      %v1107 = vpop.permute.xlu0 %1106
      %1108 = vrot.lane.b32.xlu0 %v726, 8
      %v1109 = vpop.permute.xlu0 %1108
      %1110 = vrot.lane.b32.xlu0 %v727, 8
      %v1111 = vpop.permute.xlu0 %1110
      %1112 = vrot.lane.b32.xlu0 %v744, 8
      %v1113 = vpop.permute.xlu0 %1112
      %1114 = vrot.lane.b32.xlu0 %v745, 8
      %v1115 = vpop.permute.xlu0 %1114
      %1116 = vrot.lane.b32.xlu0 %v746, 8
      %v1117 = vpop.permute.xlu0 %1116
      %1118 = vrot.lane.b32.xlu0 %v747, 8
      %v1119 = vpop.permute.xlu0 %1118
      %1120 = vrot.lane.b32.xlu0 %v748, 8
      %v1121 = vpop.permute.xlu0 %1120
      %1122 = vrot.lane.b32.xlu0 %v749, 8
      %v1123 = vpop.permute.xlu0 %1122
      %1124 = vrot.lane.b32.xlu0 %v750, 8
      %v1125 = vpop.permute.xlu0 %1124
      %1126 = vrot.lane.b32.xlu0 %v751, 8
      %v1127 = vpop.permute.xlu0 %1126
      %1128 = vrot.lane.b32.xlu0 %v752, 8
      %v1129 = vpop.permute.xlu0 %1128
      %1130 = vrot.lane.b32.xlu0 %v753, 8
      %v1131 = vpop.permute.xlu0 %1130
      %1132 = vrot.lane.b32.xlu0 %v754, 8
      %v1133 = vpop.permute.xlu0 %1132
      %1134 = vrot.lane.b32.xlu0 %v755, 8
      %v1135 = vpop.permute.xlu0 %1134
      %1136 = vrot.lane.b32.xlu0 %v756, 8
      %v1137 = vpop.permute.xlu0 %1136
      %1138 = vrot.lane.b32.xlu0 %v757, 8
      %v1139 = vpop.permute.xlu0 %1138
      %1140 = vrot.lane.b32.xlu0 %v758, 8
      %v1141 = vpop.permute.xlu0 %1140
      %1142 = vrot.lane.b32.xlu0 %v759, 8
      %v1143 = vpop.permute.xlu0 %1142
      %1144 = vrot.lane.b32.xlu0 %v776, 8
      %v1145 = vpop.permute.xlu0 %1144
      %1146 = vrot.lane.b32.xlu0 %v777, 8
      %v1147 = vpop.permute.xlu0 %1146
      %1148 = vrot.lane.b32.xlu0 %v778, 8
      %v1149 = vpop.permute.xlu0 %1148
      %1150 = vrot.lane.b32.xlu0 %v779, 8
      %v1151 = vpop.permute.xlu0 %1150
      %1152 = vrot.lane.b32.xlu0 %v780, 8
      %v1153 = vpop.permute.xlu0 %1152
      %1154 = vrot.lane.b32.xlu0 %v781, 8
      %v1155 = vpop.permute.xlu0 %1154
      %1156 = vrot.lane.b32.xlu0 %v782, 8
      %v1157 = vpop.permute.xlu0 %1156
      %1158 = vrot.lane.b32.xlu0 %v783, 8
      %v1159 = vpop.permute.xlu0 %1158
      %1160 = vrot.lane.b32.xlu0 %v784, 8
      %v1161 = vpop.permute.xlu0 %1160
      %1162 = vrot.lane.b32.xlu0 %v785, 8
      %v1163 = vpop.permute.xlu0 %1162
      %1164 = vrot.lane.b32.xlu0 %v786, 8
      %v1165 = vpop.permute.xlu0 %1164
      %1166 = vrot.lane.b32.xlu0 %v787, 8
      %v1167 = vpop.permute.xlu0 %1166
      %1168 = vrot.lane.b32.xlu0 %v788, 8
      %v1169 = vpop.permute.xlu0 %1168
      %1170 = vrot.lane.b32.xlu0 %v789, 8
      %v1171 = vpop.permute.xlu0 %1170
      %1172 = vrot.lane.b32.xlu0 %v790, 8
      %v1173 = vpop.permute.xlu0 %1172
      %1174 = vrot.lane.b32.xlu0 %v791, 8
      %v1175 = vpop.permute.xlu0 %1174
      %1176 = vrot.lane.b32.xlu0 %v808, 8
      %v1177 = vpop.permute.xlu0 %1176
      %1178 = vrot.lane.b32.xlu0 %v809, 8
      %v1179 = vpop.permute.xlu0 %1178
      %1180 = vrot.lane.b32.xlu0 %v810, 8
      %v1181 = vpop.permute.xlu0 %1180
      %1182 = vrot.lane.b32.xlu0 %v811, 8
      %v1183 = vpop.permute.xlu0 %1182
      %1184 = vrot.lane.b32.xlu0 %v812, 8
      %v1185 = vpop.permute.xlu0 %1184
      %1186 = vrot.lane.b32.xlu0 %v813, 8
      %v1187 = vpop.permute.xlu0 %1186
      %1188 = vrot.lane.b32.xlu0 %v814, 8
      %v1189 = vpop.permute.xlu0 %1188
      %1190 = vrot.lane.b32.xlu0 %v815, 8
      %v1191 = vpop.permute.xlu0 %1190
      %1192 = vrot.lane.b32.xlu0 %v816, 8
      %v1193 = vpop.permute.xlu0 %1192
      %1194 = vrot.lane.b32.xlu0 %v817, 8
      %v1195 = vpop.permute.xlu0 %1194
      %1196 = vrot.lane.b32.xlu0 %v818, 8
      %v1197 = vpop.permute.xlu0 %1196
      %1198 = vrot.lane.b32.xlu0 %v819, 8
      %v1199 = vpop.permute.xlu0 %1198
      %1200 = vrot.lane.b32.xlu0 %v820, 8
      %v1201 = vpop.permute.xlu0 %1200
      %1202 = vrot.lane.b32.xlu0 %v821, 8
      %v1203 = vpop.permute.xlu0 %1202
      %1204 = vrot.lane.b32.xlu0 %v822, 8
      %v1205 = vpop.permute.xlu0 %1204
      %1206 = vrot.lane.b32.xlu0 %v823, 8
      %v1207 = vpop.permute.xlu0 %1206
      %1208 = vrot.lane.b32.xlu0 %v840, 8
      %v1209 = vpop.permute.xlu0 %1208
      %1210 = vrot.lane.b32.xlu0 %v841, 8
      %v1211 = vpop.permute.xlu0 %1210
      %1212 = vrot.lane.b32.xlu0 %v842, 8
      %v1213 = vpop.permute.xlu0 %1212
      %1214 = vrot.lane.b32.xlu0 %v843, 8
      %v1215 = vpop.permute.xlu0 %1214
      %1216 = vrot.lane.b32.xlu0 %v844, 8
      %v1217 = vpop.permute.xlu0 %1216
      %1218 = vrot.lane.b32.xlu0 %v845, 8
      %v1219 = vpop.permute.xlu0 %1218
      %1220 = vrot.lane.b32.xlu0 %v846, 8
      %v1221 = vpop.permute.xlu0 %1220
      %1222 = vrot.lane.b32.xlu0 %v847, 8
      %v1223 = vpop.permute.xlu0 %1222
      %1224 = vrot.lane.b32.xlu0 %v848, 8
      %v1225 = vpop.permute.xlu0 %1224
      %1226 = vrot.lane.b32.xlu0 %v849, 8
      %v1227 = vpop.permute.xlu0 %1226
      %1228 = vrot.lane.b32.xlu0 %v850, 8
      %v1229 = vpop.permute.xlu0 %1228
      %1230 = vrot.lane.b32.xlu0 %v851, 8
      %v1231 = vpop.permute.xlu0 %1230
      %1232 = vrot.lane.b32.xlu0 %v852, 8
      %v1233 = vpop.permute.xlu0 %1232
      %1234 = vrot.lane.b32.xlu0 %v853, 8
      %v1235 = vpop.permute.xlu0 %1234
      %1236 = vrot.lane.b32.xlu0 %v854, 8
      %v1237 = vpop.permute.xlu0 %1236
      %1238 = vrot.lane.b32.xlu0 %v855, 8
      %v1239 = vpop.permute.xlu0 %1238
      %1240 = vrot.lane.b32.xlu0 %v872, 8
      %v1241 = vpop.permute.xlu0 %1240
      %1242 = vrot.lane.b32.xlu0 %v873, 8
      %v1243 = vpop.permute.xlu0 %1242
      %1244 = vrot.lane.b32.xlu0 %v874, 8
      %v1245 = vpop.permute.xlu0 %1244
      %1246 = vrot.lane.b32.xlu0 %v875, 8
      %v1247 = vpop.permute.xlu0 %1246
      %1248 = vrot.lane.b32.xlu0 %v876, 8
      %v1249 = vpop.permute.xlu0 %1248
      %1250 = vrot.lane.b32.xlu0 %v877, 8
      %v1251 = vpop.permute.xlu0 %1250
      %1252 = vrot.lane.b32.xlu0 %v878, 8
      %v1253 = vpop.permute.xlu0 %1252
      %1254 = vrot.lane.b32.xlu0 %v879, 8
      %v1255 = vpop.permute.xlu0 %1254
      %1256 = vrot.lane.b32.xlu0 %v880, 8
      %v1257 = vpop.permute.xlu0 %1256
      %1258 = vrot.lane.b32.xlu0 %v881, 8
      %v1259 = vpop.permute.xlu0 %1258
      %1260 = vrot.lane.b32.xlu0 %v882, 8
      %v1261 = vpop.permute.xlu0 %1260
      %1262 = vrot.lane.b32.xlu0 %v883, 8
      %v1263 = vpop.permute.xlu0 %1262
      %1264 = vrot.lane.b32.xlu0 %v884, 8
      %v1265 = vpop.permute.xlu0 %1264
      %1266 = vrot.lane.b32.xlu0 %v885, 8
      %v1267 = vpop.permute.xlu0 %1266
      %1268 = vrot.lane.b32.xlu0 %v886, 8
      %v1269 = vpop.permute.xlu0 %1268
      %1270 = vrot.lane.b32.xlu0 %v887, 8
      %v1271 = vpop.permute.xlu0 %1270
      %1272 = vrot.lane.b32.xlu0 %v904, 8
      %v1273 = vpop.permute.xlu0 %1272
      %1274 = vrot.lane.b32.xlu0 %v905, 8
      %v1275 = vpop.permute.xlu0 %1274
      %1276 = vrot.lane.b32.xlu0 %v906, 8
      %v1277 = vpop.permute.xlu0 %1276
      %1278 = vrot.lane.b32.xlu0 %v907, 8
      %v1279 = vpop.permute.xlu0 %1278
      %1280 = vrot.lane.b32.xlu0 %v908, 8
      %v1281 = vpop.permute.xlu0 %1280
      %1282 = vrot.lane.b32.xlu0 %v909, 8
      %v1283 = vpop.permute.xlu0 %1282
      %1284 = vrot.lane.b32.xlu0 %v910, 8
      %v1285 = vpop.permute.xlu0 %1284
      %1286 = vrot.lane.b32.xlu0 %v911, 8
      %v1287 = vpop.permute.xlu0 %1286
      %1288 = vrot.lane.b32.xlu0 %v912, 8
      %v1289 = vpop.permute.xlu0 %1288
      %1290 = vrot.lane.b32.xlu0 %v913, 8
      %v1291 = vpop.permute.xlu0 %1290
      %1292 = vrot.lane.b32.xlu0 %v914, 8
      %v1293 = vpop.permute.xlu0 %1292
      %1294 = vrot.lane.b32.xlu0 %v915, 8
      %v1295 = vpop.permute.xlu0 %1294
      %1296 = vrot.lane.b32.xlu0 %v916, 8
      %v1297 = vpop.permute.xlu0 %1296
      %1298 = vrot.lane.b32.xlu0 %v917, 8
      %v1299 = vpop.permute.xlu0 %1298
      %1300 = vrot.lane.b32.xlu0 %v918, 8
      %v1301 = vpop.permute.xlu0 %1300
      %1302 = vrot.lane.b32.xlu0 %v919, 8
      %v1303 = vpop.permute.xlu0 %1302
      %vm1432 = vcmask 64512
      %v1433 = vsel %vm1432, %v424, %v1049
      %v1434 = vsel %vm1432, %v425, %v1051
      %v1435 = vsel %vm1432, %v426, %v1053
      %v1436 = vsel %vm1432, %v427, %v1055
      %v1437 = vsel %vm1432, %v428, %v1057
      %v1438 = vsel %vm1432, %v429, %v1059
      %v1439 = vsel %vm1432, %v430, %v1061
      %v1440 = vsel %vm1432, %v431, %v1063
      %v1441 = vsel %vm1432, %v432, %v1065
      %v1442 = vsel %vm1432, %v433, %v1067
      %v1443 = vsel %vm1432, %v434, %v1069
      %v1444 = vsel %vm1432, %v435, %v1071
      %v1445 = vsel %vm1432, %v436, %v1073
      %v1446 = vsel %vm1432, %v437, %v1075
      %v1447 = vsel %vm1432, %v438, %v1077
      %v1448 = vsel %vm1432, %v439, %v1079
      %v1449 = vsel %vm1432, %v456, %v1081
      %v1450 = vsel %vm1432, %v457, %v1083
      %v1451 = vsel %vm1432, %v458, %v1085
      %v1452 = vsel %vm1432, %v459, %v1087
      %v1453 = vsel %vm1432, %v460, %v1089
      %v1454 = vsel %vm1432, %v461, %v1091
      %v1455 = vsel %vm1432, %v462, %v1093
      %v1456 = vsel %vm1432, %v463, %v1095
      %v1457 = vsel %vm1432, %v464, %v1097
      %v1458 = vsel %vm1432, %v465, %v1099
      %v1459 = vsel %vm1432, %v466, %v1101
      %v1460 = vsel %vm1432, %v467, %v1103
      %v1461 = vsel %vm1432, %v468, %v1105
      %v1462 = vsel %vm1432, %v469, %v1107
      %v1463 = vsel %vm1432, %v470, %v1109
      %v1464 = vsel %vm1432, %v471, %v1111
      %v1465 = vsel %vm1432, %v488, %v1113
      %v1466 = vsel %vm1432, %v489, %v1115
      %v1467 = vsel %vm1432, %v490, %v1117
      %v1468 = vsel %vm1432, %v491, %v1119
      %v1469 = vsel %vm1432, %v492, %v1121
      %v1470 = vsel %vm1432, %v493, %v1123
      %v1471 = vsel %vm1432, %v494, %v1125
      %v1472 = vsel %vm1432, %v495, %v1127
      %v1473 = vsel %vm1432, %v496, %v1129
      %v1474 = vsel %vm1432, %v497, %v1131
      %v1475 = vsel %vm1432, %v498, %v1133
      %v1476 = vsel %vm1432, %v499, %v1135
      %v1477 = vsel %vm1432, %v500, %v1137
      %v1478 = vsel %vm1432, %v501, %v1139
      %v1479 = vsel %vm1432, %v502, %v1141
      %v1480 = vsel %vm1432, %v503, %v1143
      %v1481 = vsel %vm1432, %v520, %v1145
      %v1482 = vsel %vm1432, %v521, %v1147
      %v1483 = vsel %vm1432, %v522, %v1149
      %v1484 = vsel %vm1432, %v523, %v1151
      %v1485 = vsel %vm1432, %v524, %v1153
      %v1486 = vsel %vm1432, %v525, %v1155
      %v1487 = vsel %vm1432, %v526, %v1157
      %v1488 = vsel %vm1432, %v527, %v1159
      %v1489 = vsel %vm1432, %v528, %v1161
      %v1490 = vsel %vm1432, %v529, %v1163
      %v1491 = vsel %vm1432, %v530, %v1165
      %v1492 = vsel %vm1432, %v531, %v1167
      %v1493 = vsel %vm1432, %v532, %v1169
      %v1494 = vsel %vm1432, %v533, %v1171
      %v1495 = vsel %vm1432, %v534, %v1173
      %v1496 = vsel %vm1432, %v535, %v1175
      %v1497 = vsel %vm1432, %v552, %v1177
      %v1498 = vsel %vm1432, %v553, %v1179
      %v1499 = vsel %vm1432, %v554, %v1181
      %v1500 = vsel %vm1432, %v555, %v1183
      %v1501 = vsel %vm1432, %v556, %v1185
      %v1502 = vsel %vm1432, %v557, %v1187
      %v1503 = vsel %vm1432, %v558, %v1189
      %v1504 = vsel %vm1432, %v559, %v1191
      %v1505 = vsel %vm1432, %v560, %v1193
      %v1506 = vsel %vm1432, %v561, %v1195
      %v1507 = vsel %vm1432, %v562, %v1197
      %v1508 = vsel %vm1432, %v563, %v1199
      %v1509 = vsel %vm1432, %v564, %v1201
      %v1510 = vsel %vm1432, %v565, %v1203
      %v1511 = vsel %vm1432, %v566, %v1205
      %v1512 = vsel %vm1432, %v567, %v1207
      %v1513 = vsel %vm1432, %v584, %v1209
      %v1514 = vsel %vm1432, %v585, %v1211
      %v1515 = vsel %vm1432, %v586, %v1213
      %v1516 = vsel %vm1432, %v587, %v1215
      %v1517 = vsel %vm1432, %v588, %v1217
      %v1518 = vsel %vm1432, %v589, %v1219
      %v1519 = vsel %vm1432, %v590, %v1221
      %v1520 = vsel %vm1432, %v591, %v1223
      %v1521 = vsel %vm1432, %v592, %v1225
      %v1522 = vsel %vm1432, %v593, %v1227
      %v1523 = vsel %vm1432, %v594, %v1229
      %v1524 = vsel %vm1432, %v595, %v1231
      %v1525 = vsel %vm1432, %v596, %v1233
      %v1526 = vsel %vm1432, %v597, %v1235
      %v1527 = vsel %vm1432, %v598, %v1237
      %v1528 = vsel %vm1432, %v599, %v1239
      %v1529 = vsel %vm1432, %v616, %v1241
      %v1530 = vsel %vm1432, %v617, %v1243
      %v1531 = vsel %vm1432, %v618, %v1245
      %v1532 = vsel %vm1432, %v619, %v1247
      %v1533 = vsel %vm1432, %v620, %v1249
      %v1534 = vsel %vm1432, %v621, %v1251
      %v1535 = vsel %vm1432, %v622, %v1253
      %v1536 = vsel %vm1432, %v623, %v1255
      %v1537 = vsel %vm1432, %v624, %v1257
      %v1538 = vsel %vm1432, %v625, %v1259
      %v1539 = vsel %vm1432, %v626, %v1261
      %v1540 = vsel %vm1432, %v627, %v1263
      %v1541 = vsel %vm1432, %v628, %v1265
      %v1542 = vsel %vm1432, %v629, %v1267
      %v1543 = vsel %vm1432, %v630, %v1269
      %v1544 = vsel %vm1432, %v631, %v1271
      %v1545 = vsel %vm1432, %v648, %v1273
      %v1546 = vsel %vm1432, %v649, %v1275
      %v1547 = vsel %vm1432, %v650, %v1277
      %v1548 = vsel %vm1432, %v651, %v1279
      %v1549 = vsel %vm1432, %v652, %v1281
      %v1550 = vsel %vm1432, %v653, %v1283
      %v1551 = vsel %vm1432, %v654, %v1285
      %v1552 = vsel %vm1432, %v655, %v1287
      %v1553 = vsel %vm1432, %v656, %v1289
      %v1554 = vsel %vm1432, %v657, %v1291
      %v1555 = vsel %vm1432, %v658, %v1293
      %v1556 = vsel %vm1432, %v659, %v1295
      %v1557 = vsel %vm1432, %v660, %v1297
      %v1558 = vsel %vm1432, %v661, %v1299
      %v1559 = vsel %vm1432, %v662, %v1301
      %v1560 = vsel %vm1432, %v663, %v1303
      %v1561 = vld [vmem:[%s3] sm:$0xff]
      %v1562 = vld [vmem:[%s3 + $0x8] sm:$0xff]
      %vm1563 = vcmask 130048
      %v1565 = vsel %vm1563, %v1433, 0
      %v1568 = vsel %vm1563, %v1434, 0
      %v1571 = vsel %vm1563, %v1435, 0
      %v1574 = vsel %vm1563, %v1436, 0
      %v1577 = vsel %vm1563, %v1437, 0
      %v1580 = vsel %vm1563, %v1438, 0
      %v1583 = vsel %vm1563, %v1439, 0
      %v1586 = vsel %vm1563, %v1440, 0
      %v1589 = vsel %vm1563, %v1441, 0
      %v1592 = vsel %vm1563, %v1442, 0
      %v1595 = vsel %vm1563, %v1443, 0
      %v1598 = vsel %vm1563, %v1444, 0
      %v1601 = vsel %vm1563, %v1445, 0
      %v1604 = vsel %vm1563, %v1446, 0
      %v1607 = vsel %vm1563, %v1447, 0
      %v1610 = vsel %vm1563, %v1448, 0
      %v1613 = vsel %vm1563, %v1449, 0
      %v1616 = vsel %vm1563, %v1450, 0
      %v1619 = vsel %vm1563, %v1451, 0
      %v1622 = vsel %vm1563, %v1452, 0
      %v1625 = vsel %vm1563, %v1453, 0
      %v1628 = vsel %vm1563, %v1454, 0
      %v1631 = vsel %vm1563, %v1455, 0
      %v1634 = vsel %vm1563, %v1456, 0
      %v1637 = vsel %vm1563, %v1457, 0
      %v1640 = vsel %vm1563, %v1458, 0
      %v1643 = vsel %vm1563, %v1459, 0
      %v1646 = vsel %vm1563, %v1460, 0
      %v1649 = vsel %vm1563, %v1461, 0
      %v1652 = vsel %vm1563, %v1462, 0
      %v1655 = vsel %vm1563, %v1463, 0
      %v1658 = vsel %vm1563, %v1464, 0
      %v1661 = vsel %vm1563, %v1465, 0
      %v1664 = vsel %vm1563, %v1466, 0
      %v1667 = vsel %vm1563, %v1467, 0
      %v1670 = vsel %vm1563, %v1468, 0
      %v1673 = vsel %vm1563, %v1469, 0
      %v1676 = vsel %vm1563, %v1470, 0
      %v1679 = vsel %vm1563, %v1471, 0
      %v1682 = vsel %vm1563, %v1472, 0
      %v1685 = vsel %vm1563, %v1473, 0
      %v1688 = vsel %vm1563, %v1474, 0
      %v1691 = vsel %vm1563, %v1475, 0
      %v1694 = vsel %vm1563, %v1476, 0
      %v1697 = vsel %vm1563, %v1477, 0
      %v1700 = vsel %vm1563, %v1478, 0
      %v1703 = vsel %vm1563, %v1479, 0
      %v1706 = vsel %vm1563, %v1480, 0
      %v1709 = vsel %vm1563, %v1481, 0
      %v1712 = vsel %vm1563, %v1482, 0
      %v1715 = vsel %vm1563, %v1483, 0
      %v1718 = vsel %vm1563, %v1484, 0
      %v1721 = vsel %vm1563, %v1485, 0
      %v1724 = vsel %vm1563, %v1486, 0
      %v1727 = vsel %vm1563, %v1487, 0
      %v1730 = vsel %vm1563, %v1488, 0
      %v1733 = vsel %vm1563, %v1489, 0
      %v1736 = vsel %vm1563, %v1490, 0
      %v1739 = vsel %vm1563, %v1491, 0
      %v1742 = vsel %vm1563, %v1492, 0
      %v1745 = vsel %vm1563, %v1493, 0
      %v1748 = vsel %vm1563, %v1494, 0
      %v1751 = vsel %vm1563, %v1495, 0
      %v1754 = vsel %vm1563, %v1496, 0
      %v1757 = vsel %vm1563, %v1497, 0
      %v1760 = vsel %vm1563, %v1498, 0
      %v1763 = vsel %vm1563, %v1499, 0
      %v1766 = vsel %vm1563, %v1500, 0
      %v1769 = vsel %vm1563, %v1501, 0
      %v1772 = vsel %vm1563, %v1502, 0
      %v1775 = vsel %vm1563, %v1503, 0
      %v1778 = vsel %vm1563, %v1504, 0
      %v1781 = vsel %vm1563, %v1505, 0
      %v1784 = vsel %vm1563, %v1506, 0
      %v1787 = vsel %vm1563, %v1507, 0
      %v1790 = vsel %vm1563, %v1508, 0
      %v1793 = vsel %vm1563, %v1509, 0
      %v1796 = vsel %vm1563, %v1510, 0
      %v1799 = vsel %vm1563, %v1511, 0
      %v1802 = vsel %vm1563, %v1512, 0
      %v1805 = vsel %vm1563, %v1513, 0
      %v1808 = vsel %vm1563, %v1514, 0
      %v1811 = vsel %vm1563, %v1515, 0
      %v1814 = vsel %vm1563, %v1516, 0
      %v1817 = vsel %vm1563, %v1517, 0
      %v1820 = vsel %vm1563, %v1518, 0
      %v1823 = vsel %vm1563, %v1519, 0
      %v1826 = vsel %vm1563, %v1520, 0
      %v1829 = vsel %vm1563, %v1521, 0
      %v1832 = vsel %vm1563, %v1522, 0
      %v1835 = vsel %vm1563, %v1523, 0
      %v1838 = vsel %vm1563, %v1524, 0
      %v1841 = vsel %vm1563, %v1525, 0
      %v1844 = vsel %vm1563, %v1526, 0
      %v1847 = vsel %vm1563, %v1527, 0
      %v1850 = vsel %vm1563, %v1528, 0
      %v1853 = vsel %vm1563, %v1529, 0
      %v1856 = vsel %vm1563, %v1530, 0
      %v1859 = vsel %vm1563, %v1531, 0
      %v1862 = vsel %vm1563, %v1532, 0
      %v1865 = vsel %vm1563, %v1533, 0
      %v1868 = vsel %vm1563, %v1534, 0
      %v1871 = vsel %vm1563, %v1535, 0
      %v1874 = vsel %vm1563, %v1536, 0
      %v1877 = vsel %vm1563, %v1537, 0
      %v1880 = vsel %vm1563, %v1538, 0
      %v1883 = vsel %vm1563, %v1539, 0
      %v1886 = vsel %vm1563, %v1540, 0
      %v1889 = vsel %vm1563, %v1541, 0
      %v1892 = vsel %vm1563, %v1542, 0
      %v1895 = vsel %vm1563, %v1543, 0
      %v1898 = vsel %vm1563, %v1544, 0
      %v1901 = vsel %vm1563, %v1545, 0
      %v1904 = vsel %vm1563, %v1546, 0
      %v1907 = vsel %vm1563, %v1547, 0
      %v1910 = vsel %vm1563, %v1548, 0
      %v1913 = vsel %vm1563, %v1549, 0
      %v1916 = vsel %vm1563, %v1550, 0
      %v1919 = vsel %vm1563, %v1551, 0
      %v1922 = vsel %vm1563, %v1552, 0
      %v1925 = vsel %vm1563, %v1553, 0
      %v1928 = vsel %vm1563, %v1554, 0
      %v1931 = vsel %vm1563, %v1555, 0
      %v1934 = vsel %vm1563, %v1556, 0
      %v1937 = vsel %vm1563, %v1557, 0
      %v1940 = vsel %vm1563, %v1558, 0
      %v1943 = vsel %vm1563, %v1559, 0
      %v1946 = vsel %vm1563, %v1560, 0
      %1948 = vmatprep.subr.mxu0 0.0
      %1949 = vmatpush1.msra.mxu0 0.0
      %1950 = vmatprep.subr.mxu0 0.0
      %1951 = vmatpush1.msra.mxu0 0.0
      %1952 = vmatprep.subr.mxu0 0.0
      %1953 = vmatpush1.msra.mxu0 0.0
      %1954 = vmatprep.subr.mxu0 0.0
      %1955 = vmatpush1.msra.mxu0 0.0
      %1956 = vmatprep.subr.mxu0 0.0
      %1957 = vmatpush1.msra.mxu0 0.0
      %1958 = vmatprep.subr.mxu0 0.0
      %1959 = vmatpush1.msra.mxu0 0.0
      %1960 = vmatprep.subr.mxu0 0.0
      %1961 = vmatpush1.msra.mxu0 0.0
      %1962 = vmatprep.subr.mxu0 0.0
      %1963 = vmatpush1.msra.mxu0 0.0
      %1964 = vmatprep.subr.mxu0 0.0
      %1965 = vmatpush1.msra.mxu0 0.0
      %1966 = vmatprep.subr.mxu0 0.0
      %1967 = vmatpush1.msra.mxu0 0.0
      %1968 = vmatprep.subr.mxu0 0.0
      %1969 = vmatpush1.msra.mxu0 0.0
      %1970 = vmatprep.subr.mxu0 0.0
      %1971 = vmatpush1.msra.mxu0 0.0
      %1972 = vmatprep.subr.mxu0 0.0
      %1973 = vmatpush1.msra.mxu0 0.0
      %1974 = vmatprep.subr.mxu0 0.0
      %1975 = vmatpush1.msra.mxu0 0.0
      %1976 = vmatprep.subr.mxu0 0.0
      %1977 = vmatpush1.msra.mxu0 %v1562
      %1978 = vmatprep.subr.mxu0 0.0
      %1979 = vmatpush1.msra.mxu0 %v1561
      %1980 = vmatprep.subr.mxu0 0.0
      %1981 = vmatpush2.msra.mxu0 0.0
      %1982 = vmatprep.subr.mxu0 0.0
      %1983 = vmatpush2.msra.mxu0 0.0
      %1984 = vmatprep.subr.mxu0 0.0
      %1985 = vmatpush2.msra.mxu0 0.0
      %1986 = vmatprep.subr.mxu0 0.0
      %1987 = vmatpush2.msra.mxu0 0.0
      %1988 = vmatprep.subr.mxu0 0.0
      %1989 = vmatpush2.msra.mxu0 0.0
      %1990 = vmatprep.subr.mxu0 0.0
      %1991 = vmatpush2.msra.mxu0 0.0
      %1992 = vmatprep.subr.mxu0 0.0
      %1993 = vmatpush2.msra.mxu0 0.0
      %1994 = vmatprep.subr.mxu0 0.0
      %1995 = vmatpush2.msra.mxu0 0.0
      %1996 = vmatprep.subr.mxu0 0.0
      %1997 = vmatpush2.msra.mxu0 0.0
      %1998 = vmatprep.subr.mxu0 0.0
      %1999 = vmatpush2.msra.mxu0 0.0
      %2000 = vmatprep.subr.mxu0 0.0
      %2001 = vmatpush2.msra.mxu0 0.0
      %2002 = vmatprep.subr.mxu0 0.0
      %2003 = vmatpush2.msra.mxu0 0.0
      %2004 = vmatprep.subr.mxu0 0.0
      %2005 = vmatpush2.msra.mxu0 0.0
      %2006 = vmatprep.subr.mxu0 0.0
      %2007 = vmatpush2.msra.mxu0 0.0
      %2008 = vmatprep.subr.mxu0 0.0
      %2009 = vmatpush2.msra.mxu0 0.0
      %2010 = vmatprep.subr.mxu0 0.0
      %2011 = vmatpush2.msra.mxu0 0.0
      %2012 = vmatprep.mubr.f32.mxu0 0.0
      %2013 = vmatmul.mubr.f32.gmra.mxu0 %v1565
      %v2014 = vpop.f32.mrf.mxu0
      %v2015 = vadd.f32 0.0, %v2014
      %v2016 = vpop.f32.mrf.mxu0
      %2017 = vmatprep.mubr.f32.mxu0 0.0
      %2018 = vmatmul.mubr.f32.gmra.mxu0 %v1568
      %v2019 = vpop.f32.mrf.mxu0
      %v2020 = vadd.f32 0.0, %v2019
      %v2021 = vpop.f32.mrf.mxu0
      %2022 = vmatprep.mubr.f32.mxu0 0.0
      %2023 = vmatmul.mubr.f32.gmra.mxu0 %v1571
      %v2024 = vpop.f32.mrf.mxu0
      %v2025 = vadd.f32 0.0, %v2024
      %v2026 = vpop.f32.mrf.mxu0
      %2027 = vmatprep.mubr.f32.mxu0 0.0
      %2028 = vmatmul.mubr.f32.gmra.mxu0 %v1574
      %v2029 = vpop.f32.mrf.mxu0
      %v2030 = vadd.f32 0.0, %v2029
      %v2031 = vpop.f32.mrf.mxu0
      %2032 = vmatprep.mubr.f32.mxu0 0.0
      %2033 = vmatmul.mubr.f32.gmra.mxu0 %v1577
      %v2034 = vpop.f32.mrf.mxu0
      %v2035 = vadd.f32 0.0, %v2034
      %v2036 = vpop.f32.mrf.mxu0
      %2037 = vmatprep.mubr.f32.mxu0 0.0
      %2038 = vmatmul.mubr.f32.gmra.mxu0 %v1580
      %v2039 = vpop.f32.mrf.mxu0
      %v2040 = vadd.f32 0.0, %v2039
      %v2041 = vpop.f32.mrf.mxu0
      %2042 = vmatprep.mubr.f32.mxu0 0.0
      %2043 = vmatmul.mubr.f32.gmra.mxu0 %v1583
      %v2044 = vpop.f32.mrf.mxu0
      %v2045 = vadd.f32 0.0, %v2044
      %v2046 = vpop.f32.mrf.mxu0
      %2047 = vmatprep.mubr.f32.mxu0 0.0
      %2048 = vmatmul.mubr.f32.gmra.mxu0 %v1586
      %v2049 = vpop.f32.mrf.mxu0
      %v2050 = vadd.f32 0.0, %v2049
      %v2051 = vpop.f32.mrf.mxu0
      %2052 = vmatprep.mubr.f32.mxu0 0.0
      %2053 = vmatmul.mubr.f32.gmra.mxu0 %v1589
      %v2054 = vpop.f32.mrf.mxu0
      %v2055 = vadd.f32 0.0, %v2054
      %v2056 = vpop.f32.mrf.mxu0
      %2057 = vmatprep.mubr.f32.mxu0 0.0
      %2058 = vmatmul.mubr.f32.gmra.mxu0 %v1592
      %v2059 = vpop.f32.mrf.mxu0
      %v2060 = vadd.f32 0.0, %v2059
      %v2061 = vpop.f32.mrf.mxu0
      %2062 = vmatprep.mubr.f32.mxu0 0.0
      %2063 = vmatmul.mubr.f32.gmra.mxu0 %v1595
      %v2064 = vpop.f32.mrf.mxu0
      %v2065 = vadd.f32 0.0, %v2064
      %v2066 = vpop.f32.mrf.mxu0
      %2067 = vmatprep.mubr.f32.mxu0 0.0
      %2068 = vmatmul.mubr.f32.gmra.mxu0 %v1598
      %v2069 = vpop.f32.mrf.mxu0
      %v2070 = vadd.f32 0.0, %v2069
      %v2071 = vpop.f32.mrf.mxu0
      %2072 = vmatprep.mubr.f32.mxu0 0.0
      %2073 = vmatmul.mubr.f32.gmra.mxu0 %v1601
      %v2074 = vpop.f32.mrf.mxu0
      %v2075 = vadd.f32 0.0, %v2074
      %v2076 = vpop.f32.mrf.mxu0
      %2077 = vmatprep.mubr.f32.mxu0 0.0
      %2078 = vmatmul.mubr.f32.gmra.mxu0 %v1604
      %v2079 = vpop.f32.mrf.mxu0
      %v2080 = vadd.f32 0.0, %v2079
      %v2081 = vpop.f32.mrf.mxu0
      %2082 = vmatprep.mubr.f32.mxu0 0.0
      %2083 = vmatmul.mubr.f32.gmra.mxu0 %v1607
      %v2084 = vpop.f32.mrf.mxu0
      %v2085 = vadd.f32 0.0, %v2084
      %v2086 = vpop.f32.mrf.mxu0
      %2087 = vmatprep.mubr.f32.mxu0 0.0
      %2088 = vmatmul.mubr.f32.gmra.mxu0 %v1610
      %v2089 = vpop.f32.mrf.mxu0
      %v2090 = vadd.f32 0.0, %v2089
      %v2091 = vpop.f32.mrf.mxu0
      %2092 = vmatprep.mubr.f32.mxu0 0.0
      %2093 = vmatmul.mubr.f32.gmra.mxu0 %v1613
      %v2094 = vpop.f32.mrf.mxu0
      %v2095 = vadd.f32 0.0, %v2094
      %v2096 = vpop.f32.mrf.mxu0
      %2097 = vmatprep.mubr.f32.mxu0 0.0
      %2098 = vmatmul.mubr.f32.gmra.mxu0 %v1616
      %v2099 = vpop.f32.mrf.mxu0
      %v2100 = vadd.f32 0.0, %v2099
      %v2101 = vpop.f32.mrf.mxu0
      %2102 = vmatprep.mubr.f32.mxu0 0.0
      %2103 = vmatmul.mubr.f32.gmra.mxu0 %v1619
      %v2104 = vpop.f32.mrf.mxu0
      %v2105 = vadd.f32 0.0, %v2104
      %v2106 = vpop.f32.mrf.mxu0
      %2107 = vmatprep.mubr.f32.mxu0 0.0
      %2108 = vmatmul.mubr.f32.gmra.mxu0 %v1622
      %v2109 = vpop.f32.mrf.mxu0
      %v2110 = vadd.f32 0.0, %v2109
      %v2111 = vpop.f32.mrf.mxu0
      %2112 = vmatprep.mubr.f32.mxu0 0.0
      %2113 = vmatmul.mubr.f32.gmra.mxu0 %v1625
      %v2114 = vpop.f32.mrf.mxu0
      %v2115 = vadd.f32 0.0, %v2114
      %v2116 = vpop.f32.mrf.mxu0
      %2117 = vmatprep.mubr.f32.mxu0 0.0
      %2118 = vmatmul.mubr.f32.gmra.mxu0 %v1628
      %v2119 = vpop.f32.mrf.mxu0
      %v2120 = vadd.f32 0.0, %v2119
      %v2121 = vpop.f32.mrf.mxu0
      %2122 = vmatprep.mubr.f32.mxu0 0.0
      %2123 = vmatmul.mubr.f32.gmra.mxu0 %v1631
      %v2124 = vpop.f32.mrf.mxu0
      %v2125 = vadd.f32 0.0, %v2124
      %v2126 = vpop.f32.mrf.mxu0
      %2127 = vmatprep.mubr.f32.mxu0 0.0
      %2128 = vmatmul.mubr.f32.gmra.mxu0 %v1634
      %v2129 = vpop.f32.mrf.mxu0
      %v2130 = vadd.f32 0.0, %v2129
      %v2131 = vpop.f32.mrf.mxu0
      %2132 = vmatprep.mubr.f32.mxu0 0.0
      %2133 = vmatmul.mubr.f32.gmra.mxu0 %v1637
      %v2134 = vpop.f32.mrf.mxu0
      %v2135 = vadd.f32 0.0, %v2134
      %v2136 = vpop.f32.mrf.mxu0
      %2137 = vmatprep.mubr.f32.mxu0 0.0
      %2138 = vmatmul.mubr.f32.gmra.mxu0 %v1640
      %v2139 = vpop.f32.mrf.mxu0
      %v2140 = vadd.f32 0.0, %v2139
      %v2141 = vpop.f32.mrf.mxu0
      %2142 = vmatprep.mubr.f32.mxu0 0.0
      %2143 = vmatmul.mubr.f32.gmra.mxu0 %v1643
      %v2144 = vpop.f32.mrf.mxu0
      %v2145 = vadd.f32 0.0, %v2144
      %v2146 = vpop.f32.mrf.mxu0
      %2147 = vmatprep.mubr.f32.mxu0 0.0
      %2148 = vmatmul.mubr.f32.gmra.mxu0 %v1646
      %v2149 = vpop.f32.mrf.mxu0
      %v2150 = vadd.f32 0.0, %v2149
      %v2151 = vpop.f32.mrf.mxu0
      %2152 = vmatprep.mubr.f32.mxu0 0.0
      %2153 = vmatmul.mubr.f32.gmra.mxu0 %v1649
      %v2154 = vpop.f32.mrf.mxu0
      %v2155 = vadd.f32 0.0, %v2154
      %v2156 = vpop.f32.mrf.mxu0
      %2157 = vmatprep.mubr.f32.mxu0 0.0
      %2158 = vmatmul.mubr.f32.gmra.mxu0 %v1652
      %v2159 = vpop.f32.mrf.mxu0
      %v2160 = vadd.f32 0.0, %v2159
      %v2161 = vpop.f32.mrf.mxu0
      %2162 = vmatprep.mubr.f32.mxu0 0.0
      %2163 = vmatmul.mubr.f32.gmra.mxu0 %v1655
      %v2164 = vpop.f32.mrf.mxu0
      %v2165 = vadd.f32 0.0, %v2164
      %v2166 = vpop.f32.mrf.mxu0
      %2167 = vmatprep.mubr.f32.mxu0 0.0
      %2168 = vmatmul.mubr.f32.gmra.mxu0 %v1658
      %v2169 = vpop.f32.mrf.mxu0
      %v2170 = vadd.f32 0.0, %v2169
      %v2171 = vpop.f32.mrf.mxu0
      %2172 = vmatprep.mubr.f32.mxu0 0.0
      %2173 = vmatmul.mubr.f32.gmra.mxu0 %v1661
      %v2174 = vpop.f32.mrf.mxu0
      %v2175 = vadd.f32 0.0, %v2174
      %v2176 = vpop.f32.mrf.mxu0
      %2177 = vmatprep.mubr.f32.mxu0 0.0
      %2178 = vmatmul.mubr.f32.gmra.mxu0 %v1664
      %v2179 = vpop.f32.mrf.mxu0
      %v2180 = vadd.f32 0.0, %v2179
      %v2181 = vpop.f32.mrf.mxu0
      %2182 = vmatprep.mubr.f32.mxu0 0.0
      %2183 = vmatmul.mubr.f32.gmra.mxu0 %v1667
      %v2184 = vpop.f32.mrf.mxu0
      %v2185 = vadd.f32 0.0, %v2184
      %v2186 = vpop.f32.mrf.mxu0
      %2187 = vmatprep.mubr.f32.mxu0 0.0
      %2188 = vmatmul.mubr.f32.gmra.mxu0 %v1670
      %v2189 = vpop.f32.mrf.mxu0
      %v2190 = vadd.f32 0.0, %v2189
      %v2191 = vpop.f32.mrf.mxu0
      %2192 = vmatprep.mubr.f32.mxu0 0.0
      %2193 = vmatmul.mubr.f32.gmra.mxu0 %v1673
      %v2194 = vpop.f32.mrf.mxu0
      %v2195 = vadd.f32 0.0, %v2194
      %v2196 = vpop.f32.mrf.mxu0
      %2197 = vmatprep.mubr.f32.mxu0 0.0
      %2198 = vmatmul.mubr.f32.gmra.mxu0 %v1676
      %v2199 = vpop.f32.mrf.mxu0
      %v2200 = vadd.f32 0.0, %v2199
      %v2201 = vpop.f32.mrf.mxu0
      %2202 = vmatprep.mubr.f32.mxu0 0.0
      %2203 = vmatmul.mubr.f32.gmra.mxu0 %v1679
      %v2204 = vpop.f32.mrf.mxu0
      %v2205 = vadd.f32 0.0, %v2204
      %v2206 = vpop.f32.mrf.mxu0
      %2207 = vmatprep.mubr.f32.mxu0 0.0
      %2208 = vmatmul.mubr.f32.gmra.mxu0 %v1682
      %v2209 = vpop.f32.mrf.mxu0
      %v2210 = vadd.f32 0.0, %v2209
      %v2211 = vpop.f32.mrf.mxu0
      %2212 = vmatprep.mubr.f32.mxu0 0.0
      %2213 = vmatmul.mubr.f32.gmra.mxu0 %v1685
      %v2214 = vpop.f32.mrf.mxu0
      %v2215 = vadd.f32 0.0, %v2214
      %v2216 = vpop.f32.mrf.mxu0
      %2217 = vmatprep.mubr.f32.mxu0 0.0
      %2218 = vmatmul.mubr.f32.gmra.mxu0 %v1688
      %v2219 = vpop.f32.mrf.mxu0
      %v2220 = vadd.f32 0.0, %v2219
      %v2221 = vpop.f32.mrf.mxu0
      %2222 = vmatprep.mubr.f32.mxu0 0.0
      %2223 = vmatmul.mubr.f32.gmra.mxu0 %v1691
      %v2224 = vpop.f32.mrf.mxu0
      %v2225 = vadd.f32 0.0, %v2224
      %v2226 = vpop.f32.mrf.mxu0
      %2227 = vmatprep.mubr.f32.mxu0 0.0
      %2228 = vmatmul.mubr.f32.gmra.mxu0 %v1694
      %v2229 = vpop.f32.mrf.mxu0
      %v2230 = vadd.f32 0.0, %v2229
      %v2231 = vpop.f32.mrf.mxu0
      %2232 = vmatprep.mubr.f32.mxu0 0.0
      %2233 = vmatmul.mubr.f32.gmra.mxu0 %v1697
      %v2234 = vpop.f32.mrf.mxu0
      %v2235 = vadd.f32 0.0, %v2234
      %v2236 = vpop.f32.mrf.mxu0
      %2237 = vmatprep.mubr.f32.mxu0 0.0
      %2238 = vmatmul.mubr.f32.gmra.mxu0 %v1700
      %v2239 = vpop.f32.mrf.mxu0
      %v2240 = vadd.f32 0.0, %v2239
      %v2241 = vpop.f32.mrf.mxu0
      %2242 = vmatprep.mubr.f32.mxu0 0.0
      %2243 = vmatmul.mubr.f32.gmra.mxu0 %v1703
      %v2244 = vpop.f32.mrf.mxu0
      %v2245 = vadd.f32 0.0, %v2244
      %v2246 = vpop.f32.mrf.mxu0
      %2247 = vmatprep.mubr.f32.mxu0 0.0
      %2248 = vmatmul.mubr.f32.gmra.mxu0 %v1706
      %v2249 = vpop.f32.mrf.mxu0
      %v2250 = vadd.f32 0.0, %v2249
      %v2251 = vpop.f32.mrf.mxu0
      %2252 = vmatprep.mubr.f32.mxu0 0.0
      %2253 = vmatmul.mubr.f32.gmra.mxu0 %v1709
      %v2254 = vpop.f32.mrf.mxu0
      %v2255 = vadd.f32 0.0, %v2254
      %v2256 = vpop.f32.mrf.mxu0
      %2257 = vmatprep.mubr.f32.mxu0 0.0
      %2258 = vmatmul.mubr.f32.gmra.mxu0 %v1712
      %v2259 = vpop.f32.mrf.mxu0
      %v2260 = vadd.f32 0.0, %v2259
      %v2261 = vpop.f32.mrf.mxu0
      %2262 = vmatprep.mubr.f32.mxu0 0.0
      %2263 = vmatmul.mubr.f32.gmra.mxu0 %v1715
      %v2264 = vpop.f32.mrf.mxu0
      %v2265 = vadd.f32 0.0, %v2264
      %v2266 = vpop.f32.mrf.mxu0
      %2267 = vmatprep.mubr.f32.mxu0 0.0
      %2268 = vmatmul.mubr.f32.gmra.mxu0 %v1718
      %v2269 = vpop.f32.mrf.mxu0
      %v2270 = vadd.f32 0.0, %v2269
      %v2271 = vpop.f32.mrf.mxu0
      %2272 = vmatprep.mubr.f32.mxu0 0.0
      %2273 = vmatmul.mubr.f32.gmra.mxu0 %v1721
      %v2274 = vpop.f32.mrf.mxu0
      %v2275 = vadd.f32 0.0, %v2274
      %v2276 = vpop.f32.mrf.mxu0
      %2277 = vmatprep.mubr.f32.mxu0 0.0
      %2278 = vmatmul.mubr.f32.gmra.mxu0 %v1724
      %v2279 = vpop.f32.mrf.mxu0
      %v2280 = vadd.f32 0.0, %v2279
      %v2281 = vpop.f32.mrf.mxu0
      %2282 = vmatprep.mubr.f32.mxu0 0.0
      %2283 = vmatmul.mubr.f32.gmra.mxu0 %v1727
      %v2284 = vpop.f32.mrf.mxu0
      %v2285 = vadd.f32 0.0, %v2284
      %v2286 = vpop.f32.mrf.mxu0
      %2287 = vmatprep.mubr.f32.mxu0 0.0
      %2288 = vmatmul.mubr.f32.gmra.mxu0 %v1730
      %v2289 = vpop.f32.mrf.mxu0
      %v2290 = vadd.f32 0.0, %v2289
      %v2291 = vpop.f32.mrf.mxu0
      %2292 = vmatprep.mubr.f32.mxu0 0.0
      %2293 = vmatmul.mubr.f32.gmra.mxu0 %v1733
      %v2294 = vpop.f32.mrf.mxu0
      %v2295 = vadd.f32 0.0, %v2294
      %v2296 = vpop.f32.mrf.mxu0
      %2297 = vmatprep.mubr.f32.mxu0 0.0
      %2298 = vmatmul.mubr.f32.gmra.mxu0 %v1736
      %v2299 = vpop.f32.mrf.mxu0
      %v2300 = vadd.f32 0.0, %v2299
      %v2301 = vpop.f32.mrf.mxu0
      %2302 = vmatprep.mubr.f32.mxu0 0.0
      %2303 = vmatmul.mubr.f32.gmra.mxu0 %v1739
      %v2304 = vpop.f32.mrf.mxu0
      %v2305 = vadd.f32 0.0, %v2304
      %v2306 = vpop.f32.mrf.mxu0
      %2307 = vmatprep.mubr.f32.mxu0 0.0
      %2308 = vmatmul.mubr.f32.gmra.mxu0 %v1742
      %v2309 = vpop.f32.mrf.mxu0
      %v2310 = vadd.f32 0.0, %v2309
      %v2311 = vpop.f32.mrf.mxu0
      %2312 = vmatprep.mubr.f32.mxu0 0.0
      %2313 = vmatmul.mubr.f32.gmra.mxu0 %v1745
      %v2314 = vpop.f32.mrf.mxu0
      %v2315 = vadd.f32 0.0, %v2314
      %v2316 = vpop.f32.mrf.mxu0
      %2317 = vmatprep.mubr.f32.mxu0 0.0
      %2318 = vmatmul.mubr.f32.gmra.mxu0 %v1748
      %v2319 = vpop.f32.mrf.mxu0
      %v2320 = vadd.f32 0.0, %v2319
      %v2321 = vpop.f32.mrf.mxu0
      %2322 = vmatprep.mubr.f32.mxu0 0.0
      %2323 = vmatmul.mubr.f32.gmra.mxu0 %v1751
      %v2324 = vpop.f32.mrf.mxu0
      %v2325 = vadd.f32 0.0, %v2324
      %v2326 = vpop.f32.mrf.mxu0
      %2327 = vmatprep.mubr.f32.mxu0 0.0
      %2328 = vmatmul.mubr.f32.gmra.mxu0 %v1754
      %v2329 = vpop.f32.mrf.mxu0
      %v2330 = vadd.f32 0.0, %v2329
      %v2331 = vpop.f32.mrf.mxu0
      %2332 = vmatprep.mubr.f32.mxu0 0.0
      %2333 = vmatmul.mubr.f32.gmra.mxu0 %v1757
      %v2334 = vpop.f32.mrf.mxu0
      %v2335 = vadd.f32 0.0, %v2334
      %v2336 = vpop.f32.mrf.mxu0
      %2337 = vmatprep.mubr.f32.mxu0 0.0
      %2338 = vmatmul.mubr.f32.gmra.mxu0 %v1760
      %v2339 = vpop.f32.mrf.mxu0
      %v2340 = vadd.f32 0.0, %v2339
      %v2341 = vpop.f32.mrf.mxu0
      %2342 = vmatprep.mubr.f32.mxu0 0.0
      %2343 = vmatmul.mubr.f32.gmra.mxu0 %v1763
      %v2344 = vpop.f32.mrf.mxu0
      %v2345 = vadd.f32 0.0, %v2344
      %v2346 = vpop.f32.mrf.mxu0
      %2347 = vmatprep.mubr.f32.mxu0 0.0
      %2348 = vmatmul.mubr.f32.gmra.mxu0 %v1766
      %v2349 = vpop.f32.mrf.mxu0
      %v2350 = vadd.f32 0.0, %v2349
      %v2351 = vpop.f32.mrf.mxu0
      %2352 = vmatprep.mubr.f32.mxu0 0.0
      %2353 = vmatmul.mubr.f32.gmra.mxu0 %v1769
      %v2354 = vpop.f32.mrf.mxu0
      %v2355 = vadd.f32 0.0, %v2354
      %v2356 = vpop.f32.mrf.mxu0
      %2357 = vmatprep.mubr.f32.mxu0 0.0
      %2358 = vmatmul.mubr.f32.gmra.mxu0 %v1772
      %v2359 = vpop.f32.mrf.mxu0
      %v2360 = vadd.f32 0.0, %v2359
      %v2361 = vpop.f32.mrf.mxu0
      %2362 = vmatprep.mubr.f32.mxu0 0.0
      %2363 = vmatmul.mubr.f32.gmra.mxu0 %v1775
      %v2364 = vpop.f32.mrf.mxu0
      %v2365 = vadd.f32 0.0, %v2364
      %v2366 = vpop.f32.mrf.mxu0
      %2367 = vmatprep.mubr.f32.mxu0 0.0
      %2368 = vmatmul.mubr.f32.gmra.mxu0 %v1778
      %v2369 = vpop.f32.mrf.mxu0
      %v2370 = vadd.f32 0.0, %v2369
      %v2371 = vpop.f32.mrf.mxu0
      %2372 = vmatprep.mubr.f32.mxu0 0.0
      %2373 = vmatmul.mubr.f32.gmra.mxu0 %v1781
      %v2374 = vpop.f32.mrf.mxu0
      %v2375 = vadd.f32 0.0, %v2374
      %v2376 = vpop.f32.mrf.mxu0
      %2377 = vmatprep.mubr.f32.mxu0 0.0
      %2378 = vmatmul.mubr.f32.gmra.mxu0 %v1784
      %v2379 = vpop.f32.mrf.mxu0
      %v2380 = vadd.f32 0.0, %v2379
      %v2381 = vpop.f32.mrf.mxu0
      %2382 = vmatprep.mubr.f32.mxu0 0.0
      %2383 = vmatmul.mubr.f32.gmra.mxu0 %v1787
      %v2384 = vpop.f32.mrf.mxu0
      %v2385 = vadd.f32 0.0, %v2384
      %v2386 = vpop.f32.mrf.mxu0
      %2387 = vmatprep.mubr.f32.mxu0 0.0
      %2388 = vmatmul.mubr.f32.gmra.mxu0 %v1790
      %v2389 = vpop.f32.mrf.mxu0
      %v2390 = vadd.f32 0.0, %v2389
      %v2391 = vpop.f32.mrf.mxu0
      %2392 = vmatprep.mubr.f32.mxu0 0.0
      %2393 = vmatmul.mubr.f32.gmra.mxu0 %v1793
      %v2394 = vpop.f32.mrf.mxu0
      %v2395 = vadd.f32 0.0, %v2394
      %v2396 = vpop.f32.mrf.mxu0
      %2397 = vmatprep.mubr.f32.mxu0 0.0
      %2398 = vmatmul.mubr.f32.gmra.mxu0 %v1796
      %v2399 = vpop.f32.mrf.mxu0
      %v2400 = vadd.f32 0.0, %v2399
      %v2401 = vpop.f32.mrf.mxu0
      %2402 = vmatprep.mubr.f32.mxu0 0.0
      %2403 = vmatmul.mubr.f32.gmra.mxu0 %v1799
      %v2404 = vpop.f32.mrf.mxu0
      %v2405 = vadd.f32 0.0, %v2404
      %v2406 = vpop.f32.mrf.mxu0
      %2407 = vmatprep.mubr.f32.mxu0 0.0
      %2408 = vmatmul.mubr.f32.gmra.mxu0 %v1802
      %v2409 = vpop.f32.mrf.mxu0
      %v2410 = vadd.f32 0.0, %v2409
      %v2411 = vpop.f32.mrf.mxu0
      %2412 = vmatprep.mubr.f32.mxu0 0.0
      %2413 = vmatmul.mubr.f32.gmra.mxu0 %v1805
      %v2414 = vpop.f32.mrf.mxu0
      %v2415 = vadd.f32 0.0, %v2414
      %v2416 = vpop.f32.mrf.mxu0
      %2417 = vmatprep.mubr.f32.mxu0 0.0
      %2418 = vmatmul.mubr.f32.gmra.mxu0 %v1808
      %v2419 = vpop.f32.mrf.mxu0
      %v2420 = vadd.f32 0.0, %v2419
      %v2421 = vpop.f32.mrf.mxu0
      %2422 = vmatprep.mubr.f32.mxu0 0.0
      %2423 = vmatmul.mubr.f32.gmra.mxu0 %v1811
      %v2424 = vpop.f32.mrf.mxu0
      %v2425 = vadd.f32 0.0, %v2424
      %v2426 = vpop.f32.mrf.mxu0
      %2427 = vmatprep.mubr.f32.mxu0 0.0
      %2428 = vmatmul.mubr.f32.gmra.mxu0 %v1814
      %v2429 = vpop.f32.mrf.mxu0
      %v2430 = vadd.f32 0.0, %v2429
      %v2431 = vpop.f32.mrf.mxu0
      %2432 = vmatprep.mubr.f32.mxu0 0.0
      %2433 = vmatmul.mubr.f32.gmra.mxu0 %v1817
      %v2434 = vpop.f32.mrf.mxu0
      %v2435 = vadd.f32 0.0, %v2434
      %v2436 = vpop.f32.mrf.mxu0
      %2437 = vmatprep.mubr.f32.mxu0 0.0
      %2438 = vmatmul.mubr.f32.gmra.mxu0 %v1820
      %v2439 = vpop.f32.mrf.mxu0
      %v2440 = vadd.f32 0.0, %v2439
      %v2441 = vpop.f32.mrf.mxu0
      %2442 = vmatprep.mubr.f32.mxu0 0.0
      %2443 = vmatmul.mubr.f32.gmra.mxu0 %v1823
      %v2444 = vpop.f32.mrf.mxu0
      %v2445 = vadd.f32 0.0, %v2444
      %v2446 = vpop.f32.mrf.mxu0
      %2447 = vmatprep.mubr.f32.mxu0 0.0
      %2448 = vmatmul.mubr.f32.gmra.mxu0 %v1826
      %v2449 = vpop.f32.mrf.mxu0
      %v2450 = vadd.f32 0.0, %v2449
      %v2451 = vpop.f32.mrf.mxu0
      %2452 = vmatprep.mubr.f32.mxu0 0.0
      %2453 = vmatmul.mubr.f32.gmra.mxu0 %v1829
      %v2454 = vpop.f32.mrf.mxu0
      %v2455 = vadd.f32 0.0, %v2454
      %v2456 = vpop.f32.mrf.mxu0
      %2457 = vmatprep.mubr.f32.mxu0 0.0
      %2458 = vmatmul.mubr.f32.gmra.mxu0 %v1832
      %v2459 = vpop.f32.mrf.mxu0
      %v2460 = vadd.f32 0.0, %v2459
      %v2461 = vpop.f32.mrf.mxu0
      %2462 = vmatprep.mubr.f32.mxu0 0.0
      %2463 = vmatmul.mubr.f32.gmra.mxu0 %v1835
      %v2464 = vpop.f32.mrf.mxu0
      %v2465 = vadd.f32 0.0, %v2464
      %v2466 = vpop.f32.mrf.mxu0
      %2467 = vmatprep.mubr.f32.mxu0 0.0
      %2468 = vmatmul.mubr.f32.gmra.mxu0 %v1838
      %v2469 = vpop.f32.mrf.mxu0
      %v2470 = vadd.f32 0.0, %v2469
      %v2471 = vpop.f32.mrf.mxu0
      %2472 = vmatprep.mubr.f32.mxu0 0.0
      %2473 = vmatmul.mubr.f32.gmra.mxu0 %v1841
      %v2474 = vpop.f32.mrf.mxu0
      %v2475 = vadd.f32 0.0, %v2474
      %v2476 = vpop.f32.mrf.mxu0
      %2477 = vmatprep.mubr.f32.mxu0 0.0
      %2478 = vmatmul.mubr.f32.gmra.mxu0 %v1844
      %v2479 = vpop.f32.mrf.mxu0
      %v2480 = vadd.f32 0.0, %v2479
      %v2481 = vpop.f32.mrf.mxu0
      %2482 = vmatprep.mubr.f32.mxu0 0.0
      %2483 = vmatmul.mubr.f32.gmra.mxu0 %v1847
      %v2484 = vpop.f32.mrf.mxu0
      %v2485 = vadd.f32 0.0, %v2484
      %v2486 = vpop.f32.mrf.mxu0
      %2487 = vmatprep.mubr.f32.mxu0 0.0
      %2488 = vmatmul.mubr.f32.gmra.mxu0 %v1850
      %v2489 = vpop.f32.mrf.mxu0
      %v2490 = vadd.f32 0.0, %v2489
      %v2491 = vpop.f32.mrf.mxu0
      %2492 = vmatprep.mubr.f32.mxu0 0.0
      %2493 = vmatmul.mubr.f32.gmra.mxu0 %v1853
      %v2494 = vpop.f32.mrf.mxu0
      %v2495 = vadd.f32 0.0, %v2494
      %v2496 = vpop.f32.mrf.mxu0
      %2497 = vmatprep.mubr.f32.mxu0 0.0
      %2498 = vmatmul.mubr.f32.gmra.mxu0 %v1856
      %v2499 = vpop.f32.mrf.mxu0
      %v2500 = vadd.f32 0.0, %v2499
      %v2501 = vpop.f32.mrf.mxu0
      %2502 = vmatprep.mubr.f32.mxu0 0.0
      %2503 = vmatmul.mubr.f32.gmra.mxu0 %v1859
      %v2504 = vpop.f32.mrf.mxu0
      %v2505 = vadd.f32 0.0, %v2504
      %v2506 = vpop.f32.mrf.mxu0
      %2507 = vmatprep.mubr.f32.mxu0 0.0
      %2508 = vmatmul.mubr.f32.gmra.mxu0 %v1862
      %v2509 = vpop.f32.mrf.mxu0
      %v2510 = vadd.f32 0.0, %v2509
      %v2511 = vpop.f32.mrf.mxu0
      %2512 = vmatprep.mubr.f32.mxu0 0.0
      %2513 = vmatmul.mubr.f32.gmra.mxu0 %v1865
      %v2514 = vpop.f32.mrf.mxu0
      %v2515 = vadd.f32 0.0, %v2514
      %v2516 = vpop.f32.mrf.mxu0
      %2517 = vmatprep.mubr.f32.mxu0 0.0
      %2518 = vmatmul.mubr.f32.gmra.mxu0 %v1868
      %v2519 = vpop.f32.mrf.mxu0
      %v2520 = vadd.f32 0.0, %v2519
      %v2521 = vpop.f32.mrf.mxu0
      %2522 = vmatprep.mubr.f32.mxu0 0.0
      %2523 = vmatmul.mubr.f32.gmra.mxu0 %v1871
      %v2524 = vpop.f32.mrf.mxu0
      %v2525 = vadd.f32 0.0, %v2524
      %v2526 = vpop.f32.mrf.mxu0
      %2527 = vmatprep.mubr.f32.mxu0 0.0
      %2528 = vmatmul.mubr.f32.gmra.mxu0 %v1874
      %v2529 = vpop.f32.mrf.mxu0
      %v2530 = vadd.f32 0.0, %v2529
      %v2531 = vpop.f32.mrf.mxu0
      %2532 = vmatprep.mubr.f32.mxu0 0.0
      %2533 = vmatmul.mubr.f32.gmra.mxu0 %v1877
      %v2534 = vpop.f32.mrf.mxu0
      %v2535 = vadd.f32 0.0, %v2534
      %v2536 = vpop.f32.mrf.mxu0
      %2537 = vmatprep.mubr.f32.mxu0 0.0
      %2538 = vmatmul.mubr.f32.gmra.mxu0 %v1880
      %v2539 = vpop.f32.mrf.mxu0
      %v2540 = vadd.f32 0.0, %v2539
      %v2541 = vpop.f32.mrf.mxu0
      %2542 = vmatprep.mubr.f32.mxu0 0.0
      %2543 = vmatmul.mubr.f32.gmra.mxu0 %v1883
      %v2544 = vpop.f32.mrf.mxu0
      %v2545 = vadd.f32 0.0, %v2544
      %v2546 = vpop.f32.mrf.mxu0
      %2547 = vmatprep.mubr.f32.mxu0 0.0
      %2548 = vmatmul.mubr.f32.gmra.mxu0 %v1886
      %v2549 = vpop.f32.mrf.mxu0
      %v2550 = vadd.f32 0.0, %v2549
      %v2551 = vpop.f32.mrf.mxu0
      %2552 = vmatprep.mubr.f32.mxu0 0.0
      %2553 = vmatmul.mubr.f32.gmra.mxu0 %v1889
      %v2554 = vpop.f32.mrf.mxu0
      %v2555 = vadd.f32 0.0, %v2554
      %v2556 = vpop.f32.mrf.mxu0
      %2557 = vmatprep.mubr.f32.mxu0 0.0
      %2558 = vmatmul.mubr.f32.gmra.mxu0 %v1892
      %v2559 = vpop.f32.mrf.mxu0
      %v2560 = vadd.f32 0.0, %v2559
      %v2561 = vpop.f32.mrf.mxu0
      %2562 = vmatprep.mubr.f32.mxu0 0.0
      %2563 = vmatmul.mubr.f32.gmra.mxu0 %v1895
      %v2564 = vpop.f32.mrf.mxu0
      %v2565 = vadd.f32 0.0, %v2564
      %v2566 = vpop.f32.mrf.mxu0
      %2567 = vmatprep.mubr.f32.mxu0 0.0
      %2568 = vmatmul.mubr.f32.gmra.mxu0 %v1898
      %v2569 = vpop.f32.mrf.mxu0
      %v2570 = vadd.f32 0.0, %v2569
      %v2571 = vpop.f32.mrf.mxu0
      %2572 = vmatprep.mubr.f32.mxu0 0.0
      %2573 = vmatmul.mubr.f32.gmra.mxu0 %v1901
      %v2574 = vpop.f32.mrf.mxu0
      %v2575 = vadd.f32 0.0, %v2574
      %v2576 = vpop.f32.mrf.mxu0
      %2577 = vmatprep.mubr.f32.mxu0 0.0
      %2578 = vmatmul.mubr.f32.gmra.mxu0 %v1904
      %v2579 = vpop.f32.mrf.mxu0
      %v2580 = vadd.f32 0.0, %v2579
      %v2581 = vpop.f32.mrf.mxu0
      %2582 = vmatprep.mubr.f32.mxu0 0.0
      %2583 = vmatmul.mubr.f32.gmra.mxu0 %v1907
      %v2584 = vpop.f32.mrf.mxu0
      %v2585 = vadd.f32 0.0, %v2584
      %v2586 = vpop.f32.mrf.mxu0
      %2587 = vmatprep.mubr.f32.mxu0 0.0
      %2588 = vmatmul.mubr.f32.gmra.mxu0 %v1910
      %v2589 = vpop.f32.mrf.mxu0
      %v2590 = vadd.f32 0.0, %v2589
      %v2591 = vpop.f32.mrf.mxu0
      %2592 = vmatprep.mubr.f32.mxu0 0.0
      %2593 = vmatmul.mubr.f32.gmra.mxu0 %v1913
      %v2594 = vpop.f32.mrf.mxu0
      %v2595 = vadd.f32 0.0, %v2594
      %v2596 = vpop.f32.mrf.mxu0
      %2597 = vmatprep.mubr.f32.mxu0 0.0
      %2598 = vmatmul.mubr.f32.gmra.mxu0 %v1916
      %v2599 = vpop.f32.mrf.mxu0
      %v2600 = vadd.f32 0.0, %v2599
      %v2601 = vpop.f32.mrf.mxu0
      %2602 = vmatprep.mubr.f32.mxu0 0.0
      %2603 = vmatmul.mubr.f32.gmra.mxu0 %v1919
      %v2604 = vpop.f32.mrf.mxu0
      %v2605 = vadd.f32 0.0, %v2604
      %v2606 = vpop.f32.mrf.mxu0
      %2607 = vmatprep.mubr.f32.mxu0 0.0
      %2608 = vmatmul.mubr.f32.gmra.mxu0 %v1922
      %v2609 = vpop.f32.mrf.mxu0
      %v2610 = vadd.f32 0.0, %v2609
      %v2611 = vpop.f32.mrf.mxu0
      %2612 = vmatprep.mubr.f32.mxu0 0.0
      %2613 = vmatmul.mubr.f32.gmra.mxu0 %v1925
      %v2614 = vpop.f32.mrf.mxu0
      %v2615 = vadd.f32 0.0, %v2614
      %v2616 = vpop.f32.mrf.mxu0
      %2617 = vmatprep.mubr.f32.mxu0 0.0
      %2618 = vmatmul.mubr.f32.gmra.mxu0 %v1928
      %v2619 = vpop.f32.mrf.mxu0
      %v2620 = vadd.f32 0.0, %v2619
      %v2621 = vpop.f32.mrf.mxu0
      %2622 = vmatprep.mubr.f32.mxu0 0.0
      %2623 = vmatmul.mubr.f32.gmra.mxu0 %v1931
      %v2624 = vpop.f32.mrf.mxu0
      %v2625 = vadd.f32 0.0, %v2624
      %v2626 = vpop.f32.mrf.mxu0
      %2627 = vmatprep.mubr.f32.mxu0 0.0
      %2628 = vmatmul.mubr.f32.gmra.mxu0 %v1934
      %v2629 = vpop.f32.mrf.mxu0
      %v2630 = vadd.f32 0.0, %v2629
      %v2631 = vpop.f32.mrf.mxu0
      %2632 = vmatprep.mubr.f32.mxu0 0.0
      %2633 = vmatmul.mubr.f32.gmra.mxu0 %v1937
      %v2634 = vpop.f32.mrf.mxu0
      %v2635 = vadd.f32 0.0, %v2634
      %v2636 = vpop.f32.mrf.mxu0
      %2637 = vmatprep.mubr.f32.mxu0 0.0
      %2638 = vmatmul.mubr.f32.gmra.mxu0 %v1940
      %v2639 = vpop.f32.mrf.mxu0
      %v2640 = vadd.f32 0.0, %v2639
      %v2641 = vpop.f32.mrf.mxu0
      %2642 = vmatprep.mubr.f32.mxu0 0.0
      %2643 = vmatmul.mubr.f32.gmra.mxu0 %v1943
      %v2644 = vpop.f32.mrf.mxu0
      %v2645 = vadd.f32 0.0, %v2644
      %v2646 = vpop.f32.mrf.mxu0
      %2647 = vmatprep.mubr.f32.mxu0 0.0
      %2648 = vmatmul.mubr.f32.gmra.mxu0 %v1946
      %v2649 = vpop.f32.mrf.mxu0
      %v2650 = vadd.f32 0.0, %v2649
      %v2651 = vpop.f32.mrf.mxu0
      %2652 = vdwg.mxu0
      %2653 = vxpose.xlu0.b32.start [1/16] %v392, 128
      %2654 = vxpose.xlu0.b32.cont [2/16] 0.0, 128
      %2655 = vxpose.xlu0.b32.cont [3/16] 0.0, 128
      %2656 = vxpose.xlu0.b32.cont [4/16] 0.0, 128
      %2657 = vxpose.xlu0.b32.cont [5/16] 0.0, 128
      %2658 = vxpose.xlu0.b32.cont [6/16] 0.0, 128
      %2659 = vxpose.xlu0.b32.cont [7/16] 0.0, 128
      %2660 = vxpose.xlu0.b32.cont [8/16] 0.0, 128
      %2661 = vxpose.xlu0.b32.cont [9/16] 0.0, 128
      %2662 = vxpose.xlu0.b32.cont [10/16] 0.0, 128
      %2663 = vxpose.xlu0.b32.cont [11/16] 0.0, 128
      %2664 = vxpose.xlu0.b32.cont [12/16] 0.0, 128
      %2665 = vxpose.xlu0.b32.cont [13/16] 0.0, 128
      %2666 = vxpose.xlu0.b32.cont [14/16] 0.0, 128
      %2667 = vxpose.xlu0.b32.cont [15/16] 0.0, 128
      %2668 = vxpose.xlu0.b32.end [16/16] 0.0, 128
      %v2669 = vpop.trf.xlu0
      %v2670 = vpop.trf.xlu0
      %v2671 = vpop.trf.xlu0
      %v2672 = vpop.trf.xlu0
      %v2673 = vpop.trf.xlu0
      %v2674 = vpop.trf.xlu0
      %v2675 = vpop.trf.xlu0
      %v2676 = vpop.trf.xlu0
      %v2677 = vpop.trf.xlu0
      %v2678 = vpop.trf.xlu0
      %v2679 = vpop.trf.xlu0
      %v2680 = vpop.trf.xlu0
      %v2681 = vpop.trf.xlu0
      %v2682 = vpop.trf.xlu0
      %v2683 = vpop.trf.xlu0
      %v2684 = vpop.trf.xlu0
      %2685 = vxpose.xlu0.b32.start [1/16] %v393, 128
      %2686 = vxpose.xlu0.b32.cont [2/16] 0.0, 128
      %2687 = vxpose.xlu0.b32.cont [3/16] 0.0, 128
      %2688 = vxpose.xlu0.b32.cont [4/16] 0.0, 128
      %2689 = vxpose.xlu0.b32.cont [5/16] 0.0, 128
      %2690 = vxpose.xlu0.b32.cont [6/16] 0.0, 128
      %2691 = vxpose.xlu0.b32.cont [7/16] 0.0, 128
      %2692 = vxpose.xlu0.b32.cont [8/16] 0.0, 128
      %2693 = vxpose.xlu0.b32.cont [9/16] 0.0, 128
      %2694 = vxpose.xlu0.b32.cont [10/16] 0.0, 128
      %2695 = vxpose.xlu0.b32.cont [11/16] 0.0, 128
      %2696 = vxpose.xlu0.b32.cont [12/16] 0.0, 128
      %2697 = vxpose.xlu0.b32.cont [13/16] 0.0, 128
      %2698 = vxpose.xlu0.b32.cont [14/16] 0.0, 128
      %2699 = vxpose.xlu0.b32.cont [15/16] 0.0, 128
      %2700 = vxpose.xlu0.b32.end [16/16] 0.0, 128
      %v2701 = vpop.trf.xlu0
      %v2702 = vpop.trf.xlu0
      %v2703 = vpop.trf.xlu0
      %v2704 = vpop.trf.xlu0
      %v2705 = vpop.trf.xlu0
      %v2706 = vpop.trf.xlu0
      %v2707 = vpop.trf.xlu0
      %v2708 = vpop.trf.xlu0
      %v2709 = vpop.trf.xlu0
      %v2710 = vpop.trf.xlu0
      %v2711 = vpop.trf.xlu0
      %v2712 = vpop.trf.xlu0
      %v2713 = vpop.trf.xlu0
      %v2714 = vpop.trf.xlu0
      %v2715 = vpop.trf.xlu0
      %v2716 = vpop.trf.xlu0
      %2717 = vxpose.xlu0.b32.start [1/16] %v394, 128
      %2718 = vxpose.xlu0.b32.cont [2/16] 0.0, 128
      %2719 = vxpose.xlu0.b32.cont [3/16] 0.0, 128
      %2720 = vxpose.xlu0.b32.cont [4/16] 0.0, 128
      %2721 = vxpose.xlu0.b32.cont [5/16] 0.0, 128
      %2722 = vxpose.xlu0.b32.cont [6/16] 0.0, 128
      %2723 = vxpose.xlu0.b32.cont [7/16] 0.0, 128
      %2724 = vxpose.xlu0.b32.cont [8/16] 0.0, 128
      %2725 = vxpose.xlu0.b32.cont [9/16] 0.0, 128
      %2726 = vxpose.xlu0.b32.cont [10/16] 0.0, 128
      %2727 = vxpose.xlu0.b32.cont [11/16] 0.0, 128
      %2728 = vxpose.xlu0.b32.cont [12/16] 0.0, 128
      %2729 = vxpose.xlu0.b32.cont [13/16] 0.0, 128
      %2730 = vxpose.xlu0.b32.cont [14/16] 0.0, 128
      %2731 = vxpose.xlu0.b32.cont [15/16] 0.0, 128
      %2732 = vxpose.xlu0.b32.end [16/16] 0.0, 128
      %v2733 = vpop.trf.xlu0
      %v2734 = vpop.trf.xlu0
      %v2735 = vpop.trf.xlu0
      %v2736 = vpop.trf.xlu0
      %v2737 = vpop.trf.xlu0
      %v2738 = vpop.trf.xlu0
      %v2739 = vpop.trf.xlu0
      %v2740 = vpop.trf.xlu0
      %v2741 = vpop.trf.xlu0
      %v2742 = vpop.trf.xlu0
      %v2743 = vpop.trf.xlu0
      %v2744 = vpop.trf.xlu0
      %v2745 = vpop.trf.xlu0
      %v2746 = vpop.trf.xlu0
      %v2747 = vpop.trf.xlu0
      %v2748 = vpop.trf.xlu0
      %2749 = vxpose.xlu0.b32.start [1/16] %v395, 128
      %2750 = vxpose.xlu0.b32.cont [2/16] 0.0, 128
      %2751 = vxpose.xlu0.b32.cont [3/16] 0.0, 128
      %2752 = vxpose.xlu0.b32.cont [4/16] 0.0, 128
      %2753 = vxpose.xlu0.b32.cont [5/16] 0.0, 128
      %2754 = vxpose.xlu0.b32.cont [6/16] 0.0, 128
      %2755 = vxpose.xlu0.b32.cont [7/16] 0.0, 128
      %2756 = vxpose.xlu0.b32.cont [8/16] 0.0, 128
      %2757 = vxpose.xlu0.b32.cont [9/16] 0.0, 128
      %2758 = vxpose.xlu0.b32.cont [10/16] 0.0, 128
      %2759 = vxpose.xlu0.b32.cont [11/16] 0.0, 128
      %2760 = vxpose.xlu0.b32.cont [12/16] 0.0, 128
      %2761 = vxpose.xlu0.b32.cont [13/16] 0.0, 128
      %2762 = vxpose.xlu0.b32.cont [14/16] 0.0, 128
      %2763 = vxpose.xlu0.b32.cont [15/16] 0.0, 128
      %2764 = vxpose.xlu0.b32.end [16/16] 0.0, 128
      %v2765 = vpop.trf.xlu0
      %v2766 = vpop.trf.xlu0
      %v2767 = vpop.trf.xlu0
      %v2768 = vpop.trf.xlu0
      %v2769 = vpop.trf.xlu0
      %v2770 = vpop.trf.xlu0
      %v2771 = vpop.trf.xlu0
      %v2772 = vpop.trf.xlu0
      %v2773 = vpop.trf.xlu0
      %v2774 = vpop.trf.xlu0
      %v2775 = vpop.trf.xlu0
      %v2776 = vpop.trf.xlu0
      %v2777 = vpop.trf.xlu0
      %v2778 = vpop.trf.xlu0
      %v2779 = vpop.trf.xlu0
      %v2780 = vpop.trf.xlu0
      %2781 = vxpose.xlu0.b32.start [1/16] %v396, 128
      %2782 = vxpose.xlu0.b32.cont [2/16] 0.0, 128
      %2783 = vxpose.xlu0.b32.cont [3/16] 0.0, 128
      %2784 = vxpose.xlu0.b32.cont [4/16] 0.0, 128
      %2785 = vxpose.xlu0.b32.cont [5/16] 0.0, 128
      %2786 = vxpose.xlu0.b32.cont [6/16] 0.0, 128
      %2787 = vxpose.xlu0.b32.cont [7/16] 0.0, 128
      %2788 = vxpose.xlu0.b32.cont [8/16] 0.0, 128
      %2789 = vxpose.xlu0.b32.cont [9/16] 0.0, 128
      %2790 = vxpose.xlu0.b32.cont [10/16] 0.0, 128
      %2791 = vxpose.xlu0.b32.cont [11/16] 0.0, 128
      %2792 = vxpose.xlu0.b32.cont [12/16] 0.0, 128
      %2793 = vxpose.xlu0.b32.cont [13/16] 0.0, 128
      %2794 = vxpose.xlu0.b32.cont [14/16] 0.0, 128
      %2795 = vxpose.xlu0.b32.cont [15/16] 0.0, 128
      %2796 = vxpose.xlu0.b32.end [16/16] 0.0, 128
      %v2797 = vpop.trf.xlu0
      %v2798 = vpop.trf.xlu0
      %v2799 = vpop.trf.xlu0
      %v2800 = vpop.trf.xlu0
      %v2801 = vpop.trf.xlu0
      %v2802 = vpop.trf.xlu0
      %v2803 = vpop.trf.xlu0
      %v2804 = vpop.trf.xlu0
      %v2805 = vpop.trf.xlu0
      %v2806 = vpop.trf.xlu0
      %v2807 = vpop.trf.xlu0
      %v2808 = vpop.trf.xlu0
      %v2809 = vpop.trf.xlu0
      %v2810 = vpop.trf.xlu0
      %v2811 = vpop.trf.xlu0
      %v2812 = vpop.trf.xlu0
      %2813 = vxpose.xlu0.b32.start [1/16] %v397, 128
      %2814 = vxpose.xlu0.b32.cont [2/16] 0.0, 128
      %2815 = vxpose.xlu0.b32.cont [3/16] 0.0, 128
      %2816 = vxpose.xlu0.b32.cont [4/16] 0.0, 128
      %2817 = vxpose.xlu0.b32.cont [5/16] 0.0, 128
      %2818 = vxpose.xlu0.b32.cont [6/16] 0.0, 128
      %2819 = vxpose.xlu0.b32.cont [7/16] 0.0, 128
      %2820 = vxpose.xlu0.b32.cont [8/16] 0.0, 128
      %2821 = vxpose.xlu0.b32.cont [9/16] 0.0, 128
      %2822 = vxpose.xlu0.b32.cont [10/16] 0.0, 128
      %2823 = vxpose.xlu0.b32.cont [11/16] 0.0, 128
      %2824 = vxpose.xlu0.b32.cont [12/16] 0.0, 128
      %2825 = vxpose.xlu0.b32.cont [13/16] 0.0, 128
      %2826 = vxpose.xlu0.b32.cont [14/16] 0.0, 128
      %2827 = vxpose.xlu0.b32.cont [15/16] 0.0, 128
      %2828 = vxpose.xlu0.b32.end [16/16] 0.0, 128
      %v2829 = vpop.trf.xlu0
      %v2830 = vpop.trf.xlu0
      %v2831 = vpop.trf.xlu0
      %v2832 = vpop.trf.xlu0
      %v2833 = vpop.trf.xlu0
      %v2834 = vpop.trf.xlu0
      %v2835 = vpop.trf.xlu0
      %v2836 = vpop.trf.xlu0
      %v2837 = vpop.trf.xlu0
      %v2838 = vpop.trf.xlu0
      %v2839 = vpop.trf.xlu0
      %v2840 = vpop.trf.xlu0
      %v2841 = vpop.trf.xlu0
      %v2842 = vpop.trf.xlu0
      %v2843 = vpop.trf.xlu0
      %v2844 = vpop.trf.xlu0
      %2845 = vxpose.xlu0.b32.start [1/16] %v398, 128
      %2846 = vxpose.xlu0.b32.cont [2/16] 0.0, 128
      %2847 = vxpose.xlu0.b32.cont [3/16] 0.0, 128
      %2848 = vxpose.xlu0.b32.cont [4/16] 0.0, 128
      %2849 = vxpose.xlu0.b32.cont [5/16] 0.0, 128
      %2850 = vxpose.xlu0.b32.cont [6/16] 0.0, 128
      %2851 = vxpose.xlu0.b32.cont [7/16] 0.0, 128
      %2852 = vxpose.xlu0.b32.cont [8/16] 0.0, 128
      %2853 = vxpose.xlu0.b32.cont [9/16] 0.0, 128
      %2854 = vxpose.xlu0.b32.cont [10/16] 0.0, 128
      %2855 = vxpose.xlu0.b32.cont [11/16] 0.0, 128
      %2856 = vxpose.xlu0.b32.cont [12/16] 0.0, 128
      %2857 = vxpose.xlu0.b32.cont [13/16] 0.0, 128
      %2858 = vxpose.xlu0.b32.cont [14/16] 0.0, 128
      %2859 = vxpose.xlu0.b32.cont [15/16] 0.0, 128
      %2860 = vxpose.xlu0.b32.end [16/16] 0.0, 128
      %v2861 = vpop.trf.xlu0
      %v2862 = vpop.trf.xlu0
      %v2863 = vpop.trf.xlu0
      %v2864 = vpop.trf.xlu0
      %v2865 = vpop.trf.xlu0
      %v2866 = vpop.trf.xlu0
      %v2867 = vpop.trf.xlu0
      %v2868 = vpop.trf.xlu0
      %v2869 = vpop.trf.xlu0
      %v2870 = vpop.trf.xlu0
      %v2871 = vpop.trf.xlu0
      %v2872 = vpop.trf.xlu0
      %v2873 = vpop.trf.xlu0
      %v2874 = vpop.trf.xlu0
      %v2875 = vpop.trf.xlu0
      %v2876 = vpop.trf.xlu0
      %2877 = vxpose.xlu0.b32.start [1/16] %v399, 128
      %2878 = vxpose.xlu0.b32.cont [2/16] 0.0, 128
      %2879 = vxpose.xlu0.b32.cont [3/16] 0.0, 128
      %2880 = vxpose.xlu0.b32.cont [4/16] 0.0, 128
      %2881 = vxpose.xlu0.b32.cont [5/16] 0.0, 128
      %2882 = vxpose.xlu0.b32.cont [6/16] 0.0, 128
      %2883 = vxpose.xlu0.b32.cont [7/16] 0.0, 128
      %2884 = vxpose.xlu0.b32.cont [8/16] 0.0, 128
      %2885 = vxpose.xlu0.b32.cont [9/16] 0.0, 128
      %2886 = vxpose.xlu0.b32.cont [10/16] 0.0, 128
      %2887 = vxpose.xlu0.b32.cont [11/16] 0.0, 128
      %2888 = vxpose.xlu0.b32.cont [12/16] 0.0, 128
      %2889 = vxpose.xlu0.b32.cont [13/16] 0.0, 128
      %2890 = vxpose.xlu0.b32.cont [14/16] 0.0, 128
      %2891 = vxpose.xlu0.b32.cont [15/16] 0.0, 128
      %2892 = vxpose.xlu0.b32.end [16/16] 0.0, 128
      %v2893 = vpop.trf.xlu0
      %v2894 = vpop.trf.xlu0
      %v2895 = vpop.trf.xlu0
      %v2896 = vpop.trf.xlu0
      %v2897 = vpop.trf.xlu0
      %v2898 = vpop.trf.xlu0
      %v2899 = vpop.trf.xlu0
      %v2900 = vpop.trf.xlu0
      %v2901 = vpop.trf.xlu0
      %v2902 = vpop.trf.xlu0
      %v2903 = vpop.trf.xlu0
      %v2904 = vpop.trf.xlu0
      %v2905 = vpop.trf.xlu0
      %v2906 = vpop.trf.xlu0
      %v2907 = vpop.trf.xlu0
      %v2908 = vpop.trf.xlu0
      %2909 = vxpose.xlu0.b32.start [1/16] %v400, 128
      %2910 = vxpose.xlu0.b32.cont [2/16] 0.0, 128
      %2911 = vxpose.xlu0.b32.cont [3/16] 0.0, 128
      %2912 = vxpose.xlu0.b32.cont [4/16] 0.0, 128
      %2913 = vxpose.xlu0.b32.cont [5/16] 0.0, 128
      %2914 = vxpose.xlu0.b32.cont [6/16] 0.0, 128
      %2915 = vxpose.xlu0.b32.cont [7/16] 0.0, 128
      %2916 = vxpose.xlu0.b32.cont [8/16] 0.0, 128
      %2917 = vxpose.xlu0.b32.cont [9/16] 0.0, 128
      %2918 = vxpose.xlu0.b32.cont [10/16] 0.0, 128
      %2919 = vxpose.xlu0.b32.cont [11/16] 0.0, 128
      %2920 = vxpose.xlu0.b32.cont [12/16] 0.0, 128
      %2921 = vxpose.xlu0.b32.cont [13/16] 0.0, 128
      %2922 = vxpose.xlu0.b32.cont [14/16] 0.0, 128
      %2923 = vxpose.xlu0.b32.cont [15/16] 0.0, 128
      %2924 = vxpose.xlu0.b32.end [16/16] 0.0, 128
      %v2925 = vpop.trf.xlu0
      %v2926 = vpop.trf.xlu0
      %v2927 = vpop.trf.xlu0
      %v2928 = vpop.trf.xlu0
      %v2929 = vpop.trf.xlu0
      %v2930 = vpop.trf.xlu0
      %v2931 = vpop.trf.xlu0
      %v2932 = vpop.trf.xlu0
      %v2933 = vpop.trf.xlu0
      %v2934 = vpop.trf.xlu0
      %v2935 = vpop.trf.xlu0
      %v2936 = vpop.trf.xlu0
      %v2937 = vpop.trf.xlu0
      %v2938 = vpop.trf.xlu0
      %v2939 = vpop.trf.xlu0
      %v2940 = vpop.trf.xlu0
      %2941 = vxpose.xlu0.b32.start [1/16] %v401, 128
      %2942 = vxpose.xlu0.b32.cont [2/16] 0.0, 128
      %2943 = vxpose.xlu0.b32.cont [3/16] 0.0, 128
      %2944 = vxpose.xlu0.b32.cont [4/16] 0.0, 128
      %2945 = vxpose.xlu0.b32.cont [5/16] 0.0, 128
      %2946 = vxpose.xlu0.b32.cont [6/16] 0.0, 128
      %2947 = vxpose.xlu0.b32.cont [7/16] 0.0, 128
      %2948 = vxpose.xlu0.b32.cont [8/16] 0.0, 128
      %2949 = vxpose.xlu0.b32.cont [9/16] 0.0, 128
      %2950 = vxpose.xlu0.b32.cont [10/16] 0.0, 128
      %2951 = vxpose.xlu0.b32.cont [11/16] 0.0, 128
      %2952 = vxpose.xlu0.b32.cont [12/16] 0.0, 128
      %2953 = vxpose.xlu0.b32.cont [13/16] 0.0, 128
      %2954 = vxpose.xlu0.b32.cont [14/16] 0.0, 128
      %2955 = vxpose.xlu0.b32.cont [15/16] 0.0, 128
      %2956 = vxpose.xlu0.b32.end [16/16] 0.0, 128
      %v2957 = vpop.trf.xlu0
      %v2958 = vpop.trf.xlu0
      %v2959 = vpop.trf.xlu0
      %v2960 = vpop.trf.xlu0
      %v2961 = vpop.trf.xlu0
      %v2962 = vpop.trf.xlu0
      %v2963 = vpop.trf.xlu0
      %v2964 = vpop.trf.xlu0
      %v2965 = vpop.trf.xlu0
      %v2966 = vpop.trf.xlu0
      %v2967 = vpop.trf.xlu0
      %v2968 = vpop.trf.xlu0
      %v2969 = vpop.trf.xlu0
      %v2970 = vpop.trf.xlu0
      %v2971 = vpop.trf.xlu0
      %v2972 = vpop.trf.xlu0
      %2973 = vxpose.xlu0.b32.start [1/16] %v402, 128
      %2974 = vxpose.xlu0.b32.cont [2/16] 0.0, 128
      %2975 = vxpose.xlu0.b32.cont [3/16] 0.0, 128
      %2976 = vxpose.xlu0.b32.cont [4/16] 0.0, 128
      %2977 = vxpose.xlu0.b32.cont [5/16] 0.0, 128
      %2978 = vxpose.xlu0.b32.cont [6/16] 0.0, 128
      %2979 = vxpose.xlu0.b32.cont [7/16] 0.0, 128
      %2980 = vxpose.xlu0.b32.cont [8/16] 0.0, 128
      %2981 = vxpose.xlu0.b32.cont [9/16] 0.0, 128
      %2982 = vxpose.xlu0.b32.cont [10/16] 0.0, 128
      %2983 = vxpose.xlu0.b32.cont [11/16] 0.0, 128
      %2984 = vxpose.xlu0.b32.cont [12/16] 0.0, 128
      %2985 = vxpose.xlu0.b32.cont [13/16] 0.0, 128
      %2986 = vxpose.xlu0.b32.cont [14/16] 0.0, 128
      %2987 = vxpose.xlu0.b32.cont [15/16] 0.0, 128
      %2988 = vxpose.xlu0.b32.end [16/16] 0.0, 128
      %v2989 = vpop.trf.xlu0
      %v2990 = vpop.trf.xlu0
      %v2991 = vpop.trf.xlu0
      %v2992 = vpop.trf.xlu0
      %v2993 = vpop.trf.xlu0
      %v2994 = vpop.trf.xlu0
      %v2995 = vpop.trf.xlu0
      %v2996 = vpop.trf.xlu0
      %v2997 = vpop.trf.xlu0
      %v2998 = vpop.trf.xlu0
      %v2999 = vpop.trf.xlu0
      %v3000 = vpop.trf.xlu0
      %v3001 = vpop.trf.xlu0
      %v3002 = vpop.trf.xlu0
      %v3003 = vpop.trf.xlu0
      %v3004 = vpop.trf.xlu0
      %3005 = vxpose.xlu0.b32.start [1/16] %v403, 128
      %3006 = vxpose.xlu0.b32.cont [2/16] 0.0, 128
      %3007 = vxpose.xlu0.b32.cont [3/16] 0.0, 128
      %3008 = vxpose.xlu0.b32.cont [4/16] 0.0, 128
      %3009 = vxpose.xlu0.b32.cont [5/16] 0.0, 128
      %3010 = vxpose.xlu0.b32.cont [6/16] 0.0, 128
      %3011 = vxpose.xlu0.b32.cont [7/16] 0.0, 128
      %3012 = vxpose.xlu0.b32.cont [8/16] 0.0, 128
      %3013 = vxpose.xlu0.b32.cont [9/16] 0.0, 128
      %3014 = vxpose.xlu0.b32.cont [10/16] 0.0, 128
      %3015 = vxpose.xlu0.b32.cont [11/16] 0.0, 128
      %3016 = vxpose.xlu0.b32.cont [12/16] 0.0, 128
      %3017 = vxpose.xlu0.b32.cont [13/16] 0.0, 128
      %3018 = vxpose.xlu0.b32.cont [14/16] 0.0, 128
      %3019 = vxpose.xlu0.b32.cont [15/16] 0.0, 128
      %3020 = vxpose.xlu0.b32.end [16/16] 0.0, 128
      %v3021 = vpop.trf.xlu0
      %v3022 = vpop.trf.xlu0
      %v3023 = vpop.trf.xlu0
      %v3024 = vpop.trf.xlu0
      %v3025 = vpop.trf.xlu0
      %v3026 = vpop.trf.xlu0
      %v3027 = vpop.trf.xlu0
      %v3028 = vpop.trf.xlu0
      %v3029 = vpop.trf.xlu0
      %v3030 = vpop.trf.xlu0
      %v3031 = vpop.trf.xlu0
      %v3032 = vpop.trf.xlu0
      %v3033 = vpop.trf.xlu0
      %v3034 = vpop.trf.xlu0
      %v3035 = vpop.trf.xlu0
      %v3036 = vpop.trf.xlu0
      %3037 = vxpose.xlu0.b32.start [1/16] %v404, 128
      %3038 = vxpose.xlu0.b32.cont [2/16] 0.0, 128
      %3039 = vxpose.xlu0.b32.cont [3/16] 0.0, 128
      %3040 = vxpose.xlu0.b32.cont [4/16] 0.0, 128
      %3041 = vxpose.xlu0.b32.cont [5/16] 0.0, 128
      %3042 = vxpose.xlu0.b32.cont [6/16] 0.0, 128
      %3043 = vxpose.xlu0.b32.cont [7/16] 0.0, 128
      %3044 = vxpose.xlu0.b32.cont [8/16] 0.0, 128
      %3045 = vxpose.xlu0.b32.cont [9/16] 0.0, 128
      %3046 = vxpose.xlu0.b32.cont [10/16] 0.0, 128
      %3047 = vxpose.xlu0.b32.cont [11/16] 0.0, 128
      %3048 = vxpose.xlu0.b32.cont [12/16] 0.0, 128
      %3049 = vxpose.xlu0.b32.cont [13/16] 0.0, 128
      %3050 = vxpose.xlu0.b32.cont [14/16] 0.0, 128
      %3051 = vxpose.xlu0.b32.cont [15/16] 0.0, 128
      %3052 = vxpose.xlu0.b32.end [16/16] 0.0, 128
      %v3053 = vpop.trf.xlu0
      %v3054 = vpop.trf.xlu0
      %v3055 = vpop.trf.xlu0
      %v3056 = vpop.trf.xlu0
      %v3057 = vpop.trf.xlu0
      %v3058 = vpop.trf.xlu0
      %v3059 = vpop.trf.xlu0
      %v3060 = vpop.trf.xlu0
      %v3061 = vpop.trf.xlu0
      %v3062 = vpop.trf.xlu0
      %v3063 = vpop.trf.xlu0
      %v3064 = vpop.trf.xlu0
      %v3065 = vpop.trf.xlu0
      %v3066 = vpop.trf.xlu0
      %v3067 = vpop.trf.xlu0
      %v3068 = vpop.trf.xlu0
      %3069 = vxpose.xlu0.b32.start [1/16] %v405, 128
      %3070 = vxpose.xlu0.b32.cont [2/16] 0.0, 128
      %3071 = vxpose.xlu0.b32.cont [3/16] 0.0, 128
      %3072 = vxpose.xlu0.b32.cont [4/16] 0.0, 128
      %3073 = vxpose.xlu0.b32.cont [5/16] 0.0, 128
      %3074 = vxpose.xlu0.b32.cont [6/16] 0.0, 128
      %3075 = vxpose.xlu0.b32.cont [7/16] 0.0, 128
      %3076 = vxpose.xlu0.b32.cont [8/16] 0.0, 128
      %3077 = vxpose.xlu0.b32.cont [9/16] 0.0, 128
      %3078 = vxpose.xlu0.b32.cont [10/16] 0.0, 128
      %3079 = vxpose.xlu0.b32.cont [11/16] 0.0, 128
      %3080 = vxpose.xlu0.b32.cont [12/16] 0.0, 128
      %3081 = vxpose.xlu0.b32.cont [13/16] 0.0, 128
      %3082 = vxpose.xlu0.b32.cont [14/16] 0.0, 128
      %3083 = vxpose.xlu0.b32.cont [15/16] 0.0, 128
      %3084 = vxpose.xlu0.b32.end [16/16] 0.0, 128
      %v3085 = vpop.trf.xlu0
      %v3086 = vpop.trf.xlu0
      %v3087 = vpop.trf.xlu0
      %v3088 = vpop.trf.xlu0
      %v3089 = vpop.trf.xlu0
      %v3090 = vpop.trf.xlu0
      %v3091 = vpop.trf.xlu0
      %v3092 = vpop.trf.xlu0
      %v3093 = vpop.trf.xlu0
      %v3094 = vpop.trf.xlu0
      %v3095 = vpop.trf.xlu0
      %v3096 = vpop.trf.xlu0
      %v3097 = vpop.trf.xlu0
      %v3098 = vpop.trf.xlu0
      %v3099 = vpop.trf.xlu0
      %v3100 = vpop.trf.xlu0
      %3101 = vxpose.xlu0.b32.start [1/16] %v406, 128
      %3102 = vxpose.xlu0.b32.cont [2/16] 0.0, 128
      %3103 = vxpose.xlu0.b32.cont [3/16] 0.0, 128
      %3104 = vxpose.xlu0.b32.cont [4/16] 0.0, 128
      %3105 = vxpose.xlu0.b32.cont [5/16] 0.0, 128
      %3106 = vxpose.xlu0.b32.cont [6/16] 0.0, 128
      %3107 = vxpose.xlu0.b32.cont [7/16] 0.0, 128
      %3108 = vxpose.xlu0.b32.cont [8/16] 0.0, 128
      %3109 = vxpose.xlu0.b32.cont [9/16] 0.0, 128
      %3110 = vxpose.xlu0.b32.cont [10/16] 0.0, 128
      %3111 = vxpose.xlu0.b32.cont [11/16] 0.0, 128
      %3112 = vxpose.xlu0.b32.cont [12/16] 0.0, 128
      %3113 = vxpose.xlu0.b32.cont [13/16] 0.0, 128
      %3114 = vxpose.xlu0.b32.cont [14/16] 0.0, 128
      %3115 = vxpose.xlu0.b32.cont [15/16] 0.0, 128
      %3116 = vxpose.xlu0.b32.end [16/16] 0.0, 128
      %v3117 = vpop.trf.xlu0
      %v3118 = vpop.trf.xlu0
      %v3119 = vpop.trf.xlu0
      %v3120 = vpop.trf.xlu0
      %v3121 = vpop.trf.xlu0
      %v3122 = vpop.trf.xlu0
      %v3123 = vpop.trf.xlu0
      %v3124 = vpop.trf.xlu0
      %v3125 = vpop.trf.xlu0
      %v3126 = vpop.trf.xlu0
      %v3127 = vpop.trf.xlu0
      %v3128 = vpop.trf.xlu0
      %v3129 = vpop.trf.xlu0
      %v3130 = vpop.trf.xlu0
      %v3131 = vpop.trf.xlu0
      %v3132 = vpop.trf.xlu0
      %3133 = vxpose.xlu0.b32.start [1/16] %v407, 128
      %3134 = vxpose.xlu0.b32.cont [2/16] 0.0, 128
      %3135 = vxpose.xlu0.b32.cont [3/16] 0.0, 128
      %3136 = vxpose.xlu0.b32.cont [4/16] 0.0, 128
      %3137 = vxpose.xlu0.b32.cont [5/16] 0.0, 128
      %3138 = vxpose.xlu0.b32.cont [6/16] 0.0, 128
      %3139 = vxpose.xlu0.b32.cont [7/16] 0.0, 128
      %3140 = vxpose.xlu0.b32.cont [8/16] 0.0, 128
      %3141 = vxpose.xlu0.b32.cont [9/16] 0.0, 128
      %3142 = vxpose.xlu0.b32.cont [10/16] 0.0, 128
      %3143 = vxpose.xlu0.b32.cont [11/16] 0.0, 128
      %3144 = vxpose.xlu0.b32.cont [12/16] 0.0, 128
      %3145 = vxpose.xlu0.b32.cont [13/16] 0.0, 128
      %3146 = vxpose.xlu0.b32.cont [14/16] 0.0, 128
      %3147 = vxpose.xlu0.b32.cont [15/16] 0.0, 128
      %3148 = vxpose.xlu0.b32.end [16/16] 0.0, 128
      %v3149 = vpop.trf.xlu0
      %v3150 = vpop.trf.xlu0
      %v3151 = vpop.trf.xlu0
      %v3152 = vpop.trf.xlu0
      %v3153 = vpop.trf.xlu0
      %v3154 = vpop.trf.xlu0
      %v3155 = vpop.trf.xlu0
      %v3156 = vpop.trf.xlu0
      %v3157 = vpop.trf.xlu0
      %v3158 = vpop.trf.xlu0
      %v3159 = vpop.trf.xlu0
      %v3160 = vpop.trf.xlu0
      %v3161 = vpop.trf.xlu0
      %v3162 = vpop.trf.xlu0
      %v3163 = vpop.trf.xlu0
      %v3164 = vpop.trf.xlu0
      %3293 = vrot.lane.b32.xlu0 %v2925, 8
      %v3294 = vpop.permute.xlu0 %3293
      %3295 = vrot.lane.b32.xlu0 %v2926, 8
      %v3296 = vpop.permute.xlu0 %3295
      %3297 = vrot.lane.b32.xlu0 %v2927, 8
      %v3298 = vpop.permute.xlu0 %3297
      %3299 = vrot.lane.b32.xlu0 %v2928, 8
      %v3300 = vpop.permute.xlu0 %3299
      %3301 = vrot.lane.b32.xlu0 %v2929, 8
      %v3302 = vpop.permute.xlu0 %3301
      %3303 = vrot.lane.b32.xlu0 %v2930, 8
      %v3304 = vpop.permute.xlu0 %3303
      %3305 = vrot.lane.b32.xlu0 %v2931, 8
      %v3306 = vpop.permute.xlu0 %3305
      %3307 = vrot.lane.b32.xlu0 %v2932, 8
      %v3308 = vpop.permute.xlu0 %3307
      %3309 = vrot.lane.b32.xlu0 %v2933, 8
      %v3310 = vpop.permute.xlu0 %3309
      %3311 = vrot.lane.b32.xlu0 %v2934, 8
      %v3312 = vpop.permute.xlu0 %3311
      %3313 = vrot.lane.b32.xlu0 %v2935, 8
      %v3314 = vpop.permute.xlu0 %3313
      %3315 = vrot.lane.b32.xlu0 %v2936, 8
      %v3316 = vpop.permute.xlu0 %3315
      %3317 = vrot.lane.b32.xlu0 %v2937, 8
      %v3318 = vpop.permute.xlu0 %3317
      %3319 = vrot.lane.b32.xlu0 %v2938, 8
      %v3320 = vpop.permute.xlu0 %3319
      %3321 = vrot.lane.b32.xlu0 %v2939, 8
      %v3322 = vpop.permute.xlu0 %3321
      %3323 = vrot.lane.b32.xlu0 %v2940, 8
      %v3324 = vpop.permute.xlu0 %3323
      %3325 = vrot.lane.b32.xlu0 %v2957, 8
      %v3326 = vpop.permute.xlu0 %3325
      %3327 = vrot.lane.b32.xlu0 %v2958, 8
      %v3328 = vpop.permute.xlu0 %3327
      %3329 = vrot.lane.b32.xlu0 %v2959, 8
      %v3330 = vpop.permute.xlu0 %3329
      %3331 = vrot.lane.b32.xlu0 %v2960, 8
      %v3332 = vpop.permute.xlu0 %3331
      %3333 = vrot.lane.b32.xlu0 %v2961, 8
      %v3334 = vpop.permute.xlu0 %3333
      %3335 = vrot.lane.b32.xlu0 %v2962, 8
      %v3336 = vpop.permute.xlu0 %3335
      %3337 = vrot.lane.b32.xlu0 %v2963, 8
      %v3338 = vpop.permute.xlu0 %3337
      %3339 = vrot.lane.b32.xlu0 %v2964, 8
      %v3340 = vpop.permute.xlu0 %3339
      %3341 = vrot.lane.b32.xlu0 %v2965, 8
      %v3342 = vpop.permute.xlu0 %3341
      %3343 = vrot.lane.b32.xlu0 %v2966, 8
      %v3344 = vpop.permute.xlu0 %3343
      %3345 = vrot.lane.b32.xlu0 %v2967, 8
      %v3346 = vpop.permute.xlu0 %3345
      %3347 = vrot.lane.b32.xlu0 %v2968, 8
      %v3348 = vpop.permute.xlu0 %3347
      %3349 = vrot.lane.b32.xlu0 %v2969, 8
      %v3350 = vpop.permute.xlu0 %3349
      %3351 = vrot.lane.b32.xlu0 %v2970, 8
      %v3352 = vpop.permute.xlu0 %3351
      %3353 = vrot.lane.b32.xlu0 %v2971, 8
      %v3354 = vpop.permute.xlu0 %3353
      %3355 = vrot.lane.b32.xlu0 %v2972, 8
      %v3356 = vpop.permute.xlu0 %3355
      %3357 = vrot.lane.b32.xlu0 %v2989, 8
      %v3358 = vpop.permute.xlu0 %3357
      %3359 = vrot.lane.b32.xlu0 %v2990, 8
      %v3360 = vpop.permute.xlu0 %3359
      %3361 = vrot.lane.b32.xlu0 %v2991, 8
      %v3362 = vpop.permute.xlu0 %3361
      %3363 = vrot.lane.b32.xlu0 %v2992, 8
      %v3364 = vpop.permute.xlu0 %3363
      %3365 = vrot.lane.b32.xlu0 %v2993, 8
      %v3366 = vpop.permute.xlu0 %3365
      %3367 = vrot.lane.b32.xlu0 %v2994, 8
      %v3368 = vpop.permute.xlu0 %3367
      %3369 = vrot.lane.b32.xlu0 %v2995, 8
      %v3370 = vpop.permute.xlu0 %3369
      %3371 = vrot.lane.b32.xlu0 %v2996, 8
      %v3372 = vpop.permute.xlu0 %3371
      %3373 = vrot.lane.b32.xlu0 %v2997, 8
      %v3374 = vpop.permute.xlu0 %3373
      %3375 = vrot.lane.b32.xlu0 %v2998, 8
      %v3376 = vpop.permute.xlu0 %3375
      %3377 = vrot.lane.b32.xlu0 %v2999, 8
      %v3378 = vpop.permute.xlu0 %3377
      %3379 = vrot.lane.b32.xlu0 %v3000, 8
      %v3380 = vpop.permute.xlu0 %3379
      %3381 = vrot.lane.b32.xlu0 %v3001, 8
      %v3382 = vpop.permute.xlu0 %3381
      %3383 = vrot.lane.b32.xlu0 %v3002, 8
      %v3384 = vpop.permute.xlu0 %3383
      %3385 = vrot.lane.b32.xlu0 %v3003, 8
      %v3386 = vpop.permute.xlu0 %3385
      %3387 = vrot.lane.b32.xlu0 %v3004, 8
      %v3388 = vpop.permute.xlu0 %3387
      %3389 = vrot.lane.b32.xlu0 %v3021, 8
      %v3390 = vpop.permute.xlu0 %3389
      %3391 = vrot.lane.b32.xlu0 %v3022, 8
      %v3392 = vpop.permute.xlu0 %3391
      %3393 = vrot.lane.b32.xlu0 %v3023, 8
      %v3394 = vpop.permute.xlu0 %3393
      %3395 = vrot.lane.b32.xlu0 %v3024, 8
      %v3396 = vpop.permute.xlu0 %3395
      %3397 = vrot.lane.b32.xlu0 %v3025, 8
      %v3398 = vpop.permute.xlu0 %3397
      %3399 = vrot.lane.b32.xlu0 %v3026, 8
      %v3400 = vpop.permute.xlu0 %3399
      %3401 = vrot.lane.b32.xlu0 %v3027, 8
      %v3402 = vpop.permute.xlu0 %3401
      %3403 = vrot.lane.b32.xlu0 %v3028, 8
      %v3404 = vpop.permute.xlu0 %3403
      %3405 = vrot.lane.b32.xlu0 %v3029, 8
      %v3406 = vpop.permute.xlu0 %3405
      %3407 = vrot.lane.b32.xlu0 %v3030, 8
      %v3408 = vpop.permute.xlu0 %3407
      %3409 = vrot.lane.b32.xlu0 %v3031, 8
      %v3410 = vpop.permute.xlu0 %3409
      %3411 = vrot.lane.b32.xlu0 %v3032, 8
      %v3412 = vpop.permute.xlu0 %3411
      %3413 = vrot.lane.b32.xlu0 %v3033, 8
      %v3414 = vpop.permute.xlu0 %3413
      %3415 = vrot.lane.b32.xlu0 %v3034, 8
      %v3416 = vpop.permute.xlu0 %3415
      %3417 = vrot.lane.b32.xlu0 %v3035, 8
      %v3418 = vpop.permute.xlu0 %3417
      %3419 = vrot.lane.b32.xlu0 %v3036, 8
      %v3420 = vpop.permute.xlu0 %3419
      %3421 = vrot.lane.b32.xlu0 %v3053, 8
      %v3422 = vpop.permute.xlu0 %3421
      %3423 = vrot.lane.b32.xlu0 %v3054, 8
      %v3424 = vpop.permute.xlu0 %3423
      %3425 = vrot.lane.b32.xlu0 %v3055, 8
      %v3426 = vpop.permute.xlu0 %3425
      %3427 = vrot.lane.b32.xlu0 %v3056, 8
      %v3428 = vpop.permute.xlu0 %3427
      %3429 = vrot.lane.b32.xlu0 %v3057, 8
      %v3430 = vpop.permute.xlu0 %3429
      %3431 = vrot.lane.b32.xlu0 %v3058, 8
      %v3432 = vpop.permute.xlu0 %3431
      %3433 = vrot.lane.b32.xlu0 %v3059, 8
      %v3434 = vpop.permute.xlu0 %3433
      %3435 = vrot.lane.b32.xlu0 %v3060, 8
      %v3436 = vpop.permute.xlu0 %3435
      %3437 = vrot.lane.b32.xlu0 %v3061, 8
      %v3438 = vpop.permute.xlu0 %3437
      %3439 = vrot.lane.b32.xlu0 %v3062, 8
      %v3440 = vpop.permute.xlu0 %3439
      %3441 = vrot.lane.b32.xlu0 %v3063, 8
      %v3442 = vpop.permute.xlu0 %3441
      %3443 = vrot.lane.b32.xlu0 %v3064, 8
      %v3444 = vpop.permute.xlu0 %3443
      %3445 = vrot.lane.b32.xlu0 %v3065, 8
      %v3446 = vpop.permute.xlu0 %3445
      %3447 = vrot.lane.b32.xlu0 %v3066, 8
      %v3448 = vpop.permute.xlu0 %3447
      %3449 = vrot.lane.b32.xlu0 %v3067, 8
      %v3450 = vpop.permute.xlu0 %3449
      %3451 = vrot.lane.b32.xlu0 %v3068, 8
      %v3452 = vpop.permute.xlu0 %3451
      %3453 = vrot.lane.b32.xlu0 %v3085, 8
      %v3454 = vpop.permute.xlu0 %3453
      %3455 = vrot.lane.b32.xlu0 %v3086, 8
      %v3456 = vpop.permute.xlu0 %3455
      %3457 = vrot.lane.b32.xlu0 %v3087, 8
      %v3458 = vpop.permute.xlu0 %3457
      %3459 = vrot.lane.b32.xlu0 %v3088, 8
      %v3460 = vpop.permute.xlu0 %3459
      %3461 = vrot.lane.b32.xlu0 %v3089, 8
      %v3462 = vpop.permute.xlu0 %3461
      %3463 = vrot.lane.b32.xlu0 %v3090, 8
      %v3464 = vpop.permute.xlu0 %3463
      %3465 = vrot.lane.b32.xlu0 %v3091, 8
      %v3466 = vpop.permute.xlu0 %3465
      %3467 = vrot.lane.b32.xlu0 %v3092, 8
      %v3468 = vpop.permute.xlu0 %3467
      %3469 = vrot.lane.b32.xlu0 %v3093, 8
      %v3470 = vpop.permute.xlu0 %3469
      %3471 = vrot.lane.b32.xlu0 %v3094, 8
      %v3472 = vpop.permute.xlu0 %3471
      %3473 = vrot.lane.b32.xlu0 %v3095, 8
      %v3474 = vpop.permute.xlu0 %3473
      %3475 = vrot.lane.b32.xlu0 %v3096, 8
      %v3476 = vpop.permute.xlu0 %3475
      %3477 = vrot.lane.b32.xlu0 %v3097, 8
      %v3478 = vpop.permute.xlu0 %3477
      %3479 = vrot.lane.b32.xlu0 %v3098, 8
      %v3480 = vpop.permute.xlu0 %3479
      %3481 = vrot.lane.b32.xlu0 %v3099, 8
      %v3482 = vpop.permute.xlu0 %3481
      %3483 = vrot.lane.b32.xlu0 %v3100, 8
      %v3484 = vpop.permute.xlu0 %3483
      %3485 = vrot.lane.b32.xlu0 %v3117, 8
      %v3486 = vpop.permute.xlu0 %3485
      %3487 = vrot.lane.b32.xlu0 %v3118, 8
      %v3488 = vpop.permute.xlu0 %3487
      %3489 = vrot.lane.b32.xlu0 %v3119, 8
      %v3490 = vpop.permute.xlu0 %3489
      %3491 = vrot.lane.b32.xlu0 %v3120, 8
      %v3492 = vpop.permute.xlu0 %3491
      %3493 = vrot.lane.b32.xlu0 %v3121, 8
      %v3494 = vpop.permute.xlu0 %3493
      %3495 = vrot.lane.b32.xlu0 %v3122, 8
      %v3496 = vpop.permute.xlu0 %3495
      %3497 = vrot.lane.b32.xlu0 %v3123, 8
      %v3498 = vpop.permute.xlu0 %3497
      %3499 = vrot.lane.b32.xlu0 %v3124, 8
      %v3500 = vpop.permute.xlu0 %3499
      %3501 = vrot.lane.b32.xlu0 %v3125, 8
      %v3502 = vpop.permute.xlu0 %3501
      %3503 = vrot.lane.b32.xlu0 %v3126, 8
      %v3504 = vpop.permute.xlu0 %3503
      %3505 = vrot.lane.b32.xlu0 %v3127, 8
      %v3506 = vpop.permute.xlu0 %3505
      %3507 = vrot.lane.b32.xlu0 %v3128, 8
      %v3508 = vpop.permute.xlu0 %3507
      %3509 = vrot.lane.b32.xlu0 %v3129, 8
      %v3510 = vpop.permute.xlu0 %3509
      %3511 = vrot.lane.b32.xlu0 %v3130, 8
      %v3512 = vpop.permute.xlu0 %3511
      %3513 = vrot.lane.b32.xlu0 %v3131, 8
      %v3514 = vpop.permute.xlu0 %3513
      %3515 = vrot.lane.b32.xlu0 %v3132, 8
      %v3516 = vpop.permute.xlu0 %3515
      %3517 = vrot.lane.b32.xlu0 %v3149, 8
      %v3518 = vpop.permute.xlu0 %3517
      %3519 = vrot.lane.b32.xlu0 %v3150, 8
      %v3520 = vpop.permute.xlu0 %3519
      %3521 = vrot.lane.b32.xlu0 %v3151, 8
      %v3522 = vpop.permute.xlu0 %3521
      %3523 = vrot.lane.b32.xlu0 %v3152, 8
      %v3524 = vpop.permute.xlu0 %3523
      %3525 = vrot.lane.b32.xlu0 %v3153, 8
      %v3526 = vpop.permute.xlu0 %3525
      %3527 = vrot.lane.b32.xlu0 %v3154, 8
      %v3528 = vpop.permute.xlu0 %3527
      %3529 = vrot.lane.b32.xlu0 %v3155, 8
      %v3530 = vpop.permute.xlu0 %3529
      %3531 = vrot.lane.b32.xlu0 %v3156, 8
      %v3532 = vpop.permute.xlu0 %3531
      %3533 = vrot.lane.b32.xlu0 %v3157, 8
      %v3534 = vpop.permute.xlu0 %3533
      %3535 = vrot.lane.b32.xlu0 %v3158, 8
      %v3536 = vpop.permute.xlu0 %3535
      %3537 = vrot.lane.b32.xlu0 %v3159, 8
      %v3538 = vpop.permute.xlu0 %3537
      %3539 = vrot.lane.b32.xlu0 %v3160, 8
      %v3540 = vpop.permute.xlu0 %3539
      %3541 = vrot.lane.b32.xlu0 %v3161, 8
      %v3542 = vpop.permute.xlu0 %3541
      %3543 = vrot.lane.b32.xlu0 %v3162, 8
      %v3544 = vpop.permute.xlu0 %3543
      %3545 = vrot.lane.b32.xlu0 %v3163, 8
      %v3546 = vpop.permute.xlu0 %3545
      %3547 = vrot.lane.b32.xlu0 %v3164, 8
      %v3548 = vpop.permute.xlu0 %3547
      %v3677 = vsel %vm1432, %v2669, %v3294
      %v3678 = vsel %vm1432, %v2670, %v3296
      %v3679 = vsel %vm1432, %v2671, %v3298
      %v3680 = vsel %vm1432, %v2672, %v3300
      %v3681 = vsel %vm1432, %v2673, %v3302
      %v3682 = vsel %vm1432, %v2674, %v3304
      %v3683 = vsel %vm1432, %v2675, %v3306
      %v3684 = vsel %vm1432, %v2676, %v3308
      %v3685 = vsel %vm1432, %v2677, %v3310
      %v3686 = vsel %vm1432, %v2678, %v3312
      %v3687 = vsel %vm1432, %v2679, %v3314
      %v3688 = vsel %vm1432, %v2680, %v3316
      %v3689 = vsel %vm1432, %v2681, %v3318
      %v3690 = vsel %vm1432, %v2682, %v3320
      %v3691 = vsel %vm1432, %v2683, %v3322
      %v3692 = vsel %vm1432, %v2684, %v3324
      %v3693 = vsel %vm1432, %v2701, %v3326
      %v3694 = vsel %vm1432, %v2702, %v3328
      %v3695 = vsel %vm1432, %v2703, %v3330
      %v3696 = vsel %vm1432, %v2704, %v3332
      %v3697 = vsel %vm1432, %v2705, %v3334
      %v3698 = vsel %vm1432, %v2706, %v3336
      %v3699 = vsel %vm1432, %v2707, %v3338
      %v3700 = vsel %vm1432, %v2708, %v3340
      %v3701 = vsel %vm1432, %v2709, %v3342
      %v3702 = vsel %vm1432, %v2710, %v3344
      %v3703 = vsel %vm1432, %v2711, %v3346
      %v3704 = vsel %vm1432, %v2712, %v3348
      %v3705 = vsel %vm1432, %v2713, %v3350
      %v3706 = vsel %vm1432, %v2714, %v3352
      %v3707 = vsel %vm1432, %v2715, %v3354
      %v3708 = vsel %vm1432, %v2716, %v3356
      %v3709 = vsel %vm1432, %v2733, %v3358
      %v3710 = vsel %vm1432, %v2734, %v3360
      %v3711 = vsel %vm1432, %v2735, %v3362
      %v3712 = vsel %vm1432, %v2736, %v3364
      %v3713 = vsel %vm1432, %v2737, %v3366
      %v3714 = vsel %vm1432, %v2738, %v3368
      %v3715 = vsel %vm1432, %v2739, %v3370
      %v3716 = vsel %vm1432, %v2740, %v3372
      %v3717 = vsel %vm1432, %v2741, %v3374
      %v3718 = vsel %vm1432, %v2742, %v3376
      %v3719 = vsel %vm1432, %v2743, %v3378
      %v3720 = vsel %vm1432, %v2744, %v3380
      %v3721 = vsel %vm1432, %v2745, %v3382
      %v3722 = vsel %vm1432, %v2746, %v3384
      %v3723 = vsel %vm1432, %v2747, %v3386
      %v3724 = vsel %vm1432, %v2748, %v3388
      %v3725 = vsel %vm1432, %v2765, %v3390
      %v3726 = vsel %vm1432, %v2766, %v3392
      %v3727 = vsel %vm1432, %v2767, %v3394
      %v3728 = vsel %vm1432, %v2768, %v3396
      %v3729 = vsel %vm1432, %v2769, %v3398
      %v3730 = vsel %vm1432, %v2770, %v3400
      %v3731 = vsel %vm1432, %v2771, %v3402
      %v3732 = vsel %vm1432, %v2772, %v3404
      %v3733 = vsel %vm1432, %v2773, %v3406
      %v3734 = vsel %vm1432, %v2774, %v3408
      %v3735 = vsel %vm1432, %v2775, %v3410
      %v3736 = vsel %vm1432, %v2776, %v3412
      %v3737 = vsel %vm1432, %v2777, %v3414
      %v3738 = vsel %vm1432, %v2778, %v3416
      %v3739 = vsel %vm1432, %v2779, %v3418
      %v3740 = vsel %vm1432, %v2780, %v3420
      %v3741 = vsel %vm1432, %v2797, %v3422
      %v3742 = vsel %vm1432, %v2798, %v3424
      %v3743 = vsel %vm1432, %v2799, %v3426
      %v3744 = vsel %vm1432, %v2800, %v3428
      %v3745 = vsel %vm1432, %v2801, %v3430
      %v3746 = vsel %vm1432, %v2802, %v3432
      %v3747 = vsel %vm1432, %v2803, %v3434
      %v3748 = vsel %vm1432, %v2804, %v3436
      %v3749 = vsel %vm1432, %v2805, %v3438
      %v3750 = vsel %vm1432, %v2806, %v3440
      %v3751 = vsel %vm1432, %v2807, %v3442
      %v3752 = vsel %vm1432, %v2808, %v3444
      %v3753 = vsel %vm1432, %v2809, %v3446
      %v3754 = vsel %vm1432, %v2810, %v3448
      %v3755 = vsel %vm1432, %v2811, %v3450
      %v3756 = vsel %vm1432, %v2812, %v3452
      %v3757 = vsel %vm1432, %v2829, %v3454
      %v3758 = vsel %vm1432, %v2830, %v3456
      %v3759 = vsel %vm1432, %v2831, %v3458
      %v3760 = vsel %vm1432, %v2832, %v3460
      %v3761 = vsel %vm1432, %v2833, %v3462
      %v3762 = vsel %vm1432, %v2834, %v3464
      %v3763 = vsel %vm1432, %v2835, %v3466
      %v3764 = vsel %vm1432, %v2836, %v3468
      %v3765 = vsel %vm1432, %v2837, %v3470
      %v3766 = vsel %vm1432, %v2838, %v3472
      %v3767 = vsel %vm1432, %v2839, %v3474
      %v3768 = vsel %vm1432, %v2840, %v3476
      %v3769 = vsel %vm1432, %v2841, %v3478
      %v3770 = vsel %vm1432, %v2842, %v3480
      %v3771 = vsel %vm1432, %v2843, %v3482
      %v3772 = vsel %vm1432, %v2844, %v3484
      %v3773 = vsel %vm1432, %v2861, %v3486
      %v3774 = vsel %vm1432, %v2862, %v3488
      %v3775 = vsel %vm1432, %v2863, %v3490
      %v3776 = vsel %vm1432, %v2864, %v3492
      %v3777 = vsel %vm1432, %v2865, %v3494
      %v3778 = vsel %vm1432, %v2866, %v3496
      %v3779 = vsel %vm1432, %v2867, %v3498
      %v3780 = vsel %vm1432, %v2868, %v3500
      %v3781 = vsel %vm1432, %v2869, %v3502
      %v3782 = vsel %vm1432, %v2870, %v3504
      %v3783 = vsel %vm1432, %v2871, %v3506
      %v3784 = vsel %vm1432, %v2872, %v3508
      %v3785 = vsel %vm1432, %v2873, %v3510
      %v3786 = vsel %vm1432, %v2874, %v3512
      %v3787 = vsel %vm1432, %v2875, %v3514
      %v3788 = vsel %vm1432, %v2876, %v3516
      %v3789 = vsel %vm1432, %v2893, %v3518
      %v3790 = vsel %vm1432, %v2894, %v3520
      %v3791 = vsel %vm1432, %v2895, %v3522
      %v3792 = vsel %vm1432, %v2896, %v3524
      %v3793 = vsel %vm1432, %v2897, %v3526
      %v3794 = vsel %vm1432, %v2898, %v3528
      %v3795 = vsel %vm1432, %v2899, %v3530
      %v3796 = vsel %vm1432, %v2900, %v3532
      %v3797 = vsel %vm1432, %v2901, %v3534
      %v3798 = vsel %vm1432, %v2902, %v3536
      %v3799 = vsel %vm1432, %v2903, %v3538
      %v3800 = vsel %vm1432, %v2904, %v3540
      %v3801 = vsel %vm1432, %v2905, %v3542
      %v3802 = vsel %vm1432, %v2906, %v3544
      %v3803 = vsel %vm1432, %v2907, %v3546
      %v3804 = vsel %vm1432, %v2908, %v3548
      %v3806 = vsel %vm1563, %v3677, 0
      %v3809 = vsel %vm1563, %v3678, 0
      %v3812 = vsel %vm1563, %v3679, 0
      %v3815 = vsel %vm1563, %v3680, 0
      %v3818 = vsel %vm1563, %v3681, 0
      %v3821 = vsel %vm1563, %v3682, 0
      %v3824 = vsel %vm1563, %v3683, 0
      %v3827 = vsel %vm1563, %v3684, 0
      %v3830 = vsel %vm1563, %v3685, 0
      %v3833 = vsel %vm1563, %v3686, 0
      %v3836 = vsel %vm1563, %v3687, 0
      %v3839 = vsel %vm1563, %v3688, 0
      %v3842 = vsel %vm1563, %v3689, 0
      %v3845 = vsel %vm1563, %v3690, 0
      %v3848 = vsel %vm1563, %v3691, 0
      %v3851 = vsel %vm1563, %v3692, 0
      %v3854 = vsel %vm1563, %v3693, 0
      %v3857 = vsel %vm1563, %v3694, 0
      %v3860 = vsel %vm1563, %v3695, 0
      %v3863 = vsel %vm1563, %v3696, 0
      %v3866 = vsel %vm1563, %v3697, 0
      %v3869 = vsel %vm1563, %v3698, 0
      %v3872 = vsel %vm1563, %v3699, 0
      %v3875 = vsel %vm1563, %v3700, 0
      %v3878 = vsel %vm1563, %v3701, 0
      %v3881 = vsel %vm1563, %v3702, 0
      %v3884 = vsel %vm1563, %v3703, 0
      %v3887 = vsel %vm1563, %v3704, 0
      %v3890 = vsel %vm1563, %v3705, 0
      %v3893 = vsel %vm1563, %v3706, 0
      %v3896 = vsel %vm1563, %v3707, 0
      %v3899 = vsel %vm1563, %v3708, 0
      %v3902 = vsel %vm1563, %v3709, 0
      %v3905 = vsel %vm1563, %v3710, 0
      %v3908 = vsel %vm1563, %v3711, 0
      %v3911 = vsel %vm1563, %v3712, 0
      %v3914 = vsel %vm1563, %v3713, 0
      %v3917 = vsel %vm1563, %v3714, 0
      %v3920 = vsel %vm1563, %v3715, 0
      %v3923 = vsel %vm1563, %v3716, 0
      %v3926 = vsel %vm1563, %v3717, 0
      %v3929 = vsel %vm1563, %v3718, 0
      %v3932 = vsel %vm1563, %v3719, 0
      %v3935 = vsel %vm1563, %v3720, 0
      %v3938 = vsel %vm1563, %v3721, 0
      %v3941 = vsel %vm1563, %v3722, 0
      %v3944 = vsel %vm1563, %v3723, 0
      %v3947 = vsel %vm1563, %v3724, 0
      %v3950 = vsel %vm1563, %v3725, 0
      %v3953 = vsel %vm1563, %v3726, 0
      %v3956 = vsel %vm1563, %v3727, 0
      %v3959 = vsel %vm1563, %v3728, 0
      %v3962 = vsel %vm1563, %v3729, 0
      %v3965 = vsel %vm1563, %v3730, 0
      %v3968 = vsel %vm1563, %v3731, 0
      %v3971 = vsel %vm1563, %v3732, 0
      %v3974 = vsel %vm1563, %v3733, 0
      %v3977 = vsel %vm1563, %v3734, 0
      %v3980 = vsel %vm1563, %v3735, 0
      %v3983 = vsel %vm1563, %v3736, 0
      %v3986 = vsel %vm1563, %v3737, 0
      %v3989 = vsel %vm1563, %v3738, 0
      %v3992 = vsel %vm1563, %v3739, 0
      %v3995 = vsel %vm1563, %v3740, 0
      %v3998 = vsel %vm1563, %v3741, 0
      %v4001 = vsel %vm1563, %v3742, 0
      %v4004 = vsel %vm1563, %v3743, 0
      %v4007 = vsel %vm1563, %v3744, 0
      %v4010 = vsel %vm1563, %v3745, 0
      %v4013 = vsel %vm1563, %v3746, 0
      %v4016 = vsel %vm1563, %v3747, 0
      %v4019 = vsel %vm1563, %v3748, 0
      %v4022 = vsel %vm1563, %v3749, 0
      %v4025 = vsel %vm1563, %v3750, 0
      %v4028 = vsel %vm1563, %v3751, 0
      %v4031 = vsel %vm1563, %v3752, 0
      %v4034 = vsel %vm1563, %v3753, 0
      %v4037 = vsel %vm1563, %v3754, 0
      %v4040 = vsel %vm1563, %v3755, 0
      %v4043 = vsel %vm1563, %v3756, 0
      %v4046 = vsel %vm1563, %v3757, 0
      %v4049 = vsel %vm1563, %v3758, 0
      %v4052 = vsel %vm1563, %v3759, 0
      %v4055 = vsel %vm1563, %v3760, 0
      %v4058 = vsel %vm1563, %v3761, 0
      %v4061 = vsel %vm1563, %v3762, 0
      %v4064 = vsel %vm1563, %v3763, 0
      %v4067 = vsel %vm1563, %v3764, 0
      %v4070 = vsel %vm1563, %v3765, 0
      %v4073 = vsel %vm1563, %v3766, 0
      %v4076 = vsel %vm1563, %v3767, 0
      %v4079 = vsel %vm1563, %v3768, 0
      %v4082 = vsel %vm1563, %v3769, 0
      %v4085 = vsel %vm1563, %v3770, 0
      %v4088 = vsel %vm1563, %v3771, 0
      %v4091 = vsel %vm1563, %v3772, 0
      %v4094 = vsel %vm1563, %v3773, 0
      %v4097 = vsel %vm1563, %v3774, 0
      %v4100 = vsel %vm1563, %v3775, 0
      %v4103 = vsel %vm1563, %v3776, 0
      %v4106 = vsel %vm1563, %v3777, 0
      %v4109 = vsel %vm1563, %v3778, 0
      %v4112 = vsel %vm1563, %v3779, 0
      %v4115 = vsel %vm1563, %v3780, 0
      %v4118 = vsel %vm1563, %v3781, 0
      %v4121 = vsel %vm1563, %v3782, 0
      %v4124 = vsel %vm1563, %v3783, 0
      %v4127 = vsel %vm1563, %v3784, 0
      %v4130 = vsel %vm1563, %v3785, 0
      %v4133 = vsel %vm1563, %v3786, 0
      %v4136 = vsel %vm1563, %v3787, 0
      %v4139 = vsel %vm1563, %v3788, 0
      %v4142 = vsel %vm1563, %v3789, 0
      %v4145 = vsel %vm1563, %v3790, 0
      %v4148 = vsel %vm1563, %v3791, 0
      %v4151 = vsel %vm1563, %v3792, 0
      %v4154 = vsel %vm1563, %v3793, 0
      %v4157 = vsel %vm1563, %v3794, 0
      %v4160 = vsel %vm1563, %v3795, 0
      %v4163 = vsel %vm1563, %v3796, 0
      %v4166 = vsel %vm1563, %v3797, 0
      %v4169 = vsel %vm1563, %v3798, 0
      %v4172 = vsel %vm1563, %v3799, 0
      %v4175 = vsel %vm1563, %v3800, 0
      %v4178 = vsel %vm1563, %v3801, 0
      %v4181 = vsel %vm1563, %v3802, 0
      %v4184 = vsel %vm1563, %v3803, 0
      %v4187 = vsel %vm1563, %v3804, 0
      %4189 = vmatprep.subr.mxu0 0.0
      %4190 = vmatpush1.msra.mxu0 0.0
      %4191 = vmatprep.subr.mxu0 0.0
      %4192 = vmatpush1.msra.mxu0 0.0
      %4193 = vmatprep.subr.mxu0 0.0
      %4194 = vmatpush1.msra.mxu0 0.0
      %4195 = vmatprep.subr.mxu0 0.0
      %4196 = vmatpush1.msra.mxu0 0.0
      %4197 = vmatprep.subr.mxu0 0.0
      %4198 = vmatpush1.msra.mxu0 0.0
      %4199 = vmatprep.subr.mxu0 0.0
      %4200 = vmatpush1.msra.mxu0 0.0
      %4201 = vmatprep.subr.mxu0 0.0
      %4202 = vmatpush1.msra.mxu0 0.0
      %4203 = vmatprep.subr.mxu0 0.0
      %4204 = vmatpush1.msra.mxu0 0.0
      %4205 = vmatprep.subr.mxu0 0.0
      %4206 = vmatpush1.msra.mxu0 0.0
      %4207 = vmatprep.subr.mxu0 0.0
      %4208 = vmatpush1.msra.mxu0 0.0
      %4209 = vmatprep.subr.mxu0 0.0
      %4210 = vmatpush1.msra.mxu0 0.0
      %4211 = vmatprep.subr.mxu0 0.0
      %4212 = vmatpush1.msra.mxu0 0.0
      %4213 = vmatprep.subr.mxu0 0.0
      %4214 = vmatpush1.msra.mxu0 0.0
      %4215 = vmatprep.subr.mxu0 0.0
      %4216 = vmatpush1.msra.mxu0 0.0
      %4217 = vmatprep.subr.mxu0 0.0
      %4218 = vmatpush1.msra.mxu0 %v1562
      %4219 = vmatprep.subr.mxu0 0.0
      %4220 = vmatpush1.msra.mxu0 %v1561
      %4221 = vmatprep.subr.mxu0 0.0
      %4222 = vmatpush2.msra.mxu0 0.0
      %4223 = vmatprep.subr.mxu0 0.0
      %4224 = vmatpush2.msra.mxu0 0.0
      %4225 = vmatprep.subr.mxu0 0.0
      %4226 = vmatpush2.msra.mxu0 0.0
      %4227 = vmatprep.subr.mxu0 0.0
      %4228 = vmatpush2.msra.mxu0 0.0
      %4229 = vmatprep.subr.mxu0 0.0
      %4230 = vmatpush2.msra.mxu0 0.0
      %4231 = vmatprep.subr.mxu0 0.0
      %4232 = vmatpush2.msra.mxu0 0.0
      %4233 = vmatprep.subr.mxu0 0.0
      %4234 = vmatpush2.msra.mxu0 0.0
      %4235 = vmatprep.subr.mxu0 0.0
      %4236 = vmatpush2.msra.mxu0 0.0
      %4237 = vmatprep.subr.mxu0 0.0
      %4238 = vmatpush2.msra.mxu0 0.0
      %4239 = vmatprep.subr.mxu0 0.0
      %4240 = vmatpush2.msra.mxu0 0.0
      %4241 = vmatprep.subr.mxu0 0.0
      %4242 = vmatpush2.msra.mxu0 0.0
      %4243 = vmatprep.subr.mxu0 0.0
      %4244 = vmatpush2.msra.mxu0 0.0
      %4245 = vmatprep.subr.mxu0 0.0
      %4246 = vmatpush2.msra.mxu0 0.0
      %4247 = vmatprep.subr.mxu0 0.0
      %4248 = vmatpush2.msra.mxu0 0.0
      %4249 = vmatprep.subr.mxu0 0.0
      %4250 = vmatpush2.msra.mxu0 0.0
      %4251 = vmatprep.subr.mxu0 0.0
      %4252 = vmatpush2.msra.mxu0 0.0
      %4253 = vmatprep.mubr.f32.mxu0 0.0
      %4254 = vmatmul.mubr.f32.gmra.mxu0 %v3806
      %v4255 = vpop.f32.mrf.mxu0
      %v4256 = vadd.f32 0.0, %v4255
      %v4257 = vpop.f32.mrf.mxu0
      %4258 = vmatprep.mubr.f32.mxu0 0.0
      %4259 = vmatmul.mubr.f32.gmra.mxu0 %v3809
      %v4260 = vpop.f32.mrf.mxu0
      %v4261 = vadd.f32 0.0, %v4260
      %v4262 = vpop.f32.mrf.mxu0
      %4263 = vmatprep.mubr.f32.mxu0 0.0
      %4264 = vmatmul.mubr.f32.gmra.mxu0 %v3812
      %v4265 = vpop.f32.mrf.mxu0
      %v4266 = vadd.f32 0.0, %v4265
      %v4267 = vpop.f32.mrf.mxu0
      %4268 = vmatprep.mubr.f32.mxu0 0.0
      %4269 = vmatmul.mubr.f32.gmra.mxu0 %v3815
      %v4270 = vpop.f32.mrf.mxu0
      %v4271 = vadd.f32 0.0, %v4270
      %v4272 = vpop.f32.mrf.mxu0
      %4273 = vmatprep.mubr.f32.mxu0 0.0
      %4274 = vmatmul.mubr.f32.gmra.mxu0 %v3818
      %v4275 = vpop.f32.mrf.mxu0
      %v4276 = vadd.f32 0.0, %v4275
      %v4277 = vpop.f32.mrf.mxu0
      %4278 = vmatprep.mubr.f32.mxu0 0.0
      %4279 = vmatmul.mubr.f32.gmra.mxu0 %v3821
      %v4280 = vpop.f32.mrf.mxu0
      %v4281 = vadd.f32 0.0, %v4280
      %v4282 = vpop.f32.mrf.mxu0
      %4283 = vmatprep.mubr.f32.mxu0 0.0
      %4284 = vmatmul.mubr.f32.gmra.mxu0 %v3824
      %v4285 = vpop.f32.mrf.mxu0
      %v4286 = vadd.f32 0.0, %v4285
      %v4287 = vpop.f32.mrf.mxu0
      %4288 = vmatprep.mubr.f32.mxu0 0.0
      %4289 = vmatmul.mubr.f32.gmra.mxu0 %v3827
      %v4290 = vpop.f32.mrf.mxu0
      %v4291 = vadd.f32 0.0, %v4290
      %v4292 = vpop.f32.mrf.mxu0
      %4293 = vmatprep.mubr.f32.mxu0 0.0
      %4294 = vmatmul.mubr.f32.gmra.mxu0 %v3830
      %v4295 = vpop.f32.mrf.mxu0
      %v4296 = vadd.f32 0.0, %v4295
      %v4297 = vpop.f32.mrf.mxu0
      %4298 = vmatprep.mubr.f32.mxu0 0.0
      %4299 = vmatmul.mubr.f32.gmra.mxu0 %v3833
      %v4300 = vpop.f32.mrf.mxu0
      %v4301 = vadd.f32 0.0, %v4300
      %v4302 = vpop.f32.mrf.mxu0
      %4303 = vmatprep.mubr.f32.mxu0 0.0
      %4304 = vmatmul.mubr.f32.gmra.mxu0 %v3836
      %v4305 = vpop.f32.mrf.mxu0
      %v4306 = vadd.f32 0.0, %v4305
      %v4307 = vpop.f32.mrf.mxu0
      %4308 = vmatprep.mubr.f32.mxu0 0.0
      %4309 = vmatmul.mubr.f32.gmra.mxu0 %v3839
      %v4310 = vpop.f32.mrf.mxu0
      %v4311 = vadd.f32 0.0, %v4310
      %v4312 = vpop.f32.mrf.mxu0
      %4313 = vmatprep.mubr.f32.mxu0 0.0
      %4314 = vmatmul.mubr.f32.gmra.mxu0 %v3842
      %v4315 = vpop.f32.mrf.mxu0
      %v4316 = vadd.f32 0.0, %v4315
      %v4317 = vpop.f32.mrf.mxu0
      %4318 = vmatprep.mubr.f32.mxu0 0.0
      %4319 = vmatmul.mubr.f32.gmra.mxu0 %v3845
      %v4320 = vpop.f32.mrf.mxu0
      %v4321 = vadd.f32 0.0, %v4320
      %v4322 = vpop.f32.mrf.mxu0
      %4323 = vmatprep.mubr.f32.mxu0 0.0
      %4324 = vmatmul.mubr.f32.gmra.mxu0 %v3848
      %v4325 = vpop.f32.mrf.mxu0
      %v4326 = vadd.f32 0.0, %v4325
      %v4327 = vpop.f32.mrf.mxu0
      %4328 = vmatprep.mubr.f32.mxu0 0.0
      %4329 = vmatmul.mubr.f32.gmra.mxu0 %v3851
      %v4330 = vpop.f32.mrf.mxu0
      %v4331 = vadd.f32 0.0, %v4330
      %v4332 = vpop.f32.mrf.mxu0
      %4333 = vmatprep.mubr.f32.mxu0 0.0
      %4334 = vmatmul.mubr.f32.gmra.mxu0 %v3854
      %v4335 = vpop.f32.mrf.mxu0
      %v4336 = vadd.f32 0.0, %v4335
      %v4337 = vpop.f32.mrf.mxu0
      %4338 = vmatprep.mubr.f32.mxu0 0.0
      %4339 = vmatmul.mubr.f32.gmra.mxu0 %v3857
      %v4340 = vpop.f32.mrf.mxu0
      %v4341 = vadd.f32 0.0, %v4340
      %v4342 = vpop.f32.mrf.mxu0
      %4343 = vmatprep.mubr.f32.mxu0 0.0
      %4344 = vmatmul.mubr.f32.gmra.mxu0 %v3860
      %v4345 = vpop.f32.mrf.mxu0
      %v4346 = vadd.f32 0.0, %v4345
      %v4347 = vpop.f32.mrf.mxu0
      %4348 = vmatprep.mubr.f32.mxu0 0.0
      %4349 = vmatmul.mubr.f32.gmra.mxu0 %v3863
      %v4350 = vpop.f32.mrf.mxu0
      %v4351 = vadd.f32 0.0, %v4350
      %v4352 = vpop.f32.mrf.mxu0
      %4353 = vmatprep.mubr.f32.mxu0 0.0
      %4354 = vmatmul.mubr.f32.gmra.mxu0 %v3866
      %v4355 = vpop.f32.mrf.mxu0
      %v4356 = vadd.f32 0.0, %v4355
      %v4357 = vpop.f32.mrf.mxu0
      %4358 = vmatprep.mubr.f32.mxu0 0.0
      %4359 = vmatmul.mubr.f32.gmra.mxu0 %v3869
      %v4360 = vpop.f32.mrf.mxu0
      %v4361 = vadd.f32 0.0, %v4360
      %v4362 = vpop.f32.mrf.mxu0
      %4363 = vmatprep.mubr.f32.mxu0 0.0
      %4364 = vmatmul.mubr.f32.gmra.mxu0 %v3872
      %v4365 = vpop.f32.mrf.mxu0
      %v4366 = vadd.f32 0.0, %v4365
      %v4367 = vpop.f32.mrf.mxu0
      %4368 = vmatprep.mubr.f32.mxu0 0.0
      %4369 = vmatmul.mubr.f32.gmra.mxu0 %v3875
      %v4370 = vpop.f32.mrf.mxu0
      %v4371 = vadd.f32 0.0, %v4370
      %v4372 = vpop.f32.mrf.mxu0
      %4373 = vmatprep.mubr.f32.mxu0 0.0
      %4374 = vmatmul.mubr.f32.gmra.mxu0 %v3878
      %v4375 = vpop.f32.mrf.mxu0
      %v4376 = vadd.f32 0.0, %v4375
      %v4377 = vpop.f32.mrf.mxu0
      %4378 = vmatprep.mubr.f32.mxu0 0.0
      %4379 = vmatmul.mubr.f32.gmra.mxu0 %v3881
      %v4380 = vpop.f32.mrf.mxu0
      %v4381 = vadd.f32 0.0, %v4380
      %v4382 = vpop.f32.mrf.mxu0
      %4383 = vmatprep.mubr.f32.mxu0 0.0
      %4384 = vmatmul.mubr.f32.gmra.mxu0 %v3884
      %v4385 = vpop.f32.mrf.mxu0
      %v4386 = vadd.f32 0.0, %v4385
      %v4387 = vpop.f32.mrf.mxu0
      %4388 = vmatprep.mubr.f32.mxu0 0.0
      %4389 = vmatmul.mubr.f32.gmra.mxu0 %v3887
      %v4390 = vpop.f32.mrf.mxu0
      %v4391 = vadd.f32 0.0, %v4390
      %v4392 = vpop.f32.mrf.mxu0
      %4393 = vmatprep.mubr.f32.mxu0 0.0
      %4394 = vmatmul.mubr.f32.gmra.mxu0 %v3890
      %v4395 = vpop.f32.mrf.mxu0
      %v4396 = vadd.f32 0.0, %v4395
      %v4397 = vpop.f32.mrf.mxu0
      %4398 = vmatprep.mubr.f32.mxu0 0.0
      %4399 = vmatmul.mubr.f32.gmra.mxu0 %v3893
      %v4400 = vpop.f32.mrf.mxu0
      %v4401 = vadd.f32 0.0, %v4400
      %v4402 = vpop.f32.mrf.mxu0
      %4403 = vmatprep.mubr.f32.mxu0 0.0
      %4404 = vmatmul.mubr.f32.gmra.mxu0 %v3896
      %v4405 = vpop.f32.mrf.mxu0
      %v4406 = vadd.f32 0.0, %v4405
      %v4407 = vpop.f32.mrf.mxu0
      %4408 = vmatprep.mubr.f32.mxu0 0.0
      %4409 = vmatmul.mubr.f32.gmra.mxu0 %v3899
      %v4410 = vpop.f32.mrf.mxu0
      %v4411 = vadd.f32 0.0, %v4410
      %v4412 = vpop.f32.mrf.mxu0
      %4413 = vmatprep.mubr.f32.mxu0 0.0
      %4414 = vmatmul.mubr.f32.gmra.mxu0 %v3902
      %v4415 = vpop.f32.mrf.mxu0
      %v4416 = vadd.f32 0.0, %v4415
      %v4417 = vpop.f32.mrf.mxu0
      %4418 = vmatprep.mubr.f32.mxu0 0.0
      %4419 = vmatmul.mubr.f32.gmra.mxu0 %v3905
      %v4420 = vpop.f32.mrf.mxu0
      %v4421 = vadd.f32 0.0, %v4420
      %v4422 = vpop.f32.mrf.mxu0
      %4423 = vmatprep.mubr.f32.mxu0 0.0
      %4424 = vmatmul.mubr.f32.gmra.mxu0 %v3908
      %v4425 = vpop.f32.mrf.mxu0
      %v4426 = vadd.f32 0.0, %v4425
      %v4427 = vpop.f32.mrf.mxu0
      %4428 = vmatprep.mubr.f32.mxu0 0.0
      %4429 = vmatmul.mubr.f32.gmra.mxu0 %v3911
      %v4430 = vpop.f32.mrf.mxu0
      %v4431 = vadd.f32 0.0, %v4430
      %v4432 = vpop.f32.mrf.mxu0
      %4433 = vmatprep.mubr.f32.mxu0 0.0
      %4434 = vmatmul.mubr.f32.gmra.mxu0 %v3914
      %v4435 = vpop.f32.mrf.mxu0
      %v4436 = vadd.f32 0.0, %v4435
      %v4437 = vpop.f32.mrf.mxu0
      %4438 = vmatprep.mubr.f32.mxu0 0.0
      %4439 = vmatmul.mubr.f32.gmra.mxu0 %v3917
      %v4440 = vpop.f32.mrf.mxu0
      %v4441 = vadd.f32 0.0, %v4440
      %v4442 = vpop.f32.mrf.mxu0
      %4443 = vmatprep.mubr.f32.mxu0 0.0
      %4444 = vmatmul.mubr.f32.gmra.mxu0 %v3920
      %v4445 = vpop.f32.mrf.mxu0
      %v4446 = vadd.f32 0.0, %v4445
      %v4447 = vpop.f32.mrf.mxu0
      %4448 = vmatprep.mubr.f32.mxu0 0.0
      %4449 = vmatmul.mubr.f32.gmra.mxu0 %v3923
      %v4450 = vpop.f32.mrf.mxu0
      %v4451 = vadd.f32 0.0, %v4450
      %v4452 = vpop.f32.mrf.mxu0
      %4453 = vmatprep.mubr.f32.mxu0 0.0
      %4454 = vmatmul.mubr.f32.gmra.mxu0 %v3926
      %v4455 = vpop.f32.mrf.mxu0
      %v4456 = vadd.f32 0.0, %v4455
      %v4457 = vpop.f32.mrf.mxu0
      %4458 = vmatprep.mubr.f32.mxu0 0.0
      %4459 = vmatmul.mubr.f32.gmra.mxu0 %v3929
      %v4460 = vpop.f32.mrf.mxu0
      %v4461 = vadd.f32 0.0, %v4460
      %v4462 = vpop.f32.mrf.mxu0
      %4463 = vmatprep.mubr.f32.mxu0 0.0
      %4464 = vmatmul.mubr.f32.gmra.mxu0 %v3932
      %v4465 = vpop.f32.mrf.mxu0
      %v4466 = vadd.f32 0.0, %v4465
      %v4467 = vpop.f32.mrf.mxu0
      %4468 = vmatprep.mubr.f32.mxu0 0.0
      %4469 = vmatmul.mubr.f32.gmra.mxu0 %v3935
      %v4470 = vpop.f32.mrf.mxu0
      %v4471 = vadd.f32 0.0, %v4470
      %v4472 = vpop.f32.mrf.mxu0
      %4473 = vmatprep.mubr.f32.mxu0 0.0
      %4474 = vmatmul.mubr.f32.gmra.mxu0 %v3938
      %v4475 = vpop.f32.mrf.mxu0
      %v4476 = vadd.f32 0.0, %v4475
      %v4477 = vpop.f32.mrf.mxu0
      %4478 = vmatprep.mubr.f32.mxu0 0.0
      %4479 = vmatmul.mubr.f32.gmra.mxu0 %v3941
      %v4480 = vpop.f32.mrf.mxu0
      %v4481 = vadd.f32 0.0, %v4480
      %v4482 = vpop.f32.mrf.mxu0
      %4483 = vmatprep.mubr.f32.mxu0 0.0
      %4484 = vmatmul.mubr.f32.gmra.mxu0 %v3944
      %v4485 = vpop.f32.mrf.mxu0
      %v4486 = vadd.f32 0.0, %v4485
      %v4487 = vpop.f32.mrf.mxu0
      %4488 = vmatprep.mubr.f32.mxu0 0.0
      %4489 = vmatmul.mubr.f32.gmra.mxu0 %v3947
      %v4490 = vpop.f32.mrf.mxu0
      %v4491 = vadd.f32 0.0, %v4490
      %v4492 = vpop.f32.mrf.mxu0
      %4493 = vmatprep.mubr.f32.mxu0 0.0
      %4494 = vmatmul.mubr.f32.gmra.mxu0 %v3950
      %v4495 = vpop.f32.mrf.mxu0
      %v4496 = vadd.f32 0.0, %v4495
      %v4497 = vpop.f32.mrf.mxu0
      %4498 = vmatprep.mubr.f32.mxu0 0.0
      %4499 = vmatmul.mubr.f32.gmra.mxu0 %v3953
      %v4500 = vpop.f32.mrf.mxu0
      %v4501 = vadd.f32 0.0, %v4500
      %v4502 = vpop.f32.mrf.mxu0
      %4503 = vmatprep.mubr.f32.mxu0 0.0
      %4504 = vmatmul.mubr.f32.gmra.mxu0 %v3956
      %v4505 = vpop.f32.mrf.mxu0
      %v4506 = vadd.f32 0.0, %v4505
      %v4507 = vpop.f32.mrf.mxu0
      %4508 = vmatprep.mubr.f32.mxu0 0.0
      %4509 = vmatmul.mubr.f32.gmra.mxu0 %v3959
      %v4510 = vpop.f32.mrf.mxu0
      %v4511 = vadd.f32 0.0, %v4510
      %v4512 = vpop.f32.mrf.mxu0
      %4513 = vmatprep.mubr.f32.mxu0 0.0
      %4514 = vmatmul.mubr.f32.gmra.mxu0 %v3962
      %v4515 = vpop.f32.mrf.mxu0
      %v4516 = vadd.f32 0.0, %v4515
      %v4517 = vpop.f32.mrf.mxu0
      %4518 = vmatprep.mubr.f32.mxu0 0.0
      %4519 = vmatmul.mubr.f32.gmra.mxu0 %v3965
      %v4520 = vpop.f32.mrf.mxu0
      %v4521 = vadd.f32 0.0, %v4520
      %v4522 = vpop.f32.mrf.mxu0
      %4523 = vmatprep.mubr.f32.mxu0 0.0
      %4524 = vmatmul.mubr.f32.gmra.mxu0 %v3968
      %v4525 = vpop.f32.mrf.mxu0
      %v4526 = vadd.f32 0.0, %v4525
      %v4527 = vpop.f32.mrf.mxu0
      %4528 = vmatprep.mubr.f32.mxu0 0.0
      %4529 = vmatmul.mubr.f32.gmra.mxu0 %v3971
      %v4530 = vpop.f32.mrf.mxu0
      %v4531 = vadd.f32 0.0, %v4530
      %v4532 = vpop.f32.mrf.mxu0
      %4533 = vmatprep.mubr.f32.mxu0 0.0
      %4534 = vmatmul.mubr.f32.gmra.mxu0 %v3974
      %v4535 = vpop.f32.mrf.mxu0
      %v4536 = vadd.f32 0.0, %v4535
      %v4537 = vpop.f32.mrf.mxu0
      %4538 = vmatprep.mubr.f32.mxu0 0.0
      %4539 = vmatmul.mubr.f32.gmra.mxu0 %v3977
      %v4540 = vpop.f32.mrf.mxu0
      %v4541 = vadd.f32 0.0, %v4540
      %v4542 = vpop.f32.mrf.mxu0
      %4543 = vmatprep.mubr.f32.mxu0 0.0
      %4544 = vmatmul.mubr.f32.gmra.mxu0 %v3980
      %v4545 = vpop.f32.mrf.mxu0
      %v4546 = vadd.f32 0.0, %v4545
      %v4547 = vpop.f32.mrf.mxu0
      %4548 = vmatprep.mubr.f32.mxu0 0.0
      %4549 = vmatmul.mubr.f32.gmra.mxu0 %v3983
      %v4550 = vpop.f32.mrf.mxu0
      %v4551 = vadd.f32 0.0, %v4550
      %v4552 = vpop.f32.mrf.mxu0
      %4553 = vmatprep.mubr.f32.mxu0 0.0
      %4554 = vmatmul.mubr.f32.gmra.mxu0 %v3986
      %v4555 = vpop.f32.mrf.mxu0
      %v4556 = vadd.f32 0.0, %v4555
      %v4557 = vpop.f32.mrf.mxu0
      %4558 = vmatprep.mubr.f32.mxu0 0.0
      %4559 = vmatmul.mubr.f32.gmra.mxu0 %v3989
      %v4560 = vpop.f32.mrf.mxu0
      %v4561 = vadd.f32 0.0, %v4560
      %v4562 = vpop.f32.mrf.mxu0
      %4563 = vmatprep.mubr.f32.mxu0 0.0
      %4564 = vmatmul.mubr.f32.gmra.mxu0 %v3992
      %v4565 = vpop.f32.mrf.mxu0
      %v4566 = vadd.f32 0.0, %v4565
      %v4567 = vpop.f32.mrf.mxu0
      %4568 = vmatprep.mubr.f32.mxu0 0.0
      %4569 = vmatmul.mubr.f32.gmra.mxu0 %v3995
      %v4570 = vpop.f32.mrf.mxu0
      %v4571 = vadd.f32 0.0, %v4570
      %v4572 = vpop.f32.mrf.mxu0
      %4573 = vmatprep.mubr.f32.mxu0 0.0
      %4574 = vmatmul.mubr.f32.gmra.mxu0 %v3998
      %v4575 = vpop.f32.mrf.mxu0
      %v4576 = vadd.f32 0.0, %v4575
      %v4577 = vpop.f32.mrf.mxu0
      %4578 = vmatprep.mubr.f32.mxu0 0.0
      %4579 = vmatmul.mubr.f32.gmra.mxu0 %v4001
      %v4580 = vpop.f32.mrf.mxu0
      %v4581 = vadd.f32 0.0, %v4580
      %v4582 = vpop.f32.mrf.mxu0
      %4583 = vmatprep.mubr.f32.mxu0 0.0
      %4584 = vmatmul.mubr.f32.gmra.mxu0 %v4004
      %v4585 = vpop.f32.mrf.mxu0
      %v4586 = vadd.f32 0.0, %v4585
      %v4587 = vpop.f32.mrf.mxu0
      %4588 = vmatprep.mubr.f32.mxu0 0.0
      %4589 = vmatmul.mubr.f32.gmra.mxu0 %v4007
      %v4590 = vpop.f32.mrf.mxu0
      %v4591 = vadd.f32 0.0, %v4590
      %v4592 = vpop.f32.mrf.mxu0
      %4593 = vmatprep.mubr.f32.mxu0 0.0
      %4594 = vmatmul.mubr.f32.gmra.mxu0 %v4010
      %v4595 = vpop.f32.mrf.mxu0
      %v4596 = vadd.f32 0.0, %v4595
      %v4597 = vpop.f32.mrf.mxu0
      %4598 = vmatprep.mubr.f32.mxu0 0.0
      %4599 = vmatmul.mubr.f32.gmra.mxu0 %v4013
      %v4600 = vpop.f32.mrf.mxu0
      %v4601 = vadd.f32 0.0, %v4600
      %v4602 = vpop.f32.mrf.mxu0
      %4603 = vmatprep.mubr.f32.mxu0 0.0
      %4604 = vmatmul.mubr.f32.gmra.mxu0 %v4016
      %v4605 = vpop.f32.mrf.mxu0
      %v4606 = vadd.f32 0.0, %v4605
      %v4607 = vpop.f32.mrf.mxu0
      %4608 = vmatprep.mubr.f32.mxu0 0.0
      %4609 = vmatmul.mubr.f32.gmra.mxu0 %v4019
      %v4610 = vpop.f32.mrf.mxu0
      %v4611 = vadd.f32 0.0, %v4610
      %v4612 = vpop.f32.mrf.mxu0
      %4613 = vmatprep.mubr.f32.mxu0 0.0
      %4614 = vmatmul.mubr.f32.gmra.mxu0 %v4022
      %v4615 = vpop.f32.mrf.mxu0
      %v4616 = vadd.f32 0.0, %v4615
      %v4617 = vpop.f32.mrf.mxu0
      %4618 = vmatprep.mubr.f32.mxu0 0.0
      %4619 = vmatmul.mubr.f32.gmra.mxu0 %v4025
      %v4620 = vpop.f32.mrf.mxu0
      %v4621 = vadd.f32 0.0, %v4620
      %v4622 = vpop.f32.mrf.mxu0
      %4623 = vmatprep.mubr.f32.mxu0 0.0
      %4624 = vmatmul.mubr.f32.gmra.mxu0 %v4028
      %v4625 = vpop.f32.mrf.mxu0
      %v4626 = vadd.f32 0.0, %v4625
      %v4627 = vpop.f32.mrf.mxu0
      %4628 = vmatprep.mubr.f32.mxu0 0.0
      %4629 = vmatmul.mubr.f32.gmra.mxu0 %v4031
      %v4630 = vpop.f32.mrf.mxu0
      %v4631 = vadd.f32 0.0, %v4630
      %v4632 = vpop.f32.mrf.mxu0
      %4633 = vmatprep.mubr.f32.mxu0 0.0
      %4634 = vmatmul.mubr.f32.gmra.mxu0 %v4034
      %v4635 = vpop.f32.mrf.mxu0
      %v4636 = vadd.f32 0.0, %v4635
      %v4637 = vpop.f32.mrf.mxu0
      %4638 = vmatprep.mubr.f32.mxu0 0.0
      %4639 = vmatmul.mubr.f32.gmra.mxu0 %v4037
      %v4640 = vpop.f32.mrf.mxu0
      %v4641 = vadd.f32 0.0, %v4640
      %v4642 = vpop.f32.mrf.mxu0
      %4643 = vmatprep.mubr.f32.mxu0 0.0
      %4644 = vmatmul.mubr.f32.gmra.mxu0 %v4040
      %v4645 = vpop.f32.mrf.mxu0
      %v4646 = vadd.f32 0.0, %v4645
      %v4647 = vpop.f32.mrf.mxu0
      %4648 = vmatprep.mubr.f32.mxu0 0.0
      %4649 = vmatmul.mubr.f32.gmra.mxu0 %v4043
      %v4650 = vpop.f32.mrf.mxu0
      %v4651 = vadd.f32 0.0, %v4650
      %v4652 = vpop.f32.mrf.mxu0
      %4653 = vmatprep.mubr.f32.mxu0 0.0
      %4654 = vmatmul.mubr.f32.gmra.mxu0 %v4046
      %v4655 = vpop.f32.mrf.mxu0
      %v4656 = vadd.f32 0.0, %v4655
      %v4657 = vpop.f32.mrf.mxu0
      %4658 = vmatprep.mubr.f32.mxu0 0.0
      %4659 = vmatmul.mubr.f32.gmra.mxu0 %v4049
      %v4660 = vpop.f32.mrf.mxu0
      %v4661 = vadd.f32 0.0, %v4660
      %v4662 = vpop.f32.mrf.mxu0
      %4663 = vmatprep.mubr.f32.mxu0 0.0
      %4664 = vmatmul.mubr.f32.gmra.mxu0 %v4052
      %v4665 = vpop.f32.mrf.mxu0
      %v4666 = vadd.f32 0.0, %v4665
      %v4667 = vpop.f32.mrf.mxu0
      %4668 = vmatprep.mubr.f32.mxu0 0.0
      %4669 = vmatmul.mubr.f32.gmra.mxu0 %v4055
      %v4670 = vpop.f32.mrf.mxu0
      %v4671 = vadd.f32 0.0, %v4670
      %v4672 = vpop.f32.mrf.mxu0
      %4673 = vmatprep.mubr.f32.mxu0 0.0
      %4674 = vmatmul.mubr.f32.gmra.mxu0 %v4058
      %v4675 = vpop.f32.mrf.mxu0
      %v4676 = vadd.f32 0.0, %v4675
      %v4677 = vpop.f32.mrf.mxu0
      %4678 = vmatprep.mubr.f32.mxu0 0.0
      %4679 = vmatmul.mubr.f32.gmra.mxu0 %v4061
      %v4680 = vpop.f32.mrf.mxu0
      %v4681 = vadd.f32 0.0, %v4680
      %v4682 = vpop.f32.mrf.mxu0
      %4683 = vmatprep.mubr.f32.mxu0 0.0
      %4684 = vmatmul.mubr.f32.gmra.mxu0 %v4064
      %v4685 = vpop.f32.mrf.mxu0
      %v4686 = vadd.f32 0.0, %v4685
      %v4687 = vpop.f32.mrf.mxu0
      %4688 = vmatprep.mubr.f32.mxu0 0.0
      %4689 = vmatmul.mubr.f32.gmra.mxu0 %v4067
      %v4690 = vpop.f32.mrf.mxu0
      %v4691 = vadd.f32 0.0, %v4690
      %v4692 = vpop.f32.mrf.mxu0
      %4693 = vmatprep.mubr.f32.mxu0 0.0
      %4694 = vmatmul.mubr.f32.gmra.mxu0 %v4070
      %v4695 = vpop.f32.mrf.mxu0
      %v4696 = vadd.f32 0.0, %v4695
      %v4697 = vpop.f32.mrf.mxu0
      %4698 = vmatprep.mubr.f32.mxu0 0.0
      %4699 = vmatmul.mubr.f32.gmra.mxu0 %v4073
      %v4700 = vpop.f32.mrf.mxu0
      %v4701 = vadd.f32 0.0, %v4700
      %v4702 = vpop.f32.mrf.mxu0
      %4703 = vmatprep.mubr.f32.mxu0 0.0
      %4704 = vmatmul.mubr.f32.gmra.mxu0 %v4076
      %v4705 = vpop.f32.mrf.mxu0
      %v4706 = vadd.f32 0.0, %v4705
      %v4707 = vpop.f32.mrf.mxu0
      %4708 = vmatprep.mubr.f32.mxu0 0.0
      %4709 = vmatmul.mubr.f32.gmra.mxu0 %v4079
      %v4710 = vpop.f32.mrf.mxu0
      %v4711 = vadd.f32 0.0, %v4710
      %v4712 = vpop.f32.mrf.mxu0
      %4713 = vmatprep.mubr.f32.mxu0 0.0
      %4714 = vmatmul.mubr.f32.gmra.mxu0 %v4082
      %v4715 = vpop.f32.mrf.mxu0
      %v4716 = vadd.f32 0.0, %v4715
      %v4717 = vpop.f32.mrf.mxu0
      %4718 = vmatprep.mubr.f32.mxu0 0.0
      %4719 = vmatmul.mubr.f32.gmra.mxu0 %v4085
      %v4720 = vpop.f32.mrf.mxu0
      %v4721 = vadd.f32 0.0, %v4720
      %v4722 = vpop.f32.mrf.mxu0
      %4723 = vmatprep.mubr.f32.mxu0 0.0
      %4724 = vmatmul.mubr.f32.gmra.mxu0 %v4088
      %v4725 = vpop.f32.mrf.mxu0
      %v4726 = vadd.f32 0.0, %v4725
      %v4727 = vpop.f32.mrf.mxu0
      %4728 = vmatprep.mubr.f32.mxu0 0.0
      %4729 = vmatmul.mubr.f32.gmra.mxu0 %v4091
      %v4730 = vpop.f32.mrf.mxu0
      %v4731 = vadd.f32 0.0, %v4730
      %v4732 = vpop.f32.mrf.mxu0
      %4733 = vmatprep.mubr.f32.mxu0 0.0
      %4734 = vmatmul.mubr.f32.gmra.mxu0 %v4094
      %v4735 = vpop.f32.mrf.mxu0
      %v4736 = vadd.f32 0.0, %v4735
      %v4737 = vpop.f32.mrf.mxu0
      %4738 = vmatprep.mubr.f32.mxu0 0.0
      %4739 = vmatmul.mubr.f32.gmra.mxu0 %v4097
      %v4740 = vpop.f32.mrf.mxu0
      %v4741 = vadd.f32 0.0, %v4740
      %v4742 = vpop.f32.mrf.mxu0
      %4743 = vmatprep.mubr.f32.mxu0 0.0
      %4744 = vmatmul.mubr.f32.gmra.mxu0 %v4100
      %v4745 = vpop.f32.mrf.mxu0
      %v4746 = vadd.f32 0.0, %v4745
      %v4747 = vpop.f32.mrf.mxu0
      %4748 = vmatprep.mubr.f32.mxu0 0.0
      %4749 = vmatmul.mubr.f32.gmra.mxu0 %v4103
      %v4750 = vpop.f32.mrf.mxu0
      %v4751 = vadd.f32 0.0, %v4750
      %v4752 = vpop.f32.mrf.mxu0
      %4753 = vmatprep.mubr.f32.mxu0 0.0
      %4754 = vmatmul.mubr.f32.gmra.mxu0 %v4106
      %v4755 = vpop.f32.mrf.mxu0
      %v4756 = vadd.f32 0.0, %v4755
      %v4757 = vpop.f32.mrf.mxu0
      %4758 = vmatprep.mubr.f32.mxu0 0.0
      %4759 = vmatmul.mubr.f32.gmra.mxu0 %v4109
      %v4760 = vpop.f32.mrf.mxu0
      %v4761 = vadd.f32 0.0, %v4760
      %v4762 = vpop.f32.mrf.mxu0
      %4763 = vmatprep.mubr.f32.mxu0 0.0
      %4764 = vmatmul.mubr.f32.gmra.mxu0 %v4112
      %v4765 = vpop.f32.mrf.mxu0
      %v4766 = vadd.f32 0.0, %v4765
      %v4767 = vpop.f32.mrf.mxu0
      %4768 = vmatprep.mubr.f32.mxu0 0.0
      %4769 = vmatmul.mubr.f32.gmra.mxu0 %v4115
      %v4770 = vpop.f32.mrf.mxu0
      %v4771 = vadd.f32 0.0, %v4770
      %v4772 = vpop.f32.mrf.mxu0
      %4773 = vmatprep.mubr.f32.mxu0 0.0
      %4774 = vmatmul.mubr.f32.gmra.mxu0 %v4118
      %v4775 = vpop.f32.mrf.mxu0
      %v4776 = vadd.f32 0.0, %v4775
      %v4777 = vpop.f32.mrf.mxu0
      %4778 = vmatprep.mubr.f32.mxu0 0.0
      %4779 = vmatmul.mubr.f32.gmra.mxu0 %v4121
      %v4780 = vpop.f32.mrf.mxu0
      %v4781 = vadd.f32 0.0, %v4780
      %v4782 = vpop.f32.mrf.mxu0
      %4783 = vmatprep.mubr.f32.mxu0 0.0
      %4784 = vmatmul.mubr.f32.gmra.mxu0 %v4124
      %v4785 = vpop.f32.mrf.mxu0
      %v4786 = vadd.f32 0.0, %v4785
      %v4787 = vpop.f32.mrf.mxu0
      %4788 = vmatprep.mubr.f32.mxu0 0.0
      %4789 = vmatmul.mubr.f32.gmra.mxu0 %v4127
      %v4790 = vpop.f32.mrf.mxu0
      %v4791 = vadd.f32 0.0, %v4790
      %v4792 = vpop.f32.mrf.mxu0
      %4793 = vmatprep.mubr.f32.mxu0 0.0
      %4794 = vmatmul.mubr.f32.gmra.mxu0 %v4130
      %v4795 = vpop.f32.mrf.mxu0
      %v4796 = vadd.f32 0.0, %v4795
      %v4797 = vpop.f32.mrf.mxu0
      %4798 = vmatprep.mubr.f32.mxu0 0.0
      %4799 = vmatmul.mubr.f32.gmra.mxu0 %v4133
      %v4800 = vpop.f32.mrf.mxu0
      %v4801 = vadd.f32 0.0, %v4800
      %v4802 = vpop.f32.mrf.mxu0
      %4803 = vmatprep.mubr.f32.mxu0 0.0
      %4804 = vmatmul.mubr.f32.gmra.mxu0 %v4136
      %v4805 = vpop.f32.mrf.mxu0
      %v4806 = vadd.f32 0.0, %v4805
      %v4807 = vpop.f32.mrf.mxu0
      %4808 = vmatprep.mubr.f32.mxu0 0.0
      %4809 = vmatmul.mubr.f32.gmra.mxu0 %v4139
      %v4810 = vpop.f32.mrf.mxu0
      %v4811 = vadd.f32 0.0, %v4810
      %v4812 = vpop.f32.mrf.mxu0
      %4813 = vmatprep.mubr.f32.mxu0 0.0
      %4814 = vmatmul.mubr.f32.gmra.mxu0 %v4142
      %v4815 = vpop.f32.mrf.mxu0
      %v4816 = vadd.f32 0.0, %v4815
      %v4817 = vpop.f32.mrf.mxu0
      %4818 = vmatprep.mubr.f32.mxu0 0.0
      %4819 = vmatmul.mubr.f32.gmra.mxu0 %v4145
      %v4820 = vpop.f32.mrf.mxu0
      %v4821 = vadd.f32 0.0, %v4820
      %v4822 = vpop.f32.mrf.mxu0
      %4823 = vmatprep.mubr.f32.mxu0 0.0
      %4824 = vmatmul.mubr.f32.gmra.mxu0 %v4148
      %v4825 = vpop.f32.mrf.mxu0
      %v4826 = vadd.f32 0.0, %v4825
      %v4827 = vpop.f32.mrf.mxu0
      %4828 = vmatprep.mubr.f32.mxu0 0.0
      %4829 = vmatmul.mubr.f32.gmra.mxu0 %v4151
      %v4830 = vpop.f32.mrf.mxu0
      %v4831 = vadd.f32 0.0, %v4830
      %v4832 = vpop.f32.mrf.mxu0
      %4833 = vmatprep.mubr.f32.mxu0 0.0
      %4834 = vmatmul.mubr.f32.gmra.mxu0 %v4154
      %v4835 = vpop.f32.mrf.mxu0
      %v4836 = vadd.f32 0.0, %v4835
      %v4837 = vpop.f32.mrf.mxu0
      %4838 = vmatprep.mubr.f32.mxu0 0.0
      %4839 = vmatmul.mubr.f32.gmra.mxu0 %v4157
      %v4840 = vpop.f32.mrf.mxu0
      %v4841 = vadd.f32 0.0, %v4840
      %v4842 = vpop.f32.mrf.mxu0
      %4843 = vmatprep.mubr.f32.mxu0 0.0
      %4844 = vmatmul.mubr.f32.gmra.mxu0 %v4160
      %v4845 = vpop.f32.mrf.mxu0
      %v4846 = vadd.f32 0.0, %v4845
      %v4847 = vpop.f32.mrf.mxu0
      %4848 = vmatprep.mubr.f32.mxu0 0.0
      %4849 = vmatmul.mubr.f32.gmra.mxu0 %v4163
      %v4850 = vpop.f32.mrf.mxu0
      %v4851 = vadd.f32 0.0, %v4850
      %v4852 = vpop.f32.mrf.mxu0
      %4853 = vmatprep.mubr.f32.mxu0 0.0
      %4854 = vmatmul.mubr.f32.gmra.mxu0 %v4166
      %v4855 = vpop.f32.mrf.mxu0
      %v4856 = vadd.f32 0.0, %v4855
      %v4857 = vpop.f32.mrf.mxu0
      %4858 = vmatprep.mubr.f32.mxu0 0.0
      %4859 = vmatmul.mubr.f32.gmra.mxu0 %v4169
      %v4860 = vpop.f32.mrf.mxu0
      %v4861 = vadd.f32 0.0, %v4860
      %v4862 = vpop.f32.mrf.mxu0
      %4863 = vmatprep.mubr.f32.mxu0 0.0
      %4864 = vmatmul.mubr.f32.gmra.mxu0 %v4172
      %v4865 = vpop.f32.mrf.mxu0
      %v4866 = vadd.f32 0.0, %v4865
      %v4867 = vpop.f32.mrf.mxu0
      %4868 = vmatprep.mubr.f32.mxu0 0.0
      %4869 = vmatmul.mubr.f32.gmra.mxu0 %v4175
      %v4870 = vpop.f32.mrf.mxu0
      %v4871 = vadd.f32 0.0, %v4870
      %v4872 = vpop.f32.mrf.mxu0
      %4873 = vmatprep.mubr.f32.mxu0 0.0
      %4874 = vmatmul.mubr.f32.gmra.mxu0 %v4178
      %v4875 = vpop.f32.mrf.mxu0
      %v4876 = vadd.f32 0.0, %v4875
      %v4877 = vpop.f32.mrf.mxu0
      %4878 = vmatprep.mubr.f32.mxu0 0.0
      %4879 = vmatmul.mubr.f32.gmra.mxu0 %v4181
      %v4880 = vpop.f32.mrf.mxu0
      %v4881 = vadd.f32 0.0, %v4880
      %v4882 = vpop.f32.mrf.mxu0
      %4883 = vmatprep.mubr.f32.mxu0 0.0
      %4884 = vmatmul.mubr.f32.gmra.mxu0 %v4184
      %v4885 = vpop.f32.mrf.mxu0
      %v4886 = vadd.f32 0.0, %v4885
      %v4887 = vpop.f32.mrf.mxu0
      %4888 = vmatprep.mubr.f32.mxu0 0.0
      %4889 = vmatmul.mubr.f32.gmra.mxu0 %v4187
      %v4890 = vpop.f32.mrf.mxu0
      %v4891 = vadd.f32 0.0, %v4890
      %v4892 = vpop.f32.mrf.mxu0
      %4893 = vdwg.mxu0
      %5022 = vrot.lane.b32.xlu0 %v4256, 16
      %v5023 = vpop.permute.xlu0 %5022
      %5024 = vrot.lane.b32.xlu0 %v4261, 16
      %v5025 = vpop.permute.xlu0 %5024
      %5026 = vrot.lane.b32.xlu0 %v4266, 16
      %v5027 = vpop.permute.xlu0 %5026
      %5028 = vrot.lane.b32.xlu0 %v4271, 16
      %v5029 = vpop.permute.xlu0 %5028
      %5030 = vrot.lane.b32.xlu0 %v4276, 16
      %v5031 = vpop.permute.xlu0 %5030
      %5032 = vrot.lane.b32.xlu0 %v4281, 16
      %v5033 = vpop.permute.xlu0 %5032
      %5034 = vrot.lane.b32.xlu0 %v4286, 16
      %v5035 = vpop.permute.xlu0 %5034
      %5036 = vrot.lane.b32.xlu0 %v4291, 16
      %v5037 = vpop.permute.xlu0 %5036
      %5038 = vrot.lane.b32.xlu0 %v4296, 16
      %v5039 = vpop.permute.xlu0 %5038
      %5040 = vrot.lane.b32.xlu0 %v4301, 16
      %v5041 = vpop.permute.xlu0 %5040
      %5042 = vrot.lane.b32.xlu0 %v4306, 16
      %v5043 = vpop.permute.xlu0 %5042
      %5044 = vrot.lane.b32.xlu0 %v4311, 16
      %v5045 = vpop.permute.xlu0 %5044
      %5046 = vrot.lane.b32.xlu0 %v4316, 16
      %v5047 = vpop.permute.xlu0 %5046
      %5048 = vrot.lane.b32.xlu0 %v4321, 16
      %v5049 = vpop.permute.xlu0 %5048
      %5050 = vrot.lane.b32.xlu0 %v4326, 16
      %v5051 = vpop.permute.xlu0 %5050
      %5052 = vrot.lane.b32.xlu0 %v4331, 16
      %v5053 = vpop.permute.xlu0 %5052
      %5054 = vrot.lane.b32.xlu0 %v4336, 16
      %v5055 = vpop.permute.xlu0 %5054
      %5056 = vrot.lane.b32.xlu0 %v4341, 16
      %v5057 = vpop.permute.xlu0 %5056
      %5058 = vrot.lane.b32.xlu0 %v4346, 16
      %v5059 = vpop.permute.xlu0 %5058
      %5060 = vrot.lane.b32.xlu0 %v4351, 16
      %v5061 = vpop.permute.xlu0 %5060
      %5062 = vrot.lane.b32.xlu0 %v4356, 16
      %v5063 = vpop.permute.xlu0 %5062
      %5064 = vrot.lane.b32.xlu0 %v4361, 16
      %v5065 = vpop.permute.xlu0 %5064
      %5066 = vrot.lane.b32.xlu0 %v4366, 16
      %v5067 = vpop.permute.xlu0 %5066
      %5068 = vrot.lane.b32.xlu0 %v4371, 16
      %v5069 = vpop.permute.xlu0 %5068
      %5070 = vrot.lane.b32.xlu0 %v4376, 16
      %v5071 = vpop.permute.xlu0 %5070
      %5072 = vrot.lane.b32.xlu0 %v4381, 16
      %v5073 = vpop.permute.xlu0 %5072
      %5074 = vrot.lane.b32.xlu0 %v4386, 16
      %v5075 = vpop.permute.xlu0 %5074
      %5076 = vrot.lane.b32.xlu0 %v4391, 16
      %v5077 = vpop.permute.xlu0 %5076
      %5078 = vrot.lane.b32.xlu0 %v4396, 16
      %v5079 = vpop.permute.xlu0 %5078
      %5080 = vrot.lane.b32.xlu0 %v4401, 16
      %v5081 = vpop.permute.xlu0 %5080
      %5082 = vrot.lane.b32.xlu0 %v4406, 16
      %v5083 = vpop.permute.xlu0 %5082
      %5084 = vrot.lane.b32.xlu0 %v4411, 16
      %v5085 = vpop.permute.xlu0 %5084
      %5086 = vrot.lane.b32.xlu0 %v4416, 16
      %v5087 = vpop.permute.xlu0 %5086
      %5088 = vrot.lane.b32.xlu0 %v4421, 16
      %v5089 = vpop.permute.xlu0 %5088
      %5090 = vrot.lane.b32.xlu0 %v4426, 16
      %v5091 = vpop.permute.xlu0 %5090
      %5092 = vrot.lane.b32.xlu0 %v4431, 16
      %v5093 = vpop.permute.xlu0 %5092
      %5094 = vrot.lane.b32.xlu0 %v4436, 16
      %v5095 = vpop.permute.xlu0 %5094
      %5096 = vrot.lane.b32.xlu0 %v4441, 16
      %v5097 = vpop.permute.xlu0 %5096
      %5098 = vrot.lane.b32.xlu0 %v4446, 16
      %v5099 = vpop.permute.xlu0 %5098
      %5100 = vrot.lane.b32.xlu0 %v4451, 16
      %v5101 = vpop.permute.xlu0 %5100
      %5102 = vrot.lane.b32.xlu0 %v4456, 16
      %v5103 = vpop.permute.xlu0 %5102
      %5104 = vrot.lane.b32.xlu0 %v4461, 16
      %v5105 = vpop.permute.xlu0 %5104
      %5106 = vrot.lane.b32.xlu0 %v4466, 16
      %v5107 = vpop.permute.xlu0 %5106
      %5108 = vrot.lane.b32.xlu0 %v4471, 16
      %v5109 = vpop.permute.xlu0 %5108
      %5110 = vrot.lane.b32.xlu0 %v4476, 16
      %v5111 = vpop.permute.xlu0 %5110
      %5112 = vrot.lane.b32.xlu0 %v4481, 16
      %v5113 = vpop.permute.xlu0 %5112
      %5114 = vrot.lane.b32.xlu0 %v4486, 16
      %v5115 = vpop.permute.xlu0 %5114
      %5116 = vrot.lane.b32.xlu0 %v4491, 16
      %v5117 = vpop.permute.xlu0 %5116
      %5118 = vrot.lane.b32.xlu0 %v4496, 16
      %v5119 = vpop.permute.xlu0 %5118
      %5120 = vrot.lane.b32.xlu0 %v4501, 16
      %v5121 = vpop.permute.xlu0 %5120
      %5122 = vrot.lane.b32.xlu0 %v4506, 16
      %v5123 = vpop.permute.xlu0 %5122
      %5124 = vrot.lane.b32.xlu0 %v4511, 16
      %v5125 = vpop.permute.xlu0 %5124
      %5126 = vrot.lane.b32.xlu0 %v4516, 16
      %v5127 = vpop.permute.xlu0 %5126
      %5128 = vrot.lane.b32.xlu0 %v4521, 16
      %v5129 = vpop.permute.xlu0 %5128
      %5130 = vrot.lane.b32.xlu0 %v4526, 16
      %v5131 = vpop.permute.xlu0 %5130
      %5132 = vrot.lane.b32.xlu0 %v4531, 16
      %v5133 = vpop.permute.xlu0 %5132
      %5134 = vrot.lane.b32.xlu0 %v4536, 16
      %v5135 = vpop.permute.xlu0 %5134
      %5136 = vrot.lane.b32.xlu0 %v4541, 16
      %v5137 = vpop.permute.xlu0 %5136
      %5138 = vrot.lane.b32.xlu0 %v4546, 16
      %v5139 = vpop.permute.xlu0 %5138
      %5140 = vrot.lane.b32.xlu0 %v4551, 16
      %v5141 = vpop.permute.xlu0 %5140
      %5142 = vrot.lane.b32.xlu0 %v4556, 16
      %v5143 = vpop.permute.xlu0 %5142
      %5144 = vrot.lane.b32.xlu0 %v4561, 16
      %v5145 = vpop.permute.xlu0 %5144
      %5146 = vrot.lane.b32.xlu0 %v4566, 16
      %v5147 = vpop.permute.xlu0 %5146
      %5148 = vrot.lane.b32.xlu0 %v4571, 16
      %v5149 = vpop.permute.xlu0 %5148
      %5150 = vrot.lane.b32.xlu0 %v4576, 16
      %v5151 = vpop.permute.xlu0 %5150
      %5152 = vrot.lane.b32.xlu0 %v4581, 16
      %v5153 = vpop.permute.xlu0 %5152
      %5154 = vrot.lane.b32.xlu0 %v4586, 16
      %v5155 = vpop.permute.xlu0 %5154
      %5156 = vrot.lane.b32.xlu0 %v4591, 16
      %v5157 = vpop.permute.xlu0 %5156
      %5158 = vrot.lane.b32.xlu0 %v4596, 16
      %v5159 = vpop.permute.xlu0 %5158
      %5160 = vrot.lane.b32.xlu0 %v4601, 16
      %v5161 = vpop.permute.xlu0 %5160
      %5162 = vrot.lane.b32.xlu0 %v4606, 16
      %v5163 = vpop.permute.xlu0 %5162
      %5164 = vrot.lane.b32.xlu0 %v4611, 16
      %v5165 = vpop.permute.xlu0 %5164
      %5166 = vrot.lane.b32.xlu0 %v4616, 16
      %v5167 = vpop.permute.xlu0 %5166
      %5168 = vrot.lane.b32.xlu0 %v4621, 16
      %v5169 = vpop.permute.xlu0 %5168
      %5170 = vrot.lane.b32.xlu0 %v4626, 16
      %v5171 = vpop.permute.xlu0 %5170
      %5172 = vrot.lane.b32.xlu0 %v4631, 16
      %v5173 = vpop.permute.xlu0 %5172
      %5174 = vrot.lane.b32.xlu0 %v4636, 16
      %v5175 = vpop.permute.xlu0 %5174
      %5176 = vrot.lane.b32.xlu0 %v4641, 16
      %v5177 = vpop.permute.xlu0 %5176
      %5178 = vrot.lane.b32.xlu0 %v4646, 16
      %v5179 = vpop.permute.xlu0 %5178
      %5180 = vrot.lane.b32.xlu0 %v4651, 16
      %v5181 = vpop.permute.xlu0 %5180
      %5182 = vrot.lane.b32.xlu0 %v4656, 16
      %v5183 = vpop.permute.xlu0 %5182
      %5184 = vrot.lane.b32.xlu0 %v4661, 16
      %v5185 = vpop.permute.xlu0 %5184
      %5186 = vrot.lane.b32.xlu0 %v4666, 16
      %v5187 = vpop.permute.xlu0 %5186
      %5188 = vrot.lane.b32.xlu0 %v4671, 16
      %v5189 = vpop.permute.xlu0 %5188
      %5190 = vrot.lane.b32.xlu0 %v4676, 16
      %v5191 = vpop.permute.xlu0 %5190
      %5192 = vrot.lane.b32.xlu0 %v4681, 16
      %v5193 = vpop.permute.xlu0 %5192
      %5194 = vrot.lane.b32.xlu0 %v4686, 16
      %v5195 = vpop.permute.xlu0 %5194
      %5196 = vrot.lane.b32.xlu0 %v4691, 16
      %v5197 = vpop.permute.xlu0 %5196
      %5198 = vrot.lane.b32.xlu0 %v4696, 16
      %v5199 = vpop.permute.xlu0 %5198
      %5200 = vrot.lane.b32.xlu0 %v4701, 16
      %v5201 = vpop.permute.xlu0 %5200
      %5202 = vrot.lane.b32.xlu0 %v4706, 16
      %v5203 = vpop.permute.xlu0 %5202
      %5204 = vrot.lane.b32.xlu0 %v4711, 16
      %v5205 = vpop.permute.xlu0 %5204
      %5206 = vrot.lane.b32.xlu0 %v4716, 16
      %v5207 = vpop.permute.xlu0 %5206
      %5208 = vrot.lane.b32.xlu0 %v4721, 16
      %v5209 = vpop.permute.xlu0 %5208
      %5210 = vrot.lane.b32.xlu0 %v4726, 16
      %v5211 = vpop.permute.xlu0 %5210
      %5212 = vrot.lane.b32.xlu0 %v4731, 16
      %v5213 = vpop.permute.xlu0 %5212
      %5214 = vrot.lane.b32.xlu0 %v4736, 16
      %v5215 = vpop.permute.xlu0 %5214
      %5216 = vrot.lane.b32.xlu0 %v4741, 16
      %v5217 = vpop.permute.xlu0 %5216
      %5218 = vrot.lane.b32.xlu0 %v4746, 16
      %v5219 = vpop.permute.xlu0 %5218
      %5220 = vrot.lane.b32.xlu0 %v4751, 16
      %v5221 = vpop.permute.xlu0 %5220
      %5222 = vrot.lane.b32.xlu0 %v4756, 16
      %v5223 = vpop.permute.xlu0 %5222
      %5224 = vrot.lane.b32.xlu0 %v4761, 16
      %v5225 = vpop.permute.xlu0 %5224
      %5226 = vrot.lane.b32.xlu0 %v4766, 16
      %v5227 = vpop.permute.xlu0 %5226
      %5228 = vrot.lane.b32.xlu0 %v4771, 16
      %v5229 = vpop.permute.xlu0 %5228
      %5230 = vrot.lane.b32.xlu0 %v4776, 16
      %v5231 = vpop.permute.xlu0 %5230
      %5232 = vrot.lane.b32.xlu0 %v4781, 16
      %v5233 = vpop.permute.xlu0 %5232
      %5234 = vrot.lane.b32.xlu0 %v4786, 16
      %v5235 = vpop.permute.xlu0 %5234
      %5236 = vrot.lane.b32.xlu0 %v4791, 16
      %v5237 = vpop.permute.xlu0 %5236
      %5238 = vrot.lane.b32.xlu0 %v4796, 16
      %v5239 = vpop.permute.xlu0 %5238
      %5240 = vrot.lane.b32.xlu0 %v4801, 16
      %v5241 = vpop.permute.xlu0 %5240
      %5242 = vrot.lane.b32.xlu0 %v4806, 16
      %v5243 = vpop.permute.xlu0 %5242
      %5244 = vrot.lane.b32.xlu0 %v4811, 16
      %v5245 = vpop.permute.xlu0 %5244
      %5246 = vrot.lane.b32.xlu0 %v4816, 16
      %v5247 = vpop.permute.xlu0 %5246
      %5248 = vrot.lane.b32.xlu0 %v4821, 16
      %v5249 = vpop.permute.xlu0 %5248
      %5250 = vrot.lane.b32.xlu0 %v4826, 16
      %v5251 = vpop.permute.xlu0 %5250
      %5252 = vrot.lane.b32.xlu0 %v4831, 16
      %v5253 = vpop.permute.xlu0 %5252
      %5254 = vrot.lane.b32.xlu0 %v4836, 16
      %v5255 = vpop.permute.xlu0 %5254
      %5256 = vrot.lane.b32.xlu0 %v4841, 16
      %v5257 = vpop.permute.xlu0 %5256
      %5258 = vrot.lane.b32.xlu0 %v4846, 16
      %v5259 = vpop.permute.xlu0 %5258
      %5260 = vrot.lane.b32.xlu0 %v4851, 16
      %v5261 = vpop.permute.xlu0 %5260
      %5262 = vrot.lane.b32.xlu0 %v4856, 16
      %v5263 = vpop.permute.xlu0 %5262
      %5264 = vrot.lane.b32.xlu0 %v4861, 16
      %v5265 = vpop.permute.xlu0 %5264
      %5266 = vrot.lane.b32.xlu0 %v4866, 16
      %v5267 = vpop.permute.xlu0 %5266
      %5268 = vrot.lane.b32.xlu0 %v4871, 16
      %v5269 = vpop.permute.xlu0 %5268
      %5270 = vrot.lane.b32.xlu0 %v4876, 16
      %v5271 = vpop.permute.xlu0 %5270
      %5272 = vrot.lane.b32.xlu0 %v4881, 16
      %v5273 = vpop.permute.xlu0 %5272
      %5274 = vrot.lane.b32.xlu0 %v4886, 16
      %v5275 = vpop.permute.xlu0 %5274
      %5276 = vrot.lane.b32.xlu0 %v4891, 16
      %v5277 = vpop.permute.xlu0 %5276
      %v5406 = vsel %vm1563, %v2015, %v5023
      %v5407 = vsel %vm1563, %v2020, %v5025
      %v5408 = vsel %vm1563, %v2025, %v5027
      %v5409 = vsel %vm1563, %v2030, %v5029
      %v5410 = vsel %vm1563, %v2035, %v5031
      %v5411 = vsel %vm1563, %v2040, %v5033
      %v5412 = vsel %vm1563, %v2045, %v5035
      %v5413 = vsel %vm1563, %v2050, %v5037
      %v5414 = vsel %vm1563, %v2055, %v5039
      %v5415 = vsel %vm1563, %v2060, %v5041
      %v5416 = vsel %vm1563, %v2065, %v5043
      %v5417 = vsel %vm1563, %v2070, %v5045
      %v5418 = vsel %vm1563, %v2075, %v5047
      %v5419 = vsel %vm1563, %v2080, %v5049
      %v5420 = vsel %vm1563, %v2085, %v5051
      %v5421 = vsel %vm1563, %v2090, %v5053
      %v5422 = vsel %vm1563, %v2095, %v5055
      %v5423 = vsel %vm1563, %v2100, %v5057
      %v5424 = vsel %vm1563, %v2105, %v5059
      %v5425 = vsel %vm1563, %v2110, %v5061
      %v5426 = vsel %vm1563, %v2115, %v5063
      %v5427 = vsel %vm1563, %v2120, %v5065
      %v5428 = vsel %vm1563, %v2125, %v5067
      %v5429 = vsel %vm1563, %v2130, %v5069
      %v5430 = vsel %vm1563, %v2135, %v5071
      %v5431 = vsel %vm1563, %v2140, %v5073
      %v5432 = vsel %vm1563, %v2145, %v5075
      %v5433 = vsel %vm1563, %v2150, %v5077
      %v5434 = vsel %vm1563, %v2155, %v5079
      %v5435 = vsel %vm1563, %v2160, %v5081
      %v5436 = vsel %vm1563, %v2165, %v5083
      %v5437 = vsel %vm1563, %v2170, %v5085
      %v5438 = vsel %vm1563, %v2175, %v5087
      %v5439 = vsel %vm1563, %v2180, %v5089
      %v5440 = vsel %vm1563, %v2185, %v5091
      %v5441 = vsel %vm1563, %v2190, %v5093
      %v5442 = vsel %vm1563, %v2195, %v5095
      %v5443 = vsel %vm1563, %v2200, %v5097
      %v5444 = vsel %vm1563, %v2205, %v5099
      %v5445 = vsel %vm1563, %v2210, %v5101
      %v5446 = vsel %vm1563, %v2215, %v5103
      %v5447 = vsel %vm1563, %v2220, %v5105
      %v5448 = vsel %vm1563, %v2225, %v5107
      %v5449 = vsel %vm1563, %v2230, %v5109
      %v5450 = vsel %vm1563, %v2235, %v5111
      %v5451 = vsel %vm1563, %v2240, %v5113
      %v5452 = vsel %vm1563, %v2245, %v5115
      %v5453 = vsel %vm1563, %v2250, %v5117
      %v5454 = vsel %vm1563, %v2255, %v5119
      %v5455 = vsel %vm1563, %v2260, %v5121
      %v5456 = vsel %vm1563, %v2265, %v5123
      %v5457 = vsel %vm1563, %v2270, %v5125
      %v5458 = vsel %vm1563, %v2275, %v5127
      %v5459 = vsel %vm1563, %v2280, %v5129
      %v5460 = vsel %vm1563, %v2285, %v5131
      %v5461 = vsel %vm1563, %v2290, %v5133
      %v5462 = vsel %vm1563, %v2295, %v5135
      %v5463 = vsel %vm1563, %v2300, %v5137
      %v5464 = vsel %vm1563, %v2305, %v5139
      %v5465 = vsel %vm1563, %v2310, %v5141
      %v5466 = vsel %vm1563, %v2315, %v5143
      %v5467 = vsel %vm1563, %v2320, %v5145
      %v5468 = vsel %vm1563, %v2325, %v5147
      %v5469 = vsel %vm1563, %v2330, %v5149
      %v5470 = vsel %vm1563, %v2335, %v5151
      %v5471 = vsel %vm1563, %v2340, %v5153
      %v5472 = vsel %vm1563, %v2345, %v5155
      %v5473 = vsel %vm1563, %v2350, %v5157
      %v5474 = vsel %vm1563, %v2355, %v5159
      %v5475 = vsel %vm1563, %v2360, %v5161
      %v5476 = vsel %vm1563, %v2365, %v5163
      %v5477 = vsel %vm1563, %v2370, %v5165
      %v5478 = vsel %vm1563, %v2375, %v5167
      %v5479 = vsel %vm1563, %v2380, %v5169
      %v5480 = vsel %vm1563, %v2385, %v5171
      %v5481 = vsel %vm1563, %v2390, %v5173
      %v5482 = vsel %vm1563, %v2395, %v5175
      %v5483 = vsel %vm1563, %v2400, %v5177
      %v5484 = vsel %vm1563, %v2405, %v5179
      %v5485 = vsel %vm1563, %v2410, %v5181
      %v5486 = vsel %vm1563, %v2415, %v5183
      %v5487 = vsel %vm1563, %v2420, %v5185
      %v5488 = vsel %vm1563, %v2425, %v5187
      %v5489 = vsel %vm1563, %v2430, %v5189
      %v5490 = vsel %vm1563, %v2435, %v5191
      %v5491 = vsel %vm1563, %v2440, %v5193
      %v5492 = vsel %vm1563, %v2445, %v5195
      %v5493 = vsel %vm1563, %v2450, %v5197
      %v5494 = vsel %vm1563, %v2455, %v5199
      %v5495 = vsel %vm1563, %v2460, %v5201
      %v5496 = vsel %vm1563, %v2465, %v5203
      %v5497 = vsel %vm1563, %v2470, %v5205
      %v5498 = vsel %vm1563, %v2475, %v5207
      %v5499 = vsel %vm1563, %v2480, %v5209
      %v5500 = vsel %vm1563, %v2485, %v5211
      %v5501 = vsel %vm1563, %v2490, %v5213
      %v5502 = vsel %vm1563, %v2495, %v5215
      %v5503 = vsel %vm1563, %v2500, %v5217
      %v5504 = vsel %vm1563, %v2505, %v5219
      %v5505 = vsel %vm1563, %v2510, %v5221
      %v5506 = vsel %vm1563, %v2515, %v5223
      %v5507 = vsel %vm1563, %v2520, %v5225
      %v5508 = vsel %vm1563, %v2525, %v5227
      %v5509 = vsel %vm1563, %v2530, %v5229
      %v5510 = vsel %vm1563, %v2535, %v5231
      %v5511 = vsel %vm1563, %v2540, %v5233
      %v5512 = vsel %vm1563, %v2545, %v5235
      %v5513 = vsel %vm1563, %v2550, %v5237
      %v5514 = vsel %vm1563, %v2555, %v5239
      %v5515 = vsel %vm1563, %v2560, %v5241
      %v5516 = vsel %vm1563, %v2565, %v5243
      %v5517 = vsel %vm1563, %v2570, %v5245
      %v5518 = vsel %vm1563, %v2575, %v5247
      %v5519 = vsel %vm1563, %v2580, %v5249
      %v5520 = vsel %vm1563, %v2585, %v5251
      %v5521 = vsel %vm1563, %v2590, %v5253
      %v5522 = vsel %vm1563, %v2595, %v5255
      %v5523 = vsel %vm1563, %v2600, %v5257
      %v5524 = vsel %vm1563, %v2605, %v5259
      %v5525 = vsel %vm1563, %v2610, %v5261
      %v5526 = vsel %vm1563, %v2615, %v5263
      %v5527 = vsel %vm1563, %v2620, %v5265
      %v5528 = vsel %vm1563, %v2625, %v5267
      %v5529 = vsel %vm1563, %v2630, %v5269
      %v5530 = vsel %vm1563, %v2635, %v5271
      %v5531 = vsel %vm1563, %v2640, %v5273
      %v5532 = vsel %vm1563, %v2645, %v5275
      %v5533 = vsel %vm1563, %v2650, %v5277
      %v5534 = vcombine.low %v5406, %v5438
      %v5535 = vcombine.high %v5406, %v5438
      %v5537 = vunpack.c.l.s4 1983009808
      %v5538 = vunpack.c.0.s8 %v5537
      %v5539 = vlaneseq
      %v5540 = vshrl.u32 %v5539, 7
      %v5541 = vsub.s32 %v5538, %v5540
      %v5542 = vrot.slane %v5534, %v5541
      %v5544 = vunpack.c.l.s4 1983009808
      %v5545 = vunpack.c.0.s8 %v5544
      %v5546 = vlaneseq
      %v5547 = vshrl.u32 %v5546, 7
      %v5548 = vsub.s32 %v5545, %v5547
      %v5549 = vrot.slane %v5535, %v5548
      %v5550 = vcombine.low %v5422, %v5454
      %v5551 = vcombine.high %v5422, %v5454
      %v5553 = vunpack.c.l.s4 1983009808
      %v5554 = vunpack.c.0.s8 %v5553
      %v5555 = vlaneseq
      %v5556 = vshrl.u32 %v5555, 7
      %v5557 = vsub.s32 %v5554, %v5556
      %v5558 = vrot.slane %v5550, %v5557
      %v5560 = vunpack.c.l.s4 1983009808
      %v5561 = vunpack.c.0.s8 %v5560
      %v5562 = vlaneseq
      %v5563 = vshrl.u32 %v5562, 7
      %v5564 = vsub.s32 %v5561, %v5563
      %v5565 = vrot.slane %v5551, %v5564
      %v5566 = vcombine.low %v5470, %v5502
      %v5567 = vcombine.high %v5470, %v5502
      %v5569 = vunpack.c.l.s4 1983009808
      %v5570 = vunpack.c.0.s8 %v5569
      %v5571 = vlaneseq
      %v5572 = vshrl.u32 %v5571, 7
      %v5573 = vsub.s32 %v5570, %v5572
      %v5574 = vrot.slane %v5566, %v5573
      %v5576 = vunpack.c.l.s4 1983009808
      %v5577 = vunpack.c.0.s8 %v5576
      %v5578 = vlaneseq
      %v5579 = vshrl.u32 %v5578, 7
      %v5580 = vsub.s32 %v5577, %v5579
      %v5581 = vrot.slane %v5567, %v5580
      %v5582 = vcombine.low %v5486, %v5518
      %v5583 = vcombine.high %v5486, %v5518
      %v5585 = vunpack.c.l.s4 1983009808
      %v5586 = vunpack.c.0.s8 %v5585
      %v5587 = vlaneseq
      %v5588 = vshrl.u32 %v5587, 7
      %v5589 = vsub.s32 %v5586, %v5588
      %v5590 = vrot.slane %v5582, %v5589
      %v5592 = vunpack.c.l.s4 1983009808
      %v5593 = vunpack.c.0.s8 %v5592
      %v5594 = vlaneseq
      %v5595 = vshrl.u32 %v5594, 7
      %v5596 = vsub.s32 %v5593, %v5595
      %v5597 = vrot.slane %v5583, %v5596
      %v5598 = vcombine.low %v5542, %v5558
      %v5599 = vcombine.high %v5542, %v5558
      %v5601 = vunpack.c.l.s4 1934713408
      %v5602 = vunpack.c.0.s8 %v5601
      %v5603 = vlaneseq
      %v5604 = vshrl.u32 %v5603, 7
      %v5605 = vsub.s32 %v5602, %v5604
      %v5606 = vrot.slane %v5598, %v5605
      %v5608 = vunpack.c.l.s4 1934713408
      %v5609 = vunpack.c.0.s8 %v5608
      %v5610 = vlaneseq
      %v5611 = vshrl.u32 %v5610, 7
      %v5612 = vsub.s32 %v5609, %v5611
      %v5613 = vrot.slane %v5599, %v5612
      %v5614 = vcombine.low %v5549, %v5565
      %v5615 = vcombine.high %v5549, %v5565
      %v5617 = vunpack.c.l.s4 1934713408
      %v5618 = vunpack.c.0.s8 %v5617
      %v5619 = vlaneseq
      %v5620 = vshrl.u32 %v5619, 7
      %v5621 = vsub.s32 %v5618, %v5620
      %v5622 = vrot.slane %v5614, %v5621
      %v5624 = vunpack.c.l.s4 1934713408
      %v5625 = vunpack.c.0.s8 %v5624
      %v5626 = vlaneseq
      %v5627 = vshrl.u32 %v5626, 7
      %v5628 = vsub.s32 %v5625, %v5627
      %v5629 = vrot.slane %v5615, %v5628
      %v5630 = vcombine.low %v5574, %v5590
      %v5631 = vcombine.high %v5574, %v5590
      %v5633 = vunpack.c.l.s4 1934713408
      %v5634 = vunpack.c.0.s8 %v5633
      %v5635 = vlaneseq
      %v5636 = vshrl.u32 %v5635, 7
      %v5637 = vsub.s32 %v5634, %v5636
      %v5638 = vrot.slane %v5630, %v5637
      %v5640 = vunpack.c.l.s4 1934713408
      %v5641 = vunpack.c.0.s8 %v5640
      %v5642 = vlaneseq
      %v5643 = vshrl.u32 %v5642, 7
      %v5644 = vsub.s32 %v5641, %v5643
      %v5645 = vrot.slane %v5631, %v5644
      %v5646 = vcombine.low %v5581, %v5597
      %v5647 = vcombine.high %v5581, %v5597
      %v5649 = vunpack.c.l.s4 1934713408
      %v5650 = vunpack.c.0.s8 %v5649
      %v5651 = vlaneseq
      %v5652 = vshrl.u32 %v5651, 7
      %v5653 = vsub.s32 %v5650, %v5652
      %v5654 = vrot.slane %v5646, %v5653
      %v5656 = vunpack.c.l.s4 1934713408
      %v5657 = vunpack.c.0.s8 %v5656
      %v5658 = vlaneseq
      %v5659 = vshrl.u32 %v5658, 7
      %v5660 = vsub.s32 %v5657, %v5659
      %v5661 = vrot.slane %v5647, %v5660
      %v5662 = vcombine.low %v5606, %v5638
      %v5663 = vcombine.high %v5606, %v5638
      %v5664 = vcombine.low %v5613, %v5645
      %v5665 = vcombine.high %v5613, %v5645
      %v5666 = vcombine.low %v5622, %v5654
      %v5667 = vcombine.high %v5622, %v5654
      %v5668 = vcombine.low %v5629, %v5661
      %v5669 = vcombine.high %v5629, %v5661
      %v5670 = vcombine.low %v5407, %v5439
      %v5671 = vcombine.high %v5407, %v5439
      %v5673 = vunpack.c.l.s4 1983009808
      %v5674 = vunpack.c.0.s8 %v5673
      %v5675 = vlaneseq
      %v5676 = vshrl.u32 %v5675, 7
      %v5677 = vsub.s32 %v5674, %v5676
      %v5678 = vrot.slane %v5670, %v5677
      %v5680 = vunpack.c.l.s4 1983009808
      %v5681 = vunpack.c.0.s8 %v5680
      %v5682 = vlaneseq
      %v5683 = vshrl.u32 %v5682, 7
      %v5684 = vsub.s32 %v5681, %v5683
      %v5685 = vrot.slane %v5671, %v5684
      %v5686 = vcombine.low %v5423, %v5455
      %v5687 = vcombine.high %v5423, %v5455
      %v5689 = vunpack.c.l.s4 1983009808
      %v5690 = vunpack.c.0.s8 %v5689
      %v5691 = vlaneseq
      %v5692 = vshrl.u32 %v5691, 7
      %v5693 = vsub.s32 %v5690, %v5692
      %v5694 = vrot.slane %v5686, %v5693
      %v5696 = vunpack.c.l.s4 1983009808
      %v5697 = vunpack.c.0.s8 %v5696
      %v5698 = vlaneseq
      %v5699 = vshrl.u32 %v5698, 7
      %v5700 = vsub.s32 %v5697, %v5699
      %v5701 = vrot.slane %v5687, %v5700
      %v5702 = vcombine.low %v5471, %v5503
      %v5703 = vcombine.high %v5471, %v5503
      %v5705 = vunpack.c.l.s4 1983009808
      %v5706 = vunpack.c.0.s8 %v5705
      %v5707 = vlaneseq
      %v5708 = vshrl.u32 %v5707, 7
      %v5709 = vsub.s32 %v5706, %v5708
      %v5710 = vrot.slane %v5702, %v5709
      %v5712 = vunpack.c.l.s4 1983009808
      %v5713 = vunpack.c.0.s8 %v5712
      %v5714 = vlaneseq
      %v5715 = vshrl.u32 %v5714, 7
      %v5716 = vsub.s32 %v5713, %v5715
      %v5717 = vrot.slane %v5703, %v5716
      %v5718 = vcombine.low %v5487, %v5519
      %v5719 = vcombine.high %v5487, %v5519
      %v5721 = vunpack.c.l.s4 1983009808
      %v5722 = vunpack.c.0.s8 %v5721
      %v5723 = vlaneseq
      %v5724 = vshrl.u32 %v5723, 7
      %v5725 = vsub.s32 %v5722, %v5724
      %v5726 = vrot.slane %v5718, %v5725
      %v5728 = vunpack.c.l.s4 1983009808
      %v5729 = vunpack.c.0.s8 %v5728
      %v5730 = vlaneseq
      %v5731 = vshrl.u32 %v5730, 7
      %v5732 = vsub.s32 %v5729, %v5731
      %v5733 = vrot.slane %v5719, %v5732
      %v5734 = vcombine.low %v5678, %v5694
      %v5735 = vcombine.high %v5678, %v5694
      %v5737 = vunpack.c.l.s4 1934713408
      %v5738 = vunpack.c.0.s8 %v5737
      %v5739 = vlaneseq
      %v5740 = vshrl.u32 %v5739, 7
      %v5741 = vsub.s32 %v5738, %v5740
      %v5742 = vrot.slane %v5734, %v5741
      %v5744 = vunpack.c.l.s4 1934713408
      %v5745 = vunpack.c.0.s8 %v5744
      %v5746 = vlaneseq
      %v5747 = vshrl.u32 %v5746, 7
      %v5748 = vsub.s32 %v5745, %v5747
      %v5749 = vrot.slane %v5735, %v5748
      %v5750 = vcombine.low %v5685, %v5701
      %v5751 = vcombine.high %v5685, %v5701
      %v5753 = vunpack.c.l.s4 1934713408
      %v5754 = vunpack.c.0.s8 %v5753
      %v5755 = vlaneseq
      %v5756 = vshrl.u32 %v5755, 7
      %v5757 = vsub.s32 %v5754, %v5756
      %v5758 = vrot.slane %v5750, %v5757
      %v5760 = vunpack.c.l.s4 1934713408
      %v5761 = vunpack.c.0.s8 %v5760
      %v5762 = vlaneseq
      %v5763 = vshrl.u32 %v5762, 7
      %v5764 = vsub.s32 %v5761, %v5763
      %v5765 = vrot.slane %v5751, %v5764
      %v5766 = vcombine.low %v5710, %v5726
      %v5767 = vcombine.high %v5710, %v5726
      %v5769 = vunpack.c.l.s4 1934713408
      %v5770 = vunpack.c.0.s8 %v5769
      %v5771 = vlaneseq
      %v5772 = vshrl.u32 %v5771, 7
      %v5773 = vsub.s32 %v5770, %v5772
      %v5774 = vrot.slane %v5766, %v5773
      %v5776 = vunpack.c.l.s4 1934713408
      %v5777 = vunpack.c.0.s8 %v5776
      %v5778 = vlaneseq
      %v5779 = vshrl.u32 %v5778, 7
      %v5780 = vsub.s32 %v5777, %v5779
      %v5781 = vrot.slane %v5767, %v5780
      %v5782 = vcombine.low %v5717, %v5733
      %v5783 = vcombine.high %v5717, %v5733
      %v5785 = vunpack.c.l.s4 1934713408
      %v5786 = vunpack.c.0.s8 %v5785
      %v5787 = vlaneseq
      %v5788 = vshrl.u32 %v5787, 7
      %v5789 = vsub.s32 %v5786, %v5788
      %v5790 = vrot.slane %v5782, %v5789
      %v5792 = vunpack.c.l.s4 1934713408
      %v5793 = vunpack.c.0.s8 %v5792
      %v5794 = vlaneseq
      %v5795 = vshrl.u32 %v5794, 7
      %v5796 = vsub.s32 %v5793, %v5795
      %v5797 = vrot.slane %v5783, %v5796
      %v5798 = vcombine.low %v5742, %v5774
      %v5799 = vcombine.high %v5742, %v5774
      %v5800 = vcombine.low %v5749, %v5781
      %v5801 = vcombine.high %v5749, %v5781
      %v5802 = vcombine.low %v5758, %v5790
      %v5803 = vcombine.high %v5758, %v5790
      %v5804 = vcombine.low %v5765, %v5797
      %v5805 = vcombine.high %v5765, %v5797
      %v5806 = vcombine.low %v5408, %v5440
      %v5807 = vcombine.high %v5408, %v5440
      %v5809 = vunpack.c.l.s4 1983009808
      %v5810 = vunpack.c.0.s8 %v5809
      %v5811 = vlaneseq
      %v5812 = vshrl.u32 %v5811, 7
      %v5813 = vsub.s32 %v5810, %v5812
      %v5814 = vrot.slane %v5806, %v5813
      %v5816 = vunpack.c.l.s4 1983009808
      %v5817 = vunpack.c.0.s8 %v5816
      %v5818 = vlaneseq
      %v5819 = vshrl.u32 %v5818, 7
      %v5820 = vsub.s32 %v5817, %v5819
      %v5821 = vrot.slane %v5807, %v5820
      %v5822 = vcombine.low %v5424, %v5456
      %v5823 = vcombine.high %v5424, %v5456
      %v5825 = vunpack.c.l.s4 1983009808
      %v5826 = vunpack.c.0.s8 %v5825
      %v5827 = vlaneseq
      %v5828 = vshrl.u32 %v5827, 7
      %v5829 = vsub.s32 %v5826, %v5828
      %v5830 = vrot.slane %v5822, %v5829
      %v5832 = vunpack.c.l.s4 1983009808
      %v5833 = vunpack.c.0.s8 %v5832
      %v5834 = vlaneseq
      %v5835 = vshrl.u32 %v5834, 7
      %v5836 = vsub.s32 %v5833, %v5835
      %v5837 = vrot.slane %v5823, %v5836
      %v5838 = vcombine.low %v5472, %v5504
      %v5839 = vcombine.high %v5472, %v5504
      %v5841 = vunpack.c.l.s4 1983009808
      %v5842 = vunpack.c.0.s8 %v5841
      %v5843 = vlaneseq
      %v5844 = vshrl.u32 %v5843, 7
      %v5845 = vsub.s32 %v5842, %v5844
      %v5846 = vrot.slane %v5838, %v5845
      %v5848 = vunpack.c.l.s4 1983009808
      %v5849 = vunpack.c.0.s8 %v5848
      %v5850 = vlaneseq
      %v5851 = vshrl.u32 %v5850, 7
      %v5852 = vsub.s32 %v5849, %v5851
      %v5853 = vrot.slane %v5839, %v5852
      %v5854 = vcombine.low %v5488, %v5520
      %v5855 = vcombine.high %v5488, %v5520
      %v5857 = vunpack.c.l.s4 1983009808
      %v5858 = vunpack.c.0.s8 %v5857
      %v5859 = vlaneseq
      %v5860 = vshrl.u32 %v5859, 7
      %v5861 = vsub.s32 %v5858, %v5860
      %v5862 = vrot.slane %v5854, %v5861
      %v5864 = vunpack.c.l.s4 1983009808
      %v5865 = vunpack.c.0.s8 %v5864
      %v5866 = vlaneseq
      %v5867 = vshrl.u32 %v5866, 7
      %v5868 = vsub.s32 %v5865, %v5867
      %v5869 = vrot.slane %v5855, %v5868
      %v5870 = vcombine.low %v5814, %v5830
      %v5871 = vcombine.high %v5814, %v5830
      %v5873 = vunpack.c.l.s4 1934713408
      %v5874 = vunpack.c.0.s8 %v5873
      %v5875 = vlaneseq
      %v5876 = vshrl.u32 %v5875, 7
      %v5877 = vsub.s32 %v5874, %v5876
      %v5878 = vrot.slane %v5870, %v5877
      %v5880 = vunpack.c.l.s4 1934713408
      %v5881 = vunpack.c.0.s8 %v5880
      %v5882 = vlaneseq
      %v5883 = vshrl.u32 %v5882, 7
      %v5884 = vsub.s32 %v5881, %v5883
      %v5885 = vrot.slane %v5871, %v5884
      %v5886 = vcombine.low %v5821, %v5837
      %v5887 = vcombine.high %v5821, %v5837
      %v5889 = vunpack.c.l.s4 1934713408
      %v5890 = vunpack.c.0.s8 %v5889
      %v5891 = vlaneseq
      %v5892 = vshrl.u32 %v5891, 7
      %v5893 = vsub.s32 %v5890, %v5892
      %v5894 = vrot.slane %v5886, %v5893
      %v5896 = vunpack.c.l.s4 1934713408
      %v5897 = vunpack.c.0.s8 %v5896
      %v5898 = vlaneseq
      %v5899 = vshrl.u32 %v5898, 7
      %v5900 = vsub.s32 %v5897, %v5899
      %v5901 = vrot.slane %v5887, %v5900
      %v5902 = vcombine.low %v5846, %v5862
      %v5903 = vcombine.high %v5846, %v5862
      %v5905 = vunpack.c.l.s4 1934713408
      %v5906 = vunpack.c.0.s8 %v5905
      %v5907 = vlaneseq
      %v5908 = vshrl.u32 %v5907, 7
      %v5909 = vsub.s32 %v5906, %v5908
      %v5910 = vrot.slane %v5902, %v5909
      %v5912 = vunpack.c.l.s4 1934713408
      %v5913 = vunpack.c.0.s8 %v5912
      %v5914 = vlaneseq
      %v5915 = vshrl.u32 %v5914, 7
      %v5916 = vsub.s32 %v5913, %v5915
      %v5917 = vrot.slane %v5903, %v5916
      %v5918 = vcombine.low %v5853, %v5869
      %v5919 = vcombine.high %v5853, %v5869
      %v5921 = vunpack.c.l.s4 1934713408
      %v5922 = vunpack.c.0.s8 %v5921
      %v5923 = vlaneseq
      %v5924 = vshrl.u32 %v5923, 7
      %v5925 = vsub.s32 %v5922, %v5924
      %v5926 = vrot.slane %v5918, %v5925
      %v5928 = vunpack.c.l.s4 1934713408
      %v5929 = vunpack.c.0.s8 %v5928
      %v5930 = vlaneseq
      %v5931 = vshrl.u32 %v5930, 7
      %v5932 = vsub.s32 %v5929, %v5931
      %v5933 = vrot.slane %v5919, %v5932
      %v5934 = vcombine.low %v5878, %v5910
      %v5935 = vcombine.high %v5878, %v5910
      %v5936 = vcombine.low %v5885, %v5917
      %v5937 = vcombine.high %v5885, %v5917
      %v5938 = vcombine.low %v5894, %v5926
      %v5939 = vcombine.high %v5894, %v5926
      %v5940 = vcombine.low %v5901, %v5933
      %v5941 = vcombine.high %v5901, %v5933
      %v5942 = vcombine.low %v5409, %v5441
      %v5943 = vcombine.high %v5409, %v5441
      %v5945 = vunpack.c.l.s4 1983009808
      %v5946 = vunpack.c.0.s8 %v5945
      %v5947 = vlaneseq
      %v5948 = vshrl.u32 %v5947, 7
      %v5949 = vsub.s32 %v5946, %v5948
      %v5950 = vrot.slane %v5942, %v5949
      %v5952 = vunpack.c.l.s4 1983009808
      %v5953 = vunpack.c.0.s8 %v5952
      %v5954 = vlaneseq
      %v5955 = vshrl.u32 %v5954, 7
      %v5956 = vsub.s32 %v5953, %v5955
      %v5957 = vrot.slane %v5943, %v5956
      %v5958 = vcombine.low %v5425, %v5457
      %v5959 = vcombine.high %v5425, %v5457
      %v5961 = vunpack.c.l.s4 1983009808
      %v5962 = vunpack.c.0.s8 %v5961
      %v5963 = vlaneseq
      %v5964 = vshrl.u32 %v5963, 7
      %v5965 = vsub.s32 %v5962, %v5964
      %v5966 = vrot.slane %v5958, %v5965
      %v5968 = vunpack.c.l.s4 1983009808
      %v5969 = vunpack.c.0.s8 %v5968
      %v5970 = vlaneseq
      %v5971 = vshrl.u32 %v5970, 7
      %v5972 = vsub.s32 %v5969, %v5971
      %v5973 = vrot.slane %v5959, %v5972
      %v5974 = vcombine.low %v5473, %v5505
      %v5975 = vcombine.high %v5473, %v5505
      %v5977 = vunpack.c.l.s4 1983009808
      %v5978 = vunpack.c.0.s8 %v5977
      %v5979 = vlaneseq
      %v5980 = vshrl.u32 %v5979, 7
      %v5981 = vsub.s32 %v5978, %v5980
      %v5982 = vrot.slane %v5974, %v5981
      %v5984 = vunpack.c.l.s4 1983009808
      %v5985 = vunpack.c.0.s8 %v5984
      %v5986 = vlaneseq
      %v5987 = vshrl.u32 %v5986, 7
      %v5988 = vsub.s32 %v5985, %v5987
      %v5989 = vrot.slane %v5975, %v5988
      %v5990 = vcombine.low %v5489, %v5521
      %v5991 = vcombine.high %v5489, %v5521
      %v5993 = vunpack.c.l.s4 1983009808
      %v5994 = vunpack.c.0.s8 %v5993
      %v5995 = vlaneseq
      %v5996 = vshrl.u32 %v5995, 7
      %v5997 = vsub.s32 %v5994, %v5996
      %v5998 = vrot.slane %v5990, %v5997
      %v6000 = vunpack.c.l.s4 1983009808
      %v6001 = vunpack.c.0.s8 %v6000
      %v6002 = vlaneseq
      %v6003 = vshrl.u32 %v6002, 7
      %v6004 = vsub.s32 %v6001, %v6003
      %v6005 = vrot.slane %v5991, %v6004
      %v6006 = vcombine.low %v5950, %v5966
      %v6007 = vcombine.high %v5950, %v5966
      %v6009 = vunpack.c.l.s4 1934713408
      %v6010 = vunpack.c.0.s8 %v6009
      %v6011 = vlaneseq
      %v6012 = vshrl.u32 %v6011, 7
      %v6013 = vsub.s32 %v6010, %v6012
      %v6014 = vrot.slane %v6006, %v6013
      %v6016 = vunpack.c.l.s4 1934713408
      %v6017 = vunpack.c.0.s8 %v6016
      %v6018 = vlaneseq
      %v6019 = vshrl.u32 %v6018, 7
      %v6020 = vsub.s32 %v6017, %v6019
      %v6021 = vrot.slane %v6007, %v6020
      %v6022 = vcombine.low %v5957, %v5973
      %v6023 = vcombine.high %v5957, %v5973
      %v6025 = vunpack.c.l.s4 1934713408
      %v6026 = vunpack.c.0.s8 %v6025
      %v6027 = vlaneseq
      %v6028 = vshrl.u32 %v6027, 7
      %v6029 = vsub.s32 %v6026, %v6028
      %v6030 = vrot.slane %v6022, %v6029
      %v6032 = vunpack.c.l.s4 1934713408
      %v6033 = vunpack.c.0.s8 %v6032
      %v6034 = vlaneseq
      %v6035 = vshrl.u32 %v6034, 7
      %v6036 = vsub.s32 %v6033, %v6035
      %v6037 = vrot.slane %v6023, %v6036
      %v6038 = vcombine.low %v5982, %v5998
      %v6039 = vcombine.high %v5982, %v5998
      %v6041 = vunpack.c.l.s4 1934713408
      %v6042 = vunpack.c.0.s8 %v6041
      %v6043 = vlaneseq
      %v6044 = vshrl.u32 %v6043, 7
      %v6045 = vsub.s32 %v6042, %v6044
      %v6046 = vrot.slane %v6038, %v6045
      %v6048 = vunpack.c.l.s4 1934713408
      %v6049 = vunpack.c.0.s8 %v6048
      %v6050 = vlaneseq
      %v6051 = vshrl.u32 %v6050, 7
      %v6052 = vsub.s32 %v6049, %v6051
      %v6053 = vrot.slane %v6039, %v6052
      %v6054 = vcombine.low %v5989, %v6005
      %v6055 = vcombine.high %v5989, %v6005
      %v6057 = vunpack.c.l.s4 1934713408
      %v6058 = vunpack.c.0.s8 %v6057
      %v6059 = vlaneseq
      %v6060 = vshrl.u32 %v6059, 7
      %v6061 = vsub.s32 %v6058, %v6060
      %v6062 = vrot.slane %v6054, %v6061
      %v6064 = vunpack.c.l.s4 1934713408
      %v6065 = vunpack.c.0.s8 %v6064
      %v6066 = vlaneseq
      %v6067 = vshrl.u32 %v6066, 7
      %v6068 = vsub.s32 %v6065, %v6067
      %v6069 = vrot.slane %v6055, %v6068
      %v6070 = vcombine.low %v6014, %v6046
      %v6071 = vcombine.high %v6014, %v6046
      %v6072 = vcombine.low %v6021, %v6053
      %v6073 = vcombine.high %v6021, %v6053
      %v6074 = vcombine.low %v6030, %v6062
      %v6075 = vcombine.high %v6030, %v6062
      %v6076 = vcombine.low %v6037, %v6069
      %v6077 = vcombine.high %v6037, %v6069
      %v6078 = vcombine.low %v5410, %v5442
      %v6079 = vcombine.high %v5410, %v5442
      %v6081 = vunpack.c.l.s4 1983009808
      %v6082 = vunpack.c.0.s8 %v6081
      %v6083 = vlaneseq
      %v6084 = vshrl.u32 %v6083, 7
      %v6085 = vsub.s32 %v6082, %v6084
      %v6086 = vrot.slane %v6078, %v6085
      %v6088 = vunpack.c.l.s4 1983009808
      %v6089 = vunpack.c.0.s8 %v6088
      %v6090 = vlaneseq
      %v6091 = vshrl.u32 %v6090, 7
      %v6092 = vsub.s32 %v6089, %v6091
      %v6093 = vrot.slane %v6079, %v6092
      %v6094 = vcombine.low %v5426, %v5458
      %v6095 = vcombine.high %v5426, %v5458
      %v6097 = vunpack.c.l.s4 1983009808
      %v6098 = vunpack.c.0.s8 %v6097
      %v6099 = vlaneseq
      %v6100 = vshrl.u32 %v6099, 7
      %v6101 = vsub.s32 %v6098, %v6100
      %v6102 = vrot.slane %v6094, %v6101
      %v6104 = vunpack.c.l.s4 1983009808
      %v6105 = vunpack.c.0.s8 %v6104
      %v6106 = vlaneseq
      %v6107 = vshrl.u32 %v6106, 7
      %v6108 = vsub.s32 %v6105, %v6107
      %v6109 = vrot.slane %v6095, %v6108
      %v6110 = vcombine.low %v5474, %v5506
      %v6111 = vcombine.high %v5474, %v5506
      %v6113 = vunpack.c.l.s4 1983009808
      %v6114 = vunpack.c.0.s8 %v6113
      %v6115 = vlaneseq
      %v6116 = vshrl.u32 %v6115, 7
      %v6117 = vsub.s32 %v6114, %v6116
      %v6118 = vrot.slane %v6110, %v6117
      %v6120 = vunpack.c.l.s4 1983009808
      %v6121 = vunpack.c.0.s8 %v6120
      %v6122 = vlaneseq
      %v6123 = vshrl.u32 %v6122, 7
      %v6124 = vsub.s32 %v6121, %v6123
      %v6125 = vrot.slane %v6111, %v6124
      %v6126 = vcombine.low %v5490, %v5522
      %v6127 = vcombine.high %v5490, %v5522
      %v6129 = vunpack.c.l.s4 1983009808
      %v6130 = vunpack.c.0.s8 %v6129
      %v6131 = vlaneseq
      %v6132 = vshrl.u32 %v6131, 7
      %v6133 = vsub.s32 %v6130, %v6132
      %v6134 = vrot.slane %v6126, %v6133
      %v6136 = vunpack.c.l.s4 1983009808
      %v6137 = vunpack.c.0.s8 %v6136
      %v6138 = vlaneseq
      %v6139 = vshrl.u32 %v6138, 7
      %v6140 = vsub.s32 %v6137, %v6139
      %v6141 = vrot.slane %v6127, %v6140
      %v6142 = vcombine.low %v6086, %v6102
      %v6143 = vcombine.high %v6086, %v6102
      %v6145 = vunpack.c.l.s4 1934713408
      %v6146 = vunpack.c.0.s8 %v6145
      %v6147 = vlaneseq
      %v6148 = vshrl.u32 %v6147, 7
      %v6149 = vsub.s32 %v6146, %v6148
      %v6150 = vrot.slane %v6142, %v6149
      %v6152 = vunpack.c.l.s4 1934713408
      %v6153 = vunpack.c.0.s8 %v6152
      %v6154 = vlaneseq
      %v6155 = vshrl.u32 %v6154, 7
      %v6156 = vsub.s32 %v6153, %v6155
      %v6157 = vrot.slane %v6143, %v6156
      %v6158 = vcombine.low %v6093, %v6109
      %v6159 = vcombine.high %v6093, %v6109
      %v6161 = vunpack.c.l.s4 1934713408
      %v6162 = vunpack.c.0.s8 %v6161
      %v6163 = vlaneseq
      %v6164 = vshrl.u32 %v6163, 7
      %v6165 = vsub.s32 %v6162, %v6164
      %v6166 = vrot.slane %v6158, %v6165
      %v6168 = vunpack.c.l.s4 1934713408
      %v6169 = vunpack.c.0.s8 %v6168
      %v6170 = vlaneseq
      %v6171 = vshrl.u32 %v6170, 7
      %v6172 = vsub.s32 %v6169, %v6171
      %v6173 = vrot.slane %v6159, %v6172
      %v6174 = vcombine.low %v6118, %v6134
      %v6175 = vcombine.high %v6118, %v6134
      %v6177 = vunpack.c.l.s4 1934713408
      %v6178 = vunpack.c.0.s8 %v6177
      %v6179 = vlaneseq
      %v6180 = vshrl.u32 %v6179, 7
      %v6181 = vsub.s32 %v6178, %v6180
      %v6182 = vrot.slane %v6174, %v6181
      %v6184 = vunpack.c.l.s4 1934713408
      %v6185 = vunpack.c.0.s8 %v6184
      %v6186 = vlaneseq
      %v6187 = vshrl.u32 %v6186, 7
      %v6188 = vsub.s32 %v6185, %v6187
      %v6189 = vrot.slane %v6175, %v6188
      %v6190 = vcombine.low %v6125, %v6141
      %v6191 = vcombine.high %v6125, %v6141
      %v6193 = vunpack.c.l.s4 1934713408
      %v6194 = vunpack.c.0.s8 %v6193
      %v6195 = vlaneseq
      %v6196 = vshrl.u32 %v6195, 7
      %v6197 = vsub.s32 %v6194, %v6196
      %v6198 = vrot.slane %v6190, %v6197
      %v6200 = vunpack.c.l.s4 1934713408
      %v6201 = vunpack.c.0.s8 %v6200
      %v6202 = vlaneseq
      %v6203 = vshrl.u32 %v6202, 7
      %v6204 = vsub.s32 %v6201, %v6203
      %v6205 = vrot.slane %v6191, %v6204
      %v6206 = vcombine.low %v6150, %v6182
      %v6207 = vcombine.high %v6150, %v6182
      %v6208 = vcombine.low %v6157, %v6189
      %v6209 = vcombine.high %v6157, %v6189
      %v6210 = vcombine.low %v6166, %v6198
      %v6211 = vcombine.high %v6166, %v6198
      %v6212 = vcombine.low %v6173, %v6205
      %v6213 = vcombine.high %v6173, %v6205
      %v6214 = vcombine.low %v5411, %v5443
      %v6215 = vcombine.high %v5411, %v5443
      %v6217 = vunpack.c.l.s4 1983009808
      %v6218 = vunpack.c.0.s8 %v6217
      %v6219 = vlaneseq
      %v6220 = vshrl.u32 %v6219, 7
      %v6221 = vsub.s32 %v6218, %v6220
      %v6222 = vrot.slane %v6214, %v6221
      %v6224 = vunpack.c.l.s4 1983009808
      %v6225 = vunpack.c.0.s8 %v6224
      %v6226 = vlaneseq
      %v6227 = vshrl.u32 %v6226, 7
      %v6228 = vsub.s32 %v6225, %v6227
      %v6229 = vrot.slane %v6215, %v6228
      %v6230 = vcombine.low %v5427, %v5459
      %v6231 = vcombine.high %v5427, %v5459
      %v6233 = vunpack.c.l.s4 1983009808
      %v6234 = vunpack.c.0.s8 %v6233
      %v6235 = vlaneseq
      %v6236 = vshrl.u32 %v6235, 7
      %v6237 = vsub.s32 %v6234, %v6236
      %v6238 = vrot.slane %v6230, %v6237
      %v6240 = vunpack.c.l.s4 1983009808
      %v6241 = vunpack.c.0.s8 %v6240
      %v6242 = vlaneseq
      %v6243 = vshrl.u32 %v6242, 7
      %v6244 = vsub.s32 %v6241, %v6243
      %v6245 = vrot.slane %v6231, %v6244
      %v6246 = vcombine.low %v5475, %v5507
      %v6247 = vcombine.high %v5475, %v5507
      %v6249 = vunpack.c.l.s4 1983009808
      %v6250 = vunpack.c.0.s8 %v6249
      %v6251 = vlaneseq
      %v6252 = vshrl.u32 %v6251, 7
      %v6253 = vsub.s32 %v6250, %v6252
      %v6254 = vrot.slane %v6246, %v6253
      %v6256 = vunpack.c.l.s4 1983009808
      %v6257 = vunpack.c.0.s8 %v6256
      %v6258 = vlaneseq
      %v6259 = vshrl.u32 %v6258, 7
      %v6260 = vsub.s32 %v6257, %v6259
      %v6261 = vrot.slane %v6247, %v6260
      %v6262 = vcombine.low %v5491, %v5523
      %v6263 = vcombine.high %v5491, %v5523
      %v6265 = vunpack.c.l.s4 1983009808
      %v6266 = vunpack.c.0.s8 %v6265
      %v6267 = vlaneseq
      %v6268 = vshrl.u32 %v6267, 7
      %v6269 = vsub.s32 %v6266, %v6268
      %v6270 = vrot.slane %v6262, %v6269
      %v6272 = vunpack.c.l.s4 1983009808
      %v6273 = vunpack.c.0.s8 %v6272
      %v6274 = vlaneseq
      %v6275 = vshrl.u32 %v6274, 7
      %v6276 = vsub.s32 %v6273, %v6275
      %v6277 = vrot.slane %v6263, %v6276
      %v6278 = vcombine.low %v6222, %v6238
      %v6279 = vcombine.high %v6222, %v6238
      %v6281 = vunpack.c.l.s4 1934713408
      %v6282 = vunpack.c.0.s8 %v6281
      %v6283 = vlaneseq
      %v6284 = vshrl.u32 %v6283, 7
      %v6285 = vsub.s32 %v6282, %v6284
      %v6286 = vrot.slane %v6278, %v6285
      %v6288 = vunpack.c.l.s4 1934713408
      %v6289 = vunpack.c.0.s8 %v6288
      %v6290 = vlaneseq
      %v6291 = vshrl.u32 %v6290, 7
      %v6292 = vsub.s32 %v6289, %v6291
      %v6293 = vrot.slane %v6279, %v6292
      %v6294 = vcombine.low %v6229, %v6245
      %v6295 = vcombine.high %v6229, %v6245
      %v6297 = vunpack.c.l.s4 1934713408
      %v6298 = vunpack.c.0.s8 %v6297
      %v6299 = vlaneseq
      %v6300 = vshrl.u32 %v6299, 7
      %v6301 = vsub.s32 %v6298, %v6300
      %v6302 = vrot.slane %v6294, %v6301
      %v6304 = vunpack.c.l.s4 1934713408
      %v6305 = vunpack.c.0.s8 %v6304
      %v6306 = vlaneseq
      %v6307 = vshrl.u32 %v6306, 7
      %v6308 = vsub.s32 %v6305, %v6307
      %v6309 = vrot.slane %v6295, %v6308
      %v6310 = vcombine.low %v6254, %v6270
      %v6311 = vcombine.high %v6254, %v6270
      %v6313 = vunpack.c.l.s4 1934713408
      %v6314 = vunpack.c.0.s8 %v6313
      %v6315 = vlaneseq
      %v6316 = vshrl.u32 %v6315, 7
      %v6317 = vsub.s32 %v6314, %v6316
      %v6318 = vrot.slane %v6310, %v6317
      %v6320 = vunpack.c.l.s4 1934713408
      %v6321 = vunpack.c.0.s8 %v6320
      %v6322 = vlaneseq
      %v6323 = vshrl.u32 %v6322, 7
      %v6324 = vsub.s32 %v6321, %v6323
      %v6325 = vrot.slane %v6311, %v6324
      %v6326 = vcombine.low %v6261, %v6277
      %v6327 = vcombine.high %v6261, %v6277
      %v6329 = vunpack.c.l.s4 1934713408
      %v6330 = vunpack.c.0.s8 %v6329
      %v6331 = vlaneseq
      %v6332 = vshrl.u32 %v6331, 7
      %v6333 = vsub.s32 %v6330, %v6332
      %v6334 = vrot.slane %v6326, %v6333
      %v6336 = vunpack.c.l.s4 1934713408
      %v6337 = vunpack.c.0.s8 %v6336
      %v6338 = vlaneseq
      %v6339 = vshrl.u32 %v6338, 7
      %v6340 = vsub.s32 %v6337, %v6339
      %v6341 = vrot.slane %v6327, %v6340
      %v6342 = vcombine.low %v6286, %v6318
      %v6343 = vcombine.high %v6286, %v6318
      %v6344 = vcombine.low %v6293, %v6325
      %v6345 = vcombine.high %v6293, %v6325
      %v6346 = vcombine.low %v6302, %v6334
      %v6347 = vcombine.high %v6302, %v6334
      %v6348 = vcombine.low %v6309, %v6341
      %v6349 = vcombine.high %v6309, %v6341
      %v6350 = vcombine.low %v5412, %v5444
      %v6351 = vcombine.high %v5412, %v5444
      %v6353 = vunpack.c.l.s4 1983009808
      %v6354 = vunpack.c.0.s8 %v6353
      %v6355 = vlaneseq
      %v6356 = vshrl.u32 %v6355, 7
      %v6357 = vsub.s32 %v6354, %v6356
      %v6358 = vrot.slane %v6350, %v6357
      %v6360 = vunpack.c.l.s4 1983009808
      %v6361 = vunpack.c.0.s8 %v6360
      %v6362 = vlaneseq
      %v6363 = vshrl.u32 %v6362, 7
      %v6364 = vsub.s32 %v6361, %v6363
      %v6365 = vrot.slane %v6351, %v6364
      %v6366 = vcombine.low %v5428, %v5460
      %v6367 = vcombine.high %v5428, %v5460
      %v6369 = vunpack.c.l.s4 1983009808
      %v6370 = vunpack.c.0.s8 %v6369
      %v6371 = vlaneseq
      %v6372 = vshrl.u32 %v6371, 7
      %v6373 = vsub.s32 %v6370, %v6372
      %v6374 = vrot.slane %v6366, %v6373
      %v6376 = vunpack.c.l.s4 1983009808
      %v6377 = vunpack.c.0.s8 %v6376
      %v6378 = vlaneseq
      %v6379 = vshrl.u32 %v6378, 7
      %v6380 = vsub.s32 %v6377, %v6379
      %v6381 = vrot.slane %v6367, %v6380
      %v6382 = vcombine.low %v5476, %v5508
      %v6383 = vcombine.high %v5476, %v5508
      %v6385 = vunpack.c.l.s4 1983009808
      %v6386 = vunpack.c.0.s8 %v6385
      %v6387 = vlaneseq
      %v6388 = vshrl.u32 %v6387, 7
      %v6389 = vsub.s32 %v6386, %v6388
      %v6390 = vrot.slane %v6382, %v6389
      %v6392 = vunpack.c.l.s4 1983009808
      %v6393 = vunpack.c.0.s8 %v6392
      %v6394 = vlaneseq
      %v6395 = vshrl.u32 %v6394, 7
      %v6396 = vsub.s32 %v6393, %v6395
      %v6397 = vrot.slane %v6383, %v6396
      %v6398 = vcombine.low %v5492, %v5524
      %v6399 = vcombine.high %v5492, %v5524
      %v6401 = vunpack.c.l.s4 1983009808
      %v6402 = vunpack.c.0.s8 %v6401
      %v6403 = vlaneseq
      %v6404 = vshrl.u32 %v6403, 7
      %v6405 = vsub.s32 %v6402, %v6404
      %v6406 = vrot.slane %v6398, %v6405
      %v6408 = vunpack.c.l.s4 1983009808
      %v6409 = vunpack.c.0.s8 %v6408
      %v6410 = vlaneseq
      %v6411 = vshrl.u32 %v6410, 7
      %v6412 = vsub.s32 %v6409, %v6411
      %v6413 = vrot.slane %v6399, %v6412
      %v6414 = vcombine.low %v6358, %v6374
      %v6415 = vcombine.high %v6358, %v6374
      %v6417 = vunpack.c.l.s4 1934713408
      %v6418 = vunpack.c.0.s8 %v6417
      %v6419 = vlaneseq
      %v6420 = vshrl.u32 %v6419, 7
      %v6421 = vsub.s32 %v6418, %v6420
      %v6422 = vrot.slane %v6414, %v6421
      %v6424 = vunpack.c.l.s4 1934713408
      %v6425 = vunpack.c.0.s8 %v6424
      %v6426 = vlaneseq
      %v6427 = vshrl.u32 %v6426, 7
      %v6428 = vsub.s32 %v6425, %v6427
      %v6429 = vrot.slane %v6415, %v6428
      %v6430 = vcombine.low %v6365, %v6381
      %v6431 = vcombine.high %v6365, %v6381
      %v6433 = vunpack.c.l.s4 1934713408
      %v6434 = vunpack.c.0.s8 %v6433
      %v6435 = vlaneseq
      %v6436 = vshrl.u32 %v6435, 7
      %v6437 = vsub.s32 %v6434, %v6436
      %v6438 = vrot.slane %v6430, %v6437
      %v6440 = vunpack.c.l.s4 1934713408
      %v6441 = vunpack.c.0.s8 %v6440
      %v6442 = vlaneseq
      %v6443 = vshrl.u32 %v6442, 7
      %v6444 = vsub.s32 %v6441, %v6443
      %v6445 = vrot.slane %v6431, %v6444
      %v6446 = vcombine.low %v6390, %v6406
      %v6447 = vcombine.high %v6390, %v6406
      %v6449 = vunpack.c.l.s4 1934713408
      %v6450 = vunpack.c.0.s8 %v6449
      %v6451 = vlaneseq
      %v6452 = vshrl.u32 %v6451, 7
      %v6453 = vsub.s32 %v6450, %v6452
      %v6454 = vrot.slane %v6446, %v6453
      %v6456 = vunpack.c.l.s4 1934713408
      %v6457 = vunpack.c.0.s8 %v6456
      %v6458 = vlaneseq
      %v6459 = vshrl.u32 %v6458, 7
      %v6460 = vsub.s32 %v6457, %v6459
      %v6461 = vrot.slane %v6447, %v6460
      %v6462 = vcombine.low %v6397, %v6413
      %v6463 = vcombine.high %v6397, %v6413
      %v6465 = vunpack.c.l.s4 1934713408
      %v6466 = vunpack.c.0.s8 %v6465
      %v6467 = vlaneseq
      %v6468 = vshrl.u32 %v6467, 7
      %v6469 = vsub.s32 %v6466, %v6468
      %v6470 = vrot.slane %v6462, %v6469
      %v6472 = vunpack.c.l.s4 1934713408
      %v6473 = vunpack.c.0.s8 %v6472
      %v6474 = vlaneseq
      %v6475 = vshrl.u32 %v6474, 7
      %v6476 = vsub.s32 %v6473, %v6475
      %v6477 = vrot.slane %v6463, %v6476
      %v6478 = vcombine.low %v6422, %v6454
      %v6479 = vcombine.high %v6422, %v6454
      %v6480 = vcombine.low %v6429, %v6461
      %v6481 = vcombine.high %v6429, %v6461
      %v6482 = vcombine.low %v6438, %v6470
      %v6483 = vcombine.high %v6438, %v6470
      %v6484 = vcombine.low %v6445, %v6477
      %v6485 = vcombine.high %v6445, %v6477
      %v6486 = vcombine.low %v5413, %v5445
      %v6487 = vcombine.high %v5413, %v5445
      %v6489 = vunpack.c.l.s4 1983009808
      %v6490 = vunpack.c.0.s8 %v6489
      %v6491 = vlaneseq
      %v6492 = vshrl.u32 %v6491, 7
      %v6493 = vsub.s32 %v6490, %v6492
      %v6494 = vrot.slane %v6486, %v6493
      %v6496 = vunpack.c.l.s4 1983009808
      %v6497 = vunpack.c.0.s8 %v6496
      %v6498 = vlaneseq
      %v6499 = vshrl.u32 %v6498, 7
      %v6500 = vsub.s32 %v6497, %v6499
      %v6501 = vrot.slane %v6487, %v6500
      %v6502 = vcombine.low %v5429, %v5461
      %v6503 = vcombine.high %v5429, %v5461
      %v6505 = vunpack.c.l.s4 1983009808
      %v6506 = vunpack.c.0.s8 %v6505
      %v6507 = vlaneseq
      %v6508 = vshrl.u32 %v6507, 7
      %v6509 = vsub.s32 %v6506, %v6508
      %v6510 = vrot.slane %v6502, %v6509
      %v6512 = vunpack.c.l.s4 1983009808
      %v6513 = vunpack.c.0.s8 %v6512
      %v6514 = vlaneseq
      %v6515 = vshrl.u32 %v6514, 7
      %v6516 = vsub.s32 %v6513, %v6515
      %v6517 = vrot.slane %v6503, %v6516
      %v6518 = vcombine.low %v5477, %v5509
      %v6519 = vcombine.high %v5477, %v5509
      %v6521 = vunpack.c.l.s4 1983009808
      %v6522 = vunpack.c.0.s8 %v6521
      %v6523 = vlaneseq
      %v6524 = vshrl.u32 %v6523, 7
      %v6525 = vsub.s32 %v6522, %v6524
      %v6526 = vrot.slane %v6518, %v6525
      %v6528 = vunpack.c.l.s4 1983009808
      %v6529 = vunpack.c.0.s8 %v6528
      %v6530 = vlaneseq
      %v6531 = vshrl.u32 %v6530, 7
      %v6532 = vsub.s32 %v6529, %v6531
      %v6533 = vrot.slane %v6519, %v6532
      %v6534 = vcombine.low %v5493, %v5525
      %v6535 = vcombine.high %v5493, %v5525
      %v6537 = vunpack.c.l.s4 1983009808
      %v6538 = vunpack.c.0.s8 %v6537
      %v6539 = vlaneseq
      %v6540 = vshrl.u32 %v6539, 7
      %v6541 = vsub.s32 %v6538, %v6540
      %v6542 = vrot.slane %v6534, %v6541
      %v6544 = vunpack.c.l.s4 1983009808
      %v6545 = vunpack.c.0.s8 %v6544
      %v6546 = vlaneseq
      %v6547 = vshrl.u32 %v6546, 7
      %v6548 = vsub.s32 %v6545, %v6547
      %v6549 = vrot.slane %v6535, %v6548
      %v6550 = vcombine.low %v6494, %v6510
      %v6551 = vcombine.high %v6494, %v6510
      %v6553 = vunpack.c.l.s4 1934713408
      %v6554 = vunpack.c.0.s8 %v6553
      %v6555 = vlaneseq
      %v6556 = vshrl.u32 %v6555, 7
      %v6557 = vsub.s32 %v6554, %v6556
      %v6558 = vrot.slane %v6550, %v6557
      %v6560 = vunpack.c.l.s4 1934713408
      %v6561 = vunpack.c.0.s8 %v6560
      %v6562 = vlaneseq
      %v6563 = vshrl.u32 %v6562, 7
      %v6564 = vsub.s32 %v6561, %v6563
      %v6565 = vrot.slane %v6551, %v6564
      %v6566 = vcombine.low %v6501, %v6517
      %v6567 = vcombine.high %v6501, %v6517
      %v6569 = vunpack.c.l.s4 1934713408
      %v6570 = vunpack.c.0.s8 %v6569
      %v6571 = vlaneseq
      %v6572 = vshrl.u32 %v6571, 7
      %v6573 = vsub.s32 %v6570, %v6572
      %v6574 = vrot.slane %v6566, %v6573
      %v6576 = vunpack.c.l.s4 1934713408
      %v6577 = vunpack.c.0.s8 %v6576
      %v6578 = vlaneseq
      %v6579 = vshrl.u32 %v6578, 7
      %v6580 = vsub.s32 %v6577, %v6579
      %v6581 = vrot.slane %v6567, %v6580
      %v6582 = vcombine.low %v6526, %v6542
      %v6583 = vcombine.high %v6526, %v6542
      %v6585 = vunpack.c.l.s4 1934713408
      %v6586 = vunpack.c.0.s8 %v6585
      %v6587 = vlaneseq
      %v6588 = vshrl.u32 %v6587, 7
      %v6589 = vsub.s32 %v6586, %v6588
      %v6590 = vrot.slane %v6582, %v6589
      %v6592 = vunpack.c.l.s4 1934713408
      %v6593 = vunpack.c.0.s8 %v6592
      %v6594 = vlaneseq
      %v6595 = vshrl.u32 %v6594, 7
      %v6596 = vsub.s32 %v6593, %v6595
      %v6597 = vrot.slane %v6583, %v6596
      %v6598 = vcombine.low %v6533, %v6549
      %v6599 = vcombine.high %v6533, %v6549
      %v6601 = vunpack.c.l.s4 1934713408
      %v6602 = vunpack.c.0.s8 %v6601
      %v6603 = vlaneseq
      %v6604 = vshrl.u32 %v6603, 7
      %v6605 = vsub.s32 %v6602, %v6604
      %v6606 = vrot.slane %v6598, %v6605
      %v6608 = vunpack.c.l.s4 1934713408
      %v6609 = vunpack.c.0.s8 %v6608
      %v6610 = vlaneseq
      %v6611 = vshrl.u32 %v6610, 7
      %v6612 = vsub.s32 %v6609, %v6611
      %v6613 = vrot.slane %v6599, %v6612
      %v6614 = vcombine.low %v6558, %v6590
      %v6615 = vcombine.high %v6558, %v6590
      %v6616 = vcombine.low %v6565, %v6597
      %v6617 = vcombine.high %v6565, %v6597
      %v6618 = vcombine.low %v6574, %v6606
      %v6619 = vcombine.high %v6574, %v6606
      %v6620 = vcombine.low %v6581, %v6613
      %v6621 = vcombine.high %v6581, %v6613
      %v6622 = vcombine.low %v5414, %v5446
      %v6623 = vcombine.high %v5414, %v5446
      %v6625 = vunpack.c.l.s4 1983009808
      %v6626 = vunpack.c.0.s8 %v6625
      %v6627 = vlaneseq
      %v6628 = vshrl.u32 %v6627, 7
      %v6629 = vsub.s32 %v6626, %v6628
      %v6630 = vrot.slane %v6622, %v6629
      %v6632 = vunpack.c.l.s4 1983009808
      %v6633 = vunpack.c.0.s8 %v6632
      %v6634 = vlaneseq
      %v6635 = vshrl.u32 %v6634, 7
      %v6636 = vsub.s32 %v6633, %v6635
      %v6637 = vrot.slane %v6623, %v6636
      %v6638 = vcombine.low %v5430, %v5462
      %v6639 = vcombine.high %v5430, %v5462
      %v6641 = vunpack.c.l.s4 1983009808
      %v6642 = vunpack.c.0.s8 %v6641
      %v6643 = vlaneseq
      %v6644 = vshrl.u32 %v6643, 7
      %v6645 = vsub.s32 %v6642, %v6644
      %v6646 = vrot.slane %v6638, %v6645
      %v6648 = vunpack.c.l.s4 1983009808
      %v6649 = vunpack.c.0.s8 %v6648
      %v6650 = vlaneseq
      %v6651 = vshrl.u32 %v6650, 7
      %v6652 = vsub.s32 %v6649, %v6651
      %v6653 = vrot.slane %v6639, %v6652
      %v6654 = vcombine.low %v5478, %v5510
      %v6655 = vcombine.high %v5478, %v5510
      %v6657 = vunpack.c.l.s4 1983009808
      %v6658 = vunpack.c.0.s8 %v6657
      %v6659 = vlaneseq
      %v6660 = vshrl.u32 %v6659, 7
      %v6661 = vsub.s32 %v6658, %v6660
      %v6662 = vrot.slane %v6654, %v6661
      %v6664 = vunpack.c.l.s4 1983009808
      %v6665 = vunpack.c.0.s8 %v6664
      %v6666 = vlaneseq
      %v6667 = vshrl.u32 %v6666, 7
      %v6668 = vsub.s32 %v6665, %v6667
      %v6669 = vrot.slane %v6655, %v6668
      %v6670 = vcombine.low %v5494, %v5526
      %v6671 = vcombine.high %v5494, %v5526
      %v6673 = vunpack.c.l.s4 1983009808
      %v6674 = vunpack.c.0.s8 %v6673
      %v6675 = vlaneseq
      %v6676 = vshrl.u32 %v6675, 7
      %v6677 = vsub.s32 %v6674, %v6676
      %v6678 = vrot.slane %v6670, %v6677
      %v6680 = vunpack.c.l.s4 1983009808
      %v6681 = vunpack.c.0.s8 %v6680
      %v6682 = vlaneseq
      %v6683 = vshrl.u32 %v6682, 7
      %v6684 = vsub.s32 %v6681, %v6683
      %v6685 = vrot.slane %v6671, %v6684
      %v6686 = vcombine.low %v6630, %v6646
      %v6687 = vcombine.high %v6630, %v6646
      %v6689 = vunpack.c.l.s4 1934713408
      %v6690 = vunpack.c.0.s8 %v6689
      %v6691 = vlaneseq
      %v6692 = vshrl.u32 %v6691, 7
      %v6693 = vsub.s32 %v6690, %v6692
      %v6694 = vrot.slane %v6686, %v6693
      %v6696 = vunpack.c.l.s4 1934713408
      %v6697 = vunpack.c.0.s8 %v6696
      %v6698 = vlaneseq
      %v6699 = vshrl.u32 %v6698, 7
      %v6700 = vsub.s32 %v6697, %v6699
      %v6701 = vrot.slane %v6687, %v6700
      %v6702 = vcombine.low %v6637, %v6653
      %v6703 = vcombine.high %v6637, %v6653
      %v6705 = vunpack.c.l.s4 1934713408
      %v6706 = vunpack.c.0.s8 %v6705
      %v6707 = vlaneseq
      %v6708 = vshrl.u32 %v6707, 7
      %v6709 = vsub.s32 %v6706, %v6708
      %v6710 = vrot.slane %v6702, %v6709
      %v6712 = vunpack.c.l.s4 1934713408
      %v6713 = vunpack.c.0.s8 %v6712
      %v6714 = vlaneseq
      %v6715 = vshrl.u32 %v6714, 7
      %v6716 = vsub.s32 %v6713, %v6715
      %v6717 = vrot.slane %v6703, %v6716
      %v6718 = vcombine.low %v6662, %v6678
      %v6719 = vcombine.high %v6662, %v6678
      %v6721 = vunpack.c.l.s4 1934713408
      %v6722 = vunpack.c.0.s8 %v6721
      %v6723 = vlaneseq
      %v6724 = vshrl.u32 %v6723, 7
      %v6725 = vsub.s32 %v6722, %v6724
      %v6726 = vrot.slane %v6718, %v6725
      %v6728 = vunpack.c.l.s4 1934713408
      %v6729 = vunpack.c.0.s8 %v6728
      %v6730 = vlaneseq
      %v6731 = vshrl.u32 %v6730, 7
      %v6732 = vsub.s32 %v6729, %v6731
      %v6733 = vrot.slane %v6719, %v6732
      %v6734 = vcombine.low %v6669, %v6685
      %v6735 = vcombine.high %v6669, %v6685
      %v6737 = vunpack.c.l.s4 1934713408
      %v6738 = vunpack.c.0.s8 %v6737
      %v6739 = vlaneseq
      %v6740 = vshrl.u32 %v6739, 7
      %v6741 = vsub.s32 %v6738, %v6740
      %v6742 = vrot.slane %v6734, %v6741
      %v6744 = vunpack.c.l.s4 1934713408
      %v6745 = vunpack.c.0.s8 %v6744
      %v6746 = vlaneseq
      %v6747 = vshrl.u32 %v6746, 7
      %v6748 = vsub.s32 %v6745, %v6747
      %v6749 = vrot.slane %v6735, %v6748
      %v6750 = vcombine.low %v6694, %v6726
      %v6751 = vcombine.high %v6694, %v6726
      %v6752 = vcombine.low %v6701, %v6733
      %v6753 = vcombine.high %v6701, %v6733
      %v6754 = vcombine.low %v6710, %v6742
      %v6755 = vcombine.high %v6710, %v6742
      %v6756 = vcombine.low %v6717, %v6749
      %v6757 = vcombine.high %v6717, %v6749
      %v6758 = vcombine.low %v5415, %v5447
      %v6759 = vcombine.high %v5415, %v5447
      %v6761 = vunpack.c.l.s4 1983009808
      %v6762 = vunpack.c.0.s8 %v6761
      %v6763 = vlaneseq
      %v6764 = vshrl.u32 %v6763, 7
      %v6765 = vsub.s32 %v6762, %v6764
      %v6766 = vrot.slane %v6758, %v6765
      %v6768 = vunpack.c.l.s4 1983009808
      %v6769 = vunpack.c.0.s8 %v6768
      %v6770 = vlaneseq
      %v6771 = vshrl.u32 %v6770, 7
      %v6772 = vsub.s32 %v6769, %v6771
      %v6773 = vrot.slane %v6759, %v6772
      %v6774 = vcombine.low %v5431, %v5463
      %v6775 = vcombine.high %v5431, %v5463
      %v6777 = vunpack.c.l.s4 1983009808
      %v6778 = vunpack.c.0.s8 %v6777
      %v6779 = vlaneseq
      %v6780 = vshrl.u32 %v6779, 7
      %v6781 = vsub.s32 %v6778, %v6780
      %v6782 = vrot.slane %v6774, %v6781
      %v6784 = vunpack.c.l.s4 1983009808
      %v6785 = vunpack.c.0.s8 %v6784
      %v6786 = vlaneseq
      %v6787 = vshrl.u32 %v6786, 7
      %v6788 = vsub.s32 %v6785, %v6787
      %v6789 = vrot.slane %v6775, %v6788
      %v6790 = vcombine.low %v5479, %v5511
      %v6791 = vcombine.high %v5479, %v5511
      %v6793 = vunpack.c.l.s4 1983009808
      %v6794 = vunpack.c.0.s8 %v6793
      %v6795 = vlaneseq
      %v6796 = vshrl.u32 %v6795, 7
      %v6797 = vsub.s32 %v6794, %v6796
      %v6798 = vrot.slane %v6790, %v6797
      %v6800 = vunpack.c.l.s4 1983009808
      %v6801 = vunpack.c.0.s8 %v6800
      %v6802 = vlaneseq
      %v6803 = vshrl.u32 %v6802, 7
      %v6804 = vsub.s32 %v6801, %v6803
      %v6805 = vrot.slane %v6791, %v6804
      %v6806 = vcombine.low %v5495, %v5527
      %v6807 = vcombine.high %v5495, %v5527
      %v6809 = vunpack.c.l.s4 1983009808
      %v6810 = vunpack.c.0.s8 %v6809
      %v6811 = vlaneseq
      %v6812 = vshrl.u32 %v6811, 7
      %v6813 = vsub.s32 %v6810, %v6812
      %v6814 = vrot.slane %v6806, %v6813
      %v6816 = vunpack.c.l.s4 1983009808
      %v6817 = vunpack.c.0.s8 %v6816
      %v6818 = vlaneseq
      %v6819 = vshrl.u32 %v6818, 7
      %v6820 = vsub.s32 %v6817, %v6819
      %v6821 = vrot.slane %v6807, %v6820
      %v6822 = vcombine.low %v6766, %v6782
      %v6823 = vcombine.high %v6766, %v6782
      %v6825 = vunpack.c.l.s4 1934713408
      %v6826 = vunpack.c.0.s8 %v6825
      %v6827 = vlaneseq
      %v6828 = vshrl.u32 %v6827, 7
      %v6829 = vsub.s32 %v6826, %v6828
      %v6830 = vrot.slane %v6822, %v6829
      %v6832 = vunpack.c.l.s4 1934713408
      %v6833 = vunpack.c.0.s8 %v6832
      %v6834 = vlaneseq
      %v6835 = vshrl.u32 %v6834, 7
      %v6836 = vsub.s32 %v6833, %v6835
      %v6837 = vrot.slane %v6823, %v6836
      %v6838 = vcombine.low %v6773, %v6789
      %v6839 = vcombine.high %v6773, %v6789
      %v6841 = vunpack.c.l.s4 1934713408
      %v6842 = vunpack.c.0.s8 %v6841
      %v6843 = vlaneseq
      %v6844 = vshrl.u32 %v6843, 7
      %v6845 = vsub.s32 %v6842, %v6844
      %v6846 = vrot.slane %v6838, %v6845
      %v6848 = vunpack.c.l.s4 1934713408
      %v6849 = vunpack.c.0.s8 %v6848
      %v6850 = vlaneseq
      %v6851 = vshrl.u32 %v6850, 7
      %v6852 = vsub.s32 %v6849, %v6851
      %v6853 = vrot.slane %v6839, %v6852
      %v6854 = vcombine.low %v6798, %v6814
      %v6855 = vcombine.high %v6798, %v6814
      %v6857 = vunpack.c.l.s4 1934713408
      %v6858 = vunpack.c.0.s8 %v6857
      %v6859 = vlaneseq
      %v6860 = vshrl.u32 %v6859, 7
      %v6861 = vsub.s32 %v6858, %v6860
      %v6862 = vrot.slane %v6854, %v6861
      %v6864 = vunpack.c.l.s4 1934713408
      %v6865 = vunpack.c.0.s8 %v6864
      %v6866 = vlaneseq
      %v6867 = vshrl.u32 %v6866, 7
      %v6868 = vsub.s32 %v6865, %v6867
      %v6869 = vrot.slane %v6855, %v6868
      %v6870 = vcombine.low %v6805, %v6821
      %v6871 = vcombine.high %v6805, %v6821
      %v6873 = vunpack.c.l.s4 1934713408
      %v6874 = vunpack.c.0.s8 %v6873
      %v6875 = vlaneseq
      %v6876 = vshrl.u32 %v6875, 7
      %v6877 = vsub.s32 %v6874, %v6876
      %v6878 = vrot.slane %v6870, %v6877
      %v6880 = vunpack.c.l.s4 1934713408
      %v6881 = vunpack.c.0.s8 %v6880
      %v6882 = vlaneseq
      %v6883 = vshrl.u32 %v6882, 7
      %v6884 = vsub.s32 %v6881, %v6883
      %v6885 = vrot.slane %v6871, %v6884
      %v6886 = vcombine.low %v6830, %v6862
      %v6887 = vcombine.high %v6830, %v6862
      %v6888 = vcombine.low %v6837, %v6869
      %v6889 = vcombine.high %v6837, %v6869
      %v6890 = vcombine.low %v6846, %v6878
      %v6891 = vcombine.high %v6846, %v6878
      %v6892 = vcombine.low %v6853, %v6885
      %v6893 = vcombine.high %v6853, %v6885
      %v6894 = vcombine.low %v5416, %v5448
      %v6895 = vcombine.high %v5416, %v5448
      %v6897 = vunpack.c.l.s4 1983009808
      %v6898 = vunpack.c.0.s8 %v6897
      %v6899 = vlaneseq
      %v6900 = vshrl.u32 %v6899, 7
      %v6901 = vsub.s32 %v6898, %v6900
      %v6902 = vrot.slane %v6894, %v6901
      %v6904 = vunpack.c.l.s4 1983009808
      %v6905 = vunpack.c.0.s8 %v6904
      %v6906 = vlaneseq
      %v6907 = vshrl.u32 %v6906, 7
      %v6908 = vsub.s32 %v6905, %v6907
      %v6909 = vrot.slane %v6895, %v6908
      %v6910 = vcombine.low %v5432, %v5464
      %v6911 = vcombine.high %v5432, %v5464
      %v6913 = vunpack.c.l.s4 1983009808
      %v6914 = vunpack.c.0.s8 %v6913
      %v6915 = vlaneseq
      %v6916 = vshrl.u32 %v6915, 7
      %v6917 = vsub.s32 %v6914, %v6916
      %v6918 = vrot.slane %v6910, %v6917
      %v6920 = vunpack.c.l.s4 1983009808
      %v6921 = vunpack.c.0.s8 %v6920
      %v6922 = vlaneseq
      %v6923 = vshrl.u32 %v6922, 7
      %v6924 = vsub.s32 %v6921, %v6923
      %v6925 = vrot.slane %v6911, %v6924
      %v6926 = vcombine.low %v5480, %v5512
      %v6927 = vcombine.high %v5480, %v5512
      %v6929 = vunpack.c.l.s4 1983009808
      %v6930 = vunpack.c.0.s8 %v6929
      %v6931 = vlaneseq
      %v6932 = vshrl.u32 %v6931, 7
      %v6933 = vsub.s32 %v6930, %v6932
      %v6934 = vrot.slane %v6926, %v6933
      %v6936 = vunpack.c.l.s4 1983009808
      %v6937 = vunpack.c.0.s8 %v6936
      %v6938 = vlaneseq
      %v6939 = vshrl.u32 %v6938, 7
      %v6940 = vsub.s32 %v6937, %v6939
      %v6941 = vrot.slane %v6927, %v6940
      %v6942 = vcombine.low %v5496, %v5528
      %v6943 = vcombine.high %v5496, %v5528
      %v6945 = vunpack.c.l.s4 1983009808
      %v6946 = vunpack.c.0.s8 %v6945
      %v6947 = vlaneseq
      %v6948 = vshrl.u32 %v6947, 7
      %v6949 = vsub.s32 %v6946, %v6948
      %v6950 = vrot.slane %v6942, %v6949
      %v6952 = vunpack.c.l.s4 1983009808
      %v6953 = vunpack.c.0.s8 %v6952
      %v6954 = vlaneseq
      %v6955 = vshrl.u32 %v6954, 7
      %v6956 = vsub.s32 %v6953, %v6955
      %v6957 = vrot.slane %v6943, %v6956
      %v6958 = vcombine.low %v6902, %v6918
      %v6959 = vcombine.high %v6902, %v6918
      %v6961 = vunpack.c.l.s4 1934713408
      %v6962 = vunpack.c.0.s8 %v6961
      %v6963 = vlaneseq
      %v6964 = vshrl.u32 %v6963, 7
      %v6965 = vsub.s32 %v6962, %v6964
      %v6966 = vrot.slane %v6958, %v6965
      %v6968 = vunpack.c.l.s4 1934713408
      %v6969 = vunpack.c.0.s8 %v6968
      %v6970 = vlaneseq
      %v6971 = vshrl.u32 %v6970, 7
      %v6972 = vsub.s32 %v6969, %v6971
      %v6973 = vrot.slane %v6959, %v6972
      %v6974 = vcombine.low %v6909, %v6925
      %v6975 = vcombine.high %v6909, %v6925
      %v6977 = vunpack.c.l.s4 1934713408
      %v6978 = vunpack.c.0.s8 %v6977
      %v6979 = vlaneseq
      %v6980 = vshrl.u32 %v6979, 7
      %v6981 = vsub.s32 %v6978, %v6980
      %v6982 = vrot.slane %v6974, %v6981
      %v6984 = vunpack.c.l.s4 1934713408
      %v6985 = vunpack.c.0.s8 %v6984
      %v6986 = vlaneseq
      %v6987 = vshrl.u32 %v6986, 7
      %v6988 = vsub.s32 %v6985, %v6987
      %v6989 = vrot.slane %v6975, %v6988
      %v6990 = vcombine.low %v6934, %v6950
      %v6991 = vcombine.high %v6934, %v6950
      %v6993 = vunpack.c.l.s4 1934713408
      %v6994 = vunpack.c.0.s8 %v6993
      %v6995 = vlaneseq
      %v6996 = vshrl.u32 %v6995, 7
      %v6997 = vsub.s32 %v6994, %v6996
      %v6998 = vrot.slane %v6990, %v6997
      %v7000 = vunpack.c.l.s4 1934713408
      %v7001 = vunpack.c.0.s8 %v7000
      %v7002 = vlaneseq
      %v7003 = vshrl.u32 %v7002, 7
      %v7004 = vsub.s32 %v7001, %v7003
      %v7005 = vrot.slane %v6991, %v7004
      %v7006 = vcombine.low %v6941, %v6957
      %v7007 = vcombine.high %v6941, %v6957
      %v7009 = vunpack.c.l.s4 1934713408
      %v7010 = vunpack.c.0.s8 %v7009
      %v7011 = vlaneseq
      %v7012 = vshrl.u32 %v7011, 7
      %v7013 = vsub.s32 %v7010, %v7012
      %v7014 = vrot.slane %v7006, %v7013
      %v7016 = vunpack.c.l.s4 1934713408
      %v7017 = vunpack.c.0.s8 %v7016
      %v7018 = vlaneseq
      %v7019 = vshrl.u32 %v7018, 7
      %v7020 = vsub.s32 %v7017, %v7019
      %v7021 = vrot.slane %v7007, %v7020
      %v7022 = vcombine.low %v6966, %v6998
      %v7023 = vcombine.high %v6966, %v6998
      %v7024 = vcombine.low %v6973, %v7005
      %v7025 = vcombine.high %v6973, %v7005
      %v7026 = vcombine.low %v6982, %v7014
      %v7027 = vcombine.high %v6982, %v7014
      %v7028 = vcombine.low %v6989, %v7021
      %v7029 = vcombine.high %v6989, %v7021
      %v7030 = vcombine.low %v5417, %v5449
      %v7031 = vcombine.high %v5417, %v5449
      %v7033 = vunpack.c.l.s4 1983009808
      %v7034 = vunpack.c.0.s8 %v7033
      %v7035 = vlaneseq
      %v7036 = vshrl.u32 %v7035, 7
      %v7037 = vsub.s32 %v7034, %v7036
      %v7038 = vrot.slane %v7030, %v7037
      %v7040 = vunpack.c.l.s4 1983009808
      %v7041 = vunpack.c.0.s8 %v7040
      %v7042 = vlaneseq
      %v7043 = vshrl.u32 %v7042, 7
      %v7044 = vsub.s32 %v7041, %v7043
      %v7045 = vrot.slane %v7031, %v7044
      %v7046 = vcombine.low %v5433, %v5465
      %v7047 = vcombine.high %v5433, %v5465
      %v7049 = vunpack.c.l.s4 1983009808
      %v7050 = vunpack.c.0.s8 %v7049
      %v7051 = vlaneseq
      %v7052 = vshrl.u32 %v7051, 7
      %v7053 = vsub.s32 %v7050, %v7052
      %v7054 = vrot.slane %v7046, %v7053
      %v7056 = vunpack.c.l.s4 1983009808
      %v7057 = vunpack.c.0.s8 %v7056
      %v7058 = vlaneseq
      %v7059 = vshrl.u32 %v7058, 7
      %v7060 = vsub.s32 %v7057, %v7059
      %v7061 = vrot.slane %v7047, %v7060
      %v7062 = vcombine.low %v5481, %v5513
      %v7063 = vcombine.high %v5481, %v5513
      %v7065 = vunpack.c.l.s4 1983009808
      %v7066 = vunpack.c.0.s8 %v7065
      %v7067 = vlaneseq
      %v7068 = vshrl.u32 %v7067, 7
      %v7069 = vsub.s32 %v7066, %v7068
      %v7070 = vrot.slane %v7062, %v7069
      %v7072 = vunpack.c.l.s4 1983009808
      %v7073 = vunpack.c.0.s8 %v7072
      %v7074 = vlaneseq
      %v7075 = vshrl.u32 %v7074, 7
      %v7076 = vsub.s32 %v7073, %v7075
      %v7077 = vrot.slane %v7063, %v7076
      %v7078 = vcombine.low %v5497, %v5529
      %v7079 = vcombine.high %v5497, %v5529
      %v7081 = vunpack.c.l.s4 1983009808
      %v7082 = vunpack.c.0.s8 %v7081
      %v7083 = vlaneseq
      %v7084 = vshrl.u32 %v7083, 7
      %v7085 = vsub.s32 %v7082, %v7084
      %v7086 = vrot.slane %v7078, %v7085
      %v7088 = vunpack.c.l.s4 1983009808
      %v7089 = vunpack.c.0.s8 %v7088
      %v7090 = vlaneseq
      %v7091 = vshrl.u32 %v7090, 7
      %v7092 = vsub.s32 %v7089, %v7091
      %v7093 = vrot.slane %v7079, %v7092
      %v7094 = vcombine.low %v7038, %v7054
      %v7095 = vcombine.high %v7038, %v7054
      %v7097 = vunpack.c.l.s4 1934713408
      %v7098 = vunpack.c.0.s8 %v7097
      %v7099 = vlaneseq
      %v7100 = vshrl.u32 %v7099, 7
      %v7101 = vsub.s32 %v7098, %v7100
      %v7102 = vrot.slane %v7094, %v7101
      %v7104 = vunpack.c.l.s4 1934713408
      %v7105 = vunpack.c.0.s8 %v7104
      %v7106 = vlaneseq
      %v7107 = vshrl.u32 %v7106, 7
      %v7108 = vsub.s32 %v7105, %v7107
      %v7109 = vrot.slane %v7095, %v7108
      %v7110 = vcombine.low %v7045, %v7061
      %v7111 = vcombine.high %v7045, %v7061
      %v7113 = vunpack.c.l.s4 1934713408
      %v7114 = vunpack.c.0.s8 %v7113
      %v7115 = vlaneseq
      %v7116 = vshrl.u32 %v7115, 7
      %v7117 = vsub.s32 %v7114, %v7116
      %v7118 = vrot.slane %v7110, %v7117
      %v7120 = vunpack.c.l.s4 1934713408
      %v7121 = vunpack.c.0.s8 %v7120
      %v7122 = vlaneseq
      %v7123 = vshrl.u32 %v7122, 7
      %v7124 = vsub.s32 %v7121, %v7123
      %v7125 = vrot.slane %v7111, %v7124
      %v7126 = vcombine.low %v7070, %v7086
      %v7127 = vcombine.high %v7070, %v7086
      %v7129 = vunpack.c.l.s4 1934713408
      %v7130 = vunpack.c.0.s8 %v7129
      %v7131 = vlaneseq
      %v7132 = vshrl.u32 %v7131, 7
      %v7133 = vsub.s32 %v7130, %v7132
      %v7134 = vrot.slane %v7126, %v7133
      %v7136 = vunpack.c.l.s4 1934713408
      %v7137 = vunpack.c.0.s8 %v7136
      %v7138 = vlaneseq
      %v7139 = vshrl.u32 %v7138, 7
      %v7140 = vsub.s32 %v7137, %v7139
      %v7141 = vrot.slane %v7127, %v7140
      %v7142 = vcombine.low %v7077, %v7093
      %v7143 = vcombine.high %v7077, %v7093
      %v7145 = vunpack.c.l.s4 1934713408
      %v7146 = vunpack.c.0.s8 %v7145
      %v7147 = vlaneseq
      %v7148 = vshrl.u32 %v7147, 7
      %v7149 = vsub.s32 %v7146, %v7148
      %v7150 = vrot.slane %v7142, %v7149
      %v7152 = vunpack.c.l.s4 1934713408
      %v7153 = vunpack.c.0.s8 %v7152
      %v7154 = vlaneseq
      %v7155 = vshrl.u32 %v7154, 7
      %v7156 = vsub.s32 %v7153, %v7155
      %v7157 = vrot.slane %v7143, %v7156
      %v7158 = vcombine.low %v7102, %v7134
      %v7159 = vcombine.high %v7102, %v7134
      %v7160 = vcombine.low %v7109, %v7141
      %v7161 = vcombine.high %v7109, %v7141
      %v7162 = vcombine.low %v7118, %v7150
      %v7163 = vcombine.high %v7118, %v7150
      %v7164 = vcombine.low %v7125, %v7157
      %v7165 = vcombine.high %v7125, %v7157
      %v7166 = vcombine.low %v5418, %v5450
      %v7167 = vcombine.high %v5418, %v5450
      %v7169 = vunpack.c.l.s4 1983009808
      %v7170 = vunpack.c.0.s8 %v7169
      %v7171 = vlaneseq
      %v7172 = vshrl.u32 %v7171, 7
      %v7173 = vsub.s32 %v7170, %v7172
      %v7174 = vrot.slane %v7166, %v7173
      %v7176 = vunpack.c.l.s4 1983009808
      %v7177 = vunpack.c.0.s8 %v7176
      %v7178 = vlaneseq
      %v7179 = vshrl.u32 %v7178, 7
      %v7180 = vsub.s32 %v7177, %v7179
      %v7181 = vrot.slane %v7167, %v7180
      %v7182 = vcombine.low %v5434, %v5466
      %v7183 = vcombine.high %v5434, %v5466
      %v7185 = vunpack.c.l.s4 1983009808
      %v7186 = vunpack.c.0.s8 %v7185
      %v7187 = vlaneseq
      %v7188 = vshrl.u32 %v7187, 7
      %v7189 = vsub.s32 %v7186, %v7188
      %v7190 = vrot.slane %v7182, %v7189
      %v7192 = vunpack.c.l.s4 1983009808
      %v7193 = vunpack.c.0.s8 %v7192
      %v7194 = vlaneseq
      %v7195 = vshrl.u32 %v7194, 7
      %v7196 = vsub.s32 %v7193, %v7195
      %v7197 = vrot.slane %v7183, %v7196
      %v7198 = vcombine.low %v5482, %v5514
      %v7199 = vcombine.high %v5482, %v5514
      %v7201 = vunpack.c.l.s4 1983009808
      %v7202 = vunpack.c.0.s8 %v7201
      %v7203 = vlaneseq
      %v7204 = vshrl.u32 %v7203, 7
      %v7205 = vsub.s32 %v7202, %v7204
      %v7206 = vrot.slane %v7198, %v7205
      %v7208 = vunpack.c.l.s4 1983009808
      %v7209 = vunpack.c.0.s8 %v7208
      %v7210 = vlaneseq
      %v7211 = vshrl.u32 %v7210, 7
      %v7212 = vsub.s32 %v7209, %v7211
      %v7213 = vrot.slane %v7199, %v7212
      %v7214 = vcombine.low %v5498, %v5530
      %v7215 = vcombine.high %v5498, %v5530
      %v7217 = vunpack.c.l.s4 1983009808
      %v7218 = vunpack.c.0.s8 %v7217
      %v7219 = vlaneseq
      %v7220 = vshrl.u32 %v7219, 7
      %v7221 = vsub.s32 %v7218, %v7220
      %v7222 = vrot.slane %v7214, %v7221
      %v7224 = vunpack.c.l.s4 1983009808
      %v7225 = vunpack.c.0.s8 %v7224
      %v7226 = vlaneseq
      %v7227 = vshrl.u32 %v7226, 7
      %v7228 = vsub.s32 %v7225, %v7227
      %v7229 = vrot.slane %v7215, %v7228
      %v7230 = vcombine.low %v7174, %v7190
      %v7231 = vcombine.high %v7174, %v7190
      %v7233 = vunpack.c.l.s4 1934713408
      %v7234 = vunpack.c.0.s8 %v7233
      %v7235 = vlaneseq
      %v7236 = vshrl.u32 %v7235, 7
      %v7237 = vsub.s32 %v7234, %v7236
      %v7238 = vrot.slane %v7230, %v7237
      %v7240 = vunpack.c.l.s4 1934713408
      %v7241 = vunpack.c.0.s8 %v7240
      %v7242 = vlaneseq
      %v7243 = vshrl.u32 %v7242, 7
      %v7244 = vsub.s32 %v7241, %v7243
      %v7245 = vrot.slane %v7231, %v7244
      %v7246 = vcombine.low %v7181, %v7197
      %v7247 = vcombine.high %v7181, %v7197
      %v7249 = vunpack.c.l.s4 1934713408
      %v7250 = vunpack.c.0.s8 %v7249
      %v7251 = vlaneseq
      %v7252 = vshrl.u32 %v7251, 7
      %v7253 = vsub.s32 %v7250, %v7252
      %v7254 = vrot.slane %v7246, %v7253
      %v7256 = vunpack.c.l.s4 1934713408
      %v7257 = vunpack.c.0.s8 %v7256
      %v7258 = vlaneseq
      %v7259 = vshrl.u32 %v7258, 7
      %v7260 = vsub.s32 %v7257, %v7259
      %v7261 = vrot.slane %v7247, %v7260
      %v7262 = vcombine.low %v7206, %v7222
      %v7263 = vcombine.high %v7206, %v7222
      %v7265 = vunpack.c.l.s4 1934713408
      %v7266 = vunpack.c.0.s8 %v7265
      %v7267 = vlaneseq
      %v7268 = vshrl.u32 %v7267, 7
      %v7269 = vsub.s32 %v7266, %v7268
      %v7270 = vrot.slane %v7262, %v7269
      %v7272 = vunpack.c.l.s4 1934713408
      %v7273 = vunpack.c.0.s8 %v7272
      %v7274 = vlaneseq
      %v7275 = vshrl.u32 %v7274, 7
      %v7276 = vsub.s32 %v7273, %v7275
      %v7277 = vrot.slane %v7263, %v7276
      %v7278 = vcombine.low %v7213, %v7229
      %v7279 = vcombine.high %v7213, %v7229
      %v7281 = vunpack.c.l.s4 1934713408
      %v7282 = vunpack.c.0.s8 %v7281
      %v7283 = vlaneseq
      %v7284 = vshrl.u32 %v7283, 7
      %v7285 = vsub.s32 %v7282, %v7284
      %v7286 = vrot.slane %v7278, %v7285
      %v7288 = vunpack.c.l.s4 1934713408
      %v7289 = vunpack.c.0.s8 %v7288
      %v7290 = vlaneseq
      %v7291 = vshrl.u32 %v7290, 7
      %v7292 = vsub.s32 %v7289, %v7291
      %v7293 = vrot.slane %v7279, %v7292
      %v7294 = vcombine.low %v7238, %v7270
      %v7295 = vcombine.high %v7238, %v7270
      %v7296 = vcombine.low %v7245, %v7277
      %v7297 = vcombine.high %v7245, %v7277
      %v7298 = vcombine.low %v7254, %v7286
      %v7299 = vcombine.high %v7254, %v7286
      %v7300 = vcombine.low %v7261, %v7293
      %v7301 = vcombine.high %v7261, %v7293
      %v7302 = vcombine.low %v5419, %v5451
      %v7303 = vcombine.high %v5419, %v5451
      %v7305 = vunpack.c.l.s4 1983009808
      %v7306 = vunpack.c.0.s8 %v7305
      %v7307 = vlaneseq
      %v7308 = vshrl.u32 %v7307, 7
      %v7309 = vsub.s32 %v7306, %v7308
      %v7310 = vrot.slane %v7302, %v7309
      %v7312 = vunpack.c.l.s4 1983009808
      %v7313 = vunpack.c.0.s8 %v7312
      %v7314 = vlaneseq
      %v7315 = vshrl.u32 %v7314, 7
      %v7316 = vsub.s32 %v7313, %v7315
      %v7317 = vrot.slane %v7303, %v7316
      %v7318 = vcombine.low %v5435, %v5467
      %v7319 = vcombine.high %v5435, %v5467
      %v7321 = vunpack.c.l.s4 1983009808
      %v7322 = vunpack.c.0.s8 %v7321
      %v7323 = vlaneseq
      %v7324 = vshrl.u32 %v7323, 7
      %v7325 = vsub.s32 %v7322, %v7324
      %v7326 = vrot.slane %v7318, %v7325
      %v7328 = vunpack.c.l.s4 1983009808
      %v7329 = vunpack.c.0.s8 %v7328
      %v7330 = vlaneseq
      %v7331 = vshrl.u32 %v7330, 7
      %v7332 = vsub.s32 %v7329, %v7331
      %v7333 = vrot.slane %v7319, %v7332
      %v7334 = vcombine.low %v5483, %v5515
      %v7335 = vcombine.high %v5483, %v5515
      %v7337 = vunpack.c.l.s4 1983009808
      %v7338 = vunpack.c.0.s8 %v7337
      %v7339 = vlaneseq
      %v7340 = vshrl.u32 %v7339, 7
      %v7341 = vsub.s32 %v7338, %v7340
      %v7342 = vrot.slane %v7334, %v7341
      %v7344 = vunpack.c.l.s4 1983009808
      %v7345 = vunpack.c.0.s8 %v7344
      %v7346 = vlaneseq
      %v7347 = vshrl.u32 %v7346, 7
      %v7348 = vsub.s32 %v7345, %v7347
      %v7349 = vrot.slane %v7335, %v7348
      %v7350 = vcombine.low %v5499, %v5531
      %v7351 = vcombine.high %v5499, %v5531
      %v7353 = vunpack.c.l.s4 1983009808
      %v7354 = vunpack.c.0.s8 %v7353
      %v7355 = vlaneseq
      %v7356 = vshrl.u32 %v7355, 7
      %v7357 = vsub.s32 %v7354, %v7356
      %v7358 = vrot.slane %v7350, %v7357
      %v7360 = vunpack.c.l.s4 1983009808
      %v7361 = vunpack.c.0.s8 %v7360
      %v7362 = vlaneseq
      %v7363 = vshrl.u32 %v7362, 7
      %v7364 = vsub.s32 %v7361, %v7363
      %v7365 = vrot.slane %v7351, %v7364
      %v7366 = vcombine.low %v7310, %v7326
      %v7367 = vcombine.high %v7310, %v7326
      %v7369 = vunpack.c.l.s4 1934713408
      %v7370 = vunpack.c.0.s8 %v7369
      %v7371 = vlaneseq
      %v7372 = vshrl.u32 %v7371, 7
      %v7373 = vsub.s32 %v7370, %v7372
      %v7374 = vrot.slane %v7366, %v7373
      %v7376 = vunpack.c.l.s4 1934713408
      %v7377 = vunpack.c.0.s8 %v7376
      %v7378 = vlaneseq
      %v7379 = vshrl.u32 %v7378, 7
      %v7380 = vsub.s32 %v7377, %v7379
      %v7381 = vrot.slane %v7367, %v7380
      %v7382 = vcombine.low %v7317, %v7333
      %v7383 = vcombine.high %v7317, %v7333
      %v7385 = vunpack.c.l.s4 1934713408
      %v7386 = vunpack.c.0.s8 %v7385
      %v7387 = vlaneseq
      %v7388 = vshrl.u32 %v7387, 7
      %v7389 = vsub.s32 %v7386, %v7388
      %v7390 = vrot.slane %v7382, %v7389
      %v7392 = vunpack.c.l.s4 1934713408
      %v7393 = vunpack.c.0.s8 %v7392
      %v7394 = vlaneseq
      %v7395 = vshrl.u32 %v7394, 7
      %v7396 = vsub.s32 %v7393, %v7395
      %v7397 = vrot.slane %v7383, %v7396
      %v7398 = vcombine.low %v7342, %v7358
      %v7399 = vcombine.high %v7342, %v7358
      %v7401 = vunpack.c.l.s4 1934713408
      %v7402 = vunpack.c.0.s8 %v7401
      %v7403 = vlaneseq
      %v7404 = vshrl.u32 %v7403, 7
      %v7405 = vsub.s32 %v7402, %v7404
      %v7406 = vrot.slane %v7398, %v7405
      %v7408 = vunpack.c.l.s4 1934713408
      %v7409 = vunpack.c.0.s8 %v7408
      %v7410 = vlaneseq
      %v7411 = vshrl.u32 %v7410, 7
      %v7412 = vsub.s32 %v7409, %v7411
      %v7413 = vrot.slane %v7399, %v7412
      %v7414 = vcombine.low %v7349, %v7365
      %v7415 = vcombine.high %v7349, %v7365
      %v7417 = vunpack.c.l.s4 1934713408
      %v7418 = vunpack.c.0.s8 %v7417
      %v7419 = vlaneseq
      %v7420 = vshrl.u32 %v7419, 7
      %v7421 = vsub.s32 %v7418, %v7420
      %v7422 = vrot.slane %v7414, %v7421
      %v7424 = vunpack.c.l.s4 1934713408
      %v7425 = vunpack.c.0.s8 %v7424
      %v7426 = vlaneseq
      %v7427 = vshrl.u32 %v7426, 7
      %v7428 = vsub.s32 %v7425, %v7427
      %v7429 = vrot.slane %v7415, %v7428
      %v7430 = vcombine.low %v7374, %v7406
      %v7431 = vcombine.high %v7374, %v7406
      %v7432 = vcombine.low %v7381, %v7413
      %v7433 = vcombine.high %v7381, %v7413
      %v7434 = vcombine.low %v7390, %v7422
      %v7435 = vcombine.high %v7390, %v7422
      %v7436 = vcombine.low %v7397, %v7429
      %v7437 = vcombine.high %v7397, %v7429
      %v7438 = vcombine.low %v5420, %v5452
      %v7439 = vcombine.high %v5420, %v5452
      %v7441 = vunpack.c.l.s4 1983009808
      %v7442 = vunpack.c.0.s8 %v7441
      %v7443 = vlaneseq
      %v7444 = vshrl.u32 %v7443, 7
      %v7445 = vsub.s32 %v7442, %v7444
      %v7446 = vrot.slane %v7438, %v7445
      %v7448 = vunpack.c.l.s4 1983009808
      %v7449 = vunpack.c.0.s8 %v7448
      %v7450 = vlaneseq
      %v7451 = vshrl.u32 %v7450, 7
      %v7452 = vsub.s32 %v7449, %v7451
      %v7453 = vrot.slane %v7439, %v7452
      %v7454 = vcombine.low %v5436, %v5468
      %v7455 = vcombine.high %v5436, %v5468
      %v7457 = vunpack.c.l.s4 1983009808
      %v7458 = vunpack.c.0.s8 %v7457
      %v7459 = vlaneseq
      %v7460 = vshrl.u32 %v7459, 7
      %v7461 = vsub.s32 %v7458, %v7460
      %v7462 = vrot.slane %v7454, %v7461
      %v7464 = vunpack.c.l.s4 1983009808
      %v7465 = vunpack.c.0.s8 %v7464
      %v7466 = vlaneseq
      %v7467 = vshrl.u32 %v7466, 7
      %v7468 = vsub.s32 %v7465, %v7467
      %v7469 = vrot.slane %v7455, %v7468
      %v7470 = vcombine.low %v5484, %v5516
      %v7471 = vcombine.high %v5484, %v5516
      %v7473 = vunpack.c.l.s4 1983009808
      %v7474 = vunpack.c.0.s8 %v7473
      %v7475 = vlaneseq
      %v7476 = vshrl.u32 %v7475, 7
      %v7477 = vsub.s32 %v7474, %v7476
      %v7478 = vrot.slane %v7470, %v7477
      %v7480 = vunpack.c.l.s4 1983009808
      %v7481 = vunpack.c.0.s8 %v7480
      %v7482 = vlaneseq
      %v7483 = vshrl.u32 %v7482, 7
      %v7484 = vsub.s32 %v7481, %v7483
      %v7485 = vrot.slane %v7471, %v7484
      %v7486 = vcombine.low %v5500, %v5532
      %v7487 = vcombine.high %v5500, %v5532
      %v7489 = vunpack.c.l.s4 1983009808
      %v7490 = vunpack.c.0.s8 %v7489
      %v7491 = vlaneseq
      %v7492 = vshrl.u32 %v7491, 7
      %v7493 = vsub.s32 %v7490, %v7492
      %v7494 = vrot.slane %v7486, %v7493
      %v7496 = vunpack.c.l.s4 1983009808
      %v7497 = vunpack.c.0.s8 %v7496
      %v7498 = vlaneseq
      %v7499 = vshrl.u32 %v7498, 7
      %v7500 = vsub.s32 %v7497, %v7499
      %v7501 = vrot.slane %v7487, %v7500
      %v7502 = vcombine.low %v7446, %v7462
      %v7503 = vcombine.high %v7446, %v7462
      %v7505 = vunpack.c.l.s4 1934713408
      %v7506 = vunpack.c.0.s8 %v7505
      %v7507 = vlaneseq
      %v7508 = vshrl.u32 %v7507, 7
      %v7509 = vsub.s32 %v7506, %v7508
      %v7510 = vrot.slane %v7502, %v7509
      %v7512 = vunpack.c.l.s4 1934713408
      %v7513 = vunpack.c.0.s8 %v7512
      %v7514 = vlaneseq
      %v7515 = vshrl.u32 %v7514, 7
      %v7516 = vsub.s32 %v7513, %v7515
      %v7517 = vrot.slane %v7503, %v7516
      %v7518 = vcombine.low %v7453, %v7469
      %v7519 = vcombine.high %v7453, %v7469
      %v7521 = vunpack.c.l.s4 1934713408
      %v7522 = vunpack.c.0.s8 %v7521
      %v7523 = vlaneseq
      %v7524 = vshrl.u32 %v7523, 7
      %v7525 = vsub.s32 %v7522, %v7524
      %v7526 = vrot.slane %v7518, %v7525
      %v7528 = vunpack.c.l.s4 1934713408
      %v7529 = vunpack.c.0.s8 %v7528
      %v7530 = vlaneseq
      %v7531 = vshrl.u32 %v7530, 7
      %v7532 = vsub.s32 %v7529, %v7531
      %v7533 = vrot.slane %v7519, %v7532
      %v7534 = vcombine.low %v7478, %v7494
      %v7535 = vcombine.high %v7478, %v7494
      %v7537 = vunpack.c.l.s4 1934713408
      %v7538 = vunpack.c.0.s8 %v7537
      %v7539 = vlaneseq
      %v7540 = vshrl.u32 %v7539, 7
      %v7541 = vsub.s32 %v7538, %v7540
      %v7542 = vrot.slane %v7534, %v7541
      %v7544 = vunpack.c.l.s4 1934713408
      %v7545 = vunpack.c.0.s8 %v7544
      %v7546 = vlaneseq
      %v7547 = vshrl.u32 %v7546, 7
      %v7548 = vsub.s32 %v7545, %v7547
      %v7549 = vrot.slane %v7535, %v7548
      %v7550 = vcombine.low %v7485, %v7501
      %v7551 = vcombine.high %v7485, %v7501
      %v7553 = vunpack.c.l.s4 1934713408
      %v7554 = vunpack.c.0.s8 %v7553
      %v7555 = vlaneseq
      %v7556 = vshrl.u32 %v7555, 7
      %v7557 = vsub.s32 %v7554, %v7556
      %v7558 = vrot.slane %v7550, %v7557
      %v7560 = vunpack.c.l.s4 1934713408
      %v7561 = vunpack.c.0.s8 %v7560
      %v7562 = vlaneseq
      %v7563 = vshrl.u32 %v7562, 7
      %v7564 = vsub.s32 %v7561, %v7563
      %v7565 = vrot.slane %v7551, %v7564
      %v7566 = vcombine.low %v7510, %v7542
      %v7567 = vcombine.high %v7510, %v7542
      %v7568 = vcombine.low %v7517, %v7549
      %v7569 = vcombine.high %v7517, %v7549
      %v7570 = vcombine.low %v7526, %v7558
      %v7571 = vcombine.high %v7526, %v7558
      %v7572 = vcombine.low %v7533, %v7565
      %v7573 = vcombine.high %v7533, %v7565
      %v7574 = vcombine.low %v5421, %v5453
      %v7575 = vcombine.high %v5421, %v5453
      %v7577 = vunpack.c.l.s4 1983009808
      %v7578 = vunpack.c.0.s8 %v7577
      %v7579 = vlaneseq
      %v7580 = vshrl.u32 %v7579, 7
      %v7581 = vsub.s32 %v7578, %v7580
      %v7582 = vrot.slane %v7574, %v7581
      %v7584 = vunpack.c.l.s4 1983009808
      %v7585 = vunpack.c.0.s8 %v7584
      %v7586 = vlaneseq
      %v7587 = vshrl.u32 %v7586, 7
      %v7588 = vsub.s32 %v7585, %v7587
      %v7589 = vrot.slane %v7575, %v7588
      %v7590 = vcombine.low %v5437, %v5469
      %v7591 = vcombine.high %v5437, %v5469
      %v7593 = vunpack.c.l.s4 1983009808
      %v7594 = vunpack.c.0.s8 %v7593
      %v7595 = vlaneseq
      %v7596 = vshrl.u32 %v7595, 7
      %v7597 = vsub.s32 %v7594, %v7596
      %v7598 = vrot.slane %v7590, %v7597
      %v7600 = vunpack.c.l.s4 1983009808
      %v7601 = vunpack.c.0.s8 %v7600
      %v7602 = vlaneseq
      %v7603 = vshrl.u32 %v7602, 7
      %v7604 = vsub.s32 %v7601, %v7603
      %v7605 = vrot.slane %v7591, %v7604
      %v7606 = vcombine.low %v5485, %v5517
      %v7607 = vcombine.high %v5485, %v5517
      %v7609 = vunpack.c.l.s4 1983009808
      %v7610 = vunpack.c.0.s8 %v7609
      %v7611 = vlaneseq
      %v7612 = vshrl.u32 %v7611, 7
      %v7613 = vsub.s32 %v7610, %v7612
      %v7614 = vrot.slane %v7606, %v7613
      %v7616 = vunpack.c.l.s4 1983009808
      %v7617 = vunpack.c.0.s8 %v7616
      %v7618 = vlaneseq
      %v7619 = vshrl.u32 %v7618, 7
      %v7620 = vsub.s32 %v7617, %v7619
      %v7621 = vrot.slane %v7607, %v7620
      %v7622 = vcombine.low %v5501, %v5533
      %v7623 = vcombine.high %v5501, %v5533
      %v7625 = vunpack.c.l.s4 1983009808
      %v7626 = vunpack.c.0.s8 %v7625
      %v7627 = vlaneseq
      %v7628 = vshrl.u32 %v7627, 7
      %v7629 = vsub.s32 %v7626, %v7628
      %v7630 = vrot.slane %v7622, %v7629
      %v7632 = vunpack.c.l.s4 1983009808
      %v7633 = vunpack.c.0.s8 %v7632
      %v7634 = vlaneseq
      %v7635 = vshrl.u32 %v7634, 7
      %v7636 = vsub.s32 %v7633, %v7635
      %v7637 = vrot.slane %v7623, %v7636
      %v7638 = vcombine.low %v7582, %v7598
      %v7639 = vcombine.high %v7582, %v7598
      %v7641 = vunpack.c.l.s4 1934713408
      %v7642 = vunpack.c.0.s8 %v7641
      %v7643 = vlaneseq
      %v7644 = vshrl.u32 %v7643, 7
      %v7645 = vsub.s32 %v7642, %v7644
      %v7646 = vrot.slane %v7638, %v7645
      %v7648 = vunpack.c.l.s4 1934713408
      %v7649 = vunpack.c.0.s8 %v7648
      %v7650 = vlaneseq
      %v7651 = vshrl.u32 %v7650, 7
      %v7652 = vsub.s32 %v7649, %v7651
      %v7653 = vrot.slane %v7639, %v7652
      %v7654 = vcombine.low %v7589, %v7605
      %v7655 = vcombine.high %v7589, %v7605
      %v7657 = vunpack.c.l.s4 1934713408
      %v7658 = vunpack.c.0.s8 %v7657
      %v7659 = vlaneseq
      %v7660 = vshrl.u32 %v7659, 7
      %v7661 = vsub.s32 %v7658, %v7660
      %v7662 = vrot.slane %v7654, %v7661
      %v7664 = vunpack.c.l.s4 1934713408
      %v7665 = vunpack.c.0.s8 %v7664
      %v7666 = vlaneseq
      %v7667 = vshrl.u32 %v7666, 7
      %v7668 = vsub.s32 %v7665, %v7667
      %v7669 = vrot.slane %v7655, %v7668
      %v7670 = vcombine.low %v7614, %v7630
      %v7671 = vcombine.high %v7614, %v7630
      %v7673 = vunpack.c.l.s4 1934713408
      %v7674 = vunpack.c.0.s8 %v7673
      %v7675 = vlaneseq
      %v7676 = vshrl.u32 %v7675, 7
      %v7677 = vsub.s32 %v7674, %v7676
      %v7678 = vrot.slane %v7670, %v7677
      %v7680 = vunpack.c.l.s4 1934713408
      %v7681 = vunpack.c.0.s8 %v7680
      %v7682 = vlaneseq
      %v7683 = vshrl.u32 %v7682, 7
      %v7684 = vsub.s32 %v7681, %v7683
      %v7685 = vrot.slane %v7671, %v7684
      %v7686 = vcombine.low %v7621, %v7637
      %v7687 = vcombine.high %v7621, %v7637
      %v7689 = vunpack.c.l.s4 1934713408
      %v7690 = vunpack.c.0.s8 %v7689
      %v7691 = vlaneseq
      %v7692 = vshrl.u32 %v7691, 7
      %v7693 = vsub.s32 %v7690, %v7692
      %v7694 = vrot.slane %v7686, %v7693
      %v7696 = vunpack.c.l.s4 1934713408
      %v7697 = vunpack.c.0.s8 %v7696
      %v7698 = vlaneseq
      %v7699 = vshrl.u32 %v7698, 7
      %v7700 = vsub.s32 %v7697, %v7699
      %v7701 = vrot.slane %v7687, %v7700
      %v7702 = vcombine.low %v7646, %v7678
      %v7703 = vcombine.high %v7646, %v7678
      %v7704 = vcombine.low %v7653, %v7685
      %v7705 = vcombine.high %v7653, %v7685
      %v7706 = vcombine.low %v7662, %v7694
      %v7707 = vcombine.high %v7662, %v7694
      %v7708 = vcombine.low %v7669, %v7701
      %v7709 = vcombine.high %v7669, %v7701
      %vm7710 = vcmask 261120
      %7711 = vst.msk [vmem:[%s233] sm:$0xff] %vm7710, %v5662
      %7712 = vst.msk [vmem:[%s233 + $0x8] sm:$0xff] %vm7710, %v5663
      %7713 = vst.msk [vmem:[%s233 + $0x10] sm:$0xff] %vm7710, %v5664
      %7714 = vst.msk [vmem:[%s233 + $0x18] sm:$0xff] %vm7710, %v5665
      %7715 = vst.msk [vmem:[%s233 + $0x20] sm:$0xff] %vm7710, %v5666
      %7716 = vst.msk [vmem:[%s233 + $0x28] sm:$0xff] %vm7710, %v5667
      %7717 = vst.msk [vmem:[%s233 + $0x30] sm:$0xff] %vm7710, %v5668
      %7718 = vst.msk [vmem:[%s233 + $0x38] sm:$0xff] %vm7710, %v5669
      %7719 = vst.msk [vmem:[%s233 + $0x40] sm:$0xff] %vm7710, %v5798
      %7720 = vst.msk [vmem:[%s233 + $0x48] sm:$0xff] %vm7710, %v5799
      %7721 = vst.msk [vmem:[%s233 + $0x50] sm:$0xff] %vm7710, %v5800
      %7722 = vst.msk [vmem:[%s233 + $0x58] sm:$0xff] %vm7710, %v5801
      %7723 = vst.msk [vmem:[%s233 + $0x60] sm:$0xff] %vm7710, %v5802
      %7724 = vst.msk [vmem:[%s233 + $0x68] sm:$0xff] %vm7710, %v5803
      %7725 = vst.msk [vmem:[%s233 + $0x70] sm:$0xff] %vm7710, %v5804
      %7726 = vst.msk [vmem:[%s233 + $0x78] sm:$0xff] %vm7710, %v5805
      %7727 = vst.msk [vmem:[%s233 + $0x80] sm:$0xff] %vm7710, %v5934
      %7728 = vst.msk [vmem:[%s233 + $0x88] sm:$0xff] %vm7710, %v5935
      %7729 = vst.msk [vmem:[%s233 + $0x90] sm:$0xff] %vm7710, %v5936
      %7730 = vst.msk [vmem:[%s233 + $0x98] sm:$0xff] %vm7710, %v5937
      %7731 = vst.msk [vmem:[%s233 + $0xa0] sm:$0xff] %vm7710, %v5938
      %7732 = vst.msk [vmem:[%s233 + $0xa8] sm:$0xff] %vm7710, %v5939
      %7733 = vst.msk [vmem:[%s233 + $0xb0] sm:$0xff] %vm7710, %v5940
      %7734 = vst.msk [vmem:[%s233 + $0xb8] sm:$0xff] %vm7710, %v5941
      %7735 = vst.msk [vmem:[%s233 + $0xc0] sm:$0xff] %vm7710, %v6070
      %7736 = vst.msk [vmem:[%s233 + $0xc8] sm:$0xff] %vm7710, %v6071
      %7737 = vst.msk [vmem:[%s233 + $0xd0] sm:$0xff] %vm7710, %v6072
      %7738 = vst.msk [vmem:[%s233 + $0xd8] sm:$0xff] %vm7710, %v6073
      %7739 = vst.msk [vmem:[%s233 + $0xe0] sm:$0xff] %vm7710, %v6074
      %7740 = vst.msk [vmem:[%s233 + $0xe8] sm:$0xff] %vm7710, %v6075
      %7741 = vst.msk [vmem:[%s233 + $0xf0] sm:$0xff] %vm7710, %v6076
      %7742 = vst.msk [vmem:[%s233 + $0xf8] sm:$0xff] %vm7710, %v6077
      %7743 = vst.msk [vmem:[%s233 + $0x100] sm:$0xff] %vm7710, %v6206
      %7744 = vst.msk [vmem:[%s233 + $0x108] sm:$0xff] %vm7710, %v6207
      %7745 = vst.msk [vmem:[%s233 + $0x110] sm:$0xff] %vm7710, %v6208
      %7746 = vst.msk [vmem:[%s233 + $0x118] sm:$0xff] %vm7710, %v6209
      %7747 = vst.msk [vmem:[%s233 + $0x120] sm:$0xff] %vm7710, %v6210
      %7748 = vst.msk [vmem:[%s233 + $0x128] sm:$0xff] %vm7710, %v6211
      %7749 = vst.msk [vmem:[%s233 + $0x130] sm:$0xff] %vm7710, %v6212
      %7750 = vst.msk [vmem:[%s233 + $0x138] sm:$0xff] %vm7710, %v6213
      %7751 = vst.msk [vmem:[%s233 + $0x140] sm:$0xff] %vm7710, %v6342
      %7752 = vst.msk [vmem:[%s233 + $0x148] sm:$0xff] %vm7710, %v6343
      %7753 = vst.msk [vmem:[%s233 + $0x150] sm:$0xff] %vm7710, %v6344
      %7754 = vst.msk [vmem:[%s233 + $0x158] sm:$0xff] %vm7710, %v6345
      %7755 = vst.msk [vmem:[%s233 + $0x160] sm:$0xff] %vm7710, %v6346
      %7756 = vst.msk [vmem:[%s233 + $0x168] sm:$0xff] %vm7710, %v6347
      %7757 = vst.msk [vmem:[%s233 + $0x170] sm:$0xff] %vm7710, %v6348
      %7758 = vst.msk [vmem:[%s233 + $0x178] sm:$0xff] %vm7710, %v6349
      %7759 = vst.msk [vmem:[%s233 + $0x180] sm:$0xff] %vm7710, %v6478
      %7760 = vst.msk [vmem:[%s233 + $0x188] sm:$0xff] %vm7710, %v6479
      %7761 = vst.msk [vmem:[%s233 + $0x190] sm:$0xff] %vm7710, %v6480
      %7762 = vst.msk [vmem:[%s233 + $0x198] sm:$0xff] %vm7710, %v6481
      %7763 = vst.msk [vmem:[%s233 + $0x1a0] sm:$0xff] %vm7710, %v6482
      %7764 = vst.msk [vmem:[%s233 + $0x1a8] sm:$0xff] %vm7710, %v6483
      %7765 = vst.msk [vmem:[%s233 + $0x1b0] sm:$0xff] %vm7710, %v6484
      %7766 = vst.msk [vmem:[%s233 + $0x1b8] sm:$0xff] %vm7710, %v6485
      %7767 = vst.msk [vmem:[%s233 + $0x1c0] sm:$0xff] %vm7710, %v6614
      %7768 = vst.msk [vmem:[%s233 + $0x1c8] sm:$0xff] %vm7710, %v6615
      %7769 = vst.msk [vmem:[%s233 + $0x1d0] sm:$0xff] %vm7710, %v6616
      %7770 = vst.msk [vmem:[%s233 + $0x1d8] sm:$0xff] %vm7710, %v6617
      %7771 = vst.msk [vmem:[%s233 + $0x1e0] sm:$0xff] %vm7710, %v6618
      %7772 = vst.msk [vmem:[%s233 + $0x1e8] sm:$0xff] %vm7710, %v6619
      %7773 = vst.msk [vmem:[%s233 + $0x1f0] sm:$0xff] %vm7710, %v6620
      %7774 = vst.msk [vmem:[%s233 + $0x1f8] sm:$0xff] %vm7710, %v6621
      %7775 = vst.msk [vmem:[%s233 + $0x200] sm:$0xff] %vm7710, %v6750
      %7776 = vst.msk [vmem:[%s233 + $0x208] sm:$0xff] %vm7710, %v6751
      %7777 = vst.msk [vmem:[%s233 + $0x210] sm:$0xff] %vm7710, %v6752
      %7778 = vst.msk [vmem:[%s233 + $0x218] sm:$0xff] %vm7710, %v6753
      %7779 = vst.msk [vmem:[%s233 + $0x220] sm:$0xff] %vm7710, %v6754
      %7780 = vst.msk [vmem:[%s233 + $0x228] sm:$0xff] %vm7710, %v6755
      %7781 = vst.msk [vmem:[%s233 + $0x230] sm:$0xff] %vm7710, %v6756
      %7782 = vst.msk [vmem:[%s233 + $0x238] sm:$0xff] %vm7710, %v6757
      %7783 = vst.msk [vmem:[%s233 + $0x240] sm:$0xff] %vm7710, %v6886
      %7784 = vst.msk [vmem:[%s233 + $0x248] sm:$0xff] %vm7710, %v6887
      %7785 = vst.msk [vmem:[%s233 + $0x250] sm:$0xff] %vm7710, %v6888
      %7786 = vst.msk [vmem:[%s233 + $0x258] sm:$0xff] %vm7710, %v6889
      %7787 = vst.msk [vmem:[%s233 + $0x260] sm:$0xff] %vm7710, %v6890
      %7788 = vst.msk [vmem:[%s233 + $0x268] sm:$0xff] %vm7710, %v6891
      %7789 = vst.msk [vmem:[%s233 + $0x270] sm:$0xff] %vm7710, %v6892
      %7790 = vst.msk [vmem:[%s233 + $0x278] sm:$0xff] %vm7710, %v6893
      %7791 = vst.msk [vmem:[%s233 + $0x280] sm:$0xff] %vm7710, %v7022
      %7792 = vst.msk [vmem:[%s233 + $0x288] sm:$0xff] %vm7710, %v7023
      %7793 = vst.msk [vmem:[%s233 + $0x290] sm:$0xff] %vm7710, %v7024
      %7794 = vst.msk [vmem:[%s233 + $0x298] sm:$0xff] %vm7710, %v7025
      %7795 = vst.msk [vmem:[%s233 + $0x2a0] sm:$0xff] %vm7710, %v7026
      %7796 = vst.msk [vmem:[%s233 + $0x2a8] sm:$0xff] %vm7710, %v7027
      %7797 = vst.msk [vmem:[%s233 + $0x2b0] sm:$0xff] %vm7710, %v7028
      %7798 = vst.msk [vmem:[%s233 + $0x2b8] sm:$0xff] %vm7710, %v7029
      %7799 = vst.msk [vmem:[%s233 + $0x2c0] sm:$0xff] %vm7710, %v7158
      %7800 = vst.msk [vmem:[%s233 + $0x2c8] sm:$0xff] %vm7710, %v7159
      %7801 = vst.msk [vmem:[%s233 + $0x2d0] sm:$0xff] %vm7710, %v7160
      %7802 = vst.msk [vmem:[%s233 + $0x2d8] sm:$0xff] %vm7710, %v7161
      %7803 = vst.msk [vmem:[%s233 + $0x2e0] sm:$0xff] %vm7710, %v7162
      %7804 = vst.msk [vmem:[%s233 + $0x2e8] sm:$0xff] %vm7710, %v7163
      %7805 = vst.msk [vmem:[%s233 + $0x2f0] sm:$0xff] %vm7710, %v7164
      %7806 = vst.msk [vmem:[%s233 + $0x2f8] sm:$0xff] %vm7710, %v7165
      %7807 = vst.msk [vmem:[%s233 + $0x300] sm:$0xff] %vm7710, %v7294
      %7808 = vst.msk [vmem:[%s233 + $0x308] sm:$0xff] %vm7710, %v7295
      %7809 = vst.msk [vmem:[%s233 + $0x310] sm:$0xff] %vm7710, %v7296
      %7810 = vst.msk [vmem:[%s233 + $0x318] sm:$0xff] %vm7710, %v7297
      %7811 = vst.msk [vmem:[%s233 + $0x320] sm:$0xff] %vm7710, %v7298
      %7812 = vst.msk [vmem:[%s233 + $0x328] sm:$0xff] %vm7710, %v7299
      %7813 = vst.msk [vmem:[%s233 + $0x330] sm:$0xff] %vm7710, %v7300
      %7814 = vst.msk [vmem:[%s233 + $0x338] sm:$0xff] %vm7710, %v7301
      %7815 = vst.msk [vmem:[%s233 + $0x340] sm:$0xff] %vm7710, %v7430
      %7816 = vst.msk [vmem:[%s233 + $0x348] sm:$0xff] %vm7710, %v7431
      %7817 = vst.msk [vmem:[%s233 + $0x350] sm:$0xff] %vm7710, %v7432
      %7818 = vst.msk [vmem:[%s233 + $0x358] sm:$0xff] %vm7710, %v7433
      %7819 = vst.msk [vmem:[%s233 + $0x360] sm:$0xff] %vm7710, %v7434
      %7820 = vst.msk [vmem:[%s233 + $0x368] sm:$0xff] %vm7710, %v7435
      %7821 = vst.msk [vmem:[%s233 + $0x370] sm:$0xff] %vm7710, %v7436
      %7822 = vst.msk [vmem:[%s233 + $0x378] sm:$0xff] %vm7710, %v7437
      %7823 = vst.msk [vmem:[%s233 + $0x380] sm:$0xff] %vm7710, %v7566
      %7824 = vst.msk [vmem:[%s233 + $0x388] sm:$0xff] %vm7710, %v7567
      %7825 = vst.msk [vmem:[%s233 + $0x390] sm:$0xff] %vm7710, %v7568
      %7826 = vst.msk [vmem:[%s233 + $0x398] sm:$0xff] %vm7710, %v7569
      %7827 = vst.msk [vmem:[%s233 + $0x3a0] sm:$0xff] %vm7710, %v7570
      %7828 = vst.msk [vmem:[%s233 + $0x3a8] sm:$0xff] %vm7710, %v7571
      %7829 = vst.msk [vmem:[%s233 + $0x3b0] sm:$0xff] %vm7710, %v7572
      %7830 = vst.msk [vmem:[%s233 + $0x3b8] sm:$0xff] %vm7710, %v7573
      %7831 = vst.msk [vmem:[%s233 + $0x3c0] sm:$0xff] %vm7710, %v7702
      %7832 = vst.msk [vmem:[%s233 + $0x3c8] sm:$0xff] %vm7710, %v7703
      %7833 = vst.msk [vmem:[%s233 + $0x3d0] sm:$0xff] %vm7710, %v7704
      %7834 = vst.msk [vmem:[%s233 + $0x3d8] sm:$0xff] %vm7710, %v7705
      %7835 = vst.msk [vmem:[%s233 + $0x3e0] sm:$0xff] %vm7710, %v7706
      %7836 = vst.msk [vmem:[%s233 + $0x3e8] sm:$0xff] %vm7710, %v7707
      %7837 = vst.msk [vmem:[%s233 + $0x3f0] sm:$0xff] %vm7710, %v7708
      %7838 = vst.msk [vmem:[%s233 + $0x3f8] sm:$0xff] %vm7710, %v7709
      %p7839 = scmp.lt.s32.totalorder %s19, 1
      %s7840 = scalar_select %p7839, %s19, 1
      %p7841 = scmp.lt.s32.totalorder %s20, 0
      %s7842 = scalar_select %p7841, %s20, 0
      %s7843 = smul.addr %s7840, 128
      %s7844 = sadd.s32 %s7842, %s7843
      %s7845 = smul.addr %s7844, 8
      %s7846 = scalar_lea.vmem %s4, %s7845
      // Predicated region
      $region37: #{group9_forward.3} parent=35 // pred_check
        %p7847 = pneg %p138
      $region38: #{group9_forward.3} parent=35 // pred_check_branch
        %7849 = sbr.rel (%p7847) target = $region40
      $region39: #{group9_forward.3} parent=35 // pred_region
        _
      $region40: #{group9_forward.3} parent=35 // pred_fallthru
        _
    $region36: #{group9_forward.3} parent=5 // pred_fallthru
      _
    %p7850 = scmp.le.s32.totalorder 2, %s10
    // Predicated region
    $region41: #{group9_forward.3} parent=5 // pred_check
      %p7851 = pneg %p7850
    $region42: #{group9_forward.3} parent=5 // pred_check_branch
      %7853 = sbr.rel (%p7851) target = $region44
    $region43: #{group9_forward.3} parent=5 // pred_region
      %s7854 = ssub.s32 %s10, 2
      // Predicated region
      $region45: #{group9_forward.3} parent=43 // pred_check
        %p7855 = pneg %p144
      $region46: #{group9_forward.3} parent=43 // pred_check_branch
        %7857 = sbr.rel (%p7855) target = $region48
      $region47: #{group9_forward.3} parent=43 // pred_region
        %p7858 = scmp.lt.s32.totalorder %s21, 1
        %s7859 = scalar_select %p7858, %s21, 1
        %p7860 = scmp.lt.s32.totalorder %s22, 0
        %s7861 = scalar_select %p7860, %s22, 0
        %s7862 = smul.addr %s7859, 128
        %s7863 = sadd.s32 %s7861, %s7862
        %s7864 = smul.addr %s7863, 8
        %s7865 = scalar_lea.vmem %s4, %s7864
      $region48: #{group9_forward.3} parent=43 // pred_fallthru
        _
    $region44: #{group9_forward.3} parent=5 // pred_fallthru
      _
  $region6: #{group9_forward.3} parent=0 // loop_footer
    %s14 = sadd.s32 1, %s10
  $region7: #{group9_forward.3} parent=0 // loop_footer_branch
    %9 = sbr.rel target = $region3
  $region8: #{group9_forward.3} parent=0 // loop_exit
    _

</llo_original>
